<compile_context>
chip_gen: v7x
topology: tpu7x:2x2x1
jax: 0.10.0
libtpu: 0.0.40
codegen_flags: <defaults>
</compile_context>

<pallas_src>
import functools

import jax
import jax.numpy as jnp
from jax import lax
from jax.experimental import pallas as pl
from jax.experimental.pallas import tpu as pltpu

_EPS = 1e-6            # F.pairwise_distance default eps (added to the difference)
_LANE = 128
_SUBLANE = 8

_TARGET_BLOCK_BYTES = 4 * 1024 * 1024    # ~4 MiB per input block per grid step
_MAX_TB = 8192                           # bounds the lane-padded label buffer
_MIN_PALLAS_BYTES = 1 * 1024 * 1024      # below this, XLA fusion beats launch cost
_VMEM_LIMIT = 48 * 1024 * 1024           # < 64 MiB physical on v7x, > default scoped


def _round_up(x, m):
    return ((x + m - 1) // m) * m


def _contrastive_loss_kernel(o1_ref, o2_ref, label_ref, out_ref, *,
                             margin, batch, need_mask):
    tb = o1_ref.shape[0]

    # Stream native dtype from HBM; upcast post-load so arithmetic is f32.
    o1 = o1_ref[...].astype(jnp.float32)                   # (TB, D)
    o2 = o2_ref[...].astype(jnp.float32)                   # (TB, D)
    label = label_ref[...].astype(jnp.float32)             # (TB, 1)

    diff = o1 - o2 + _EPS                                   # (TB, D)
    sq_dist = jnp.sum(diff * diff, axis=-1, keepdims=True)  # (TB, 1)
    dist = jnp.sqrt(sq_dist)                                # (TB, 1)
    hinge = jnp.maximum(margin - dist, 0.0)
    # Positive term uses sq_dist directly (== dist**2 up to a ULP).
    per_row = (1.0 - label) * sq_dist + label * (hinge * hinge)

    if need_mask:
        # Last tile's edge block holds unspecified rows: zero them via select
        # (jnp.where also stops garbage NaN/Inf from propagating).
        row_ids = pl.program_id(0) * tb + lax.broadcasted_iota(
            jnp.int32, (tb, 1), 0)
        per_row = jnp.where(row_ids < batch, per_row, 0.0)

    # One partial sum per tile, broadcast into a single lane-dense (8, 128)
    # block -> one unmasked vector store per grid step.
    partial = jnp.sum(per_row)
    out_ref[...] = jnp.full(out_ref.shape, partial, dtype=out_ref.dtype)


def _reference_loss(output1, output2, label, margin=200.0):
    # Pure-JAX path, matching PyTorch semantics exactly (also the tiny-shape path).
    o1 = output1.astype(jnp.float32)
    o2 = output2.astype(jnp.float32)
    lab = jnp.reshape(label, (o1.shape[0], 1)).astype(jnp.float32)
    d = jnp.sqrt(jnp.sum((o1 - o2 + _EPS) ** 2, axis=-1, keepdims=True))
    hinge = jnp.maximum(margin - d, 0.0)
    return jnp.mean((1.0 - lab) * d ** 2 + lab * hinge ** 2)


def contrastive_loss(output1, output2, label, margin=200.0):
    """Pallas-backed ContrastiveLoss forward.

    output1, output2: (B, D) floats (any float dtype; streamed natively)
    label:            (B, 1) or (B,) floats (0 = similar pair, 1 = dissimilar)
    returns:          scalar float32
    """
    B, D = output1.shape
    label = jnp.reshape(label, (B, 1))

    itemsize = output1.dtype.itemsize
    Dp = _round_up(D, _LANE)                 # lane-padded VMEM footprint per row
    bytes_per_input = B * Dp * itemsize

    # Tiny problems: fixed pallas_call launch/DMA cost dominates -> plain XLA.
    if bytes_per_input < _MIN_PALLAS_BYTES:
        return _reference_loss(output1, output2, label, margin)

    # Balanced tiling: ~_TARGET_BLOCK_BYTES per input block, >=2 (even) tiles
    # so both v7x TensorCores get work, TB a multiple of 8.  No wrapper pads:
    # the edge block of the last tile is masked inside the kernel.
    num_tiles = max(2, pl.cdiv(bytes_per_input, _TARGET_BLOCK_BYTES))
    num_tiles += num_tiles % 2
    TB = _round_up(pl.cdiv(B, num_tiles), _SUBLANE)
    TB = max(_SUBLANE, min(TB, _MAX_TB))
    num_tiles = pl.cdiv(B, TB)
    need_mask = (num_tiles * TB) != B

    kernel = functools.partial(
        _contrastive_loss_kernel,
        margin=float(margin), batch=B, need_mask=bool(need_mask))

    partials = pl.pallas_call(
        kernel,
        out_shape=jax.ShapeDtypeStruct((num_tiles, _SUBLANE, _LANE), jnp.float32),
        grid_spec=pltpu.PrefetchScalarGridSpec(
            num_scalar_prefetch=0,
            grid=(num_tiles,),
            in_specs=[
                pl.BlockSpec((TB, D), lambda i: (i, 0)),   # full-extent feature dim
                pl.BlockSpec((TB, D), lambda i: (i, 0)),
                pl.BlockSpec((TB, 1), lambda i: (i, 0)),
            ],
            out_specs=pl.BlockSpec((1, _SUBLANE, _LANE), lambda i: (i, 0, 0)),
        ),
        compiler_params=pltpu.CompilerParams(
            dimension_semantics=("parallel",),
            vmem_limit_bytes=_VMEM_LIMIT,
        ),
        cost_estimate=pl.CostEstimate(
            flops=5 * B * D + 8 * B,
            transcendentals=B,
            bytes_accessed=2 * B * D * itemsize + B * label.dtype.itemsize
                           + num_tiles * _SUBLANE * _LANE * 4,
        ),
    )(output1, output2, label)

    # Tiny epilogue in plain JAX: sum per-tile partials, mean over the true B.
    return jnp.sum(partials[:, 0, 0]) / B


if __name__ == "__main__":
    key = jax.random.PRNGKey(0)
    k = jax.random.split(key, 9)

    # Case 1 (Pallas path): multi-tile f32, B not a multiple of the tile and
    # D not a multiple of 128 (exercises edge-row masking + full-extent D block).
    B, D = 3000, 160
    o1 = 10.0 * jax.random.normal(k[0], (B, D), dtype=jnp.float32)
    o2 = 10.0 * jax.random.normal(k[1], (B, D), dtype=jnp.float32)
    lab = jax.random.bernoulli(k[2], 0.5, (B, 1)).astype(jnp.float32)
    loss = jax.block_until_ready(contrastive_loss(o1, o2, lab))
    ref = jax.block_until_ready(_reference_loss(o1, o2, lab))
    assert jnp.allclose(loss, ref, rtol=1e-4, atol=1e-2), (loss, ref)

    # Case 2 (Pallas path): bf16 inputs streamed natively, upcast in-kernel.
    B2, D2 = 4096, 200
    o1b = (5.0 * jax.random.normal(k[3], (B2, D2), jnp.float32)).astype(jnp.bfloat16)
    o2b = (5.0 * jax.random.normal(k[4], (B2, D2), jnp.float32)).astype(jnp.bfloat16)
    labb = jax.random.bernoulli(k[5], 0.5, (B2, 1)).astype(jnp.float32)
    loss2 = jax.block_until_ready(contrastive_loss(o1b, o2b, labb))
    ref2 = jax.block_until_ready(_reference_loss(o1b, o2b, labb))
    assert jnp.allclose(loss2, ref2, rtol=1e-4, atol=1e-2), (loss2, ref2)

    # Case 3 (tiny short-circuit path): small shapes typical of the module.
    B3, D3 = 8, 32
    o1c = jax.random.normal(k[6], (B3, D3), dtype=jnp.float32)
    o2c = jax.random.normal(k[7], (B3, D3), dtype=jnp.float32)
    labc = jax.random.bernoulli(k[8], 0.5, (B3, 1)).astype(jnp.float32)
    loss3 = jax.block_until_ready(contrastive_loss(o1c, o2c, labc))
    ref3 = jax.block_until_ready(_reference_loss(o1c, o2c, labc))
    assert jnp.allclose(loss3, ref3, rtol=1e-5, atol=1e-3), (loss3, ref3)

    print("KERNEL_OK")
</pallas_src>

<mosaic_0001>
module attributes {stable_mosaic.version = 11 : i64} {
  func.func @_contrastive_loss_kernel(%arg0: i32, %arg1: memref<1504x160xf32, #tpu.memory_space<vmem>>, %arg2: memref<1504x160xf32, #tpu.memory_space<vmem>>, %arg3: memref<1504x1xf32, #tpu.memory_space<vmem>>, %arg4: memref<1x8x128xf32, #tpu.memory_space<vmem>>) attributes {dimension_semantics = [#tpu.dimension_semantics<parallel>], iteration_bounds = array<i64: 2>, scalar_prefetch = 0 : i64, scratch_operands = 0 : i64, tpu.core_type = #tpu.core_type<tc>, window_params = [{transform_indices = @transform_0, window_bounds = array<i64: 1504, 160>}, {transform_indices = @transform_1, window_bounds = array<i64: 1504, 160>}, {transform_indices = @transform_2, window_bounds = array<i64: 1504, 1>}, {transform_indices = @transform_3, window_bounds = array<i64: 1, 8, 128>}]} {
    %c0 = arith.constant 0 : index
    %c0_0 = arith.constant 0 : index
    %0 = vector.load %arg1[%c0, %c0_0] : memref<1504x160xf32, #tpu.memory_space<vmem>>, vector<1504x160xf32>
    %c0_1 = arith.constant 0 : index
    %c0_2 = arith.constant 0 : index
    %1 = vector.load %arg2[%c0_1, %c0_2] : memref<1504x160xf32, #tpu.memory_space<vmem>>, vector<1504x160xf32>
    %c0_3 = arith.constant 0 : index
    %c0_4 = arith.constant 0 : index
    %2 = vector.load %arg3[%c0_3, %c0_4] : memref<1504x1xf32, #tpu.memory_space<vmem>>, vector<1504x1xf32>
    %3 = arith.subf %0, %1 : vector<1504x160xf32>
    %cst = arith.constant 9.99999997E-7 : f32
    %4 = vector.broadcast %cst : f32 to vector<1504x160xf32>
    %5 = arith.addf %3, %4 : vector<1504x160xf32>
    %6 = arith.mulf %5, %5 : vector<1504x160xf32>
    %cst_5 = arith.constant dense<0.000000e+00> : vector<1504xf32>
    %7 = vector.multi_reduction <add>, %6, %cst_5 [1] : vector<1504x160xf32> to vector<1504xf32>
    %8 = vector.shape_cast %7 : vector<1504xf32> to vector<1504x1xf32>
    %9 = math.sqrt %8 : vector<1504x1xf32>
    %cst_6 = arith.constant 2.000000e+02 : f32
    %10 = vector.broadcast %cst_6 : f32 to vector<1504x1xf32>
    %11 = arith.subf %10, %9 : vector<1504x1xf32>
    %cst_7 = arith.constant 0.000000e+00 : f32
    %12 = vector.broadcast %cst_7 : f32 to vector<1504x1xf32>
    %13 = arith.maximumf %11, %12 : vector<1504x1xf32>
    %cst_8 = arith.constant 1.000000e+00 : f32
    %14 = vector.broadcast %cst_8 : f32 to vector<1504x1xf32>
    %15 = arith.subf %14, %2 : vector<1504x1xf32>
    %16 = arith.mulf %15, %8 : vector<1504x1xf32>
    %17 = arith.mulf %13, %13 : vector<1504x1xf32>
    %18 = arith.mulf %2, %17 : vector<1504x1xf32>
    %19 = arith.addf %16, %18 : vector<1504x1xf32>
    %c1504_i32 = arith.constant 1504 : i32
    %20 = arith.muli %arg0, %c1504_i32 : i32
    %21 = tpu.iota {dimensions = array<i32: 0>} : vector<1504x1xi32>
    %22 = vector.broadcast %20 : i32 to vector<1504x1xi32>
    %23 = arith.addi %22, %21 : vector<1504x1xi32>
    %c3000_i32 = arith.constant 3000 : i32
    %24 = vector.broadcast %c3000_i32 : i32 to vector<1504x1xi32>
    %25 = arith.cmpi slt, %23, %24 : vector<1504x1xi32>
    %cst_9 = arith.constant 0.000000e+00 : f32
    %26 = vector.broadcast %cst_9 : f32 to vector<1504x1xf32>
    %27 = arith.select %25, %19, %26 : vector<1504x1xi1>, vector<1504x1xf32>
    %28 = vector.shape_cast %27 : vector<1504x1xf32> to vector<1x1504x1xf32>
    %cst_10 = arith.constant dense<0.000000e+00> : vector<1xf32>
    %29 = vector.multi_reduction <add>, %28, %cst_10 [1, 2] : vector<1x1504x1xf32> to vector<1xf32>
    %30 = vector.shape_cast %29 : vector<1xf32> to vector<1x1x1xf32>
    %31 = vector.extract %30[0, 0, 0] : f32 from vector<1x1x1xf32>
    %32 = vector.broadcast %31 : f32 to vector<1x8x128xf32>
    %c0_11 = arith.constant 0 : index
    %c0_12 = arith.constant 0 : index
    %c0_13 = arith.constant 0 : index
    %33 = vector.load %arg4[%c0_11, %c0_12, %c0_13] : memref<1x8x128xf32, #tpu.memory_space<vmem>>, vector<1x8x128xf32>
    tpu.vector_store %arg4[%c0_11, %c0_12, %c0_13], %32 {strides = array<i32>} : memref<1x8x128xf32, #tpu.memory_space<vmem>>, vector<1x8x128xf32>,
    return
  }
  func.func @transform_0(%arg0: i32) -> (i32, i32) {
    %c0_i32 = arith.constant 0 : i32
    %c0_i32_0 = arith.constant 0 : i32
    return %arg0, %c0_i32 : i32, i32
  }
  func.func @transform_1(%arg0: i32) -> (i32, i32) {
    %c0_i32 = arith.constant 0 : i32
    %c0_i32_0 = arith.constant 0 : i32
    return %arg0, %c0_i32 : i32, i32
  }
  func.func @transform_2(%arg0: i32) -> (i32, i32) {
    %c0_i32 = arith.constant 0 : i32
    %c0_i32_0 = arith.constant 0 : i32
    return %arg0, %c0_i32 : i32, i32
  }
  func.func @transform_3(%arg0: i32) -> (i32, i32, i32) {
    %c0_i32 = arith.constant 0 : i32
    %c0_i32_0 = arith.constant 0 : i32
    %c0_i32_1 = arith.constant 0 : i32
    return %arg0, %c0_i32, %c0_i32_0 : i32, i32, i32
  }
}

</mosaic_0001>

<llo_original>
// kernel: tpu_custom_call.1
$region0: #{tpu_custom_call.1}
  #allocation0 [shape = 'u32[]', space=smem, size = 0x4, offset = 0x4, fixed_abs, tag = 'smem constant byte address 0x4 - core index']
  #allocation1 [shape = 'u32[144,128]{1,0:T(1,128)}', space=vmem, size = 0x12000, scoped, tag = 'internal scratch']
  %s0 = inlined_call_operand.vmem [shape: f32[3000,160], index: 0, kind: input, shape index: {}]
  %s1 = inlined_call_operand.vmem [shape: f32[3000,160], index: 1, kind: input, shape index: {}]
  %s2 = inlined_call_operand.vmem [shape: f32[3000,1], index: 2, kind: input, shape index: {}]
  %s3 = inlined_call_operand.hbm [shape: f32[2,8,128], index: 3, kind: output, shape index: {}]
  %s4 = sld [smem:[#allocation0]]
  $region45: #{tpu_custom_call.1} parent=0
    _
  %s6 = ssub.s32 1, %s4
  %s7 = scalar_select 0, %s6, %s4
  $region1: #{tpu_custom_call.1} parent=0
    #allocation2 [shape = 'u8[8192]{0}', space=vmem, size = 0x2000, scoped, tag = 'output window, operand 0']
    #allocation3 [shape = 's32[2]{0}', space=sflag, size = 0x8, scoped, tag = 'scoped memory for tpu_custom_call.1']
    %8 = vsyncpa [#allocation3], 0
    %s9 = scalar_lea.sflag [#allocation3], 1
    %10 = vsyncpa %s9, 0
    loop: start=0, step=1, limit=4
    $region2: #{tpu_custom_call.1} parent=1 // loop_pre_header
      _
    $region3: #{tpu_custom_call.1} parent=1 // loop_header
      %s12 = sphi 0, %s16
      %p13 = scmp.ge.s32.totalorder %s12, 4
      %s22 = sphi 0, %s24
      %s25 = sphi 0, %s22
      %s26 = sphi 0, %s25
      %s42 = sphi 0, %s26
      %s48 = sphi 0, %s50
      %s51 = sphi 0, %s48
      %s52 = sphi 0, %s51
      %s68 = sphi 0, %s52
      %s74 = sphi 0, %s76
      %s77 = sphi 0, %s74
      %s78 = sphi 0, %s77
      %s94 = sphi 0, %s78
      %s100 = sphi 0, %s102
      %s103 = sphi 0, %s100
      %s104 = sphi 0, %s103
      %s120 = sphi 0, %s104
    $region4: #{tpu_custom_call.1} parent=1 // loop_header_branch
      %15 = sbr.rel (%p13) target = $region8
    $region5: #{tpu_custom_call.1} parent=1 // loop_body
      %s17 = ssub.s32 %s12, 1
      %s18 = ssub.s32 %s12, 2
      %s19 = sadd.s32 %s12, 1
      %s20 = ssub.s32 %s12, %s19
      %p21 = scmp.eq.s32.totalorder %s20, 0
      %s23 = sadd.s32 %s22, 1
      %s24 = scalar_select %p21, %s22, %s23
      %p27 = pneg %p21
      %p28 = scmp.eq.s32.totalorder %s12, 1
      %p29 = por %p27, %p28
      %p30 = scmp.ne.s32.totalorder %s22, %s25
      %p31 = scmp.eq.s32.totalorder %s12, 0
      %p32 = por %p30, %p31
      %p33 = scmp.ne.s32.totalorder %s22, %s25
      %p34 = scmp.eq.s32.totalorder %s17, 1
      %p35 = por %p33, %p34
      %p36 = scmp.ne.s32.totalorder %s25, %s26
      %p37 = scmp.eq.s32.totalorder %s17, 0
      %p38 = por %p36, %p37
      %p39 = scmp.ne.s32.totalorder %s25, %s26
      %p40 = scmp.eq.s32.totalorder %s18, 1
      %p41 = por %p39, %p40
      %p43 = scmp.ne.s32.totalorder %s26, %s42
      %p44 = scmp.eq.s32.totalorder %s18, 0
      %p45 = por %p43, %p44
      %s46 = ssub.s32 %s12, %s19
      %p47 = scmp.eq.s32.totalorder %s46, 0
      %s49 = sadd.s32 %s48, 1
      %s50 = scalar_select %p47, %s48, %s49
      %p53 = pneg %p47
      %p54 = scmp.eq.s32.totalorder %s12, 1
      %p55 = por %p53, %p54
      %p56 = scmp.ne.s32.totalorder %s48, %s51
      %p57 = scmp.eq.s32.totalorder %s12, 0
      %p58 = por %p56, %p57
      %p59 = scmp.ne.s32.totalorder %s48, %s51
      %p60 = scmp.eq.s32.totalorder %s17, 1
      %p61 = por %p59, %p60
      %p62 = scmp.ne.s32.totalorder %s51, %s52
      %p63 = scmp.eq.s32.totalorder %s17, 0
      %p64 = por %p62, %p63
      %p65 = scmp.ne.s32.totalorder %s51, %s52
      %p66 = scmp.eq.s32.totalorder %s18, 1
      %p67 = por %p65, %p66
      %p69 = scmp.ne.s32.totalorder %s52, %s68
      %p70 = scmp.eq.s32.totalorder %s18, 0
      %p71 = por %p69, %p70
      %s72 = ssub.s32 %s12, %s19
      %p73 = scmp.eq.s32.totalorder %s72, 0
      %s75 = sadd.s32 %s74, 1
      %s76 = scalar_select %p73, %s74, %s75
      %p79 = pneg %p73
      %p80 = scmp.eq.s32.totalorder %s12, 1
      %p81 = por %p79, %p80
      %p82 = scmp.ne.s32.totalorder %s74, %s77
      %p83 = scmp.eq.s32.totalorder %s12, 0
      %p84 = por %p82, %p83
      %p85 = scmp.ne.s32.totalorder %s74, %s77
      %p86 = scmp.eq.s32.totalorder %s17, 1
      %p87 = por %p85, %p86
      %p88 = scmp.ne.s32.totalorder %s77, %s78
      %p89 = scmp.eq.s32.totalorder %s17, 0
      %p90 = por %p88, %p89
      %p91 = scmp.ne.s32.totalorder %s77, %s78
      %p92 = scmp.eq.s32.totalorder %s18, 1
      %p93 = por %p91, %p92
      %p95 = scmp.ne.s32.totalorder %s78, %s94
      %p96 = scmp.eq.s32.totalorder %s18, 0
      %p97 = por %p95, %p96
      %s98 = ssub.s32 %s12, %s19
      %p99 = scmp.eq.s32.totalorder %s98, 0
      %s101 = sadd.s32 %s100, 1
      %s102 = scalar_select %p99, %s100, %s101
      %p105 = pneg %p99
      %p106 = scmp.eq.s32.totalorder %s12, 1
      %p107 = por %p105, %p106
      %p108 = scmp.ne.s32.totalorder %s100, %s103
      %p109 = scmp.eq.s32.totalorder %s12, 0
      %p110 = por %p108, %p109
      %p111 = scmp.ne.s32.totalorder %s100, %s103
      %p112 = scmp.eq.s32.totalorder %s17, 1
      %p113 = por %p111, %p112
      %p114 = scmp.ne.s32.totalorder %s103, %s104
      %p115 = scmp.eq.s32.totalorder %s17, 0
      %p116 = por %p114, %p115
      %p117 = scmp.ne.s32.totalorder %s103, %s104
      %p118 = scmp.eq.s32.totalorder %s18, 1
      %p119 = por %p117, %p118
      %p121 = scmp.ne.s32.totalorder %s104, %s120
      %p122 = scmp.eq.s32.totalorder %s18, 0
      %p123 = por %p121, %p122
      %p124 = scmp.le.s32.totalorder 1, %s12
      %p125 = scmp.lt.s32.totalorder %s12, 3
      %p126 = pnand %p124, %p125
      %p127 = pneg %p126
      // Predicated region
      $region9: #{tpu_custom_call.1} parent=5 // pred_check
        _
      $region10: #{tpu_custom_call.1} parent=5 // pred_check_branch
        %129 = sbr.rel (%p126) target = $region12
      $region11: #{tpu_custom_call.1} parent=5 // pred_region
        %s130 = ssub.s32 %s12, 1
      $region12: #{tpu_custom_call.1} parent=5 // pred_fallthru
        _
      %p131 = scmp.lt.s32.totalorder %s12, 2
      // Predicated region
      $region13: #{tpu_custom_call.1} parent=5 // pred_check
        %p132 = pneg %p131
      $region14: #{tpu_custom_call.1} parent=5 // pred_check_branch
        %134 = sbr.rel (%p132) target = $region16
      $region15: #{tpu_custom_call.1} parent=5 // pred_region
        // Predicated region
        $region17: #{tpu_custom_call.1} parent=15 // pred_check
          %p135 = pneg %p32
        $region18: #{tpu_custom_call.1} parent=15 // pred_check_branch
          %137 = sbr.rel (%p135) target = $region20
        $region19: #{tpu_custom_call.1} parent=15 // pred_region
          %s138 = smul.u32 188, %s12
          %s139 = ssub.s32 375, %s138
          %p140 = scmp.lt.s32.totalorder %s139, 188
          %s141 = scalar_select %p140, %s139, 188
          %s142 = smul.u32 128, %s141
          %s143 = smul.u32 %s142, 2
          %p144 = scmp.lt.s32.totalorder %s138, 374
          %s145 = scalar_select %p144, %s138, 374
          %s146 = smul.addr %s145, 2
          %s147 = smul.addr %s146, 8
          %s148 = scalar_lea.vmem %s0, %s147
          %s149 = smul.u32 188, %s12
          %s150 = ssub.s32 375, %s149
          %p151 = scmp.lt.s32.totalorder %s150, 188
          %s152 = scalar_select %p151, %s150, 188
          %s153 = smul.u32 128, %s152
          %s154 = smul.u32 %s153, 2
        $region20: #{tpu_custom_call.1} parent=15 // pred_fallthru
          _
        // Predicated region
        $region21: #{tpu_custom_call.1} parent=15 // pred_check
          %p155 = pneg %p58
        $region22: #{tpu_custom_call.1} parent=15 // pred_check_branch
          %157 = sbr.rel (%p155) target = $region24
        $region23: #{tpu_custom_call.1} parent=15 // pred_region
          %s158 = smul.u32 188, %s12
          %s159 = ssub.s32 375, %s158
          %p160 = scmp.lt.s32.totalorder %s159, 188
          %s161 = scalar_select %p160, %s159, 188
          %s162 = smul.u32 128, %s161
          %s163 = smul.u32 %s162, 2
          %p164 = scmp.lt.s32.totalorder %s158, 374
          %s165 = scalar_select %p164, %s158, 374
          %s166 = smul.addr %s165, 2
          %s167 = smul.addr %s166, 8
          %s168 = scalar_lea.vmem %s1, %s167
          %s169 = smul.u32 188, %s12
          %s170 = ssub.s32 375, %s169
          %p171 = scmp.lt.s32.totalorder %s170, 188
          %s172 = scalar_select %p171, %s170, 188
          %s173 = smul.u32 128, %s172
          %s174 = smul.u32 %s173, 2
        $region24: #{tpu_custom_call.1} parent=15 // pred_fallthru
          _
        // Predicated region
        $region25: #{tpu_custom_call.1} parent=15 // pred_check
          %p175 = pneg %p84
        $region26: #{tpu_custom_call.1} parent=15 // pred_check_branch
          %177 = sbr.rel (%p175) target = $region28
        $region27: #{tpu_custom_call.1} parent=15 // pred_region
          %s178 = smul.u32 188, %s12
          %s179 = ssub.s32 375, %s178
          %p180 = scmp.lt.s32.totalorder %s179, 188
          %s181 = scalar_select %p180, %s179, 188
          %s182 = smul.u32 128, %s181
          %p183 = scmp.lt.s32.totalorder %s178, 374
          %s184 = scalar_select %p183, %s178, 374
          %s185 = smul.addr %s184, 8
          %s186 = scalar_lea.vmem %s2, %s185
          %s187 = smul.u32 188, %s12
          %s188 = ssub.s32 375, %s187
          %p189 = scmp.lt.s32.totalorder %s188, 188
          %s190 = scalar_select %p189, %s188, 188
          %s191 = smul.u32 128, %s190
        $region28: #{tpu_custom_call.1} parent=15 // pred_fallthru
          _
      $region16: #{tpu_custom_call.1} parent=5 // pred_fallthru
        _
      %p192 = scmp.le.s32.totalorder 1, %s12
      %p193 = scmp.lt.s32.totalorder %s12, 3
      %p194 = pnand %p192, %p193
      %p195 = pneg %p194
      // Predicated region
      $region29: #{tpu_custom_call.1} parent=5 // pred_check
        _
      $region30: #{tpu_custom_call.1} parent=5 // pred_check_branch
        %197 = sbr.rel (%p194) target = $region32
      $region31: #{tpu_custom_call.1} parent=5 // pred_region
        %s198 = ssub.s32 %s12, 1
        %s199 = smul.u32 188, %s17
        %s200 = ssub.s32 375, %s199
        %p201 = scmp.lt.s32.totalorder %s200, 188
        %s202 = scalar_select %p201, %s200, 188
        %s203 = smul.u32 128, %s202
        %s204 = smul.u32 %s203, 2
        %p205 = scmp.lt.s32.totalorder %s199, 374
        %s206 = scalar_select %p205, %s199, 374
        %s207 = smul.addr %s206, 2
        %s208 = smul.addr %s207, 8
        %s209 = scalar_lea.vmem %s0, %s208
        %p210 = pneg %p38
        %p211 = pneg %p35
        %s212 = smul.u32 188, %s17
        %s213 = ssub.s32 375, %s212
        %p214 = scmp.lt.s32.totalorder %s213, 188
        %s215 = scalar_select %p214, %s213, 188
        %s216 = smul.u32 128, %s215
        %s217 = smul.u32 %s216, 2
        %p218 = scmp.lt.s32.totalorder %s212, 374
        %s219 = scalar_select %p218, %s212, 374
        %s220 = smul.addr %s219, 2
        %s221 = smul.addr %s220, 8
        %s222 = scalar_lea.vmem %s1, %s221
        %p223 = pneg %p64
        %p224 = pneg %p61
        %s225 = smul.u32 188, %s17
        %s226 = ssub.s32 375, %s225
        %p227 = scmp.lt.s32.totalorder %s226, 188
        %s228 = scalar_select %p227, %s226, 188
        %s229 = smul.u32 128, %s228
        %p230 = scmp.lt.s32.totalorder %s225, 374
        %s231 = scalar_select %p230, %s225, 374
        %s232 = smul.addr %s231, 8
        %s233 = scalar_lea.vmem %s2, %s232
        %p234 = pneg %p90
        %p235 = pneg %p87
        %p236 = pneg %p116
        %p237 = pneg %p113
        %s238 = sand.u32 %s103, 1
        %s239 = scalar_lea.sflag [#allocation3], %s238
        %s240 = sand.u32 %s103, 1
        %s241 = smul.addr %s240, 8
        %s242 = scalar_lea.vmem [#allocation2], %s241
        %s243 = smul.u32 188, %s17
        %s244 = ssub.s32 375, %s243
        %p245 = scmp.lt.s32.totalorder %s244, 188
        %s246 = scalar_select %p245, %s244, 188
        %s247 = smul.u32 128, %s246
        %s248 = smul.u32 %s247, 2
        %p249 = scmp.lt.s32.totalorder %s243, 374
        %s250 = scalar_select %p249, %s243, 374
        %s251 = smul.addr %s250, 2
        %s252 = smul.addr %s251, 8
        %s253 = scalar_lea.vmem %s0, %s252
        %s254 = smul.u32 188, %s17
        %s255 = ssub.s32 375, %s254
        %p256 = scmp.lt.s32.totalorder %s255, 188
        %s257 = scalar_select %p256, %s255, 188
        %s258 = smul.u32 128, %s257
        %s259 = smul.u32 %s258, 2
        %s260 = smul.u32 188, %s17
        %s261 = ssub.s32 375, %s260
        %p262 = scmp.lt.s32.totalorder %s261, 188
        %s263 = scalar_select %p262, %s261, 188
        %s264 = smul.u32 128, %s263
        %s265 = smul.u32 %s264, 2
        %p266 = scmp.lt.s32.totalorder %s260, 374
        %s267 = scalar_select %p266, %s260, 374
        %s268 = smul.addr %s267, 2
        %s269 = smul.addr %s268, 8
        %s270 = scalar_lea.vmem %s1, %s269
        %s271 = smul.u32 188, %s17
        %s272 = ssub.s32 375, %s271
        %p273 = scmp.lt.s32.totalorder %s272, 188
        %s274 = scalar_select %p273, %s272, 188
        %s275 = smul.u32 128, %s274
        %s276 = smul.u32 %s275, 2
        %s277 = smul.u32 188, %s17
        %s278 = ssub.s32 375, %s277
        %p279 = scmp.lt.s32.totalorder %s278, 188
        %s280 = scalar_select %p279, %s278, 188
        %s281 = smul.u32 128, %s280
        %p282 = scmp.lt.s32.totalorder %s277, 374
        %s283 = scalar_select %p282, %s277, 374
        %s284 = smul.addr %s283, 8
        %s285 = scalar_lea.vmem %s2, %s284
        %s286 = smul.u32 188, %s17
        %s287 = ssub.s32 375, %s286
        %p288 = scmp.lt.s32.totalorder %s287, 188
        %s289 = scalar_select %p288, %s287, 188
        %s290 = smul.u32 128, %s289
        %v291 = vld [vmem:[%s253] sm:$0xff]
        %v292 = vld [vmem:[%s253 + $0x8] sm:$0xff]
        %v293 = vld [vmem:[%s253 + $0x10] sm:$0xff]
        %v294 = vld [vmem:[%s253 + $0x18] sm:$0xff]
        %v295 = vld [vmem:[%s253 + $0x20] sm:$0xff]
        %v296 = vld [vmem:[%s253 + $0x28] sm:$0xff]
        %v297 = vld [vmem:[%s253 + $0x30] sm:$0xff]
        %v298 = vld [vmem:[%s253 + $0x38] sm:$0xff]
        %v299 = vld [vmem:[%s253 + $0x40] sm:$0xff]
        %v300 = vld [vmem:[%s253 + $0x48] sm:$0xff]
        %v301 = vld [vmem:[%s253 + $0x50] sm:$0xff]
        %v302 = vld [vmem:[%s253 + $0x58] sm:$0xff]
        %v303 = vld [vmem:[%s253 + $0x60] sm:$0xff]
        %v304 = vld [vmem:[%s253 + $0x68] sm:$0xff]
        %v305 = vld [vmem:[%s253 + $0x70] sm:$0xff]
        %v306 = vld [vmem:[%s253 + $0x78] sm:$0xff]
        %v307 = vld [vmem:[%s253 + $0x80] sm:$0xff]
        %v308 = vld [vmem:[%s253 + $0x88] sm:$0xff]
        %v309 = vld [vmem:[%s253 + $0x90] sm:$0xff]
        %v310 = vld [vmem:[%s253 + $0x98] sm:$0xff]
        %v311 = vld [vmem:[%s253 + $0xa0] sm:$0xff]
        %v312 = vld [vmem:[%s253 + $0xa8] sm:$0xff]
        %v313 = vld [vmem:[%s253 + $0xb0] sm:$0xff]
        %v314 = vld [vmem:[%s253 + $0xb8] sm:$0xff]
        %v315 = vld [vmem:[%s253 + $0xc0] sm:$0xff]
        %v316 = vld [vmem:[%s253 + $0xc8] sm:$0xff]
        %v317 = vld [vmem:[%s253 + $0xd0] sm:$0xff]
        %v318 = vld [vmem:[%s253 + $0xd8] sm:$0xff]
        %v319 = vld [vmem:[%s253 + $0xe0] sm:$0xff]
        %v320 = vld [vmem:[%s253 + $0xe8] sm:$0xff]
        %v321 = vld [vmem:[%s253 + $0xf0] sm:$0xff]
        %v322 = vld [vmem:[%s253 + $0xf8] sm:$0xff]
        %v323 = vld [vmem:[%s253 + $0x100] sm:$0xff]
        %v324 = vld [vmem:[%s253 + $0x108] sm:$0xff]
        %v325 = vld [vmem:[%s253 + $0x110] sm:$0xff]
        %v326 = vld [vmem:[%s253 + $0x118] sm:$0xff]
        %v327 = vld [vmem:[%s253 + $0x120] sm:$0xff]
        %v328 = vld [vmem:[%s253 + $0x128] sm:$0xff]
        %v329 = vld [vmem:[%s253 + $0x130] sm:$0xff]
        %v330 = vld [vmem:[%s253 + $0x138] sm:$0xff]
        %v331 = vld [vmem:[%s253 + $0x140] sm:$0xff]
        %v332 = vld [vmem:[%s253 + $0x148] sm:$0xff]
        %v333 = vld [vmem:[%s253 + $0x150] sm:$0xff]
        %v334 = vld [vmem:[%s253 + $0x158] sm:$0xff]
        %v335 = vld [vmem:[%s253 + $0x160] sm:$0xff]
        %v336 = vld [vmem:[%s253 + $0x168] sm:$0xff]
        %v337 = vld [vmem:[%s253 + $0x170] sm:$0xff]
        %v338 = vld [vmem:[%s253 + $0x178] sm:$0xff]
        %v339 = vld [vmem:[%s253 + $0x180] sm:$0xff]
        %v340 = vld [vmem:[%s253 + $0x188] sm:$0xff]
        %v341 = vld [vmem:[%s253 + $0x190] sm:$0xff]
        %v342 = vld [vmem:[%s253 + $0x198] sm:$0xff]
        %v343 = vld [vmem:[%s253 + $0x1a0] sm:$0xff]
        %v344 = vld [vmem:[%s253 + $0x1a8] sm:$0xff]
        %v345 = vld [vmem:[%s253 + $0x1b0] sm:$0xff]
        %v346 = vld [vmem:[%s253 + $0x1b8] sm:$0xff]
        %v347 = vld [vmem:[%s253 + $0x1c0] sm:$0xff]
        %v348 = vld [vmem:[%s253 + $0x1c8] sm:$0xff]
        %v349 = vld [vmem:[%s253 + $0x1d0] sm:$0xff]
        %v350 = vld [vmem:[%s253 + $0x1d8] sm:$0xff]
        %v351 = vld [vmem:[%s253 + $0x1e0] sm:$0xff]
        %v352 = vld [vmem:[%s253 + $0x1e8] sm:$0xff]
        %v353 = vld [vmem:[%s253 + $0x1f0] sm:$0xff]
        %v354 = vld [vmem:[%s253 + $0x1f8] sm:$0xff]
        %v355 = vld [vmem:[%s253 + $0x200] sm:$0xff]
        %v356 = vld [vmem:[%s253 + $0x208] sm:$0xff]
        %v357 = vld [vmem:[%s253 + $0x210] sm:$0xff]
        %v358 = vld [vmem:[%s253 + $0x218] sm:$0xff]
        %v359 = vld [vmem:[%s253 + $0x220] sm:$0xff]
        %v360 = vld [vmem:[%s253 + $0x228] sm:$0xff]
        %v361 = vld [vmem:[%s253 + $0x230] sm:$0xff]
        %v362 = vld [vmem:[%s253 + $0x238] sm:$0xff]
        %v363 = vld [vmem:[%s253 + $0x240] sm:$0xff]
        %v364 = vld [vmem:[%s253 + $0x248] sm:$0xff]
        %v365 = vld [vmem:[%s253 + $0x250] sm:$0xff]
        %v366 = vld [vmem:[%s253 + $0x258] sm:$0xff]
        %v367 = vld [vmem:[%s253 + $0x260] sm:$0xff]
        %v368 = vld [vmem:[%s253 + $0x268] sm:$0xff]
        %v369 = vld [vmem:[%s253 + $0x270] sm:$0xff]
        %v370 = vld [vmem:[%s253 + $0x278] sm:$0xff]
        %v371 = vld [vmem:[%s253 + $0x280] sm:$0xff]
        %v372 = vld [vmem:[%s253 + $0x288] sm:$0xff]
        %v373 = vld [vmem:[%s253 + $0x290] sm:$0xff]
        %v374 = vld [vmem:[%s253 + $0x298] sm:$0xff]
        %v375 = vld [vmem:[%s253 + $0x2a0] sm:$0xff]
        %v376 = vld [vmem:[%s253 + $0x2a8] sm:$0xff]
        %v377 = vld [vmem:[%s253 + $0x2b0] sm:$0xff]
        %v378 = vld [vmem:[%s253 + $0x2b8] sm:$0xff]
        %v379 = vld [vmem:[%s253 + $0x2c0] sm:$0xff]
        %v380 = vld [vmem:[%s253 + $0x2c8] sm:$0xff]
        %v381 = vld [vmem:[%s253 + $0x2d0] sm:$0xff]
        %v382 = vld [vmem:[%s253 + $0x2d8] sm:$0xff]
        %v383 = vld [vmem:[%s253 + $0x2e0] sm:$0xff]
        %v384 = vld [vmem:[%s253 + $0x2e8] sm:$0xff]
        %v385 = vld [vmem:[%s253 + $0x2f0] sm:$0xff]
        %v386 = vld [vmem:[%s253 + $0x2f8] sm:$0xff]
        %v387 = vld [vmem:[%s253 + $0x300] sm:$0xff]
        %v388 = vld [vmem:[%s253 + $0x308] sm:$0xff]
        %v389 = vld [vmem:[%s253 + $0x310] sm:$0xff]
        %v390 = vld [vmem:[%s253 + $0x318] sm:$0xff]
        %v391 = vld [vmem:[%s253 + $0x320] sm:$0xff]
        %v392 = vld [vmem:[%s253 + $0x328] sm:$0xff]
        %v393 = vld [vmem:[%s253 + $0x330] sm:$0xff]
        %v394 = vld [vmem:[%s253 + $0x338] sm:$0xff]
        %v395 = vld [vmem:[%s253 + $0x340] sm:$0xff]
        %v396 = vld [vmem:[%s253 + $0x348] sm:$0xff]
        %v397 = vld [vmem:[%s253 + $0x350] sm:$0xff]
        %v398 = vld [vmem:[%s253 + $0x358] sm:$0xff]
        %v399 = vld [vmem:[%s253 + $0x360] sm:$0xff]
        %v400 = vld [vmem:[%s253 + $0x368] sm:$0xff]
        %v401 = vld [vmem:[%s253 + $0x370] sm:$0xff]
        %v402 = vld [vmem:[%s253 + $0x378] sm:$0xff]
        %v403 = vld [vmem:[%s253 + $0x380] sm:$0xff]
        %v404 = vld [vmem:[%s253 + $0x388] sm:$0xff]
        %v405 = vld [vmem:[%s253 + $0x390] sm:$0xff]
        %v406 = vld [vmem:[%s253 + $0x398] sm:$0xff]
        %v407 = vld [vmem:[%s253 + $0x3a0] sm:$0xff]
        %v408 = vld [vmem:[%s253 + $0x3a8] sm:$0xff]
        %v409 = vld [vmem:[%s253 + $0x3b0] sm:$0xff]
        %v410 = vld [vmem:[%s253 + $0x3b8] sm:$0xff]
        %v411 = vld [vmem:[%s253 + $0x3c0] sm:$0xff]
        %v412 = vld [vmem:[%s253 + $0x3c8] sm:$0xff]
        %v413 = vld [vmem:[%s253 + $0x3d0] sm:$0xff]
        %v414 = vld [vmem:[%s253 + $0x3d8] sm:$0xff]
        %v415 = vld [vmem:[%s253 + $0x3e0] sm:$0xff]
        %v416 = vld [vmem:[%s253 + $0x3e8] sm:$0xff]
        %v417 = vld [vmem:[%s253 + $0x3f0] sm:$0xff]
        %v418 = vld [vmem:[%s253 + $0x3f8] sm:$0xff]
        %v419 = vld [vmem:[%s253 + $0x400] sm:$0xff]
        %v420 = vld [vmem:[%s253 + $0x408] sm:$0xff]
        %v421 = vld [vmem:[%s253 + $0x410] sm:$0xff]
        %v422 = vld [vmem:[%s253 + $0x418] sm:$0xff]
        %v423 = vld [vmem:[%s253 + $0x420] sm:$0xff]
        %v424 = vld [vmem:[%s253 + $0x428] sm:$0xff]
        %v425 = vld [vmem:[%s253 + $0x430] sm:$0xff]
        %v426 = vld [vmem:[%s253 + $0x438] sm:$0xff]
        %v427 = vld [vmem:[%s253 + $0x440] sm:$0xff]
        %v428 = vld [vmem:[%s253 + $0x448] sm:$0xff]
        %v429 = vld [vmem:[%s253 + $0x450] sm:$0xff]
        %v430 = vld [vmem:[%s253 + $0x458] sm:$0xff]
        %v431 = vld [vmem:[%s253 + $0x460] sm:$0xff]
        %v432 = vld [vmem:[%s253 + $0x468] sm:$0xff]
        %v433 = vld [vmem:[%s253 + $0x470] sm:$0xff]
        %v434 = vld [vmem:[%s253 + $0x478] sm:$0xff]
        %v435 = vld [vmem:[%s253 + $0x480] sm:$0xff]
        %v436 = vld [vmem:[%s253 + $0x488] sm:$0xff]
        %v437 = vld [vmem:[%s253 + $0x490] sm:$0xff]
        %v438 = vld [vmem:[%s253 + $0x498] sm:$0xff]
        %v439 = vld [vmem:[%s253 + $0x4a0] sm:$0xff]
        %v440 = vld [vmem:[%s253 + $0x4a8] sm:$0xff]
        %v441 = vld [vmem:[%s253 + $0x4b0] sm:$0xff]
        %v442 = vld [vmem:[%s253 + $0x4b8] sm:$0xff]
        %v443 = vld [vmem:[%s253 + $0x4c0] sm:$0xff]
        %v444 = vld [vmem:[%s253 + $0x4c8] sm:$0xff]
        %v445 = vld [vmem:[%s253 + $0x4d0] sm:$0xff]
        %v446 = vld [vmem:[%s253 + $0x4d8] sm:$0xff]
        %v447 = vld [vmem:[%s253 + $0x4e0] sm:$0xff]
        %v448 = vld [vmem:[%s253 + $0x4e8] sm:$0xff]
        %v449 = vld [vmem:[%s253 + $0x4f0] sm:$0xff]
        %v450 = vld [vmem:[%s253 + $0x4f8] sm:$0xff]
        %v451 = vld [vmem:[%s253 + $0x500] sm:$0xff]
        %v452 = vld [vmem:[%s253 + $0x508] sm:$0xff]
        %v453 = vld [vmem:[%s253 + $0x510] sm:$0xff]
        %v454 = vld [vmem:[%s253 + $0x518] sm:$0xff]
        %v455 = vld [vmem:[%s253 + $0x520] sm:$0xff]
        %v456 = vld [vmem:[%s253 + $0x528] sm:$0xff]
        %v457 = vld [vmem:[%s253 + $0x530] sm:$0xff]
        %v458 = vld [vmem:[%s253 + $0x538] sm:$0xff]
        %v459 = vld [vmem:[%s253 + $0x540] sm:$0xff]
        %v460 = vld [vmem:[%s253 + $0x548] sm:$0xff]
        %v461 = vld [vmem:[%s253 + $0x550] sm:$0xff]
        %v462 = vld [vmem:[%s253 + $0x558] sm:$0xff]
        %v463 = vld [vmem:[%s253 + $0x560] sm:$0xff]
        %v464 = vld [vmem:[%s253 + $0x568] sm:$0xff]
        %v465 = vld [vmem:[%s253 + $0x570] sm:$0xff]
        %v466 = vld [vmem:[%s253 + $0x578] sm:$0xff]
        %v467 = vld [vmem:[%s253 + $0x580] sm:$0xff]
        %v468 = vld [vmem:[%s253 + $0x588] sm:$0xff]
        %v469 = vld [vmem:[%s253 + $0x590] sm:$0xff]
        %v470 = vld [vmem:[%s253 + $0x598] sm:$0xff]
        %v471 = vld [vmem:[%s253 + $0x5a0] sm:$0xff]
        %v472 = vld [vmem:[%s253 + $0x5a8] sm:$0xff]
        %v473 = vld [vmem:[%s253 + $0x5b0] sm:$0xff]
        %v474 = vld [vmem:[%s253 + $0x5b8] sm:$0xff]
        %v475 = vld [vmem:[%s253 + $0x5c0] sm:$0xff]
        %v476 = vld [vmem:[%s253 + $0x5c8] sm:$0xff]
        %v477 = vld [vmem:[%s253 + $0x5d0] sm:$0xff]
        %v478 = vld [vmem:[%s253 + $0x5d8] sm:$0xff]
        %v479 = vld [vmem:[%s253 + $0x5e0] sm:$0xff]
        %v480 = vld [vmem:[%s253 + $0x5e8] sm:$0xff]
        %v481 = vld [vmem:[%s253 + $0x5f0] sm:$0xff]
        %v482 = vld [vmem:[%s253 + $0x5f8] sm:$0xff]
        %v483 = vld [vmem:[%s253 + $0x600] sm:$0xff]
        %v484 = vld [vmem:[%s253 + $0x608] sm:$0xff]
        %v485 = vld [vmem:[%s253 + $0x610] sm:$0xff]
        %v486 = vld [vmem:[%s253 + $0x618] sm:$0xff]
        %v487 = vld [vmem:[%s253 + $0x620] sm:$0xff]
        %v488 = vld [vmem:[%s253 + $0x628] sm:$0xff]
        %v489 = vld [vmem:[%s253 + $0x630] sm:$0xff]
        %v490 = vld [vmem:[%s253 + $0x638] sm:$0xff]
        %v491 = vld [vmem:[%s253 + $0x640] sm:$0xff]
        %v492 = vld [vmem:[%s253 + $0x648] sm:$0xff]
        %v493 = vld [vmem:[%s253 + $0x650] sm:$0xff]
        %v494 = vld [vmem:[%s253 + $0x658] sm:$0xff]
        %v495 = vld [vmem:[%s253 + $0x660] sm:$0xff]
        %v496 = vld [vmem:[%s253 + $0x668] sm:$0xff]
        %v497 = vld [vmem:[%s253 + $0x670] sm:$0xff]
        %v498 = vld [vmem:[%s253 + $0x678] sm:$0xff]
        %v499 = vld [vmem:[%s253 + $0x680] sm:$0xff]
        %v500 = vld [vmem:[%s253 + $0x688] sm:$0xff]
        %v501 = vld [vmem:[%s253 + $0x690] sm:$0xff]
        %v502 = vld [vmem:[%s253 + $0x698] sm:$0xff]
        %v503 = vld [vmem:[%s253 + $0x6a0] sm:$0xff]
        %v504 = vld [vmem:[%s253 + $0x6a8] sm:$0xff]
        %v505 = vld [vmem:[%s253 + $0x6b0] sm:$0xff]
        %v506 = vld [vmem:[%s253 + $0x6b8] sm:$0xff]
        %v507 = vld [vmem:[%s253 + $0x6c0] sm:$0xff]
        %v508 = vld [vmem:[%s253 + $0x6c8] sm:$0xff]
        %v509 = vld [vmem:[%s253 + $0x6d0] sm:$0xff]
        %v510 = vld [vmem:[%s253 + $0x6d8] sm:$0xff]
        %v511 = vld [vmem:[%s253 + $0x6e0] sm:$0xff]
        %v512 = vld [vmem:[%s253 + $0x6e8] sm:$0xff]
        %v513 = vld [vmem:[%s253 + $0x6f0] sm:$0xff]
        %v514 = vld [vmem:[%s253 + $0x6f8] sm:$0xff]
        %v515 = vld [vmem:[%s253 + $0x700] sm:$0xff]
        %v516 = vld [vmem:[%s253 + $0x708] sm:$0xff]
        %v517 = vld [vmem:[%s253 + $0x710] sm:$0xff]
        %v518 = vld [vmem:[%s253 + $0x718] sm:$0xff]
        %v519 = vld [vmem:[%s253 + $0x720] sm:$0xff]
        %v520 = vld [vmem:[%s253 + $0x728] sm:$0xff]
        %v521 = vld [vmem:[%s253 + $0x730] sm:$0xff]
        %v522 = vld [vmem:[%s253 + $0x738] sm:$0xff]
        %v523 = vld [vmem:[%s253 + $0x740] sm:$0xff]
        %v524 = vld [vmem:[%s253 + $0x748] sm:$0xff]
        %v525 = vld [vmem:[%s253 + $0x750] sm:$0xff]
        %v526 = vld [vmem:[%s253 + $0x758] sm:$0xff]
        %v527 = vld [vmem:[%s253 + $0x760] sm:$0xff]
        %v528 = vld [vmem:[%s253 + $0x768] sm:$0xff]
        %v529 = vld [vmem:[%s253 + $0x770] sm:$0xff]
        %v530 = vld [vmem:[%s253 + $0x778] sm:$0xff]
        %v531 = vld [vmem:[%s253 + $0x780] sm:$0xff]
        %v532 = vld [vmem:[%s253 + $0x788] sm:$0xff]
        %v533 = vld [vmem:[%s253 + $0x790] sm:$0xff]
        %v534 = vld [vmem:[%s253 + $0x798] sm:$0xff]
        %v535 = vld [vmem:[%s253 + $0x7a0] sm:$0xff]
        %v536 = vld [vmem:[%s253 + $0x7a8] sm:$0xff]
        %v537 = vld [vmem:[%s253 + $0x7b0] sm:$0xff]
        %v538 = vld [vmem:[%s253 + $0x7b8] sm:$0xff]
        %v539 = vld [vmem:[%s253 + $0x7c0] sm:$0xff]
        %v540 = vld [vmem:[%s253 + $0x7c8] sm:$0xff]
        %v541 = vld [vmem:[%s253 + $0x7d0] sm:$0xff]
        %v542 = vld [vmem:[%s253 + $0x7d8] sm:$0xff]
        %v543 = vld [vmem:[%s253 + $0x7e0] sm:$0xff]
        %v544 = vld [vmem:[%s253 + $0x7e8] sm:$0xff]
        %v545 = vld [vmem:[%s253 + $0x7f0] sm:$0xff]
        %v546 = vld [vmem:[%s253 + $0x7f8] sm:$0xff]
        %v547 = vld [vmem:[%s253 + $0x800] sm:$0xff]
        %v548 = vld [vmem:[%s253 + $0x808] sm:$0xff]
        %v549 = vld [vmem:[%s253 + $0x810] sm:$0xff]
        %v550 = vld [vmem:[%s253 + $0x818] sm:$0xff]
        %v551 = vld [vmem:[%s253 + $0x820] sm:$0xff]
        %v552 = vld [vmem:[%s253 + $0x828] sm:$0xff]
        %v553 = vld [vmem:[%s253 + $0x830] sm:$0xff]
        %v554 = vld [vmem:[%s253 + $0x838] sm:$0xff]
        %v555 = vld [vmem:[%s253 + $0x840] sm:$0xff]
        %v556 = vld [vmem:[%s253 + $0x848] sm:$0xff]
        %v557 = vld [vmem:[%s253 + $0x850] sm:$0xff]
        %v558 = vld [vmem:[%s253 + $0x858] sm:$0xff]
        %v559 = vld [vmem:[%s253 + $0x860] sm:$0xff]
        %v560 = vld [vmem:[%s253 + $0x868] sm:$0xff]
        %v561 = vld [vmem:[%s253 + $0x870] sm:$0xff]
        %v562 = vld [vmem:[%s253 + $0x878] sm:$0xff]
        %v563 = vld [vmem:[%s253 + $0x880] sm:$0xff]
        %v564 = vld [vmem:[%s253 + $0x888] sm:$0xff]
        %v565 = vld [vmem:[%s253 + $0x890] sm:$0xff]
        %v566 = vld [vmem:[%s253 + $0x898] sm:$0xff]
        %v567 = vld [vmem:[%s253 + $0x8a0] sm:$0xff]
        %v568 = vld [vmem:[%s253 + $0x8a8] sm:$0xff]
        %v569 = vld [vmem:[%s253 + $0x8b0] sm:$0xff]
        %v570 = vld [vmem:[%s253 + $0x8b8] sm:$0xff]
        %v571 = vld [vmem:[%s253 + $0x8c0] sm:$0xff]
        %v572 = vld [vmem:[%s253 + $0x8c8] sm:$0xff]
        %v573 = vld [vmem:[%s253 + $0x8d0] sm:$0xff]
        %v574 = vld [vmem:[%s253 + $0x8d8] sm:$0xff]
        %v575 = vld [vmem:[%s253 + $0x8e0] sm:$0xff]
        %v576 = vld [vmem:[%s253 + $0x8e8] sm:$0xff]
        %v577 = vld [vmem:[%s253 + $0x8f0] sm:$0xff]
        %v578 = vld [vmem:[%s253 + $0x8f8] sm:$0xff]
        %v579 = vld [vmem:[%s253 + $0x900] sm:$0xff]
        %v580 = vld [vmem:[%s253 + $0x908] sm:$0xff]
        %v581 = vld [vmem:[%s253 + $0x910] sm:$0xff]
        %v582 = vld [vmem:[%s253 + $0x918] sm:$0xff]
        %v583 = vld [vmem:[%s253 + $0x920] sm:$0xff]
        %v584 = vld [vmem:[%s253 + $0x928] sm:$0xff]
        %v585 = vld [vmem:[%s253 + $0x930] sm:$0xff]
        %v586 = vld [vmem:[%s253 + $0x938] sm:$0xff]
        %v587 = vld [vmem:[%s253 + $0x940] sm:$0xff]
        %v588 = vld [vmem:[%s253 + $0x948] sm:$0xff]
        %v589 = vld [vmem:[%s253 + $0x950] sm:$0xff]
        %v590 = vld [vmem:[%s253 + $0x958] sm:$0xff]
        %v591 = vld [vmem:[%s253 + $0x960] sm:$0xff]
        %v592 = vld [vmem:[%s253 + $0x968] sm:$0xff]
        %v593 = vld [vmem:[%s253 + $0x970] sm:$0xff]
        %v594 = vld [vmem:[%s253 + $0x978] sm:$0xff]
        %v595 = vld [vmem:[%s253 + $0x980] sm:$0xff]
        %v596 = vld [vmem:[%s253 + $0x988] sm:$0xff]
        %v597 = vld [vmem:[%s253 + $0x990] sm:$0xff]
        %v598 = vld [vmem:[%s253 + $0x998] sm:$0xff]
        %v599 = vld [vmem:[%s253 + $0x9a0] sm:$0xff]
        %v600 = vld [vmem:[%s253 + $0x9a8] sm:$0xff]
        %v601 = vld [vmem:[%s253 + $0x9b0] sm:$0xff]
        %v602 = vld [vmem:[%s253 + $0x9b8] sm:$0xff]
        %v603 = vld [vmem:[%s253 + $0x9c0] sm:$0xff]
        %v604 = vld [vmem:[%s253 + $0x9c8] sm:$0xff]
        %v605 = vld [vmem:[%s253 + $0x9d0] sm:$0xff]
        %v606 = vld [vmem:[%s253 + $0x9d8] sm:$0xff]
        %v607 = vld [vmem:[%s253 + $0x9e0] sm:$0xff]
        %v608 = vld [vmem:[%s253 + $0x9e8] sm:$0xff]
        %v609 = vld [vmem:[%s253 + $0x9f0] sm:$0xff]
        %v610 = vld [vmem:[%s253 + $0x9f8] sm:$0xff]
        %v611 = vld [vmem:[%s253 + $0xa00] sm:$0xff]
        %v612 = vld [vmem:[%s253 + $0xa08] sm:$0xff]
        %v613 = vld [vmem:[%s253 + $0xa10] sm:$0xff]
        %v614 = vld [vmem:[%s253 + $0xa18] sm:$0xff]
        %v615 = vld [vmem:[%s253 + $0xa20] sm:$0xff]
        %v616 = vld [vmem:[%s253 + $0xa28] sm:$0xff]
        %v617 = vld [vmem:[%s253 + $0xa30] sm:$0xff]
        %v618 = vld [vmem:[%s253 + $0xa38] sm:$0xff]
        %v619 = vld [vmem:[%s253 + $0xa40] sm:$0xff]
        %v620 = vld [vmem:[%s253 + $0xa48] sm:$0xff]
        %v621 = vld [vmem:[%s253 + $0xa50] sm:$0xff]
        %v622 = vld [vmem:[%s253 + $0xa58] sm:$0xff]
        %v623 = vld [vmem:[%s253 + $0xa60] sm:$0xff]
        %v624 = vld [vmem:[%s253 + $0xa68] sm:$0xff]
        %v625 = vld [vmem:[%s253 + $0xa70] sm:$0xff]
        %v626 = vld [vmem:[%s253 + $0xa78] sm:$0xff]
        %v627 = vld [vmem:[%s253 + $0xa80] sm:$0xff]
        %v628 = vld [vmem:[%s253 + $0xa88] sm:$0xff]
        %v629 = vld [vmem:[%s253 + $0xa90] sm:$0xff]
        %v630 = vld [vmem:[%s253 + $0xa98] sm:$0xff]
        %v631 = vld [vmem:[%s253 + $0xaa0] sm:$0xff]
        %v632 = vld [vmem:[%s253 + $0xaa8] sm:$0xff]
        %v633 = vld [vmem:[%s253 + $0xab0] sm:$0xff]
        %v634 = vld [vmem:[%s253 + $0xab8] sm:$0xff]
        %v635 = vld [vmem:[%s253 + $0xac0] sm:$0xff]
        %v636 = vld [vmem:[%s253 + $0xac8] sm:$0xff]
        %v637 = vld [vmem:[%s253 + $0xad0] sm:$0xff]
        %v638 = vld [vmem:[%s253 + $0xad8] sm:$0xff]
        %v639 = vld [vmem:[%s253 + $0xae0] sm:$0xff]
        %v640 = vld [vmem:[%s253 + $0xae8] sm:$0xff]
        %v641 = vld [vmem:[%s253 + $0xaf0] sm:$0xff]
        %v642 = vld [vmem:[%s253 + $0xaf8] sm:$0xff]
        %v643 = vld [vmem:[%s253 + $0xb00] sm:$0xff]
        %v644 = vld [vmem:[%s253 + $0xb08] sm:$0xff]
        %v645 = vld [vmem:[%s253 + $0xb10] sm:$0xff]
        %v646 = vld [vmem:[%s253 + $0xb18] sm:$0xff]
        %v647 = vld [vmem:[%s253 + $0xb20] sm:$0xff]
        %v648 = vld [vmem:[%s253 + $0xb28] sm:$0xff]
        %v649 = vld [vmem:[%s253 + $0xb30] sm:$0xff]
        %v650 = vld [vmem:[%s253 + $0xb38] sm:$0xff]
        %v651 = vld [vmem:[%s253 + $0xb40] sm:$0xff]
        %v652 = vld [vmem:[%s253 + $0xb48] sm:$0xff]
        %v653 = vld [vmem:[%s253 + $0xb50] sm:$0xff]
        %v654 = vld [vmem:[%s253 + $0xb58] sm:$0xff]
        %v655 = vld [vmem:[%s253 + $0xb60] sm:$0xff]
        %v656 = vld [vmem:[%s253 + $0xb68] sm:$0xff]
        %v657 = vld [vmem:[%s253 + $0xb70] sm:$0xff]
        %v658 = vld [vmem:[%s253 + $0xb78] sm:$0xff]
        %v659 = vld [vmem:[%s253 + $0xb80] sm:$0xff]
        %v660 = vld [vmem:[%s253 + $0xb88] sm:$0xff]
        %v661 = vld [vmem:[%s253 + $0xb90] sm:$0xff]
        %v662 = vld [vmem:[%s253 + $0xb98] sm:$0xff]
        %v663 = vld [vmem:[%s253 + $0xba0] sm:$0xff]
        %v664 = vld [vmem:[%s253 + $0xba8] sm:$0xff]
        %v665 = vld [vmem:[%s253 + $0xbb0] sm:$0xff]
        %v666 = vld [vmem:[%s253 + $0xbb8] sm:$0xff]
        %v667 = vld [vmem:[%s270] sm:$0xff]
        %v668 = vld [vmem:[%s270 + $0x8] sm:$0xff]
        %v669 = vld [vmem:[%s270 + $0x10] sm:$0xff]
        %v670 = vld [vmem:[%s270 + $0x18] sm:$0xff]
        %v671 = vld [vmem:[%s270 + $0x20] sm:$0xff]
        %v672 = vld [vmem:[%s270 + $0x28] sm:$0xff]
        %v673 = vld [vmem:[%s270 + $0x30] sm:$0xff]
        %v674 = vld [vmem:[%s270 + $0x38] sm:$0xff]
        %v675 = vld [vmem:[%s270 + $0x40] sm:$0xff]
        %v676 = vld [vmem:[%s270 + $0x48] sm:$0xff]
        %v677 = vld [vmem:[%s270 + $0x50] sm:$0xff]
        %v678 = vld [vmem:[%s270 + $0x58] sm:$0xff]
        %v679 = vld [vmem:[%s270 + $0x60] sm:$0xff]
        %v680 = vld [vmem:[%s270 + $0x68] sm:$0xff]
        %v681 = vld [vmem:[%s270 + $0x70] sm:$0xff]
        %v682 = vld [vmem:[%s270 + $0x78] sm:$0xff]
        %v683 = vld [vmem:[%s270 + $0x80] sm:$0xff]
        %v684 = vld [vmem:[%s270 + $0x88] sm:$0xff]
        %v685 = vld [vmem:[%s270 + $0x90] sm:$0xff]
        %v686 = vld [vmem:[%s270 + $0x98] sm:$0xff]
        %v687 = vld [vmem:[%s270 + $0xa0] sm:$0xff]
        %v688 = vld [vmem:[%s270 + $0xa8] sm:$0xff]
        %v689 = vld [vmem:[%s270 + $0xb0] sm:$0xff]
        %v690 = vld [vmem:[%s270 + $0xb8] sm:$0xff]
        %v691 = vld [vmem:[%s270 + $0xc0] sm:$0xff]
        %v692 = vld [vmem:[%s270 + $0xc8] sm:$0xff]
        %v693 = vld [vmem:[%s270 + $0xd0] sm:$0xff]
        %v694 = vld [vmem:[%s270 + $0xd8] sm:$0xff]
        %v695 = vld [vmem:[%s270 + $0xe0] sm:$0xff]
        %v696 = vld [vmem:[%s270 + $0xe8] sm:$0xff]
        %v697 = vld [vmem:[%s270 + $0xf0] sm:$0xff]
        %v698 = vld [vmem:[%s270 + $0xf8] sm:$0xff]
        %v699 = vld [vmem:[%s270 + $0x100] sm:$0xff]
        %v700 = vld [vmem:[%s270 + $0x108] sm:$0xff]
        %v701 = vld [vmem:[%s270 + $0x110] sm:$0xff]
        %v702 = vld [vmem:[%s270 + $0x118] sm:$0xff]
        %v703 = vld [vmem:[%s270 + $0x120] sm:$0xff]
        %v704 = vld [vmem:[%s270 + $0x128] sm:$0xff]
        %v705 = vld [vmem:[%s270 + $0x130] sm:$0xff]
        %v706 = vld [vmem:[%s270 + $0x138] sm:$0xff]
        %v707 = vld [vmem:[%s270 + $0x140] sm:$0xff]
        %v708 = vld [vmem:[%s270 + $0x148] sm:$0xff]
        %v709 = vld [vmem:[%s270 + $0x150] sm:$0xff]
        %v710 = vld [vmem:[%s270 + $0x158] sm:$0xff]
        %v711 = vld [vmem:[%s270 + $0x160] sm:$0xff]
        %v712 = vld [vmem:[%s270 + $0x168] sm:$0xff]
        %v713 = vld [vmem:[%s270 + $0x170] sm:$0xff]
        %v714 = vld [vmem:[%s270 + $0x178] sm:$0xff]
        %v715 = vld [vmem:[%s270 + $0x180] sm:$0xff]
        %v716 = vld [vmem:[%s270 + $0x188] sm:$0xff]
        %v717 = vld [vmem:[%s270 + $0x190] sm:$0xff]
        %v718 = vld [vmem:[%s270 + $0x198] sm:$0xff]
        %v719 = vld [vmem:[%s270 + $0x1a0] sm:$0xff]
        %v720 = vld [vmem:[%s270 + $0x1a8] sm:$0xff]
        %v721 = vld [vmem:[%s270 + $0x1b0] sm:$0xff]
        %v722 = vld [vmem:[%s270 + $0x1b8] sm:$0xff]
        %v723 = vld [vmem:[%s270 + $0x1c0] sm:$0xff]
        %v724 = vld [vmem:[%s270 + $0x1c8] sm:$0xff]
        %v725 = vld [vmem:[%s270 + $0x1d0] sm:$0xff]
        %v726 = vld [vmem:[%s270 + $0x1d8] sm:$0xff]
        %v727 = vld [vmem:[%s270 + $0x1e0] sm:$0xff]
        %v728 = vld [vmem:[%s270 + $0x1e8] sm:$0xff]
        %v729 = vld [vmem:[%s270 + $0x1f0] sm:$0xff]
        %v730 = vld [vmem:[%s270 + $0x1f8] sm:$0xff]
        %v731 = vld [vmem:[%s270 + $0x200] sm:$0xff]
        %v732 = vld [vmem:[%s270 + $0x208] sm:$0xff]
        %v733 = vld [vmem:[%s270 + $0x210] sm:$0xff]
        %v734 = vld [vmem:[%s270 + $0x218] sm:$0xff]
        %v735 = vld [vmem:[%s270 + $0x220] sm:$0xff]
        %v736 = vld [vmem:[%s270 + $0x228] sm:$0xff]
        %v737 = vld [vmem:[%s270 + $0x230] sm:$0xff]
        %v738 = vld [vmem:[%s270 + $0x238] sm:$0xff]
        %v739 = vld [vmem:[%s270 + $0x240] sm:$0xff]
        %v740 = vld [vmem:[%s270 + $0x248] sm:$0xff]
        %v741 = vld [vmem:[%s270 + $0x250] sm:$0xff]
        %v742 = vld [vmem:[%s270 + $0x258] sm:$0xff]
        %v743 = vld [vmem:[%s270 + $0x260] sm:$0xff]
        %v744 = vld [vmem:[%s270 + $0x268] sm:$0xff]
        %v745 = vld [vmem:[%s270 + $0x270] sm:$0xff]
        %v746 = vld [vmem:[%s270 + $0x278] sm:$0xff]
        %v747 = vld [vmem:[%s270 + $0x280] sm:$0xff]
        %v748 = vld [vmem:[%s270 + $0x288] sm:$0xff]
        %v749 = vld [vmem:[%s270 + $0x290] sm:$0xff]
        %v750 = vld [vmem:[%s270 + $0x298] sm:$0xff]
        %v751 = vld [vmem:[%s270 + $0x2a0] sm:$0xff]
        %v752 = vld [vmem:[%s270 + $0x2a8] sm:$0xff]
        %v753 = vld [vmem:[%s270 + $0x2b0] sm:$0xff]
        %v754 = vld [vmem:[%s270 + $0x2b8] sm:$0xff]
        %v755 = vld [vmem:[%s270 + $0x2c0] sm:$0xff]
        %v756 = vld [vmem:[%s270 + $0x2c8] sm:$0xff]
        %v757 = vld [vmem:[%s270 + $0x2d0] sm:$0xff]
        %v758 = vld [vmem:[%s270 + $0x2d8] sm:$0xff]
        %v759 = vld [vmem:[%s270 + $0x2e0] sm:$0xff]
        %v760 = vld [vmem:[%s270 + $0x2e8] sm:$0xff]
        %v761 = vld [vmem:[%s270 + $0x2f0] sm:$0xff]
        %v762 = vld [vmem:[%s270 + $0x2f8] sm:$0xff]
        %v763 = vld [vmem:[%s270 + $0x300] sm:$0xff]
        %v764 = vld [vmem:[%s270 + $0x308] sm:$0xff]
        %v765 = vld [vmem:[%s270 + $0x310] sm:$0xff]
        %v766 = vld [vmem:[%s270 + $0x318] sm:$0xff]
        %v767 = vld [vmem:[%s270 + $0x320] sm:$0xff]
        %v768 = vld [vmem:[%s270 + $0x328] sm:$0xff]
        %v769 = vld [vmem:[%s270 + $0x330] sm:$0xff]
        %v770 = vld [vmem:[%s270 + $0x338] sm:$0xff]
        %v771 = vld [vmem:[%s270 + $0x340] sm:$0xff]
        %v772 = vld [vmem:[%s270 + $0x348] sm:$0xff]
        %v773 = vld [vmem:[%s270 + $0x350] sm:$0xff]
        %v774 = vld [vmem:[%s270 + $0x358] sm:$0xff]
        %v775 = vld [vmem:[%s270 + $0x360] sm:$0xff]
        %v776 = vld [vmem:[%s270 + $0x368] sm:$0xff]
        %v777 = vld [vmem:[%s270 + $0x370] sm:$0xff]
        %v778 = vld [vmem:[%s270 + $0x378] sm:$0xff]
        %v779 = vld [vmem:[%s270 + $0x380] sm:$0xff]
        %v780 = vld [vmem:[%s270 + $0x388] sm:$0xff]
        %v781 = vld [vmem:[%s270 + $0x390] sm:$0xff]
        %v782 = vld [vmem:[%s270 + $0x398] sm:$0xff]
        %v783 = vld [vmem:[%s270 + $0x3a0] sm:$0xff]
        %v784 = vld [vmem:[%s270 + $0x3a8] sm:$0xff]
        %v785 = vld [vmem:[%s270 + $0x3b0] sm:$0xff]
        %v786 = vld [vmem:[%s270 + $0x3b8] sm:$0xff]
        %v787 = vld [vmem:[%s270 + $0x3c0] sm:$0xff]
        %v788 = vld [vmem:[%s270 + $0x3c8] sm:$0xff]
        %v789 = vld [vmem:[%s270 + $0x3d0] sm:$0xff]
        %v790 = vld [vmem:[%s270 + $0x3d8] sm:$0xff]
        %v791 = vld [vmem:[%s270 + $0x3e0] sm:$0xff]
        %v792 = vld [vmem:[%s270 + $0x3e8] sm:$0xff]
        %v793 = vld [vmem:[%s270 + $0x3f0] sm:$0xff]
        %v794 = vld [vmem:[%s270 + $0x3f8] sm:$0xff]
        %v795 = vld [vmem:[%s270 + $0x400] sm:$0xff]
        %v796 = vld [vmem:[%s270 + $0x408] sm:$0xff]
        %v797 = vld [vmem:[%s270 + $0x410] sm:$0xff]
        %v798 = vld [vmem:[%s270 + $0x418] sm:$0xff]
        %v799 = vld [vmem:[%s270 + $0x420] sm:$0xff]
        %v800 = vld [vmem:[%s270 + $0x428] sm:$0xff]
        %v801 = vld [vmem:[%s270 + $0x430] sm:$0xff]
        %v802 = vld [vmem:[%s270 + $0x438] sm:$0xff]
        %v803 = vld [vmem:[%s270 + $0x440] sm:$0xff]
        %v804 = vld [vmem:[%s270 + $0x448] sm:$0xff]
        %v805 = vld [vmem:[%s270 + $0x450] sm:$0xff]
        %v806 = vld [vmem:[%s270 + $0x458] sm:$0xff]
        %v807 = vld [vmem:[%s270 + $0x460] sm:$0xff]
        %v808 = vld [vmem:[%s270 + $0x468] sm:$0xff]
        %v809 = vld [vmem:[%s270 + $0x470] sm:$0xff]
        %v810 = vld [vmem:[%s270 + $0x478] sm:$0xff]
        %v811 = vld [vmem:[%s270 + $0x480] sm:$0xff]
        %v812 = vld [vmem:[%s270 + $0x488] sm:$0xff]
        %v813 = vld [vmem:[%s270 + $0x490] sm:$0xff]
        %v814 = vld [vmem:[%s270 + $0x498] sm:$0xff]
        %v815 = vld [vmem:[%s270 + $0x4a0] sm:$0xff]
        %v816 = vld [vmem:[%s270 + $0x4a8] sm:$0xff]
        %v817 = vld [vmem:[%s270 + $0x4b0] sm:$0xff]
        %v818 = vld [vmem:[%s270 + $0x4b8] sm:$0xff]
        %v819 = vld [vmem:[%s270 + $0x4c0] sm:$0xff]
        %v820 = vld [vmem:[%s270 + $0x4c8] sm:$0xff]
        %v821 = vld [vmem:[%s270 + $0x4d0] sm:$0xff]
        %v822 = vld [vmem:[%s270 + $0x4d8] sm:$0xff]
        %v823 = vld [vmem:[%s270 + $0x4e0] sm:$0xff]
        %v824 = vld [vmem:[%s270 + $0x4e8] sm:$0xff]
        %v825 = vld [vmem:[%s270 + $0x4f0] sm:$0xff]
        %v826 = vld [vmem:[%s270 + $0x4f8] sm:$0xff]
        %v827 = vld [vmem:[%s270 + $0x500] sm:$0xff]
        %v828 = vld [vmem:[%s270 + $0x508] sm:$0xff]
        %v829 = vld [vmem:[%s270 + $0x510] sm:$0xff]
        %v830 = vld [vmem:[%s270 + $0x518] sm:$0xff]
        %v831 = vld [vmem:[%s270 + $0x520] sm:$0xff]
        %v832 = vld [vmem:[%s270 + $0x528] sm:$0xff]
        %v833 = vld [vmem:[%s270 + $0x530] sm:$0xff]
        %v834 = vld [vmem:[%s270 + $0x538] sm:$0xff]
        %v835 = vld [vmem:[%s270 + $0x540] sm:$0xff]
        %v836 = vld [vmem:[%s270 + $0x548] sm:$0xff]
        %v837 = vld [vmem:[%s270 + $0x550] sm:$0xff]
        %v838 = vld [vmem:[%s270 + $0x558] sm:$0xff]
        %v839 = vld [vmem:[%s270 + $0x560] sm:$0xff]
        %v840 = vld [vmem:[%s270 + $0x568] sm:$0xff]
        %v841 = vld [vmem:[%s270 + $0x570] sm:$0xff]
        %v842 = vld [vmem:[%s270 + $0x578] sm:$0xff]
        %v843 = vld [vmem:[%s270 + $0x580] sm:$0xff]
        %v844 = vld [vmem:[%s270 + $0x588] sm:$0xff]
        %v845 = vld [vmem:[%s270 + $0x590] sm:$0xff]
        %v846 = vld [vmem:[%s270 + $0x598] sm:$0xff]
        %v847 = vld [vmem:[%s270 + $0x5a0] sm:$0xff]
        %v848 = vld [vmem:[%s270 + $0x5a8] sm:$0xff]
        %v849 = vld [vmem:[%s270 + $0x5b0] sm:$0xff]
        %v850 = vld [vmem:[%s270 + $0x5b8] sm:$0xff]
        %v851 = vld [vmem:[%s270 + $0x5c0] sm:$0xff]
        %v852 = vld [vmem:[%s270 + $0x5c8] sm:$0xff]
        %v853 = vld [vmem:[%s270 + $0x5d0] sm:$0xff]
        %v854 = vld [vmem:[%s270 + $0x5d8] sm:$0xff]
        %v855 = vld [vmem:[%s270 + $0x5e0] sm:$0xff]
        %v856 = vld [vmem:[%s270 + $0x5e8] sm:$0xff]
        %v857 = vld [vmem:[%s270 + $0x5f0] sm:$0xff]
        %v858 = vld [vmem:[%s270 + $0x5f8] sm:$0xff]
        %v859 = vld [vmem:[%s270 + $0x600] sm:$0xff]
        %v860 = vld [vmem:[%s270 + $0x608] sm:$0xff]
        %v861 = vld [vmem:[%s270 + $0x610] sm:$0xff]
        %v862 = vld [vmem:[%s270 + $0x618] sm:$0xff]
        %v863 = vld [vmem:[%s270 + $0x620] sm:$0xff]
        %v864 = vld [vmem:[%s270 + $0x628] sm:$0xff]
        %v865 = vld [vmem:[%s270 + $0x630] sm:$0xff]
        %v866 = vld [vmem:[%s270 + $0x638] sm:$0xff]
        %v867 = vld [vmem:[%s270 + $0x640] sm:$0xff]
        %v868 = vld [vmem:[%s270 + $0x648] sm:$0xff]
        %v869 = vld [vmem:[%s270 + $0x650] sm:$0xff]
        %v870 = vld [vmem:[%s270 + $0x658] sm:$0xff]
        %v871 = vld [vmem:[%s270 + $0x660] sm:$0xff]
        %v872 = vld [vmem:[%s270 + $0x668] sm:$0xff]
        %v873 = vld [vmem:[%s270 + $0x670] sm:$0xff]
        %v874 = vld [vmem:[%s270 + $0x678] sm:$0xff]
        %v875 = vld [vmem:[%s270 + $0x680] sm:$0xff]
        %v876 = vld [vmem:[%s270 + $0x688] sm:$0xff]
        %v877 = vld [vmem:[%s270 + $0x690] sm:$0xff]
        %v878 = vld [vmem:[%s270 + $0x698] sm:$0xff]
        %v879 = vld [vmem:[%s270 + $0x6a0] sm:$0xff]
        %v880 = vld [vmem:[%s270 + $0x6a8] sm:$0xff]
        %v881 = vld [vmem:[%s270 + $0x6b0] sm:$0xff]
        %v882 = vld [vmem:[%s270 + $0x6b8] sm:$0xff]
        %v883 = vld [vmem:[%s270 + $0x6c0] sm:$0xff]
        %v884 = vld [vmem:[%s270 + $0x6c8] sm:$0xff]
        %v885 = vld [vmem:[%s270 + $0x6d0] sm:$0xff]
        %v886 = vld [vmem:[%s270 + $0x6d8] sm:$0xff]
        %v887 = vld [vmem:[%s270 + $0x6e0] sm:$0xff]
        %v888 = vld [vmem:[%s270 + $0x6e8] sm:$0xff]
        %v889 = vld [vmem:[%s270 + $0x6f0] sm:$0xff]
        %v890 = vld [vmem:[%s270 + $0x6f8] sm:$0xff]
        %v891 = vld [vmem:[%s270 + $0x700] sm:$0xff]
        %v892 = vld [vmem:[%s270 + $0x708] sm:$0xff]
        %v893 = vld [vmem:[%s270 + $0x710] sm:$0xff]
        %v894 = vld [vmem:[%s270 + $0x718] sm:$0xff]
        %v895 = vld [vmem:[%s270 + $0x720] sm:$0xff]
        %v896 = vld [vmem:[%s270 + $0x728] sm:$0xff]
        %v897 = vld [vmem:[%s270 + $0x730] sm:$0xff]
        %v898 = vld [vmem:[%s270 + $0x738] sm:$0xff]
        %v899 = vld [vmem:[%s270 + $0x740] sm:$0xff]
        %v900 = vld [vmem:[%s270 + $0x748] sm:$0xff]
        %v901 = vld [vmem:[%s270 + $0x750] sm:$0xff]
        %v902 = vld [vmem:[%s270 + $0x758] sm:$0xff]
        %v903 = vld [vmem:[%s270 + $0x760] sm:$0xff]
        %v904 = vld [vmem:[%s270 + $0x768] sm:$0xff]
        %v905 = vld [vmem:[%s270 + $0x770] sm:$0xff]
        %v906 = vld [vmem:[%s270 + $0x778] sm:$0xff]
        %v907 = vld [vmem:[%s270 + $0x780] sm:$0xff]
        %v908 = vld [vmem:[%s270 + $0x788] sm:$0xff]
        %v909 = vld [vmem:[%s270 + $0x790] sm:$0xff]
        %v910 = vld [vmem:[%s270 + $0x798] sm:$0xff]
        %v911 = vld [vmem:[%s270 + $0x7a0] sm:$0xff]
        %v912 = vld [vmem:[%s270 + $0x7a8] sm:$0xff]
        %v913 = vld [vmem:[%s270 + $0x7b0] sm:$0xff]
        %v914 = vld [vmem:[%s270 + $0x7b8] sm:$0xff]
        %v915 = vld [vmem:[%s270 + $0x7c0] sm:$0xff]
        %v916 = vld [vmem:[%s270 + $0x7c8] sm:$0xff]
        %v917 = vld [vmem:[%s270 + $0x7d0] sm:$0xff]
        %v918 = vld [vmem:[%s270 + $0x7d8] sm:$0xff]
        %v919 = vld [vmem:[%s270 + $0x7e0] sm:$0xff]
        %v920 = vld [vmem:[%s270 + $0x7e8] sm:$0xff]
        %v921 = vld [vmem:[%s270 + $0x7f0] sm:$0xff]
        %v922 = vld [vmem:[%s270 + $0x7f8] sm:$0xff]
        %v923 = vld [vmem:[%s270 + $0x800] sm:$0xff]
        %v924 = vld [vmem:[%s270 + $0x808] sm:$0xff]
        %v925 = vld [vmem:[%s270 + $0x810] sm:$0xff]
        %v926 = vld [vmem:[%s270 + $0x818] sm:$0xff]
        %v927 = vld [vmem:[%s270 + $0x820] sm:$0xff]
        %v928 = vld [vmem:[%s270 + $0x828] sm:$0xff]
        %v929 = vld [vmem:[%s270 + $0x830] sm:$0xff]
        %v930 = vld [vmem:[%s270 + $0x838] sm:$0xff]
        %v931 = vld [vmem:[%s270 + $0x840] sm:$0xff]
        %v932 = vld [vmem:[%s270 + $0x848] sm:$0xff]
        %v933 = vld [vmem:[%s270 + $0x850] sm:$0xff]
        %v934 = vld [vmem:[%s270 + $0x858] sm:$0xff]
        %v935 = vld [vmem:[%s270 + $0x860] sm:$0xff]
        %v936 = vld [vmem:[%s270 + $0x868] sm:$0xff]
        %v937 = vld [vmem:[%s270 + $0x870] sm:$0xff]
        %v938 = vld [vmem:[%s270 + $0x878] sm:$0xff]
        %v939 = vld [vmem:[%s270 + $0x880] sm:$0xff]
        %v940 = vld [vmem:[%s270 + $0x888] sm:$0xff]
        %v941 = vld [vmem:[%s270 + $0x890] sm:$0xff]
        %v942 = vld [vmem:[%s270 + $0x898] sm:$0xff]
        %v943 = vld [vmem:[%s270 + $0x8a0] sm:$0xff]
        %v944 = vld [vmem:[%s270 + $0x8a8] sm:$0xff]
        %v945 = vld [vmem:[%s270 + $0x8b0] sm:$0xff]
        %v946 = vld [vmem:[%s270 + $0x8b8] sm:$0xff]
        %v947 = vld [vmem:[%s270 + $0x8c0] sm:$0xff]
        %v948 = vld [vmem:[%s270 + $0x8c8] sm:$0xff]
        %v949 = vld [vmem:[%s270 + $0x8d0] sm:$0xff]
        %v950 = vld [vmem:[%s270 + $0x8d8] sm:$0xff]
        %v951 = vld [vmem:[%s270 + $0x8e0] sm:$0xff]
        %v952 = vld [vmem:[%s270 + $0x8e8] sm:$0xff]
        %v953 = vld [vmem:[%s270 + $0x8f0] sm:$0xff]
        %v954 = vld [vmem:[%s270 + $0x8f8] sm:$0xff]
        %v955 = vld [vmem:[%s270 + $0x900] sm:$0xff]
        %v956 = vld [vmem:[%s270 + $0x908] sm:$0xff]
        %v957 = vld [vmem:[%s270 + $0x910] sm:$0xff]
        %v958 = vld [vmem:[%s270 + $0x918] sm:$0xff]
        %v959 = vld [vmem:[%s270 + $0x920] sm:$0xff]
        %v960 = vld [vmem:[%s270 + $0x928] sm:$0xff]
        %v961 = vld [vmem:[%s270 + $0x930] sm:$0xff]
        %v962 = vld [vmem:[%s270 + $0x938] sm:$0xff]
        %v963 = vld [vmem:[%s270 + $0x940] sm:$0xff]
        %v964 = vld [vmem:[%s270 + $0x948] sm:$0xff]
        %v965 = vld [vmem:[%s270 + $0x950] sm:$0xff]
        %v966 = vld [vmem:[%s270 + $0x958] sm:$0xff]
        %v967 = vld [vmem:[%s270 + $0x960] sm:$0xff]
        %v968 = vld [vmem:[%s270 + $0x968] sm:$0xff]
        %v969 = vld [vmem:[%s270 + $0x970] sm:$0xff]
        %v970 = vld [vmem:[%s270 + $0x978] sm:$0xff]
        %v971 = vld [vmem:[%s270 + $0x980] sm:$0xff]
        %v972 = vld [vmem:[%s270 + $0x988] sm:$0xff]
        %v973 = vld [vmem:[%s270 + $0x990] sm:$0xff]
        %v974 = vld [vmem:[%s270 + $0x998] sm:$0xff]
        %v975 = vld [vmem:[%s270 + $0x9a0] sm:$0xff]
        %v976 = vld [vmem:[%s270 + $0x9a8] sm:$0xff]
        %v977 = vld [vmem:[%s270 + $0x9b0] sm:$0xff]
        %v978 = vld [vmem:[%s270 + $0x9b8] sm:$0xff]
        %v979 = vld [vmem:[%s270 + $0x9c0] sm:$0xff]
        %v980 = vld [vmem:[%s270 + $0x9c8] sm:$0xff]
        %v981 = vld [vmem:[%s270 + $0x9d0] sm:$0xff]
        %v982 = vld [vmem:[%s270 + $0x9d8] sm:$0xff]
        %v983 = vld [vmem:[%s270 + $0x9e0] sm:$0xff]
        %v984 = vld [vmem:[%s270 + $0x9e8] sm:$0xff]
        %v985 = vld [vmem:[%s270 + $0x9f0] sm:$0xff]
        %v986 = vld [vmem:[%s270 + $0x9f8] sm:$0xff]
        %v987 = vld [vmem:[%s270 + $0xa00] sm:$0xff]
        %v988 = vld [vmem:[%s270 + $0xa08] sm:$0xff]
        %v989 = vld [vmem:[%s270 + $0xa10] sm:$0xff]
        %v990 = vld [vmem:[%s270 + $0xa18] sm:$0xff]
        %v991 = vld [vmem:[%s270 + $0xa20] sm:$0xff]
        %v992 = vld [vmem:[%s270 + $0xa28] sm:$0xff]
        %v993 = vld [vmem:[%s270 + $0xa30] sm:$0xff]
        %v994 = vld [vmem:[%s270 + $0xa38] sm:$0xff]
        %v995 = vld [vmem:[%s270 + $0xa40] sm:$0xff]
        %v996 = vld [vmem:[%s270 + $0xa48] sm:$0xff]
        %v997 = vld [vmem:[%s270 + $0xa50] sm:$0xff]
        %v998 = vld [vmem:[%s270 + $0xa58] sm:$0xff]
        %v999 = vld [vmem:[%s270 + $0xa60] sm:$0xff]
        %v1000 = vld [vmem:[%s270 + $0xa68] sm:$0xff]
        %v1001 = vld [vmem:[%s270 + $0xa70] sm:$0xff]
        %v1002 = vld [vmem:[%s270 + $0xa78] sm:$0xff]
        %v1003 = vld [vmem:[%s270 + $0xa80] sm:$0xff]
        %v1004 = vld [vmem:[%s270 + $0xa88] sm:$0xff]
        %v1005 = vld [vmem:[%s270 + $0xa90] sm:$0xff]
        %v1006 = vld [vmem:[%s270 + $0xa98] sm:$0xff]
        %v1007 = vld [vmem:[%s270 + $0xaa0] sm:$0xff]
        %v1008 = vld [vmem:[%s270 + $0xaa8] sm:$0xff]
        %v1009 = vld [vmem:[%s270 + $0xab0] sm:$0xff]
        %v1010 = vld [vmem:[%s270 + $0xab8] sm:$0xff]
        %v1011 = vld [vmem:[%s270 + $0xac0] sm:$0xff]
        %v1012 = vld [vmem:[%s270 + $0xac8] sm:$0xff]
        %v1013 = vld [vmem:[%s270 + $0xad0] sm:$0xff]
        %v1014 = vld [vmem:[%s270 + $0xad8] sm:$0xff]
        %v1015 = vld [vmem:[%s270 + $0xae0] sm:$0xff]
        %v1016 = vld [vmem:[%s270 + $0xae8] sm:$0xff]
        %v1017 = vld [vmem:[%s270 + $0xaf0] sm:$0xff]
        %v1018 = vld [vmem:[%s270 + $0xaf8] sm:$0xff]
        %v1019 = vld [vmem:[%s270 + $0xb00] sm:$0xff]
        %v1020 = vld [vmem:[%s270 + $0xb08] sm:$0xff]
        %v1021 = vld [vmem:[%s270 + $0xb10] sm:$0xff]
        %v1022 = vld [vmem:[%s270 + $0xb18] sm:$0xff]
        %v1023 = vld [vmem:[%s270 + $0xb20] sm:$0xff]
        %v1024 = vld [vmem:[%s270 + $0xb28] sm:$0xff]
        %v1025 = vld [vmem:[%s270 + $0xb30] sm:$0xff]
        %v1026 = vld [vmem:[%s270 + $0xb38] sm:$0xff]
        %v1027 = vld [vmem:[%s270 + $0xb40] sm:$0xff]
        %v1028 = vld [vmem:[%s270 + $0xb48] sm:$0xff]
        %v1029 = vld [vmem:[%s270 + $0xb50] sm:$0xff]
        %v1030 = vld [vmem:[%s270 + $0xb58] sm:$0xff]
        %v1031 = vld [vmem:[%s270 + $0xb60] sm:$0xff]
        %v1032 = vld [vmem:[%s270 + $0xb68] sm:$0xff]
        %v1033 = vld [vmem:[%s270 + $0xb70] sm:$0xff]
        %v1034 = vld [vmem:[%s270 + $0xb78] sm:$0xff]
        %v1035 = vld [vmem:[%s270 + $0xb80] sm:$0xff]
        %v1036 = vld [vmem:[%s270 + $0xb88] sm:$0xff]
        %v1037 = vld [vmem:[%s270 + $0xb90] sm:$0xff]
        %v1038 = vld [vmem:[%s270 + $0xb98] sm:$0xff]
        %v1039 = vld [vmem:[%s270 + $0xba0] sm:$0xff]
        %v1040 = vld [vmem:[%s270 + $0xba8] sm:$0xff]
        %v1041 = vld [vmem:[%s270 + $0xbb0] sm:$0xff]
        %v1042 = vld [vmem:[%s270 + $0xbb8] sm:$0xff]
        %v1043 = vld [vmem:[%s285] sm:$0xff]
        %v1044 = vld [vmem:[%s285 + $0x8] sm:$0xff]
        %v1045 = vld [vmem:[%s285 + $0x10] sm:$0xff]
        %v1046 = vld [vmem:[%s285 + $0x18] sm:$0xff]
        %v1047 = vld [vmem:[%s285 + $0x20] sm:$0xff]
        %v1048 = vld [vmem:[%s285 + $0x28] sm:$0xff]
        %v1049 = vld [vmem:[%s285 + $0x30] sm:$0xff]
        %v1050 = vld [vmem:[%s285 + $0x38] sm:$0xff]
        %v1051 = vld [vmem:[%s285 + $0x40] sm:$0xff]
        %v1052 = vld [vmem:[%s285 + $0x48] sm:$0xff]
        %v1053 = vld [vmem:[%s285 + $0x50] sm:$0xff]
        %v1054 = vld [vmem:[%s285 + $0x58] sm:$0xff]
        %v1055 = vld [vmem:[%s285 + $0x60] sm:$0xff]
        %v1056 = vld [vmem:[%s285 + $0x68] sm:$0xff]
        %v1057 = vld [vmem:[%s285 + $0x70] sm:$0xff]
        %v1058 = vld [vmem:[%s285 + $0x78] sm:$0xff]
        %v1059 = vld [vmem:[%s285 + $0x80] sm:$0xff]
        %v1060 = vld [vmem:[%s285 + $0x88] sm:$0xff]
        %v1061 = vld [vmem:[%s285 + $0x90] sm:$0xff]
        %v1062 = vld [vmem:[%s285 + $0x98] sm:$0xff]
        %v1063 = vld [vmem:[%s285 + $0xa0] sm:$0xff]
        %v1064 = vld [vmem:[%s285 + $0xa8] sm:$0xff]
        %v1065 = vld [vmem:[%s285 + $0xb0] sm:$0xff]
        %v1066 = vld [vmem:[%s285 + $0xb8] sm:$0xff]
        %v1067 = vld [vmem:[%s285 + $0xc0] sm:$0xff]
        %v1068 = vld [vmem:[%s285 + $0xc8] sm:$0xff]
        %v1069 = vld [vmem:[%s285 + $0xd0] sm:$0xff]
        %v1070 = vld [vmem:[%s285 + $0xd8] sm:$0xff]
        %v1071 = vld [vmem:[%s285 + $0xe0] sm:$0xff]
        %v1072 = vld [vmem:[%s285 + $0xe8] sm:$0xff]
        %v1073 = vld [vmem:[%s285 + $0xf0] sm:$0xff]
        %v1074 = vld [vmem:[%s285 + $0xf8] sm:$0xff]
        %v1075 = vld [vmem:[%s285 + $0x100] sm:$0xff]
        %v1076 = vld [vmem:[%s285 + $0x108] sm:$0xff]
        %v1077 = vld [vmem:[%s285 + $0x110] sm:$0xff]
        %v1078 = vld [vmem:[%s285 + $0x118] sm:$0xff]
        %v1079 = vld [vmem:[%s285 + $0x120] sm:$0xff]
        %v1080 = vld [vmem:[%s285 + $0x128] sm:$0xff]
        %v1081 = vld [vmem:[%s285 + $0x130] sm:$0xff]
        %v1082 = vld [vmem:[%s285 + $0x138] sm:$0xff]
        %v1083 = vld [vmem:[%s285 + $0x140] sm:$0xff]
        %v1084 = vld [vmem:[%s285 + $0x148] sm:$0xff]
        %v1085 = vld [vmem:[%s285 + $0x150] sm:$0xff]
        %v1086 = vld [vmem:[%s285 + $0x158] sm:$0xff]
        %v1087 = vld [vmem:[%s285 + $0x160] sm:$0xff]
        %v1088 = vld [vmem:[%s285 + $0x168] sm:$0xff]
        %v1089 = vld [vmem:[%s285 + $0x170] sm:$0xff]
        %v1090 = vld [vmem:[%s285 + $0x178] sm:$0xff]
        %v1091 = vld [vmem:[%s285 + $0x180] sm:$0xff]
        %v1092 = vld [vmem:[%s285 + $0x188] sm:$0xff]
        %v1093 = vld [vmem:[%s285 + $0x190] sm:$0xff]
        %v1094 = vld [vmem:[%s285 + $0x198] sm:$0xff]
        %v1095 = vld [vmem:[%s285 + $0x1a0] sm:$0xff]
        %v1096 = vld [vmem:[%s285 + $0x1a8] sm:$0xff]
        %v1097 = vld [vmem:[%s285 + $0x1b0] sm:$0xff]
        %v1098 = vld [vmem:[%s285 + $0x1b8] sm:$0xff]
        %v1099 = vld [vmem:[%s285 + $0x1c0] sm:$0xff]
        %v1100 = vld [vmem:[%s285 + $0x1c8] sm:$0xff]
        %v1101 = vld [vmem:[%s285 + $0x1d0] sm:$0xff]
        %v1102 = vld [vmem:[%s285 + $0x1d8] sm:$0xff]
        %v1103 = vld [vmem:[%s285 + $0x1e0] sm:$0xff]
        %v1104 = vld [vmem:[%s285 + $0x1e8] sm:$0xff]
        %v1105 = vld [vmem:[%s285 + $0x1f0] sm:$0xff]
        %v1106 = vld [vmem:[%s285 + $0x1f8] sm:$0xff]
        %v1107 = vld [vmem:[%s285 + $0x200] sm:$0xff]
        %v1108 = vld [vmem:[%s285 + $0x208] sm:$0xff]
        %v1109 = vld [vmem:[%s285 + $0x210] sm:$0xff]
        %v1110 = vld [vmem:[%s285 + $0x218] sm:$0xff]
        %v1111 = vld [vmem:[%s285 + $0x220] sm:$0xff]
        %v1112 = vld [vmem:[%s285 + $0x228] sm:$0xff]
        %v1113 = vld [vmem:[%s285 + $0x230] sm:$0xff]
        %v1114 = vld [vmem:[%s285 + $0x238] sm:$0xff]
        %v1115 = vld [vmem:[%s285 + $0x240] sm:$0xff]
        %v1116 = vld [vmem:[%s285 + $0x248] sm:$0xff]
        %v1117 = vld [vmem:[%s285 + $0x250] sm:$0xff]
        %v1118 = vld [vmem:[%s285 + $0x258] sm:$0xff]
        %v1119 = vld [vmem:[%s285 + $0x260] sm:$0xff]
        %v1120 = vld [vmem:[%s285 + $0x268] sm:$0xff]
        %v1121 = vld [vmem:[%s285 + $0x270] sm:$0xff]
        %v1122 = vld [vmem:[%s285 + $0x278] sm:$0xff]
        %v1123 = vld [vmem:[%s285 + $0x280] sm:$0xff]
        %v1124 = vld [vmem:[%s285 + $0x288] sm:$0xff]
        %v1125 = vld [vmem:[%s285 + $0x290] sm:$0xff]
        %v1126 = vld [vmem:[%s285 + $0x298] sm:$0xff]
        %v1127 = vld [vmem:[%s285 + $0x2a0] sm:$0xff]
        %v1128 = vld [vmem:[%s285 + $0x2a8] sm:$0xff]
        %v1129 = vld [vmem:[%s285 + $0x2b0] sm:$0xff]
        %v1130 = vld [vmem:[%s285 + $0x2b8] sm:$0xff]
        %v1131 = vld [vmem:[%s285 + $0x2c0] sm:$0xff]
        %v1132 = vld [vmem:[%s285 + $0x2c8] sm:$0xff]
        %v1133 = vld [vmem:[%s285 + $0x2d0] sm:$0xff]
        %v1134 = vld [vmem:[%s285 + $0x2d8] sm:$0xff]
        %v1135 = vld [vmem:[%s285 + $0x2e0] sm:$0xff]
        %v1136 = vld [vmem:[%s285 + $0x2e8] sm:$0xff]
        %v1137 = vld [vmem:[%s285 + $0x2f0] sm:$0xff]
        %v1138 = vld [vmem:[%s285 + $0x2f8] sm:$0xff]
        %v1139 = vld [vmem:[%s285 + $0x300] sm:$0xff]
        %v1140 = vld [vmem:[%s285 + $0x308] sm:$0xff]
        %v1141 = vld [vmem:[%s285 + $0x310] sm:$0xff]
        %v1142 = vld [vmem:[%s285 + $0x318] sm:$0xff]
        %v1143 = vld [vmem:[%s285 + $0x320] sm:$0xff]
        %v1144 = vld [vmem:[%s285 + $0x328] sm:$0xff]
        %v1145 = vld [vmem:[%s285 + $0x330] sm:$0xff]
        %v1146 = vld [vmem:[%s285 + $0x338] sm:$0xff]
        %v1147 = vld [vmem:[%s285 + $0x340] sm:$0xff]
        %v1148 = vld [vmem:[%s285 + $0x348] sm:$0xff]
        %v1149 = vld [vmem:[%s285 + $0x350] sm:$0xff]
        %v1150 = vld [vmem:[%s285 + $0x358] sm:$0xff]
        %v1151 = vld [vmem:[%s285 + $0x360] sm:$0xff]
        %v1152 = vld [vmem:[%s285 + $0x368] sm:$0xff]
        %v1153 = vld [vmem:[%s285 + $0x370] sm:$0xff]
        %v1154 = vld [vmem:[%s285 + $0x378] sm:$0xff]
        %v1155 = vld [vmem:[%s285 + $0x380] sm:$0xff]
        %v1156 = vld [vmem:[%s285 + $0x388] sm:$0xff]
        %v1157 = vld [vmem:[%s285 + $0x390] sm:$0xff]
        %v1158 = vld [vmem:[%s285 + $0x398] sm:$0xff]
        %v1159 = vld [vmem:[%s285 + $0x3a0] sm:$0xff]
        %v1160 = vld [vmem:[%s285 + $0x3a8] sm:$0xff]
        %v1161 = vld [vmem:[%s285 + $0x3b0] sm:$0xff]
        %v1162 = vld [vmem:[%s285 + $0x3b8] sm:$0xff]
        %v1163 = vld [vmem:[%s285 + $0x3c0] sm:$0xff]
        %v1164 = vld [vmem:[%s285 + $0x3c8] sm:$0xff]
        %v1165 = vld [vmem:[%s285 + $0x3d0] sm:$0xff]
        %v1166 = vld [vmem:[%s285 + $0x3d8] sm:$0xff]
        %v1167 = vld [vmem:[%s285 + $0x3e0] sm:$0xff]
        %v1168 = vld [vmem:[%s285 + $0x3e8] sm:$0xff]
        %v1169 = vld [vmem:[%s285 + $0x3f0] sm:$0xff]
        %v1170 = vld [vmem:[%s285 + $0x3f8] sm:$0xff]
        %v1171 = vld [vmem:[%s285 + $0x400] sm:$0xff]
        %v1172 = vld [vmem:[%s285 + $0x408] sm:$0xff]
        %v1173 = vld [vmem:[%s285 + $0x410] sm:$0xff]
        %v1174 = vld [vmem:[%s285 + $0x418] sm:$0xff]
        %v1175 = vld [vmem:[%s285 + $0x420] sm:$0xff]
        %v1176 = vld [vmem:[%s285 + $0x428] sm:$0xff]
        %v1177 = vld [vmem:[%s285 + $0x430] sm:$0xff]
        %v1178 = vld [vmem:[%s285 + $0x438] sm:$0xff]
        %v1179 = vld [vmem:[%s285 + $0x440] sm:$0xff]
        %v1180 = vld [vmem:[%s285 + $0x448] sm:$0xff]
        %v1181 = vld [vmem:[%s285 + $0x450] sm:$0xff]
        %v1182 = vld [vmem:[%s285 + $0x458] sm:$0xff]
        %v1183 = vld [vmem:[%s285 + $0x460] sm:$0xff]
        %v1184 = vld [vmem:[%s285 + $0x468] sm:$0xff]
        %v1185 = vld [vmem:[%s285 + $0x470] sm:$0xff]
        %v1186 = vld [vmem:[%s285 + $0x478] sm:$0xff]
        %v1187 = vld [vmem:[%s285 + $0x480] sm:$0xff]
        %v1188 = vld [vmem:[%s285 + $0x488] sm:$0xff]
        %v1189 = vld [vmem:[%s285 + $0x490] sm:$0xff]
        %v1190 = vld [vmem:[%s285 + $0x498] sm:$0xff]
        %v1191 = vld [vmem:[%s285 + $0x4a0] sm:$0xff]
        %v1192 = vld [vmem:[%s285 + $0x4a8] sm:$0xff]
        %v1193 = vld [vmem:[%s285 + $0x4b0] sm:$0xff]
        %v1194 = vld [vmem:[%s285 + $0x4b8] sm:$0xff]
        %v1195 = vld [vmem:[%s285 + $0x4c0] sm:$0xff]
        %v1196 = vld [vmem:[%s285 + $0x4c8] sm:$0xff]
        %v1197 = vld [vmem:[%s285 + $0x4d0] sm:$0xff]
        %v1198 = vld [vmem:[%s285 + $0x4d8] sm:$0xff]
        %v1199 = vld [vmem:[%s285 + $0x4e0] sm:$0xff]
        %v1200 = vld [vmem:[%s285 + $0x4e8] sm:$0xff]
        %v1201 = vld [vmem:[%s285 + $0x4f0] sm:$0xff]
        %v1202 = vld [vmem:[%s285 + $0x4f8] sm:$0xff]
        %v1203 = vld [vmem:[%s285 + $0x500] sm:$0xff]
        %v1204 = vld [vmem:[%s285 + $0x508] sm:$0xff]
        %v1205 = vld [vmem:[%s285 + $0x510] sm:$0xff]
        %v1206 = vld [vmem:[%s285 + $0x518] sm:$0xff]
        %v1207 = vld [vmem:[%s285 + $0x520] sm:$0xff]
        %v1208 = vld [vmem:[%s285 + $0x528] sm:$0xff]
        %v1209 = vld [vmem:[%s285 + $0x530] sm:$0xff]
        %v1210 = vld [vmem:[%s285 + $0x538] sm:$0xff]
        %v1211 = vld [vmem:[%s285 + $0x540] sm:$0xff]
        %v1212 = vld [vmem:[%s285 + $0x548] sm:$0xff]
        %v1213 = vld [vmem:[%s285 + $0x550] sm:$0xff]
        %v1214 = vld [vmem:[%s285 + $0x558] sm:$0xff]
        %v1215 = vld [vmem:[%s285 + $0x560] sm:$0xff]
        %v1216 = vld [vmem:[%s285 + $0x568] sm:$0xff]
        %v1217 = vld [vmem:[%s285 + $0x570] sm:$0xff]
        %v1218 = vld [vmem:[%s285 + $0x578] sm:$0xff]
        %v1219 = vld [vmem:[%s285 + $0x580] sm:$0xff]
        %v1220 = vld [vmem:[%s285 + $0x588] sm:$0xff]
        %v1221 = vld [vmem:[%s285 + $0x590] sm:$0xff]
        %v1222 = vld [vmem:[%s285 + $0x598] sm:$0xff]
        %v1223 = vld [vmem:[%s285 + $0x5a0] sm:$0xff]
        %v1224 = vld [vmem:[%s285 + $0x5a8] sm:$0xff]
        %v1225 = vld [vmem:[%s285 + $0x5b0] sm:$0xff]
        %v1226 = vld [vmem:[%s285 + $0x5b8] sm:$0xff]
        %v1227 = vld [vmem:[%s285 + $0x5c0] sm:$0xff]
        %v1228 = vld [vmem:[%s285 + $0x5c8] sm:$0xff]
        %v1229 = vld [vmem:[%s285 + $0x5d0] sm:$0xff]
        %v1230 = vld [vmem:[%s285 + $0x5d8] sm:$0xff]
        %v1231 = vsub.f32 %v291, %v667
        %v1232 = vsub.f32 %v292, %v668
        %v1233 = vsub.f32 %v293, %v669
        %v1234 = vsub.f32 %v294, %v670
        %v1235 = vsub.f32 %v295, %v671
        %v1236 = vsub.f32 %v296, %v672
        %v1237 = vsub.f32 %v297, %v673
        %v1238 = vsub.f32 %v298, %v674
        %v1239 = vsub.f32 %v299, %v675
        %v1240 = vsub.f32 %v300, %v676
        %v1241 = vsub.f32 %v301, %v677
        %v1242 = vsub.f32 %v302, %v678
        %v1243 = vsub.f32 %v303, %v679
        %v1244 = vsub.f32 %v304, %v680
        %v1245 = vsub.f32 %v305, %v681
        %v1246 = vsub.f32 %v306, %v682
        %v1247 = vsub.f32 %v307, %v683
        %v1248 = vsub.f32 %v308, %v684
        %v1249 = vsub.f32 %v309, %v685
        %v1250 = vsub.f32 %v310, %v686
        %v1251 = vsub.f32 %v311, %v687
        %v1252 = vsub.f32 %v312, %v688
        %v1253 = vsub.f32 %v313, %v689
        %v1254 = vsub.f32 %v314, %v690
        %v1255 = vsub.f32 %v315, %v691
        %v1256 = vsub.f32 %v316, %v692
        %v1257 = vsub.f32 %v317, %v693
        %v1258 = vsub.f32 %v318, %v694
        %v1259 = vsub.f32 %v319, %v695
        %v1260 = vsub.f32 %v320, %v696
        %v1261 = vsub.f32 %v321, %v697
        %v1262 = vsub.f32 %v322, %v698
        %v1263 = vsub.f32 %v323, %v699
        %v1264 = vsub.f32 %v324, %v700
        %v1265 = vsub.f32 %v325, %v701
        %v1266 = vsub.f32 %v326, %v702
        %v1267 = vsub.f32 %v327, %v703
        %v1268 = vsub.f32 %v328, %v704
        %v1269 = vsub.f32 %v329, %v705
        %v1270 = vsub.f32 %v330, %v706
        %v1271 = vsub.f32 %v331, %v707
        %v1272 = vsub.f32 %v332, %v708
        %v1273 = vsub.f32 %v333, %v709
        %v1274 = vsub.f32 %v334, %v710
        %v1275 = vsub.f32 %v335, %v711
        %v1276 = vsub.f32 %v336, %v712
        %v1277 = vsub.f32 %v337, %v713
        %v1278 = vsub.f32 %v338, %v714
        %v1279 = vsub.f32 %v339, %v715
        %v1280 = vsub.f32 %v340, %v716
        %v1281 = vsub.f32 %v341, %v717
        %v1282 = vsub.f32 %v342, %v718
        %v1283 = vsub.f32 %v343, %v719
        %v1284 = vsub.f32 %v344, %v720
        %v1285 = vsub.f32 %v345, %v721
        %v1286 = vsub.f32 %v346, %v722
        %v1287 = vsub.f32 %v347, %v723
        %v1288 = vsub.f32 %v348, %v724
        %v1289 = vsub.f32 %v349, %v725
        %v1290 = vsub.f32 %v350, %v726
        %v1291 = vsub.f32 %v351, %v727
        %v1292 = vsub.f32 %v352, %v728
        %v1293 = vsub.f32 %v353, %v729
        %v1294 = vsub.f32 %v354, %v730
        %v1295 = vsub.f32 %v355, %v731
        %v1296 = vsub.f32 %v356, %v732
        %v1297 = vsub.f32 %v357, %v733
        %v1298 = vsub.f32 %v358, %v734
        %v1299 = vsub.f32 %v359, %v735
        %v1300 = vsub.f32 %v360, %v736
        %v1301 = vsub.f32 %v361, %v737
        %v1302 = vsub.f32 %v362, %v738
        %v1303 = vsub.f32 %v363, %v739
        %v1304 = vsub.f32 %v364, %v740
        %v1305 = vsub.f32 %v365, %v741
        %v1306 = vsub.f32 %v366, %v742
        %v1307 = vsub.f32 %v367, %v743
        %v1308 = vsub.f32 %v368, %v744
        %v1309 = vsub.f32 %v369, %v745
        %v1310 = vsub.f32 %v370, %v746
        %v1311 = vsub.f32 %v371, %v747
        %v1312 = vsub.f32 %v372, %v748
        %v1313 = vsub.f32 %v373, %v749
        %v1314 = vsub.f32 %v374, %v750
        %v1315 = vsub.f32 %v375, %v751
        %v1316 = vsub.f32 %v376, %v752
        %v1317 = vsub.f32 %v377, %v753
        %v1318 = vsub.f32 %v378, %v754
        %v1319 = vsub.f32 %v379, %v755
        %v1320 = vsub.f32 %v380, %v756
        %v1321 = vsub.f32 %v381, %v757
        %v1322 = vsub.f32 %v382, %v758
        %v1323 = vsub.f32 %v383, %v759
        %v1324 = vsub.f32 %v384, %v760
        %v1325 = vsub.f32 %v385, %v761
        %v1326 = vsub.f32 %v386, %v762
        %v1327 = vsub.f32 %v387, %v763
        %v1328 = vsub.f32 %v388, %v764
        %v1329 = vsub.f32 %v389, %v765
        %v1330 = vsub.f32 %v390, %v766
        %v1331 = vsub.f32 %v391, %v767
        %v1332 = vsub.f32 %v392, %v768
        %v1333 = vsub.f32 %v393, %v769
        %v1334 = vsub.f32 %v394, %v770
        %v1335 = vsub.f32 %v395, %v771
        %v1336 = vsub.f32 %v396, %v772
        %v1337 = vsub.f32 %v397, %v773
        %v1338 = vsub.f32 %v398, %v774
        %v1339 = vsub.f32 %v399, %v775
        %v1340 = vsub.f32 %v400, %v776
        %v1341 = vsub.f32 %v401, %v777
        %v1342 = vsub.f32 %v402, %v778
        %v1343 = vsub.f32 %v403, %v779
        %v1344 = vsub.f32 %v404, %v780
        %v1345 = vsub.f32 %v405, %v781
        %v1346 = vsub.f32 %v406, %v782
        %v1347 = vsub.f32 %v407, %v783
        %v1348 = vsub.f32 %v408, %v784
        %v1349 = vsub.f32 %v409, %v785
        %v1350 = vsub.f32 %v410, %v786
        %v1351 = vsub.f32 %v411, %v787
        %v1352 = vsub.f32 %v412, %v788
        %v1353 = vsub.f32 %v413, %v789
        %v1354 = vsub.f32 %v414, %v790
        %v1355 = vsub.f32 %v415, %v791
        %v1356 = vsub.f32 %v416, %v792
        %v1357 = vsub.f32 %v417, %v793
        %v1358 = vsub.f32 %v418, %v794
        %v1359 = vsub.f32 %v419, %v795
        %v1360 = vsub.f32 %v420, %v796
        %v1361 = vsub.f32 %v421, %v797
        %v1362 = vsub.f32 %v422, %v798
        %v1363 = vsub.f32 %v423, %v799
        %v1364 = vsub.f32 %v424, %v800
        %v1365 = vsub.f32 %v425, %v801
        %v1366 = vsub.f32 %v426, %v802
        %v1367 = vsub.f32 %v427, %v803
        %v1368 = vsub.f32 %v428, %v804
        %v1369 = vsub.f32 %v429, %v805
        %v1370 = vsub.f32 %v430, %v806
        %v1371 = vsub.f32 %v431, %v807
        %v1372 = vsub.f32 %v432, %v808
        %v1373 = vsub.f32 %v433, %v809
        %v1374 = vsub.f32 %v434, %v810
        %v1375 = vsub.f32 %v435, %v811
        %v1376 = vsub.f32 %v436, %v812
        %v1377 = vsub.f32 %v437, %v813
        %v1378 = vsub.f32 %v438, %v814
        %v1379 = vsub.f32 %v439, %v815
        %v1380 = vsub.f32 %v440, %v816
        %v1381 = vsub.f32 %v441, %v817
        %v1382 = vsub.f32 %v442, %v818
        %v1383 = vsub.f32 %v443, %v819
        %v1384 = vsub.f32 %v444, %v820
        %v1385 = vsub.f32 %v445, %v821
        %v1386 = vsub.f32 %v446, %v822
        %v1387 = vsub.f32 %v447, %v823
        %v1388 = vsub.f32 %v448, %v824
        %v1389 = vsub.f32 %v449, %v825
        %v1390 = vsub.f32 %v450, %v826
        %v1391 = vsub.f32 %v451, %v827
        %v1392 = vsub.f32 %v452, %v828
        %v1393 = vsub.f32 %v453, %v829
        %v1394 = vsub.f32 %v454, %v830
        %v1395 = vsub.f32 %v455, %v831
        %v1396 = vsub.f32 %v456, %v832
        %v1397 = vsub.f32 %v457, %v833
        %v1398 = vsub.f32 %v458, %v834
        %v1399 = vsub.f32 %v459, %v835
        %v1400 = vsub.f32 %v460, %v836
        %v1401 = vsub.f32 %v461, %v837
        %v1402 = vsub.f32 %v462, %v838
        %v1403 = vsub.f32 %v463, %v839
        %v1404 = vsub.f32 %v464, %v840
        %v1405 = vsub.f32 %v465, %v841
        %v1406 = vsub.f32 %v466, %v842
        %v1407 = vsub.f32 %v467, %v843
        %v1408 = vsub.f32 %v468, %v844
        %v1409 = vsub.f32 %v469, %v845
        %v1410 = vsub.f32 %v470, %v846
        %v1411 = vsub.f32 %v471, %v847
        %v1412 = vsub.f32 %v472, %v848
        %v1413 = vsub.f32 %v473, %v849
        %v1414 = vsub.f32 %v474, %v850
        %v1415 = vsub.f32 %v475, %v851
        %v1416 = vsub.f32 %v476, %v852
        %v1417 = vsub.f32 %v477, %v853
        %v1418 = vsub.f32 %v478, %v854
        %v1419 = vsub.f32 %v479, %v855
        %v1420 = vsub.f32 %v480, %v856
        %v1421 = vsub.f32 %v481, %v857
        %v1422 = vsub.f32 %v482, %v858
        %v1423 = vsub.f32 %v483, %v859
        %v1424 = vsub.f32 %v484, %v860
        %v1425 = vsub.f32 %v485, %v861
        %v1426 = vsub.f32 %v486, %v862
        %v1427 = vsub.f32 %v487, %v863
        %v1428 = vsub.f32 %v488, %v864
        %v1429 = vsub.f32 %v489, %v865
        %v1430 = vsub.f32 %v490, %v866
        %v1431 = vsub.f32 %v491, %v867
        %v1432 = vsub.f32 %v492, %v868
        %v1433 = vsub.f32 %v493, %v869
        %v1434 = vsub.f32 %v494, %v870
        %v1435 = vsub.f32 %v495, %v871
        %v1436 = vsub.f32 %v496, %v872
        %v1437 = vsub.f32 %v497, %v873
        %v1438 = vsub.f32 %v498, %v874
        %v1439 = vsub.f32 %v499, %v875
        %v1440 = vsub.f32 %v500, %v876
        %v1441 = vsub.f32 %v501, %v877
        %v1442 = vsub.f32 %v502, %v878
        %v1443 = vsub.f32 %v503, %v879
        %v1444 = vsub.f32 %v504, %v880
        %v1445 = vsub.f32 %v505, %v881
        %v1446 = vsub.f32 %v506, %v882
        %v1447 = vsub.f32 %v507, %v883
        %v1448 = vsub.f32 %v508, %v884
        %v1449 = vsub.f32 %v509, %v885
        %v1450 = vsub.f32 %v510, %v886
        %v1451 = vsub.f32 %v511, %v887
        %v1452 = vsub.f32 %v512, %v888
        %v1453 = vsub.f32 %v513, %v889
        %v1454 = vsub.f32 %v514, %v890
        %v1455 = vsub.f32 %v515, %v891
        %v1456 = vsub.f32 %v516, %v892
        %v1457 = vsub.f32 %v517, %v893
        %v1458 = vsub.f32 %v518, %v894
        %v1459 = vsub.f32 %v519, %v895
        %v1460 = vsub.f32 %v520, %v896
        %v1461 = vsub.f32 %v521, %v897
        %v1462 = vsub.f32 %v522, %v898
        %v1463 = vsub.f32 %v523, %v899
        %v1464 = vsub.f32 %v524, %v900
        %v1465 = vsub.f32 %v525, %v901
        %v1466 = vsub.f32 %v526, %v902
        %v1467 = vsub.f32 %v527, %v903
        %v1468 = vsub.f32 %v528, %v904
        %v1469 = vsub.f32 %v529, %v905
        %v1470 = vsub.f32 %v530, %v906
        %v1471 = vsub.f32 %v531, %v907
        %v1472 = vsub.f32 %v532, %v908
        %v1473 = vsub.f32 %v533, %v909
        %v1474 = vsub.f32 %v534, %v910
        %v1475 = vsub.f32 %v535, %v911
        %v1476 = vsub.f32 %v536, %v912
        %v1477 = vsub.f32 %v537, %v913
        %v1478 = vsub.f32 %v538, %v914
        %v1479 = vsub.f32 %v539, %v915
        %v1480 = vsub.f32 %v540, %v916
        %v1481 = vsub.f32 %v541, %v917
        %v1482 = vsub.f32 %v542, %v918
        %v1483 = vsub.f32 %v543, %v919
        %v1484 = vsub.f32 %v544, %v920
        %v1485 = vsub.f32 %v545, %v921
        %v1486 = vsub.f32 %v546, %v922
        %v1487 = vsub.f32 %v547, %v923
        %v1488 = vsub.f32 %v548, %v924
        %v1489 = vsub.f32 %v549, %v925
        %v1490 = vsub.f32 %v550, %v926
        %v1491 = vsub.f32 %v551, %v927
        %v1492 = vsub.f32 %v552, %v928
        %v1493 = vsub.f32 %v553, %v929
        %v1494 = vsub.f32 %v554, %v930
        %v1495 = vsub.f32 %v555, %v931
        %v1496 = vsub.f32 %v556, %v932
        %v1497 = vsub.f32 %v557, %v933
        %v1498 = vsub.f32 %v558, %v934
        %v1499 = vsub.f32 %v559, %v935
        %v1500 = vsub.f32 %v560, %v936
        %v1501 = vsub.f32 %v561, %v937
        %v1502 = vsub.f32 %v562, %v938
        %v1503 = vsub.f32 %v563, %v939
        %v1504 = vsub.f32 %v564, %v940
        %v1505 = vsub.f32 %v565, %v941
        %v1506 = vsub.f32 %v566, %v942
        %v1507 = vsub.f32 %v567, %v943
        %v1508 = vsub.f32 %v568, %v944
        %v1509 = vsub.f32 %v569, %v945
        %v1510 = vsub.f32 %v570, %v946
        %v1511 = vsub.f32 %v571, %v947
        %v1512 = vsub.f32 %v572, %v948
        %v1513 = vsub.f32 %v573, %v949
        %v1514 = vsub.f32 %v574, %v950
        %v1515 = vsub.f32 %v575, %v951
        %v1516 = vsub.f32 %v576, %v952
        %v1517 = vsub.f32 %v577, %v953
        %v1518 = vsub.f32 %v578, %v954
        %v1519 = vsub.f32 %v579, %v955
        %v1520 = vsub.f32 %v580, %v956
        %v1521 = vsub.f32 %v581, %v957
        %v1522 = vsub.f32 %v582, %v958
        %v1523 = vsub.f32 %v583, %v959
        %v1524 = vsub.f32 %v584, %v960
        %v1525 = vsub.f32 %v585, %v961
        %v1526 = vsub.f32 %v586, %v962
        %v1527 = vsub.f32 %v587, %v963
        %v1528 = vsub.f32 %v588, %v964
        %v1529 = vsub.f32 %v589, %v965
        %v1530 = vsub.f32 %v590, %v966
        %v1531 = vsub.f32 %v591, %v967
        %v1532 = vsub.f32 %v592, %v968
        %v1533 = vsub.f32 %v593, %v969
        %v1534 = vsub.f32 %v594, %v970
        %v1535 = vsub.f32 %v595, %v971
        %v1536 = vsub.f32 %v596, %v972
        %v1537 = vsub.f32 %v597, %v973
        %v1538 = vsub.f32 %v598, %v974
        %v1539 = vsub.f32 %v599, %v975
        %v1540 = vsub.f32 %v600, %v976
        %v1541 = vsub.f32 %v601, %v977
        %v1542 = vsub.f32 %v602, %v978
        %v1543 = vsub.f32 %v603, %v979
        %v1544 = vsub.f32 %v604, %v980
        %v1545 = vsub.f32 %v605, %v981
        %v1546 = vsub.f32 %v606, %v982
        %v1547 = vsub.f32 %v607, %v983
        %v1548 = vsub.f32 %v608, %v984
        %v1549 = vsub.f32 %v609, %v985
        %v1550 = vsub.f32 %v610, %v986
        %v1551 = vsub.f32 %v611, %v987
        %v1552 = vsub.f32 %v612, %v988
        %v1553 = vsub.f32 %v613, %v989
        %v1554 = vsub.f32 %v614, %v990
        %v1555 = vsub.f32 %v615, %v991
        %v1556 = vsub.f32 %v616, %v992
        %v1557 = vsub.f32 %v617, %v993
        %v1558 = vsub.f32 %v618, %v994
        %v1559 = vsub.f32 %v619, %v995
        %v1560 = vsub.f32 %v620, %v996
        %v1561 = vsub.f32 %v621, %v997
        %v1562 = vsub.f32 %v622, %v998
        %v1563 = vsub.f32 %v623, %v999
        %v1564 = vsub.f32 %v624, %v1000
        %v1565 = vsub.f32 %v625, %v1001
        %v1566 = vsub.f32 %v626, %v1002
        %v1567 = vsub.f32 %v627, %v1003
        %v1568 = vsub.f32 %v628, %v1004
        %v1569 = vsub.f32 %v629, %v1005
        %v1570 = vsub.f32 %v630, %v1006
        %v1571 = vsub.f32 %v631, %v1007
        %v1572 = vsub.f32 %v632, %v1008
        %v1573 = vsub.f32 %v633, %v1009
        %v1574 = vsub.f32 %v634, %v1010
        %v1575 = vsub.f32 %v635, %v1011
        %v1576 = vsub.f32 %v636, %v1012
        %v1577 = vsub.f32 %v637, %v1013
        %v1578 = vsub.f32 %v638, %v1014
        %v1579 = vsub.f32 %v639, %v1015
        %v1580 = vsub.f32 %v640, %v1016
        %v1581 = vsub.f32 %v641, %v1017
        %v1582 = vsub.f32 %v642, %v1018
        %v1583 = vsub.f32 %v643, %v1019
        %v1584 = vsub.f32 %v644, %v1020
        %v1585 = vsub.f32 %v645, %v1021
        %v1586 = vsub.f32 %v646, %v1022
        %v1587 = vsub.f32 %v647, %v1023
        %v1588 = vsub.f32 %v648, %v1024
        %v1589 = vsub.f32 %v649, %v1025
        %v1590 = vsub.f32 %v650, %v1026
        %v1591 = vsub.f32 %v651, %v1027
        %v1592 = vsub.f32 %v652, %v1028
        %v1593 = vsub.f32 %v653, %v1029
        %v1594 = vsub.f32 %v654, %v1030
        %v1595 = vsub.f32 %v655, %v1031
        %v1596 = vsub.f32 %v656, %v1032
        %v1597 = vsub.f32 %v657, %v1033
        %v1598 = vsub.f32 %v658, %v1034
        %v1599 = vsub.f32 %v659, %v1035
        %v1600 = vsub.f32 %v660, %v1036
        %v1601 = vsub.f32 %v661, %v1037
        %v1602 = vsub.f32 %v662, %v1038
        %v1603 = vsub.f32 %v663, %v1039
        %v1604 = vsub.f32 %v664, %v1040
        %v1605 = vsub.f32 %v665, %v1041
        %v1606 = vsub.f32 %v666, %v1042
        %v1607 = vadd.f32 %v1231, 1e-06
        %v1608 = vadd.f32 %v1232, 1e-06
        %v1609 = vadd.f32 %v1233, 1e-06
        %v1610 = vadd.f32 %v1234, 1e-06
        %v1611 = vadd.f32 %v1235, 1e-06
        %v1612 = vadd.f32 %v1236, 1e-06
        %v1613 = vadd.f32 %v1237, 1e-06
        %v1614 = vadd.f32 %v1238, 1e-06
        %v1615 = vadd.f32 %v1239, 1e-06
        %v1616 = vadd.f32 %v1240, 1e-06
        %v1617 = vadd.f32 %v1241, 1e-06
        %v1618 = vadd.f32 %v1242, 1e-06
        %v1619 = vadd.f32 %v1243, 1e-06
        %v1620 = vadd.f32 %v1244, 1e-06
        %v1621 = vadd.f32 %v1245, 1e-06
        %v1622 = vadd.f32 %v1246, 1e-06
        %v1623 = vadd.f32 %v1247, 1e-06
        %v1624 = vadd.f32 %v1248, 1e-06
        %v1625 = vadd.f32 %v1249, 1e-06
        %v1626 = vadd.f32 %v1250, 1e-06
        %v1627 = vadd.f32 %v1251, 1e-06
        %v1628 = vadd.f32 %v1252, 1e-06
        %v1629 = vadd.f32 %v1253, 1e-06
        %v1630 = vadd.f32 %v1254, 1e-06
        %v1631 = vadd.f32 %v1255, 1e-06
        %v1632 = vadd.f32 %v1256, 1e-06
        %v1633 = vadd.f32 %v1257, 1e-06
        %v1634 = vadd.f32 %v1258, 1e-06
        %v1635 = vadd.f32 %v1259, 1e-06
        %v1636 = vadd.f32 %v1260, 1e-06
        %v1637 = vadd.f32 %v1261, 1e-06
        %v1638 = vadd.f32 %v1262, 1e-06
        %v1639 = vadd.f32 %v1263, 1e-06
        %v1640 = vadd.f32 %v1264, 1e-06
        %v1641 = vadd.f32 %v1265, 1e-06
        %v1642 = vadd.f32 %v1266, 1e-06
        %v1643 = vadd.f32 %v1267, 1e-06
        %v1644 = vadd.f32 %v1268, 1e-06
        %v1645 = vadd.f32 %v1269, 1e-06
        %v1646 = vadd.f32 %v1270, 1e-06
        %v1647 = vadd.f32 %v1271, 1e-06
        %v1648 = vadd.f32 %v1272, 1e-06
        %v1649 = vadd.f32 %v1273, 1e-06
        %v1650 = vadd.f32 %v1274, 1e-06
        %v1651 = vadd.f32 %v1275, 1e-06
        %v1652 = vadd.f32 %v1276, 1e-06
        %v1653 = vadd.f32 %v1277, 1e-06
        %v1654 = vadd.f32 %v1278, 1e-06
        %v1655 = vadd.f32 %v1279, 1e-06
        %v1656 = vadd.f32 %v1280, 1e-06
        %v1657 = vadd.f32 %v1281, 1e-06
        %v1658 = vadd.f32 %v1282, 1e-06
        %v1659 = vadd.f32 %v1283, 1e-06
        %v1660 = vadd.f32 %v1284, 1e-06
        %v1661 = vadd.f32 %v1285, 1e-06
        %v1662 = vadd.f32 %v1286, 1e-06
        %v1663 = vadd.f32 %v1287, 1e-06
        %v1664 = vadd.f32 %v1288, 1e-06
        %v1665 = vadd.f32 %v1289, 1e-06
        %v1666 = vadd.f32 %v1290, 1e-06
        %v1667 = vadd.f32 %v1291, 1e-06
        %v1668 = vadd.f32 %v1292, 1e-06
        %v1669 = vadd.f32 %v1293, 1e-06
        %v1670 = vadd.f32 %v1294, 1e-06
        %v1671 = vadd.f32 %v1295, 1e-06
        %v1672 = vadd.f32 %v1296, 1e-06
        %v1673 = vadd.f32 %v1297, 1e-06
        %v1674 = vadd.f32 %v1298, 1e-06
        %v1675 = vadd.f32 %v1299, 1e-06
        %v1676 = vadd.f32 %v1300, 1e-06
        %v1677 = vadd.f32 %v1301, 1e-06
        %v1678 = vadd.f32 %v1302, 1e-06
        %v1679 = vadd.f32 %v1303, 1e-06
        %v1680 = vadd.f32 %v1304, 1e-06
        %v1681 = vadd.f32 %v1305, 1e-06
        %v1682 = vadd.f32 %v1306, 1e-06
        %v1683 = vadd.f32 %v1307, 1e-06
        %v1684 = vadd.f32 %v1308, 1e-06
        %v1685 = vadd.f32 %v1309, 1e-06
        %v1686 = vadd.f32 %v1310, 1e-06
        %v1687 = vadd.f32 %v1311, 1e-06
        %v1688 = vadd.f32 %v1312, 1e-06
        %v1689 = vadd.f32 %v1313, 1e-06
        %v1690 = vadd.f32 %v1314, 1e-06
        %v1691 = vadd.f32 %v1315, 1e-06
        %v1692 = vadd.f32 %v1316, 1e-06
        %v1693 = vadd.f32 %v1317, 1e-06
        %v1694 = vadd.f32 %v1318, 1e-06
        %v1695 = vadd.f32 %v1319, 1e-06
        %v1696 = vadd.f32 %v1320, 1e-06
        %v1697 = vadd.f32 %v1321, 1e-06
        %v1698 = vadd.f32 %v1322, 1e-06
        %v1699 = vadd.f32 %v1323, 1e-06
        %v1700 = vadd.f32 %v1324, 1e-06
        %v1701 = vadd.f32 %v1325, 1e-06
        %v1702 = vadd.f32 %v1326, 1e-06
        %v1703 = vadd.f32 %v1327, 1e-06
        %v1704 = vadd.f32 %v1328, 1e-06
        %v1705 = vadd.f32 %v1329, 1e-06
        %v1706 = vadd.f32 %v1330, 1e-06
        %v1707 = vadd.f32 %v1331, 1e-06
        %v1708 = vadd.f32 %v1332, 1e-06
        %v1709 = vadd.f32 %v1333, 1e-06
        %v1710 = vadd.f32 %v1334, 1e-06
        %v1711 = vadd.f32 %v1335, 1e-06
        %v1712 = vadd.f32 %v1336, 1e-06
        %v1713 = vadd.f32 %v1337, 1e-06
        %v1714 = vadd.f32 %v1338, 1e-06
        %v1715 = vadd.f32 %v1339, 1e-06
        %v1716 = vadd.f32 %v1340, 1e-06
        %v1717 = vadd.f32 %v1341, 1e-06
        %v1718 = vadd.f32 %v1342, 1e-06
        %v1719 = vadd.f32 %v1343, 1e-06
        %v1720 = vadd.f32 %v1344, 1e-06
        %v1721 = vadd.f32 %v1345, 1e-06
        %v1722 = vadd.f32 %v1346, 1e-06
        %v1723 = vadd.f32 %v1347, 1e-06
        %v1724 = vadd.f32 %v1348, 1e-06
        %v1725 = vadd.f32 %v1349, 1e-06
        %v1726 = vadd.f32 %v1350, 1e-06
        %v1727 = vadd.f32 %v1351, 1e-06
        %v1728 = vadd.f32 %v1352, 1e-06
        %v1729 = vadd.f32 %v1353, 1e-06
        %v1730 = vadd.f32 %v1354, 1e-06
        %v1731 = vadd.f32 %v1355, 1e-06
        %v1732 = vadd.f32 %v1356, 1e-06
        %v1733 = vadd.f32 %v1357, 1e-06
        %v1734 = vadd.f32 %v1358, 1e-06
        %v1735 = vadd.f32 %v1359, 1e-06
        %v1736 = vadd.f32 %v1360, 1e-06
        %v1737 = vadd.f32 %v1361, 1e-06
        %v1738 = vadd.f32 %v1362, 1e-06
        %v1739 = vadd.f32 %v1363, 1e-06
        %v1740 = vadd.f32 %v1364, 1e-06
        %v1741 = vadd.f32 %v1365, 1e-06
        %v1742 = vadd.f32 %v1366, 1e-06
        %v1743 = vadd.f32 %v1367, 1e-06
        %v1744 = vadd.f32 %v1368, 1e-06
        %v1745 = vadd.f32 %v1369, 1e-06
        %v1746 = vadd.f32 %v1370, 1e-06
        %v1747 = vadd.f32 %v1371, 1e-06
        %v1748 = vadd.f32 %v1372, 1e-06
        %v1749 = vadd.f32 %v1373, 1e-06
        %v1750 = vadd.f32 %v1374, 1e-06
        %v1751 = vadd.f32 %v1375, 1e-06
        %v1752 = vadd.f32 %v1376, 1e-06
        %v1753 = vadd.f32 %v1377, 1e-06
        %v1754 = vadd.f32 %v1378, 1e-06
        %v1755 = vadd.f32 %v1379, 1e-06
        %v1756 = vadd.f32 %v1380, 1e-06
        %v1757 = vadd.f32 %v1381, 1e-06
        %v1758 = vadd.f32 %v1382, 1e-06
        %v1759 = vadd.f32 %v1383, 1e-06
        %v1760 = vadd.f32 %v1384, 1e-06
        %v1761 = vadd.f32 %v1385, 1e-06
        %v1762 = vadd.f32 %v1386, 1e-06
        %v1763 = vadd.f32 %v1387, 1e-06
        %v1764 = vadd.f32 %v1388, 1e-06
        %v1765 = vadd.f32 %v1389, 1e-06
        %v1766 = vadd.f32 %v1390, 1e-06
        %v1767 = vadd.f32 %v1391, 1e-06
        %v1768 = vadd.f32 %v1392, 1e-06
        %v1769 = vadd.f32 %v1393, 1e-06
        %v1770 = vadd.f32 %v1394, 1e-06
        %v1771 = vadd.f32 %v1395, 1e-06
        %v1772 = vadd.f32 %v1396, 1e-06
        %v1773 = vadd.f32 %v1397, 1e-06
        %v1774 = vadd.f32 %v1398, 1e-06
        %v1775 = vadd.f32 %v1399, 1e-06
        %v1776 = vadd.f32 %v1400, 1e-06
        %v1777 = vadd.f32 %v1401, 1e-06
        %v1778 = vadd.f32 %v1402, 1e-06
        %v1779 = vadd.f32 %v1403, 1e-06
        %v1780 = vadd.f32 %v1404, 1e-06
        %v1781 = vadd.f32 %v1405, 1e-06
        %v1782 = vadd.f32 %v1406, 1e-06
        %v1783 = vadd.f32 %v1407, 1e-06
        %v1784 = vadd.f32 %v1408, 1e-06
        %v1785 = vadd.f32 %v1409, 1e-06
        %v1786 = vadd.f32 %v1410, 1e-06
        %v1787 = vadd.f32 %v1411, 1e-06
        %v1788 = vadd.f32 %v1412, 1e-06
        %v1789 = vadd.f32 %v1413, 1e-06
        %v1790 = vadd.f32 %v1414, 1e-06
        %v1791 = vadd.f32 %v1415, 1e-06
        %v1792 = vadd.f32 %v1416, 1e-06
        %v1793 = vadd.f32 %v1417, 1e-06
        %v1794 = vadd.f32 %v1418, 1e-06
        %v1795 = vadd.f32 %v1419, 1e-06
        %v1796 = vadd.f32 %v1420, 1e-06
        %v1797 = vadd.f32 %v1421, 1e-06
        %v1798 = vadd.f32 %v1422, 1e-06
        %v1799 = vadd.f32 %v1423, 1e-06
        %v1800 = vadd.f32 %v1424, 1e-06
        %v1801 = vadd.f32 %v1425, 1e-06
        %v1802 = vadd.f32 %v1426, 1e-06
        %v1803 = vadd.f32 %v1427, 1e-06
        %v1804 = vadd.f32 %v1428, 1e-06
        %v1805 = vadd.f32 %v1429, 1e-06
        %v1806 = vadd.f32 %v1430, 1e-06
        %v1807 = vadd.f32 %v1431, 1e-06
        %v1808 = vadd.f32 %v1432, 1e-06
        %v1809 = vadd.f32 %v1433, 1e-06
        %v1810 = vadd.f32 %v1434, 1e-06
        %v1811 = vadd.f32 %v1435, 1e-06
        %v1812 = vadd.f32 %v1436, 1e-06
        %v1813 = vadd.f32 %v1437, 1e-06
        %v1814 = vadd.f32 %v1438, 1e-06
        %v1815 = vadd.f32 %v1439, 1e-06
        %v1816 = vadd.f32 %v1440, 1e-06
        %v1817 = vadd.f32 %v1441, 1e-06
        %v1818 = vadd.f32 %v1442, 1e-06
        %v1819 = vadd.f32 %v1443, 1e-06
        %v1820 = vadd.f32 %v1444, 1e-06
        %v1821 = vadd.f32 %v1445, 1e-06
        %v1822 = vadd.f32 %v1446, 1e-06
        %v1823 = vadd.f32 %v1447, 1e-06
        %v1824 = vadd.f32 %v1448, 1e-06
        %v1825 = vadd.f32 %v1449, 1e-06
        %v1826 = vadd.f32 %v1450, 1e-06
        %v1827 = vadd.f32 %v1451, 1e-06
        %v1828 = vadd.f32 %v1452, 1e-06
        %v1829 = vadd.f32 %v1453, 1e-06
        %v1830 = vadd.f32 %v1454, 1e-06
        %v1831 = vadd.f32 %v1455, 1e-06
        %v1832 = vadd.f32 %v1456, 1e-06
        %v1833 = vadd.f32 %v1457, 1e-06
        %v1834 = vadd.f32 %v1458, 1e-06
        %v1835 = vadd.f32 %v1459, 1e-06
        %v1836 = vadd.f32 %v1460, 1e-06
        %v1837 = vadd.f32 %v1461, 1e-06
        %v1838 = vadd.f32 %v1462, 1e-06
        %v1839 = vadd.f32 %v1463, 1e-06
        %v1840 = vadd.f32 %v1464, 1e-06
        %v1841 = vadd.f32 %v1465, 1e-06
        %v1842 = vadd.f32 %v1466, 1e-06
        %v1843 = vadd.f32 %v1467, 1e-06
        %v1844 = vadd.f32 %v1468, 1e-06
        %v1845 = vadd.f32 %v1469, 1e-06
        %v1846 = vadd.f32 %v1470, 1e-06
        %v1847 = vadd.f32 %v1471, 1e-06
        %v1848 = vadd.f32 %v1472, 1e-06
        %v1849 = vadd.f32 %v1473, 1e-06
        %v1850 = vadd.f32 %v1474, 1e-06
        %v1851 = vadd.f32 %v1475, 1e-06
        %v1852 = vadd.f32 %v1476, 1e-06
        %v1853 = vadd.f32 %v1477, 1e-06
        %v1854 = vadd.f32 %v1478, 1e-06
        %v1855 = vadd.f32 %v1479, 1e-06
        %v1856 = vadd.f32 %v1480, 1e-06
        %v1857 = vadd.f32 %v1481, 1e-06
        %v1858 = vadd.f32 %v1482, 1e-06
        %v1859 = vadd.f32 %v1483, 1e-06
        %v1860 = vadd.f32 %v1484, 1e-06
        %v1861 = vadd.f32 %v1485, 1e-06
        %v1862 = vadd.f32 %v1486, 1e-06
        %v1863 = vadd.f32 %v1487, 1e-06
        %v1864 = vadd.f32 %v1488, 1e-06
        %v1865 = vadd.f32 %v1489, 1e-06
        %v1866 = vadd.f32 %v1490, 1e-06
        %v1867 = vadd.f32 %v1491, 1e-06
        %v1868 = vadd.f32 %v1492, 1e-06
        %v1869 = vadd.f32 %v1493, 1e-06
        %v1870 = vadd.f32 %v1494, 1e-06
        %v1871 = vadd.f32 %v1495, 1e-06
        %v1872 = vadd.f32 %v1496, 1e-06
        %v1873 = vadd.f32 %v1497, 1e-06
        %v1874 = vadd.f32 %v1498, 1e-06
        %v1875 = vadd.f32 %v1499, 1e-06
        %v1876 = vadd.f32 %v1500, 1e-06
        %v1877 = vadd.f32 %v1501, 1e-06
        %v1878 = vadd.f32 %v1502, 1e-06
        %v1879 = vadd.f32 %v1503, 1e-06
        %v1880 = vadd.f32 %v1504, 1e-06
        %v1881 = vadd.f32 %v1505, 1e-06
        %v1882 = vadd.f32 %v1506, 1e-06
        %v1883 = vadd.f32 %v1507, 1e-06
        %v1884 = vadd.f32 %v1508, 1e-06
        %v1885 = vadd.f32 %v1509, 1e-06
        %v1886 = vadd.f32 %v1510, 1e-06
        %v1887 = vadd.f32 %v1511, 1e-06
        %v1888 = vadd.f32 %v1512, 1e-06
        %v1889 = vadd.f32 %v1513, 1e-06
        %v1890 = vadd.f32 %v1514, 1e-06
        %v1891 = vadd.f32 %v1515, 1e-06
        %v1892 = vadd.f32 %v1516, 1e-06
        %v1893 = vadd.f32 %v1517, 1e-06
        %v1894 = vadd.f32 %v1518, 1e-06
        %v1895 = vadd.f32 %v1519, 1e-06
        %v1896 = vadd.f32 %v1520, 1e-06
        %v1897 = vadd.f32 %v1521, 1e-06
        %v1898 = vadd.f32 %v1522, 1e-06
        %v1899 = vadd.f32 %v1523, 1e-06
        %v1900 = vadd.f32 %v1524, 1e-06
        %v1901 = vadd.f32 %v1525, 1e-06
        %v1902 = vadd.f32 %v1526, 1e-06
        %v1903 = vadd.f32 %v1527, 1e-06
        %v1904 = vadd.f32 %v1528, 1e-06
        %v1905 = vadd.f32 %v1529, 1e-06
        %v1906 = vadd.f32 %v1530, 1e-06
        %v1907 = vadd.f32 %v1531, 1e-06
        %v1908 = vadd.f32 %v1532, 1e-06
        %v1909 = vadd.f32 %v1533, 1e-06
        %v1910 = vadd.f32 %v1534, 1e-06
        %v1911 = vadd.f32 %v1535, 1e-06
        %v1912 = vadd.f32 %v1536, 1e-06
        %v1913 = vadd.f32 %v1537, 1e-06
        %v1914 = vadd.f32 %v1538, 1e-06
        %v1915 = vadd.f32 %v1539, 1e-06
        %v1916 = vadd.f32 %v1540, 1e-06
        %v1917 = vadd.f32 %v1541, 1e-06
        %v1918 = vadd.f32 %v1542, 1e-06
        %v1919 = vadd.f32 %v1543, 1e-06
        %v1920 = vadd.f32 %v1544, 1e-06
        %v1921 = vadd.f32 %v1545, 1e-06
        %v1922 = vadd.f32 %v1546, 1e-06
        %v1923 = vadd.f32 %v1547, 1e-06
        %v1924 = vadd.f32 %v1548, 1e-06
        %v1925 = vadd.f32 %v1549, 1e-06
        %v1926 = vadd.f32 %v1550, 1e-06
        %v1927 = vadd.f32 %v1551, 1e-06
        %v1928 = vadd.f32 %v1552, 1e-06
        %v1929 = vadd.f32 %v1553, 1e-06
        %v1930 = vadd.f32 %v1554, 1e-06
        %v1931 = vadd.f32 %v1555, 1e-06
        %v1932 = vadd.f32 %v1556, 1e-06
        %v1933 = vadd.f32 %v1557, 1e-06
        %v1934 = vadd.f32 %v1558, 1e-06
        %v1935 = vadd.f32 %v1559, 1e-06
        %v1936 = vadd.f32 %v1560, 1e-06
        %v1937 = vadd.f32 %v1561, 1e-06
        %v1938 = vadd.f32 %v1562, 1e-06
        %v1939 = vadd.f32 %v1563, 1e-06
        %v1940 = vadd.f32 %v1564, 1e-06
        %v1941 = vadd.f32 %v1565, 1e-06
        %v1942 = vadd.f32 %v1566, 1e-06
        %v1943 = vadd.f32 %v1567, 1e-06
        %v1944 = vadd.f32 %v1568, 1e-06
        %v1945 = vadd.f32 %v1569, 1e-06
        %v1946 = vadd.f32 %v1570, 1e-06
        %v1947 = vadd.f32 %v1571, 1e-06
        %v1948 = vadd.f32 %v1572, 1e-06
        %v1949 = vadd.f32 %v1573, 1e-06
        %v1950 = vadd.f32 %v1574, 1e-06
        %v1951 = vadd.f32 %v1575, 1e-06
        %v1952 = vadd.f32 %v1576, 1e-06
        %v1953 = vadd.f32 %v1577, 1e-06
        %v1954 = vadd.f32 %v1578, 1e-06
        %v1955 = vadd.f32 %v1579, 1e-06
        %v1956 = vadd.f32 %v1580, 1e-06
        %v1957 = vadd.f32 %v1581, 1e-06
        %v1958 = vadd.f32 %v1582, 1e-06
        %v1959 = vadd.f32 %v1583, 1e-06
        %v1960 = vadd.f32 %v1584, 1e-06
        %v1961 = vadd.f32 %v1585, 1e-06
        %v1962 = vadd.f32 %v1586, 1e-06
        %v1963 = vadd.f32 %v1587, 1e-06
        %v1964 = vadd.f32 %v1588, 1e-06
        %v1965 = vadd.f32 %v1589, 1e-06
        %v1966 = vadd.f32 %v1590, 1e-06
        %v1967 = vadd.f32 %v1591, 1e-06
        %v1968 = vadd.f32 %v1592, 1e-06
        %v1969 = vadd.f32 %v1593, 1e-06
        %v1970 = vadd.f32 %v1594, 1e-06
        %v1971 = vadd.f32 %v1595, 1e-06
        %v1972 = vadd.f32 %v1596, 1e-06
        %v1973 = vadd.f32 %v1597, 1e-06
        %v1974 = vadd.f32 %v1598, 1e-06
        %v1975 = vadd.f32 %v1599, 1e-06
        %v1976 = vadd.f32 %v1600, 1e-06
        %v1977 = vadd.f32 %v1601, 1e-06
        %v1978 = vadd.f32 %v1602, 1e-06
        %v1979 = vadd.f32 %v1603, 1e-06
        %v1980 = vadd.f32 %v1604, 1e-06
        %v1981 = vadd.f32 %v1605, 1e-06
        %v1982 = vadd.f32 %v1606, 1e-06
        %v1983 = vmul.f32 %v1607, %v1607
        %v1984 = vmul.f32 %v1608, %v1608
        %v1985 = vmul.f32 %v1609, %v1609
        %v1986 = vmul.f32 %v1610, %v1610
        %v1987 = vmul.f32 %v1611, %v1611
        %v1988 = vmul.f32 %v1612, %v1612
        %v1989 = vmul.f32 %v1613, %v1613
        %v1990 = vmul.f32 %v1614, %v1614
        %v1991 = vmul.f32 %v1615, %v1615
        %v1992 = vmul.f32 %v1616, %v1616
        %v1993 = vmul.f32 %v1617, %v1617
        %v1994 = vmul.f32 %v1618, %v1618
        %v1995 = vmul.f32 %v1619, %v1619
        %v1996 = vmul.f32 %v1620, %v1620
        %v1997 = vmul.f32 %v1621, %v1621
        %v1998 = vmul.f32 %v1622, %v1622
        %v1999 = vmul.f32 %v1623, %v1623
        %v2000 = vmul.f32 %v1624, %v1624
        %v2001 = vmul.f32 %v1625, %v1625
        %v2002 = vmul.f32 %v1626, %v1626
        %v2003 = vmul.f32 %v1627, %v1627
        %v2004 = vmul.f32 %v1628, %v1628
        %v2005 = vmul.f32 %v1629, %v1629
        %v2006 = vmul.f32 %v1630, %v1630
        %v2007 = vmul.f32 %v1631, %v1631
        %v2008 = vmul.f32 %v1632, %v1632
        %v2009 = vmul.f32 %v1633, %v1633
        %v2010 = vmul.f32 %v1634, %v1634
        %v2011 = vmul.f32 %v1635, %v1635
        %v2012 = vmul.f32 %v1636, %v1636
        %v2013 = vmul.f32 %v1637, %v1637
        %v2014 = vmul.f32 %v1638, %v1638
        %v2015 = vmul.f32 %v1639, %v1639
        %v2016 = vmul.f32 %v1640, %v1640
        %v2017 = vmul.f32 %v1641, %v1641
        %v2018 = vmul.f32 %v1642, %v1642
        %v2019 = vmul.f32 %v1643, %v1643
        %v2020 = vmul.f32 %v1644, %v1644
        %v2021 = vmul.f32 %v1645, %v1645
        %v2022 = vmul.f32 %v1646, %v1646
        %v2023 = vmul.f32 %v1647, %v1647
        %v2024 = vmul.f32 %v1648, %v1648
        %v2025 = vmul.f32 %v1649, %v1649
        %v2026 = vmul.f32 %v1650, %v1650
        %v2027 = vmul.f32 %v1651, %v1651
        %v2028 = vmul.f32 %v1652, %v1652
        %v2029 = vmul.f32 %v1653, %v1653
        %v2030 = vmul.f32 %v1654, %v1654
        %v2031 = vmul.f32 %v1655, %v1655
        %v2032 = vmul.f32 %v1656, %v1656
        %v2033 = vmul.f32 %v1657, %v1657
        %v2034 = vmul.f32 %v1658, %v1658
        %v2035 = vmul.f32 %v1659, %v1659
        %v2036 = vmul.f32 %v1660, %v1660
        %v2037 = vmul.f32 %v1661, %v1661
        %v2038 = vmul.f32 %v1662, %v1662
        %v2039 = vmul.f32 %v1663, %v1663
        %v2040 = vmul.f32 %v1664, %v1664
        %v2041 = vmul.f32 %v1665, %v1665
        %v2042 = vmul.f32 %v1666, %v1666
        %v2043 = vmul.f32 %v1667, %v1667
        %v2044 = vmul.f32 %v1668, %v1668
        %v2045 = vmul.f32 %v1669, %v1669
        %v2046 = vmul.f32 %v1670, %v1670
        %v2047 = vmul.f32 %v1671, %v1671
        %v2048 = vmul.f32 %v1672, %v1672
        %v2049 = vmul.f32 %v1673, %v1673
        %v2050 = vmul.f32 %v1674, %v1674
        %v2051 = vmul.f32 %v1675, %v1675
        %v2052 = vmul.f32 %v1676, %v1676
        %v2053 = vmul.f32 %v1677, %v1677
        %v2054 = vmul.f32 %v1678, %v1678
        %v2055 = vmul.f32 %v1679, %v1679
        %v2056 = vmul.f32 %v1680, %v1680
        %v2057 = vmul.f32 %v1681, %v1681
        %v2058 = vmul.f32 %v1682, %v1682
        %v2059 = vmul.f32 %v1683, %v1683
        %v2060 = vmul.f32 %v1684, %v1684
        %v2061 = vmul.f32 %v1685, %v1685
        %v2062 = vmul.f32 %v1686, %v1686
        %v2063 = vmul.f32 %v1687, %v1687
        %v2064 = vmul.f32 %v1688, %v1688
        %v2065 = vmul.f32 %v1689, %v1689
        %v2066 = vmul.f32 %v1690, %v1690
        %v2067 = vmul.f32 %v1691, %v1691
        %v2068 = vmul.f32 %v1692, %v1692
        %v2069 = vmul.f32 %v1693, %v1693
        %v2070 = vmul.f32 %v1694, %v1694
        %v2071 = vmul.f32 %v1695, %v1695
        %v2072 = vmul.f32 %v1696, %v1696
        %v2073 = vmul.f32 %v1697, %v1697
        %v2074 = vmul.f32 %v1698, %v1698
        %v2075 = vmul.f32 %v1699, %v1699
        %v2076 = vmul.f32 %v1700, %v1700
        %v2077 = vmul.f32 %v1701, %v1701
        %v2078 = vmul.f32 %v1702, %v1702
        %v2079 = vmul.f32 %v1703, %v1703
        %v2080 = vmul.f32 %v1704, %v1704
        %v2081 = vmul.f32 %v1705, %v1705
        %v2082 = vmul.f32 %v1706, %v1706
        %v2083 = vmul.f32 %v1707, %v1707
        %v2084 = vmul.f32 %v1708, %v1708
        %v2085 = vmul.f32 %v1709, %v1709
        %v2086 = vmul.f32 %v1710, %v1710
        %v2087 = vmul.f32 %v1711, %v1711
        %v2088 = vmul.f32 %v1712, %v1712
        %v2089 = vmul.f32 %v1713, %v1713
        %v2090 = vmul.f32 %v1714, %v1714
        %v2091 = vmul.f32 %v1715, %v1715
        %v2092 = vmul.f32 %v1716, %v1716
        %v2093 = vmul.f32 %v1717, %v1717
        %v2094 = vmul.f32 %v1718, %v1718
        %v2095 = vmul.f32 %v1719, %v1719
        %v2096 = vmul.f32 %v1720, %v1720
        %v2097 = vmul.f32 %v1721, %v1721
        %v2098 = vmul.f32 %v1722, %v1722
        %v2099 = vmul.f32 %v1723, %v1723
        %v2100 = vmul.f32 %v1724, %v1724
        %v2101 = vmul.f32 %v1725, %v1725
        %v2102 = vmul.f32 %v1726, %v1726
        %v2103 = vmul.f32 %v1727, %v1727
        %v2104 = vmul.f32 %v1728, %v1728
        %v2105 = vmul.f32 %v1729, %v1729
        %v2106 = vmul.f32 %v1730, %v1730
        %v2107 = vmul.f32 %v1731, %v1731
        %v2108 = vmul.f32 %v1732, %v1732
        %v2109 = vmul.f32 %v1733, %v1733
        %v2110 = vmul.f32 %v1734, %v1734
        %v2111 = vmul.f32 %v1735, %v1735
        %v2112 = vmul.f32 %v1736, %v1736
        %v2113 = vmul.f32 %v1737, %v1737
        %v2114 = vmul.f32 %v1738, %v1738
        %v2115 = vmul.f32 %v1739, %v1739
        %v2116 = vmul.f32 %v1740, %v1740
        %v2117 = vmul.f32 %v1741, %v1741
        %v2118 = vmul.f32 %v1742, %v1742
        %v2119 = vmul.f32 %v1743, %v1743
        %v2120 = vmul.f32 %v1744, %v1744
        %v2121 = vmul.f32 %v1745, %v1745
        %v2122 = vmul.f32 %v1746, %v1746
        %v2123 = vmul.f32 %v1747, %v1747
        %v2124 = vmul.f32 %v1748, %v1748
        %v2125 = vmul.f32 %v1749, %v1749
        %v2126 = vmul.f32 %v1750, %v1750
        %v2127 = vmul.f32 %v1751, %v1751
        %v2128 = vmul.f32 %v1752, %v1752
        %v2129 = vmul.f32 %v1753, %v1753
        %v2130 = vmul.f32 %v1754, %v1754
        %v2131 = vmul.f32 %v1755, %v1755
        %v2132 = vmul.f32 %v1756, %v1756
        %v2133 = vmul.f32 %v1757, %v1757
        %v2134 = vmul.f32 %v1758, %v1758
        %v2135 = vmul.f32 %v1759, %v1759
        %v2136 = vmul.f32 %v1760, %v1760
        %v2137 = vmul.f32 %v1761, %v1761
        %v2138 = vmul.f32 %v1762, %v1762
        %v2139 = vmul.f32 %v1763, %v1763
        %v2140 = vmul.f32 %v1764, %v1764
        %v2141 = vmul.f32 %v1765, %v1765
        %v2142 = vmul.f32 %v1766, %v1766
        %v2143 = vmul.f32 %v1767, %v1767
        %v2144 = vmul.f32 %v1768, %v1768
        %v2145 = vmul.f32 %v1769, %v1769
        %v2146 = vmul.f32 %v1770, %v1770
        %v2147 = vmul.f32 %v1771, %v1771
        %v2148 = vmul.f32 %v1772, %v1772
        %v2149 = vmul.f32 %v1773, %v1773
        %v2150 = vmul.f32 %v1774, %v1774
        %v2151 = vmul.f32 %v1775, %v1775
        %v2152 = vmul.f32 %v1776, %v1776
        %v2153 = vmul.f32 %v1777, %v1777
        %v2154 = vmul.f32 %v1778, %v1778
        %v2155 = vmul.f32 %v1779, %v1779
        %v2156 = vmul.f32 %v1780, %v1780
        %v2157 = vmul.f32 %v1781, %v1781
        %v2158 = vmul.f32 %v1782, %v1782
        %v2159 = vmul.f32 %v1783, %v1783
        %v2160 = vmul.f32 %v1784, %v1784
        %v2161 = vmul.f32 %v1785, %v1785
        %v2162 = vmul.f32 %v1786, %v1786
        %v2163 = vmul.f32 %v1787, %v1787
        %v2164 = vmul.f32 %v1788, %v1788
        %v2165 = vmul.f32 %v1789, %v1789
        %v2166 = vmul.f32 %v1790, %v1790
        %v2167 = vmul.f32 %v1791, %v1791
        %v2168 = vmul.f32 %v1792, %v1792
        %v2169 = vmul.f32 %v1793, %v1793
        %v2170 = vmul.f32 %v1794, %v1794
        %v2171 = vmul.f32 %v1795, %v1795
        %v2172 = vmul.f32 %v1796, %v1796
        %v2173 = vmul.f32 %v1797, %v1797
        %v2174 = vmul.f32 %v1798, %v1798
        %v2175 = vmul.f32 %v1799, %v1799
        %v2176 = vmul.f32 %v1800, %v1800
        %v2177 = vmul.f32 %v1801, %v1801
        %v2178 = vmul.f32 %v1802, %v1802
        %v2179 = vmul.f32 %v1803, %v1803
        %v2180 = vmul.f32 %v1804, %v1804
        %v2181 = vmul.f32 %v1805, %v1805
        %v2182 = vmul.f32 %v1806, %v1806
        %v2183 = vmul.f32 %v1807, %v1807
        %v2184 = vmul.f32 %v1808, %v1808
        %v2185 = vmul.f32 %v1809, %v1809
        %v2186 = vmul.f32 %v1810, %v1810
        %v2187 = vmul.f32 %v1811, %v1811
        %v2188 = vmul.f32 %v1812, %v1812
        %v2189 = vmul.f32 %v1813, %v1813
        %v2190 = vmul.f32 %v1814, %v1814
        %v2191 = vmul.f32 %v1815, %v1815
        %v2192 = vmul.f32 %v1816, %v1816
        %v2193 = vmul.f32 %v1817, %v1817
        %v2194 = vmul.f32 %v1818, %v1818
        %v2195 = vmul.f32 %v1819, %v1819
        %v2196 = vmul.f32 %v1820, %v1820
        %v2197 = vmul.f32 %v1821, %v1821
        %v2198 = vmul.f32 %v1822, %v1822
        %v2199 = vmul.f32 %v1823, %v1823
        %v2200 = vmul.f32 %v1824, %v1824
        %v2201 = vmul.f32 %v1825, %v1825
        %v2202 = vmul.f32 %v1826, %v1826
        %v2203 = vmul.f32 %v1827, %v1827
        %v2204 = vmul.f32 %v1828, %v1828
        %v2205 = vmul.f32 %v1829, %v1829
        %v2206 = vmul.f32 %v1830, %v1830
        %v2207 = vmul.f32 %v1831, %v1831
        %v2208 = vmul.f32 %v1832, %v1832
        %v2209 = vmul.f32 %v1833, %v1833
        %v2210 = vmul.f32 %v1834, %v1834
        %v2211 = vmul.f32 %v1835, %v1835
        %v2212 = vmul.f32 %v1836, %v1836
        %v2213 = vmul.f32 %v1837, %v1837
        %v2214 = vmul.f32 %v1838, %v1838
        %v2215 = vmul.f32 %v1839, %v1839
        %v2216 = vmul.f32 %v1840, %v1840
        %v2217 = vmul.f32 %v1841, %v1841
        %v2218 = vmul.f32 %v1842, %v1842
        %v2219 = vmul.f32 %v1843, %v1843
        %v2220 = vmul.f32 %v1844, %v1844
        %v2221 = vmul.f32 %v1845, %v1845
        %v2222 = vmul.f32 %v1846, %v1846
        %v2223 = vmul.f32 %v1847, %v1847
        %v2224 = vmul.f32 %v1848, %v1848
        %v2225 = vmul.f32 %v1849, %v1849
        %v2226 = vmul.f32 %v1850, %v1850
        %v2227 = vmul.f32 %v1851, %v1851
        %v2228 = vmul.f32 %v1852, %v1852
        %v2229 = vmul.f32 %v1853, %v1853
        %v2230 = vmul.f32 %v1854, %v1854
        %v2231 = vmul.f32 %v1855, %v1855
        %v2232 = vmul.f32 %v1856, %v1856
        %v2233 = vmul.f32 %v1857, %v1857
        %v2234 = vmul.f32 %v1858, %v1858
        %v2235 = vmul.f32 %v1859, %v1859
        %v2236 = vmul.f32 %v1860, %v1860
        %v2237 = vmul.f32 %v1861, %v1861
        %v2238 = vmul.f32 %v1862, %v1862
        %v2239 = vmul.f32 %v1863, %v1863
        %v2240 = vmul.f32 %v1864, %v1864
        %v2241 = vmul.f32 %v1865, %v1865
        %v2242 = vmul.f32 %v1866, %v1866
        %v2243 = vmul.f32 %v1867, %v1867
        %v2244 = vmul.f32 %v1868, %v1868
        %v2245 = vmul.f32 %v1869, %v1869
        %v2246 = vmul.f32 %v1870, %v1870
        %v2247 = vmul.f32 %v1871, %v1871
        %v2248 = vmul.f32 %v1872, %v1872
        %v2249 = vmul.f32 %v1873, %v1873
        %v2250 = vmul.f32 %v1874, %v1874
        %v2251 = vmul.f32 %v1875, %v1875
        %v2252 = vmul.f32 %v1876, %v1876
        %v2253 = vmul.f32 %v1877, %v1877
        %v2254 = vmul.f32 %v1878, %v1878
        %v2255 = vmul.f32 %v1879, %v1879
        %v2256 = vmul.f32 %v1880, %v1880
        %v2257 = vmul.f32 %v1881, %v1881
        %v2258 = vmul.f32 %v1882, %v1882
        %v2259 = vmul.f32 %v1883, %v1883
        %v2260 = vmul.f32 %v1884, %v1884
        %v2261 = vmul.f32 %v1885, %v1885
        %v2262 = vmul.f32 %v1886, %v1886
        %v2263 = vmul.f32 %v1887, %v1887
        %v2264 = vmul.f32 %v1888, %v1888
        %v2265 = vmul.f32 %v1889, %v1889
        %v2266 = vmul.f32 %v1890, %v1890
        %v2267 = vmul.f32 %v1891, %v1891
        %v2268 = vmul.f32 %v1892, %v1892
        %v2269 = vmul.f32 %v1893, %v1893
        %v2270 = vmul.f32 %v1894, %v1894
        %v2271 = vmul.f32 %v1895, %v1895
        %v2272 = vmul.f32 %v1896, %v1896
        %v2273 = vmul.f32 %v1897, %v1897
        %v2274 = vmul.f32 %v1898, %v1898
        %v2275 = vmul.f32 %v1899, %v1899
        %v2276 = vmul.f32 %v1900, %v1900
        %v2277 = vmul.f32 %v1901, %v1901
        %v2278 = vmul.f32 %v1902, %v1902
        %v2279 = vmul.f32 %v1903, %v1903
        %v2280 = vmul.f32 %v1904, %v1904
        %v2281 = vmul.f32 %v1905, %v1905
        %v2282 = vmul.f32 %v1906, %v1906
        %v2283 = vmul.f32 %v1907, %v1907
        %v2284 = vmul.f32 %v1908, %v1908
        %v2285 = vmul.f32 %v1909, %v1909
        %v2286 = vmul.f32 %v1910, %v1910
        %v2287 = vmul.f32 %v1911, %v1911
        %v2288 = vmul.f32 %v1912, %v1912
        %v2289 = vmul.f32 %v1913, %v1913
        %v2290 = vmul.f32 %v1914, %v1914
        %v2291 = vmul.f32 %v1915, %v1915
        %v2292 = vmul.f32 %v1916, %v1916
        %v2293 = vmul.f32 %v1917, %v1917
        %v2294 = vmul.f32 %v1918, %v1918
        %v2295 = vmul.f32 %v1919, %v1919
        %v2296 = vmul.f32 %v1920, %v1920
        %v2297 = vmul.f32 %v1921, %v1921
        %v2298 = vmul.f32 %v1922, %v1922
        %v2299 = vmul.f32 %v1923, %v1923
        %v2300 = vmul.f32 %v1924, %v1924
        %v2301 = vmul.f32 %v1925, %v1925
        %v2302 = vmul.f32 %v1926, %v1926
        %v2303 = vmul.f32 %v1927, %v1927
        %v2304 = vmul.f32 %v1928, %v1928
        %v2305 = vmul.f32 %v1929, %v1929
        %v2306 = vmul.f32 %v1930, %v1930
        %v2307 = vmul.f32 %v1931, %v1931
        %v2308 = vmul.f32 %v1932, %v1932
        %v2309 = vmul.f32 %v1933, %v1933
        %v2310 = vmul.f32 %v1934, %v1934
        %v2311 = vmul.f32 %v1935, %v1935
        %v2312 = vmul.f32 %v1936, %v1936
        %v2313 = vmul.f32 %v1937, %v1937
        %v2314 = vmul.f32 %v1938, %v1938
        %v2315 = vmul.f32 %v1939, %v1939
        %v2316 = vmul.f32 %v1940, %v1940
        %v2317 = vmul.f32 %v1941, %v1941
        %v2318 = vmul.f32 %v1942, %v1942
        %v2319 = vmul.f32 %v1943, %v1943
        %v2320 = vmul.f32 %v1944, %v1944
        %v2321 = vmul.f32 %v1945, %v1945
        %v2322 = vmul.f32 %v1946, %v1946
        %v2323 = vmul.f32 %v1947, %v1947
        %v2324 = vmul.f32 %v1948, %v1948
        %v2325 = vmul.f32 %v1949, %v1949
        %v2326 = vmul.f32 %v1950, %v1950
        %v2327 = vmul.f32 %v1951, %v1951
        %v2328 = vmul.f32 %v1952, %v1952
        %v2329 = vmul.f32 %v1953, %v1953
        %v2330 = vmul.f32 %v1954, %v1954
        %v2331 = vmul.f32 %v1955, %v1955
        %v2332 = vmul.f32 %v1956, %v1956
        %v2333 = vmul.f32 %v1957, %v1957
        %v2334 = vmul.f32 %v1958, %v1958
        %v2335 = vmul.f32 %v1959, %v1959
        %v2336 = vmul.f32 %v1960, %v1960
        %v2337 = vmul.f32 %v1961, %v1961
        %v2338 = vmul.f32 %v1962, %v1962
        %v2339 = vmul.f32 %v1963, %v1963
        %v2340 = vmul.f32 %v1964, %v1964
        %v2341 = vmul.f32 %v1965, %v1965
        %v2342 = vmul.f32 %v1966, %v1966
        %v2343 = vmul.f32 %v1967, %v1967
        %v2344 = vmul.f32 %v1968, %v1968
        %v2345 = vmul.f32 %v1969, %v1969
        %v2346 = vmul.f32 %v1970, %v1970
        %v2347 = vmul.f32 %v1971, %v1971
        %v2348 = vmul.f32 %v1972, %v1972
        %v2349 = vmul.f32 %v1973, %v1973
        %v2350 = vmul.f32 %v1974, %v1974
        %v2351 = vmul.f32 %v1975, %v1975
        %v2352 = vmul.f32 %v1976, %v1976
        %v2353 = vmul.f32 %v1977, %v1977
        %v2354 = vmul.f32 %v1978, %v1978
        %v2355 = vmul.f32 %v1979, %v1979
        %v2356 = vmul.f32 %v1980, %v1980
        %v2357 = vmul.f32 %v1981, %v1981
        %v2358 = vmul.f32 %v1982, %v1982
        %vm2359 = vcmask 261120
        %v2360 = vsel %vm2359, %v1984, 0.0
        %v2361 = vadd.f32 %v1983, %v2360
        %2362 = vadd.xlane.f32.xlu0 %v2361
        %v2363 = vpop.xlane.xlu0 %2362
        %v2364 = vsel %vm2359, %v1986, 0.0
        %v2365 = vadd.f32 %v1985, %v2364
        %2366 = vadd.xlane.f32.xlu0 %v2365
        %v2367 = vpop.xlane.xlu0 %2366
        %v2368 = vsel %vm2359, %v1988, 0.0
        %v2369 = vadd.f32 %v1987, %v2368
        %2370 = vadd.xlane.f32.xlu0 %v2369
        %v2371 = vpop.xlane.xlu0 %2370
        %v2372 = vsel %vm2359, %v1990, 0.0
        %v2373 = vadd.f32 %v1989, %v2372
        %2374 = vadd.xlane.f32.xlu0 %v2373
        %v2375 = vpop.xlane.xlu0 %2374
        %v2376 = vsel %vm2359, %v1992, 0.0
        %v2377 = vadd.f32 %v1991, %v2376
        %2378 = vadd.xlane.f32.xlu0 %v2377
        %v2379 = vpop.xlane.xlu0 %2378
        %v2380 = vsel %vm2359, %v1994, 0.0
        %v2381 = vadd.f32 %v1993, %v2380
        %2382 = vadd.xlane.f32.xlu0 %v2381
        %v2383 = vpop.xlane.xlu0 %2382
        %v2384 = vsel %vm2359, %v1996, 0.0
        %v2385 = vadd.f32 %v1995, %v2384
        %2386 = vadd.xlane.f32.xlu0 %v2385
        %v2387 = vpop.xlane.xlu0 %2386
        %v2388 = vsel %vm2359, %v1998, 0.0
        %v2389 = vadd.f32 %v1997, %v2388
        %2390 = vadd.xlane.f32.xlu0 %v2389
        %v2391 = vpop.xlane.xlu0 %2390
        %v2392 = vsel %vm2359, %v2000, 0.0
        %v2393 = vadd.f32 %v1999, %v2392
        %2394 = vadd.xlane.f32.xlu0 %v2393
        %v2395 = vpop.xlane.xlu0 %2394
        %v2396 = vsel %vm2359, %v2002, 0.0
        %v2397 = vadd.f32 %v2001, %v2396
        %2398 = vadd.xlane.f32.xlu0 %v2397
        %v2399 = vpop.xlane.xlu0 %2398
        %v2400 = vsel %vm2359, %v2004, 0.0
        %v2401 = vadd.f32 %v2003, %v2400
        %2402 = vadd.xlane.f32.xlu0 %v2401
        %v2403 = vpop.xlane.xlu0 %2402
        %v2404 = vsel %vm2359, %v2006, 0.0
        %v2405 = vadd.f32 %v2005, %v2404
        %2406 = vadd.xlane.f32.xlu0 %v2405
        %v2407 = vpop.xlane.xlu0 %2406
        %v2408 = vsel %vm2359, %v2008, 0.0
        %v2409 = vadd.f32 %v2007, %v2408
        %2410 = vadd.xlane.f32.xlu0 %v2409
        %v2411 = vpop.xlane.xlu0 %2410
        %v2412 = vsel %vm2359, %v2010, 0.0
        %v2413 = vadd.f32 %v2009, %v2412
        %2414 = vadd.xlane.f32.xlu0 %v2413
        %v2415 = vpop.xlane.xlu0 %2414
        %v2416 = vsel %vm2359, %v2012, 0.0
        %v2417 = vadd.f32 %v2011, %v2416
        %2418 = vadd.xlane.f32.xlu0 %v2417
        %v2419 = vpop.xlane.xlu0 %2418
        %v2420 = vsel %vm2359, %v2014, 0.0
        %v2421 = vadd.f32 %v2013, %v2420
        %2422 = vadd.xlane.f32.xlu0 %v2421
        %v2423 = vpop.xlane.xlu0 %2422
        %v2424 = vsel %vm2359, %v2016, 0.0
        %v2425 = vadd.f32 %v2015, %v2424
        %2426 = vadd.xlane.f32.xlu0 %v2425
        %v2427 = vpop.xlane.xlu0 %2426
        %v2428 = vsel %vm2359, %v2018, 0.0
        %v2429 = vadd.f32 %v2017, %v2428
        %2430 = vadd.xlane.f32.xlu0 %v2429
        %v2431 = vpop.xlane.xlu0 %2430
        %v2432 = vsel %vm2359, %v2020, 0.0
        %v2433 = vadd.f32 %v2019, %v2432
        %2434 = vadd.xlane.f32.xlu0 %v2433
        %v2435 = vpop.xlane.xlu0 %2434
        %v2436 = vsel %vm2359, %v2022, 0.0
        %v2437 = vadd.f32 %v2021, %v2436
        %2438 = vadd.xlane.f32.xlu0 %v2437
        %v2439 = vpop.xlane.xlu0 %2438
        %v2440 = vsel %vm2359, %v2024, 0.0
        %v2441 = vadd.f32 %v2023, %v2440
        %2442 = vadd.xlane.f32.xlu0 %v2441
        %v2443 = vpop.xlane.xlu0 %2442
        %v2444 = vsel %vm2359, %v2026, 0.0
        %v2445 = vadd.f32 %v2025, %v2444
        %2446 = vadd.xlane.f32.xlu0 %v2445
        %v2447 = vpop.xlane.xlu0 %2446
        %v2448 = vsel %vm2359, %v2028, 0.0
        %v2449 = vadd.f32 %v2027, %v2448
        %2450 = vadd.xlane.f32.xlu0 %v2449
        %v2451 = vpop.xlane.xlu0 %2450
        %v2452 = vsel %vm2359, %v2030, 0.0
        %v2453 = vadd.f32 %v2029, %v2452
        %2454 = vadd.xlane.f32.xlu0 %v2453
        %v2455 = vpop.xlane.xlu0 %2454
        %v2456 = vsel %vm2359, %v2032, 0.0
        %v2457 = vadd.f32 %v2031, %v2456
        %2458 = vadd.xlane.f32.xlu0 %v2457
        %v2459 = vpop.xlane.xlu0 %2458
        %v2460 = vsel %vm2359, %v2034, 0.0
        %v2461 = vadd.f32 %v2033, %v2460
        %2462 = vadd.xlane.f32.xlu0 %v2461
        %v2463 = vpop.xlane.xlu0 %2462
        %v2464 = vsel %vm2359, %v2036, 0.0
        %v2465 = vadd.f32 %v2035, %v2464
        %2466 = vadd.xlane.f32.xlu0 %v2465
        %v2467 = vpop.xlane.xlu0 %2466
        %v2468 = vsel %vm2359, %v2038, 0.0
        %v2469 = vadd.f32 %v2037, %v2468
        %2470 = vadd.xlane.f32.xlu0 %v2469
        %v2471 = vpop.xlane.xlu0 %2470
        %v2472 = vsel %vm2359, %v2040, 0.0
        %v2473 = vadd.f32 %v2039, %v2472
        %2474 = vadd.xlane.f32.xlu0 %v2473
        %v2475 = vpop.xlane.xlu0 %2474
        %v2476 = vsel %vm2359, %v2042, 0.0
        %v2477 = vadd.f32 %v2041, %v2476
        %2478 = vadd.xlane.f32.xlu0 %v2477
        %v2479 = vpop.xlane.xlu0 %2478
        %v2480 = vsel %vm2359, %v2044, 0.0
        %v2481 = vadd.f32 %v2043, %v2480
        %2482 = vadd.xlane.f32.xlu0 %v2481
        %v2483 = vpop.xlane.xlu0 %2482
        %v2484 = vsel %vm2359, %v2046, 0.0
        %v2485 = vadd.f32 %v2045, %v2484
        %2486 = vadd.xlane.f32.xlu0 %v2485
        %v2487 = vpop.xlane.xlu0 %2486
        %v2488 = vsel %vm2359, %v2048, 0.0
        %v2489 = vadd.f32 %v2047, %v2488
        %2490 = vadd.xlane.f32.xlu0 %v2489
        %v2491 = vpop.xlane.xlu0 %2490
        %v2492 = vsel %vm2359, %v2050, 0.0
        %v2493 = vadd.f32 %v2049, %v2492
        %2494 = vadd.xlane.f32.xlu0 %v2493
        %v2495 = vpop.xlane.xlu0 %2494
        %v2496 = vsel %vm2359, %v2052, 0.0
        %v2497 = vadd.f32 %v2051, %v2496
        %2498 = vadd.xlane.f32.xlu0 %v2497
        %v2499 = vpop.xlane.xlu0 %2498
        %v2500 = vsel %vm2359, %v2054, 0.0
        %v2501 = vadd.f32 %v2053, %v2500
        %2502 = vadd.xlane.f32.xlu0 %v2501
        %v2503 = vpop.xlane.xlu0 %2502
        %v2504 = vsel %vm2359, %v2056, 0.0
        %v2505 = vadd.f32 %v2055, %v2504
        %2506 = vadd.xlane.f32.xlu0 %v2505
        %v2507 = vpop.xlane.xlu0 %2506
        %v2508 = vsel %vm2359, %v2058, 0.0
        %v2509 = vadd.f32 %v2057, %v2508
        %2510 = vadd.xlane.f32.xlu0 %v2509
        %v2511 = vpop.xlane.xlu0 %2510
        %v2512 = vsel %vm2359, %v2060, 0.0
        %v2513 = vadd.f32 %v2059, %v2512
        %2514 = vadd.xlane.f32.xlu0 %v2513
        %v2515 = vpop.xlane.xlu0 %2514
        %v2516 = vsel %vm2359, %v2062, 0.0
        %v2517 = vadd.f32 %v2061, %v2516
        %2518 = vadd.xlane.f32.xlu0 %v2517
        %v2519 = vpop.xlane.xlu0 %2518
        %v2520 = vsel %vm2359, %v2064, 0.0
        %v2521 = vadd.f32 %v2063, %v2520
        %2522 = vadd.xlane.f32.xlu0 %v2521
        %v2523 = vpop.xlane.xlu0 %2522
        %v2524 = vsel %vm2359, %v2066, 0.0
        %v2525 = vadd.f32 %v2065, %v2524
        %2526 = vadd.xlane.f32.xlu0 %v2525
        %v2527 = vpop.xlane.xlu0 %2526
        %v2528 = vsel %vm2359, %v2068, 0.0
        %v2529 = vadd.f32 %v2067, %v2528
        %2530 = vadd.xlane.f32.xlu0 %v2529
        %v2531 = vpop.xlane.xlu0 %2530
        %v2532 = vsel %vm2359, %v2070, 0.0
        %v2533 = vadd.f32 %v2069, %v2532
        %2534 = vadd.xlane.f32.xlu0 %v2533
        %v2535 = vpop.xlane.xlu0 %2534
        %v2536 = vsel %vm2359, %v2072, 0.0
        %v2537 = vadd.f32 %v2071, %v2536
        %2538 = vadd.xlane.f32.xlu0 %v2537
        %v2539 = vpop.xlane.xlu0 %2538
        %v2540 = vsel %vm2359, %v2074, 0.0
        %v2541 = vadd.f32 %v2073, %v2540
        %2542 = vadd.xlane.f32.xlu0 %v2541
        %v2543 = vpop.xlane.xlu0 %2542
        %v2544 = vsel %vm2359, %v2076, 0.0
        %v2545 = vadd.f32 %v2075, %v2544
        %2546 = vadd.xlane.f32.xlu0 %v2545
        %v2547 = vpop.xlane.xlu0 %2546
        %v2548 = vsel %vm2359, %v2078, 0.0
        %v2549 = vadd.f32 %v2077, %v2548
        %2550 = vadd.xlane.f32.xlu0 %v2549
        %v2551 = vpop.xlane.xlu0 %2550
        %v2552 = vsel %vm2359, %v2080, 0.0
        %v2553 = vadd.f32 %v2079, %v2552
        %2554 = vadd.xlane.f32.xlu0 %v2553
        %v2555 = vpop.xlane.xlu0 %2554
        %v2556 = vsel %vm2359, %v2082, 0.0
        %v2557 = vadd.f32 %v2081, %v2556
        %2558 = vadd.xlane.f32.xlu0 %v2557
        %v2559 = vpop.xlane.xlu0 %2558
        %v2560 = vsel %vm2359, %v2084, 0.0
        %v2561 = vadd.f32 %v2083, %v2560
        %2562 = vadd.xlane.f32.xlu0 %v2561
        %v2563 = vpop.xlane.xlu0 %2562
        %v2564 = vsel %vm2359, %v2086, 0.0
        %v2565 = vadd.f32 %v2085, %v2564
        %2566 = vadd.xlane.f32.xlu0 %v2565
        %v2567 = vpop.xlane.xlu0 %2566
        %v2568 = vsel %vm2359, %v2088, 0.0
        %v2569 = vadd.f32 %v2087, %v2568
        %2570 = vadd.xlane.f32.xlu0 %v2569
        %v2571 = vpop.xlane.xlu0 %2570
        %v2572 = vsel %vm2359, %v2090, 0.0
        %v2573 = vadd.f32 %v2089, %v2572
        %2574 = vadd.xlane.f32.xlu0 %v2573
        %v2575 = vpop.xlane.xlu0 %2574
        %v2576 = vsel %vm2359, %v2092, 0.0
        %v2577 = vadd.f32 %v2091, %v2576
        %2578 = vadd.xlane.f32.xlu0 %v2577
        %v2579 = vpop.xlane.xlu0 %2578
        %v2580 = vsel %vm2359, %v2094, 0.0
        %v2581 = vadd.f32 %v2093, %v2580
        %2582 = vadd.xlane.f32.xlu0 %v2581
        %v2583 = vpop.xlane.xlu0 %2582
        %v2584 = vsel %vm2359, %v2096, 0.0
        %v2585 = vadd.f32 %v2095, %v2584
        %2586 = vadd.xlane.f32.xlu0 %v2585
        %v2587 = vpop.xlane.xlu0 %2586
        %v2588 = vsel %vm2359, %v2098, 0.0
        %v2589 = vadd.f32 %v2097, %v2588
        %2590 = vadd.xlane.f32.xlu0 %v2589
        %v2591 = vpop.xlane.xlu0 %2590
        %v2592 = vsel %vm2359, %v2100, 0.0
        %v2593 = vadd.f32 %v2099, %v2592
        %2594 = vadd.xlane.f32.xlu0 %v2593
        %v2595 = vpop.xlane.xlu0 %2594
        %v2596 = vsel %vm2359, %v2102, 0.0
        %v2597 = vadd.f32 %v2101, %v2596
        %2598 = vadd.xlane.f32.xlu0 %v2597
        %v2599 = vpop.xlane.xlu0 %2598
        %v2600 = vsel %vm2359, %v2104, 0.0
        %v2601 = vadd.f32 %v2103, %v2600
        %2602 = vadd.xlane.f32.xlu0 %v2601
        %v2603 = vpop.xlane.xlu0 %2602
        %v2604 = vsel %vm2359, %v2106, 0.0
        %v2605 = vadd.f32 %v2105, %v2604
        %2606 = vadd.xlane.f32.xlu0 %v2605
        %v2607 = vpop.xlane.xlu0 %2606
        %v2608 = vsel %vm2359, %v2108, 0.0
        %v2609 = vadd.f32 %v2107, %v2608
        %2610 = vadd.xlane.f32.xlu0 %v2609
        %v2611 = vpop.xlane.xlu0 %2610
        %v2612 = vsel %vm2359, %v2110, 0.0
        %v2613 = vadd.f32 %v2109, %v2612
        %2614 = vadd.xlane.f32.xlu0 %v2613
        %v2615 = vpop.xlane.xlu0 %2614
        %v2616 = vsel %vm2359, %v2112, 0.0
        %v2617 = vadd.f32 %v2111, %v2616
        %2618 = vadd.xlane.f32.xlu0 %v2617
        %v2619 = vpop.xlane.xlu0 %2618
        %v2620 = vsel %vm2359, %v2114, 0.0
        %v2621 = vadd.f32 %v2113, %v2620
        %2622 = vadd.xlane.f32.xlu0 %v2621
        %v2623 = vpop.xlane.xlu0 %2622
        %v2624 = vsel %vm2359, %v2116, 0.0
        %v2625 = vadd.f32 %v2115, %v2624
        %2626 = vadd.xlane.f32.xlu0 %v2625
        %v2627 = vpop.xlane.xlu0 %2626
        %v2628 = vsel %vm2359, %v2118, 0.0
        %v2629 = vadd.f32 %v2117, %v2628
        %2630 = vadd.xlane.f32.xlu0 %v2629
        %v2631 = vpop.xlane.xlu0 %2630
        %v2632 = vsel %vm2359, %v2120, 0.0
        %v2633 = vadd.f32 %v2119, %v2632
        %2634 = vadd.xlane.f32.xlu0 %v2633
        %v2635 = vpop.xlane.xlu0 %2634
        %v2636 = vsel %vm2359, %v2122, 0.0
        %v2637 = vadd.f32 %v2121, %v2636
        %2638 = vadd.xlane.f32.xlu0 %v2637
        %v2639 = vpop.xlane.xlu0 %2638
        %v2640 = vsel %vm2359, %v2124, 0.0
        %v2641 = vadd.f32 %v2123, %v2640
        %2642 = vadd.xlane.f32.xlu0 %v2641
        %v2643 = vpop.xlane.xlu0 %2642
        %v2644 = vsel %vm2359, %v2126, 0.0
        %v2645 = vadd.f32 %v2125, %v2644
        %2646 = vadd.xlane.f32.xlu0 %v2645
        %v2647 = vpop.xlane.xlu0 %2646
        %v2648 = vsel %vm2359, %v2128, 0.0
        %v2649 = vadd.f32 %v2127, %v2648
        %2650 = vadd.xlane.f32.xlu0 %v2649
        %v2651 = vpop.xlane.xlu0 %2650
        %v2652 = vsel %vm2359, %v2130, 0.0
        %v2653 = vadd.f32 %v2129, %v2652
        %2654 = vadd.xlane.f32.xlu0 %v2653
        %v2655 = vpop.xlane.xlu0 %2654
        %v2656 = vsel %vm2359, %v2132, 0.0
        %v2657 = vadd.f32 %v2131, %v2656
        %2658 = vadd.xlane.f32.xlu0 %v2657
        %v2659 = vpop.xlane.xlu0 %2658
        %v2660 = vsel %vm2359, %v2134, 0.0
        %v2661 = vadd.f32 %v2133, %v2660
        %2662 = vadd.xlane.f32.xlu0 %v2661
        %v2663 = vpop.xlane.xlu0 %2662
        %v2664 = vsel %vm2359, %v2136, 0.0
        %v2665 = vadd.f32 %v2135, %v2664
        %2666 = vadd.xlane.f32.xlu0 %v2665
        %v2667 = vpop.xlane.xlu0 %2666
        %v2668 = vsel %vm2359, %v2138, 0.0
        %v2669 = vadd.f32 %v2137, %v2668
        %2670 = vadd.xlane.f32.xlu0 %v2669
        %v2671 = vpop.xlane.xlu0 %2670
        %v2672 = vsel %vm2359, %v2140, 0.0
        %v2673 = vadd.f32 %v2139, %v2672
        %2674 = vadd.xlane.f32.xlu0 %v2673
        %v2675 = vpop.xlane.xlu0 %2674
        %v2676 = vsel %vm2359, %v2142, 0.0
        %v2677 = vadd.f32 %v2141, %v2676
        %2678 = vadd.xlane.f32.xlu0 %v2677
        %v2679 = vpop.xlane.xlu0 %2678
        %v2680 = vsel %vm2359, %v2144, 0.0
        %v2681 = vadd.f32 %v2143, %v2680
        %2682 = vadd.xlane.f32.xlu0 %v2681
        %v2683 = vpop.xlane.xlu0 %2682
        %v2684 = vsel %vm2359, %v2146, 0.0
        %v2685 = vadd.f32 %v2145, %v2684
        %2686 = vadd.xlane.f32.xlu0 %v2685
        %v2687 = vpop.xlane.xlu0 %2686
        %v2688 = vsel %vm2359, %v2148, 0.0
        %v2689 = vadd.f32 %v2147, %v2688
        %2690 = vadd.xlane.f32.xlu0 %v2689
        %v2691 = vpop.xlane.xlu0 %2690
        %v2692 = vsel %vm2359, %v2150, 0.0
        %v2693 = vadd.f32 %v2149, %v2692
        %2694 = vadd.xlane.f32.xlu0 %v2693
        %v2695 = vpop.xlane.xlu0 %2694
        %v2696 = vsel %vm2359, %v2152, 0.0
        %v2697 = vadd.f32 %v2151, %v2696
        %2698 = vadd.xlane.f32.xlu0 %v2697
        %v2699 = vpop.xlane.xlu0 %2698
        %v2700 = vsel %vm2359, %v2154, 0.0
        %v2701 = vadd.f32 %v2153, %v2700
        %2702 = vadd.xlane.f32.xlu0 %v2701
        %v2703 = vpop.xlane.xlu0 %2702
        %v2704 = vsel %vm2359, %v2156, 0.0
        %v2705 = vadd.f32 %v2155, %v2704
        %2706 = vadd.xlane.f32.xlu0 %v2705
        %v2707 = vpop.xlane.xlu0 %2706
        %v2708 = vsel %vm2359, %v2158, 0.0
        %v2709 = vadd.f32 %v2157, %v2708
        %2710 = vadd.xlane.f32.xlu0 %v2709
        %v2711 = vpop.xlane.xlu0 %2710
        %v2712 = vsel %vm2359, %v2160, 0.0
        %v2713 = vadd.f32 %v2159, %v2712
        %2714 = vadd.xlane.f32.xlu0 %v2713
        %v2715 = vpop.xlane.xlu0 %2714
        %v2716 = vsel %vm2359, %v2162, 0.0
        %v2717 = vadd.f32 %v2161, %v2716
        %2718 = vadd.xlane.f32.xlu0 %v2717
        %v2719 = vpop.xlane.xlu0 %2718
        %v2720 = vsel %vm2359, %v2164, 0.0
        %v2721 = vadd.f32 %v2163, %v2720
        %2722 = vadd.xlane.f32.xlu0 %v2721
        %v2723 = vpop.xlane.xlu0 %2722
        %v2724 = vsel %vm2359, %v2166, 0.0
        %v2725 = vadd.f32 %v2165, %v2724
        %2726 = vadd.xlane.f32.xlu0 %v2725
        %v2727 = vpop.xlane.xlu0 %2726
        %v2728 = vsel %vm2359, %v2168, 0.0
        %v2729 = vadd.f32 %v2167, %v2728
        %2730 = vadd.xlane.f32.xlu0 %v2729
        %v2731 = vpop.xlane.xlu0 %2730
        %v2732 = vsel %vm2359, %v2170, 0.0
        %v2733 = vadd.f32 %v2169, %v2732
        %2734 = vadd.xlane.f32.xlu0 %v2733
        %v2735 = vpop.xlane.xlu0 %2734
        %v2736 = vsel %vm2359, %v2172, 0.0
        %v2737 = vadd.f32 %v2171, %v2736
        %2738 = vadd.xlane.f32.xlu0 %v2737
        %v2739 = vpop.xlane.xlu0 %2738
        %v2740 = vsel %vm2359, %v2174, 0.0
        %v2741 = vadd.f32 %v2173, %v2740
        %2742 = vadd.xlane.f32.xlu0 %v2741
        %v2743 = vpop.xlane.xlu0 %2742
        %v2744 = vsel %vm2359, %v2176, 0.0
        %v2745 = vadd.f32 %v2175, %v2744
        %2746 = vadd.xlane.f32.xlu0 %v2745
        %v2747 = vpop.xlane.xlu0 %2746
        %v2748 = vsel %vm2359, %v2178, 0.0
        %v2749 = vadd.f32 %v2177, %v2748
        %2750 = vadd.xlane.f32.xlu0 %v2749
        %v2751 = vpop.xlane.xlu0 %2750
        %v2752 = vsel %vm2359, %v2180, 0.0
        %v2753 = vadd.f32 %v2179, %v2752
        %2754 = vadd.xlane.f32.xlu0 %v2753
        %v2755 = vpop.xlane.xlu0 %2754
        %v2756 = vsel %vm2359, %v2182, 0.0
        %v2757 = vadd.f32 %v2181, %v2756
        %2758 = vadd.xlane.f32.xlu0 %v2757
        %v2759 = vpop.xlane.xlu0 %2758
        %v2760 = vsel %vm2359, %v2184, 0.0
        %v2761 = vadd.f32 %v2183, %v2760
        %2762 = vadd.xlane.f32.xlu0 %v2761
        %v2763 = vpop.xlane.xlu0 %2762
        %v2764 = vsel %vm2359, %v2186, 0.0
        %v2765 = vadd.f32 %v2185, %v2764
        %2766 = vadd.xlane.f32.xlu0 %v2765
        %v2767 = vpop.xlane.xlu0 %2766
        %v2768 = vsel %vm2359, %v2188, 0.0
        %v2769 = vadd.f32 %v2187, %v2768
        %2770 = vadd.xlane.f32.xlu0 %v2769
        %v2771 = vpop.xlane.xlu0 %2770
        %v2772 = vsel %vm2359, %v2190, 0.0
        %v2773 = vadd.f32 %v2189, %v2772
        %2774 = vadd.xlane.f32.xlu0 %v2773
        %v2775 = vpop.xlane.xlu0 %2774
        %v2776 = vsel %vm2359, %v2192, 0.0
        %v2777 = vadd.f32 %v2191, %v2776
        %2778 = vadd.xlane.f32.xlu0 %v2777
        %v2779 = vpop.xlane.xlu0 %2778
        %v2780 = vsel %vm2359, %v2194, 0.0
        %v2781 = vadd.f32 %v2193, %v2780
        %2782 = vadd.xlane.f32.xlu0 %v2781
        %v2783 = vpop.xlane.xlu0 %2782
        %v2784 = vsel %vm2359, %v2196, 0.0
        %v2785 = vadd.f32 %v2195, %v2784
        %2786 = vadd.xlane.f32.xlu0 %v2785
        %v2787 = vpop.xlane.xlu0 %2786
        %v2788 = vsel %vm2359, %v2198, 0.0
        %v2789 = vadd.f32 %v2197, %v2788
        %2790 = vadd.xlane.f32.xlu0 %v2789
        %v2791 = vpop.xlane.xlu0 %2790
        %v2792 = vsel %vm2359, %v2200, 0.0
        %v2793 = vadd.f32 %v2199, %v2792
        %2794 = vadd.xlane.f32.xlu0 %v2793
        %v2795 = vpop.xlane.xlu0 %2794
        %v2796 = vsel %vm2359, %v2202, 0.0
        %v2797 = vadd.f32 %v2201, %v2796
        %2798 = vadd.xlane.f32.xlu0 %v2797
        %v2799 = vpop.xlane.xlu0 %2798
        %v2800 = vsel %vm2359, %v2204, 0.0
        %v2801 = vadd.f32 %v2203, %v2800
        %2802 = vadd.xlane.f32.xlu0 %v2801
        %v2803 = vpop.xlane.xlu0 %2802
        %v2804 = vsel %vm2359, %v2206, 0.0
        %v2805 = vadd.f32 %v2205, %v2804
        %2806 = vadd.xlane.f32.xlu0 %v2805
        %v2807 = vpop.xlane.xlu0 %2806
        %v2808 = vsel %vm2359, %v2208, 0.0
        %v2809 = vadd.f32 %v2207, %v2808
        %2810 = vadd.xlane.f32.xlu0 %v2809
        %v2811 = vpop.xlane.xlu0 %2810
        %v2812 = vsel %vm2359, %v2210, 0.0
        %v2813 = vadd.f32 %v2209, %v2812
        %2814 = vadd.xlane.f32.xlu0 %v2813
        %v2815 = vpop.xlane.xlu0 %2814
        %v2816 = vsel %vm2359, %v2212, 0.0
        %v2817 = vadd.f32 %v2211, %v2816
        %2818 = vadd.xlane.f32.xlu0 %v2817
        %v2819 = vpop.xlane.xlu0 %2818
        %v2820 = vsel %vm2359, %v2214, 0.0
        %v2821 = vadd.f32 %v2213, %v2820
        %2822 = vadd.xlane.f32.xlu0 %v2821
        %v2823 = vpop.xlane.xlu0 %2822
        %v2824 = vsel %vm2359, %v2216, 0.0
        %v2825 = vadd.f32 %v2215, %v2824
        %2826 = vadd.xlane.f32.xlu0 %v2825
        %v2827 = vpop.xlane.xlu0 %2826
        %v2828 = vsel %vm2359, %v2218, 0.0
        %v2829 = vadd.f32 %v2217, %v2828
        %2830 = vadd.xlane.f32.xlu0 %v2829
        %v2831 = vpop.xlane.xlu0 %2830
        %v2832 = vsel %vm2359, %v2220, 0.0
        %v2833 = vadd.f32 %v2219, %v2832
        %2834 = vadd.xlane.f32.xlu0 %v2833
        %v2835 = vpop.xlane.xlu0 %2834
        %v2836 = vsel %vm2359, %v2222, 0.0
        %v2837 = vadd.f32 %v2221, %v2836
        %2838 = vadd.xlane.f32.xlu0 %v2837
        %v2839 = vpop.xlane.xlu0 %2838
        %v2840 = vsel %vm2359, %v2224, 0.0
        %v2841 = vadd.f32 %v2223, %v2840
        %2842 = vadd.xlane.f32.xlu0 %v2841
        %v2843 = vpop.xlane.xlu0 %2842
        %v2844 = vsel %vm2359, %v2226, 0.0
        %v2845 = vadd.f32 %v2225, %v2844
        %2846 = vadd.xlane.f32.xlu0 %v2845
        %v2847 = vpop.xlane.xlu0 %2846
        %v2848 = vsel %vm2359, %v2228, 0.0
        %v2849 = vadd.f32 %v2227, %v2848
        %2850 = vadd.xlane.f32.xlu0 %v2849
        %v2851 = vpop.xlane.xlu0 %2850
        %v2852 = vsel %vm2359, %v2230, 0.0
        %v2853 = vadd.f32 %v2229, %v2852
        %2854 = vadd.xlane.f32.xlu0 %v2853
        %v2855 = vpop.xlane.xlu0 %2854
        %v2856 = vsel %vm2359, %v2232, 0.0
        %v2857 = vadd.f32 %v2231, %v2856
        %2858 = vadd.xlane.f32.xlu0 %v2857
        %v2859 = vpop.xlane.xlu0 %2858
        %v2860 = vsel %vm2359, %v2234, 0.0
        %v2861 = vadd.f32 %v2233, %v2860
        %2862 = vadd.xlane.f32.xlu0 %v2861
        %v2863 = vpop.xlane.xlu0 %2862
        %v2864 = vsel %vm2359, %v2236, 0.0
        %v2865 = vadd.f32 %v2235, %v2864
        %2866 = vadd.xlane.f32.xlu0 %v2865
        %v2867 = vpop.xlane.xlu0 %2866
        %v2868 = vsel %vm2359, %v2238, 0.0
        %v2869 = vadd.f32 %v2237, %v2868
        %2870 = vadd.xlane.f32.xlu0 %v2869
        %v2871 = vpop.xlane.xlu0 %2870
        %v2872 = vsel %vm2359, %v2240, 0.0
        %v2873 = vadd.f32 %v2239, %v2872
        %2874 = vadd.xlane.f32.xlu0 %v2873
        %v2875 = vpop.xlane.xlu0 %2874
        %v2876 = vsel %vm2359, %v2242, 0.0
        %v2877 = vadd.f32 %v2241, %v2876
        %2878 = vadd.xlane.f32.xlu0 %v2877
        %v2879 = vpop.xlane.xlu0 %2878
        %v2880 = vsel %vm2359, %v2244, 0.0
        %v2881 = vadd.f32 %v2243, %v2880
        %2882 = vadd.xlane.f32.xlu0 %v2881
        %v2883 = vpop.xlane.xlu0 %2882
        %v2884 = vsel %vm2359, %v2246, 0.0
        %v2885 = vadd.f32 %v2245, %v2884
        %2886 = vadd.xlane.f32.xlu0 %v2885
        %v2887 = vpop.xlane.xlu0 %2886
        %v2888 = vsel %vm2359, %v2248, 0.0
        %v2889 = vadd.f32 %v2247, %v2888
        %2890 = vadd.xlane.f32.xlu0 %v2889
        %v2891 = vpop.xlane.xlu0 %2890
        %v2892 = vsel %vm2359, %v2250, 0.0
        %v2893 = vadd.f32 %v2249, %v2892
        %2894 = vadd.xlane.f32.xlu0 %v2893
        %v2895 = vpop.xlane.xlu0 %2894
        %v2896 = vsel %vm2359, %v2252, 0.0
        %v2897 = vadd.f32 %v2251, %v2896
        %2898 = vadd.xlane.f32.xlu0 %v2897
        %v2899 = vpop.xlane.xlu0 %2898
        %v2900 = vsel %vm2359, %v2254, 0.0
        %v2901 = vadd.f32 %v2253, %v2900
        %2902 = vadd.xlane.f32.xlu0 %v2901
        %v2903 = vpop.xlane.xlu0 %2902
        %v2904 = vsel %vm2359, %v2256, 0.0
        %v2905 = vadd.f32 %v2255, %v2904
        %2906 = vadd.xlane.f32.xlu0 %v2905
        %v2907 = vpop.xlane.xlu0 %2906
        %v2908 = vsel %vm2359, %v2258, 0.0
        %v2909 = vadd.f32 %v2257, %v2908
        %2910 = vadd.xlane.f32.xlu0 %v2909
        %v2911 = vpop.xlane.xlu0 %2910
        %v2912 = vsel %vm2359, %v2260, 0.0
        %v2913 = vadd.f32 %v2259, %v2912
        %2914 = vadd.xlane.f32.xlu0 %v2913
        %v2915 = vpop.xlane.xlu0 %2914
        %v2916 = vsel %vm2359, %v2262, 0.0
        %v2917 = vadd.f32 %v2261, %v2916
        %2918 = vadd.xlane.f32.xlu0 %v2917
        %v2919 = vpop.xlane.xlu0 %2918
        %v2920 = vsel %vm2359, %v2264, 0.0
        %v2921 = vadd.f32 %v2263, %v2920
        %2922 = vadd.xlane.f32.xlu0 %v2921
        %v2923 = vpop.xlane.xlu0 %2922
        %v2924 = vsel %vm2359, %v2266, 0.0
        %v2925 = vadd.f32 %v2265, %v2924
        %2926 = vadd.xlane.f32.xlu0 %v2925
        %v2927 = vpop.xlane.xlu0 %2926
        %v2928 = vsel %vm2359, %v2268, 0.0
        %v2929 = vadd.f32 %v2267, %v2928
        %2930 = vadd.xlane.f32.xlu0 %v2929
        %v2931 = vpop.xlane.xlu0 %2930
        %v2932 = vsel %vm2359, %v2270, 0.0
        %v2933 = vadd.f32 %v2269, %v2932
        %2934 = vadd.xlane.f32.xlu0 %v2933
        %v2935 = vpop.xlane.xlu0 %2934
        %v2936 = vsel %vm2359, %v2272, 0.0
        %v2937 = vadd.f32 %v2271, %v2936
        %2938 = vadd.xlane.f32.xlu0 %v2937
        %v2939 = vpop.xlane.xlu0 %2938
        %v2940 = vsel %vm2359, %v2274, 0.0
        %v2941 = vadd.f32 %v2273, %v2940
        %2942 = vadd.xlane.f32.xlu0 %v2941
        %v2943 = vpop.xlane.xlu0 %2942
        %v2944 = vsel %vm2359, %v2276, 0.0
        %v2945 = vadd.f32 %v2275, %v2944
        %2946 = vadd.xlane.f32.xlu0 %v2945
        %v2947 = vpop.xlane.xlu0 %2946
        %v2948 = vsel %vm2359, %v2278, 0.0
        %v2949 = vadd.f32 %v2277, %v2948
        %2950 = vadd.xlane.f32.xlu0 %v2949
        %v2951 = vpop.xlane.xlu0 %2950
        %v2952 = vsel %vm2359, %v2280, 0.0
        %v2953 = vadd.f32 %v2279, %v2952
        %2954 = vadd.xlane.f32.xlu0 %v2953
        %v2955 = vpop.xlane.xlu0 %2954
        %v2956 = vsel %vm2359, %v2282, 0.0
        %v2957 = vadd.f32 %v2281, %v2956
        %2958 = vadd.xlane.f32.xlu0 %v2957
        %v2959 = vpop.xlane.xlu0 %2958
        %v2960 = vsel %vm2359, %v2284, 0.0
        %v2961 = vadd.f32 %v2283, %v2960
        %2962 = vadd.xlane.f32.xlu0 %v2961
        %v2963 = vpop.xlane.xlu0 %2962
        %v2964 = vsel %vm2359, %v2286, 0.0
        %v2965 = vadd.f32 %v2285, %v2964
        %2966 = vadd.xlane.f32.xlu0 %v2965
        %v2967 = vpop.xlane.xlu0 %2966
        %v2968 = vsel %vm2359, %v2288, 0.0
        %v2969 = vadd.f32 %v2287, %v2968
        %2970 = vadd.xlane.f32.xlu0 %v2969
        %v2971 = vpop.xlane.xlu0 %2970
        %v2972 = vsel %vm2359, %v2290, 0.0
        %v2973 = vadd.f32 %v2289, %v2972
        %2974 = vadd.xlane.f32.xlu0 %v2973
        %v2975 = vpop.xlane.xlu0 %2974
        %v2976 = vsel %vm2359, %v2292, 0.0
        %v2977 = vadd.f32 %v2291, %v2976
        %2978 = vadd.xlane.f32.xlu0 %v2977
        %v2979 = vpop.xlane.xlu0 %2978
        %v2980 = vsel %vm2359, %v2294, 0.0
        %v2981 = vadd.f32 %v2293, %v2980
        %2982 = vadd.xlane.f32.xlu0 %v2981
        %v2983 = vpop.xlane.xlu0 %2982
        %v2984 = vsel %vm2359, %v2296, 0.0
        %v2985 = vadd.f32 %v2295, %v2984
        %2986 = vadd.xlane.f32.xlu0 %v2985
        %v2987 = vpop.xlane.xlu0 %2986
        %v2988 = vsel %vm2359, %v2298, 0.0
        %v2989 = vadd.f32 %v2297, %v2988
        %2990 = vadd.xlane.f32.xlu0 %v2989
        %v2991 = vpop.xlane.xlu0 %2990
        %v2992 = vsel %vm2359, %v2300, 0.0
        %v2993 = vadd.f32 %v2299, %v2992
        %2994 = vadd.xlane.f32.xlu0 %v2993
        %v2995 = vpop.xlane.xlu0 %2994
        %v2996 = vsel %vm2359, %v2302, 0.0
        %v2997 = vadd.f32 %v2301, %v2996
        %2998 = vadd.xlane.f32.xlu0 %v2997
        %v2999 = vpop.xlane.xlu0 %2998
        %v3000 = vsel %vm2359, %v2304, 0.0
        %v3001 = vadd.f32 %v2303, %v3000
        %3002 = vadd.xlane.f32.xlu0 %v3001
        %v3003 = vpop.xlane.xlu0 %3002
        %v3004 = vsel %vm2359, %v2306, 0.0
        %v3005 = vadd.f32 %v2305, %v3004
        %3006 = vadd.xlane.f32.xlu0 %v3005
        %v3007 = vpop.xlane.xlu0 %3006
        %v3008 = vsel %vm2359, %v2308, 0.0
        %v3009 = vadd.f32 %v2307, %v3008
        %3010 = vadd.xlane.f32.xlu0 %v3009
        %v3011 = vpop.xlane.xlu0 %3010
        %v3012 = vsel %vm2359, %v2310, 0.0
        %v3013 = vadd.f32 %v2309, %v3012
        %3014 = vadd.xlane.f32.xlu0 %v3013
        %v3015 = vpop.xlane.xlu0 %3014
        %v3016 = vsel %vm2359, %v2312, 0.0
        %v3017 = vadd.f32 %v2311, %v3016
        %3018 = vadd.xlane.f32.xlu0 %v3017
        %v3019 = vpop.xlane.xlu0 %3018
        %v3020 = vsel %vm2359, %v2314, 0.0
        %v3021 = vadd.f32 %v2313, %v3020
        %3022 = vadd.xlane.f32.xlu0 %v3021
        %v3023 = vpop.xlane.xlu0 %3022
        %v3024 = vsel %vm2359, %v2316, 0.0
        %v3025 = vadd.f32 %v2315, %v3024
        %3026 = vadd.xlane.f32.xlu0 %v3025
        %v3027 = vpop.xlane.xlu0 %3026
        %v3028 = vsel %vm2359, %v2318, 0.0
        %v3029 = vadd.f32 %v2317, %v3028
        %3030 = vadd.xlane.f32.xlu0 %v3029
        %v3031 = vpop.xlane.xlu0 %3030
        %v3032 = vsel %vm2359, %v2320, 0.0
        %v3033 = vadd.f32 %v2319, %v3032
        %3034 = vadd.xlane.f32.xlu0 %v3033
        %v3035 = vpop.xlane.xlu0 %3034
        %v3036 = vsel %vm2359, %v2322, 0.0
        %v3037 = vadd.f32 %v2321, %v3036
        %3038 = vadd.xlane.f32.xlu0 %v3037
        %v3039 = vpop.xlane.xlu0 %3038
        %v3040 = vsel %vm2359, %v2324, 0.0
        %v3041 = vadd.f32 %v2323, %v3040
        %3042 = vadd.xlane.f32.xlu0 %v3041
        %v3043 = vpop.xlane.xlu0 %3042
        %v3044 = vsel %vm2359, %v2326, 0.0
        %v3045 = vadd.f32 %v2325, %v3044
        %3046 = vadd.xlane.f32.xlu0 %v3045
        %v3047 = vpop.xlane.xlu0 %3046
        %v3048 = vsel %vm2359, %v2328, 0.0
        %v3049 = vadd.f32 %v2327, %v3048
        %3050 = vadd.xlane.f32.xlu0 %v3049
        %v3051 = vpop.xlane.xlu0 %3050
        %v3052 = vsel %vm2359, %v2330, 0.0
        %v3053 = vadd.f32 %v2329, %v3052
        %3054 = vadd.xlane.f32.xlu0 %v3053
        %v3055 = vpop.xlane.xlu0 %3054
        %v3056 = vsel %vm2359, %v2332, 0.0
        %v3057 = vadd.f32 %v2331, %v3056
        %3058 = vadd.xlane.f32.xlu0 %v3057
        %v3059 = vpop.xlane.xlu0 %3058
        %v3060 = vsel %vm2359, %v2334, 0.0
        %v3061 = vadd.f32 %v2333, %v3060
        %3062 = vadd.xlane.f32.xlu0 %v3061
        %v3063 = vpop.xlane.xlu0 %3062
        %v3064 = vsel %vm2359, %v2336, 0.0
        %v3065 = vadd.f32 %v2335, %v3064
        %3066 = vadd.xlane.f32.xlu0 %v3065
        %v3067 = vpop.xlane.xlu0 %3066
        %v3068 = vsel %vm2359, %v2338, 0.0
        %v3069 = vadd.f32 %v2337, %v3068
        %3070 = vadd.xlane.f32.xlu0 %v3069
        %v3071 = vpop.xlane.xlu0 %3070
        %v3072 = vsel %vm2359, %v2340, 0.0
        %v3073 = vadd.f32 %v2339, %v3072
        %3074 = vadd.xlane.f32.xlu0 %v3073
        %v3075 = vpop.xlane.xlu0 %3074
        %v3076 = vsel %vm2359, %v2342, 0.0
        %v3077 = vadd.f32 %v2341, %v3076
        %3078 = vadd.xlane.f32.xlu0 %v3077
        %v3079 = vpop.xlane.xlu0 %3078
        %v3080 = vsel %vm2359, %v2344, 0.0
        %v3081 = vadd.f32 %v2343, %v3080
        %3082 = vadd.xlane.f32.xlu0 %v3081
        %v3083 = vpop.xlane.xlu0 %3082
        %v3084 = vsel %vm2359, %v2346, 0.0
        %v3085 = vadd.f32 %v2345, %v3084
        %3086 = vadd.xlane.f32.xlu0 %v3085
        %v3087 = vpop.xlane.xlu0 %3086
        %v3088 = vsel %vm2359, %v2348, 0.0
        %v3089 = vadd.f32 %v2347, %v3088
        %3090 = vadd.xlane.f32.xlu0 %v3089
        %v3091 = vpop.xlane.xlu0 %3090
        %v3092 = vsel %vm2359, %v2350, 0.0
        %v3093 = vadd.f32 %v2349, %v3092
        %3094 = vadd.xlane.f32.xlu0 %v3093
        %v3095 = vpop.xlane.xlu0 %3094
        %v3096 = vsel %vm2359, %v2352, 0.0
        %v3097 = vadd.f32 %v2351, %v3096
        %3098 = vadd.xlane.f32.xlu0 %v3097
        %v3099 = vpop.xlane.xlu0 %3098
        %v3100 = vsel %vm2359, %v2354, 0.0
        %v3101 = vadd.f32 %v2353, %v3100
        %3102 = vadd.xlane.f32.xlu0 %v3101
        %v3103 = vpop.xlane.xlu0 %3102
        %v3104 = vsel %vm2359, %v2356, 0.0
        %v3105 = vadd.f32 %v2355, %v3104
        %3106 = vadd.xlane.f32.xlu0 %v3105
        %v3107 = vpop.xlane.xlu0 %3106
        %v3108 = vsel %vm2359, %v2358, 0.0
        %v3109 = vadd.f32 %v2357, %v3108
        %3110 = vadd.xlane.f32.xlu0 %v3109
        %v3111 = vpop.xlane.xlu0 %3110
        %v3112 = vrsqrt.pop %v2363
        %v3113 = vmul.f32 %v2363, %v3112
        %vm3114 = vcmp.eq.f32.partialorder %v2363, inf
        %v3115 = vsel %vm3114, %v2363, %v3113
        %vm3116 = vcmp.eq.f32.partialorder %v2363, 0.0
        %v3117 = vand.u32 %v2363, 2147483648
        %v3118 = vsel %vm3116, %v3117, %v3115
        %v3119 = vrsqrt.pop %v2367
        %v3120 = vmul.f32 %v2367, %v3119
        %vm3121 = vcmp.eq.f32.partialorder %v2367, inf
        %v3122 = vsel %vm3121, %v2367, %v3120
        %vm3123 = vcmp.eq.f32.partialorder %v2367, 0.0
        %v3124 = vand.u32 %v2367, 2147483648
        %v3125 = vsel %vm3123, %v3124, %v3122
        %v3126 = vrsqrt.pop %v2371
        %v3127 = vmul.f32 %v2371, %v3126
        %vm3128 = vcmp.eq.f32.partialorder %v2371, inf
        %v3129 = vsel %vm3128, %v2371, %v3127
        %vm3130 = vcmp.eq.f32.partialorder %v2371, 0.0
        %v3131 = vand.u32 %v2371, 2147483648
        %v3132 = vsel %vm3130, %v3131, %v3129
        %v3133 = vrsqrt.pop %v2375
        %v3134 = vmul.f32 %v2375, %v3133
        %vm3135 = vcmp.eq.f32.partialorder %v2375, inf
        %v3136 = vsel %vm3135, %v2375, %v3134
        %vm3137 = vcmp.eq.f32.partialorder %v2375, 0.0
        %v3138 = vand.u32 %v2375, 2147483648
        %v3139 = vsel %vm3137, %v3138, %v3136
        %v3140 = vrsqrt.pop %v2379
        %v3141 = vmul.f32 %v2379, %v3140
        %vm3142 = vcmp.eq.f32.partialorder %v2379, inf
        %v3143 = vsel %vm3142, %v2379, %v3141
        %vm3144 = vcmp.eq.f32.partialorder %v2379, 0.0
        %v3145 = vand.u32 %v2379, 2147483648
        %v3146 = vsel %vm3144, %v3145, %v3143
        %v3147 = vrsqrt.pop %v2383
        %v3148 = vmul.f32 %v2383, %v3147
        %vm3149 = vcmp.eq.f32.partialorder %v2383, inf
        %v3150 = vsel %vm3149, %v2383, %v3148
        %vm3151 = vcmp.eq.f32.partialorder %v2383, 0.0
        %v3152 = vand.u32 %v2383, 2147483648
        %v3153 = vsel %vm3151, %v3152, %v3150
        %v3154 = vrsqrt.pop %v2387
        %v3155 = vmul.f32 %v2387, %v3154
        %vm3156 = vcmp.eq.f32.partialorder %v2387, inf
        %v3157 = vsel %vm3156, %v2387, %v3155
        %vm3158 = vcmp.eq.f32.partialorder %v2387, 0.0
        %v3159 = vand.u32 %v2387, 2147483648
        %v3160 = vsel %vm3158, %v3159, %v3157
        %v3161 = vrsqrt.pop %v2391
        %v3162 = vmul.f32 %v2391, %v3161
        %vm3163 = vcmp.eq.f32.partialorder %v2391, inf
        %v3164 = vsel %vm3163, %v2391, %v3162
        %vm3165 = vcmp.eq.f32.partialorder %v2391, 0.0
        %v3166 = vand.u32 %v2391, 2147483648
        %v3167 = vsel %vm3165, %v3166, %v3164
        %v3168 = vrsqrt.pop %v2395
        %v3169 = vmul.f32 %v2395, %v3168
        %vm3170 = vcmp.eq.f32.partialorder %v2395, inf
        %v3171 = vsel %vm3170, %v2395, %v3169
        %vm3172 = vcmp.eq.f32.partialorder %v2395, 0.0
        %v3173 = vand.u32 %v2395, 2147483648
        %v3174 = vsel %vm3172, %v3173, %v3171
        %v3175 = vrsqrt.pop %v2399
        %v3176 = vmul.f32 %v2399, %v3175
        %vm3177 = vcmp.eq.f32.partialorder %v2399, inf
        %v3178 = vsel %vm3177, %v2399, %v3176
        %vm3179 = vcmp.eq.f32.partialorder %v2399, 0.0
        %v3180 = vand.u32 %v2399, 2147483648
        %v3181 = vsel %vm3179, %v3180, %v3178
        %v3182 = vrsqrt.pop %v2403
        %v3183 = vmul.f32 %v2403, %v3182
        %vm3184 = vcmp.eq.f32.partialorder %v2403, inf
        %v3185 = vsel %vm3184, %v2403, %v3183
        %vm3186 = vcmp.eq.f32.partialorder %v2403, 0.0
        %v3187 = vand.u32 %v2403, 2147483648
        %v3188 = vsel %vm3186, %v3187, %v3185
        %v3189 = vrsqrt.pop %v2407
        %v3190 = vmul.f32 %v2407, %v3189
        %vm3191 = vcmp.eq.f32.partialorder %v2407, inf
        %v3192 = vsel %vm3191, %v2407, %v3190
        %vm3193 = vcmp.eq.f32.partialorder %v2407, 0.0
        %v3194 = vand.u32 %v2407, 2147483648
        %v3195 = vsel %vm3193, %v3194, %v3192
        %v3196 = vrsqrt.pop %v2411
        %v3197 = vmul.f32 %v2411, %v3196
        %vm3198 = vcmp.eq.f32.partialorder %v2411, inf
        %v3199 = vsel %vm3198, %v2411, %v3197
        %vm3200 = vcmp.eq.f32.partialorder %v2411, 0.0
        %v3201 = vand.u32 %v2411, 2147483648
        %v3202 = vsel %vm3200, %v3201, %v3199
        %v3203 = vrsqrt.pop %v2415
        %v3204 = vmul.f32 %v2415, %v3203
        %vm3205 = vcmp.eq.f32.partialorder %v2415, inf
        %v3206 = vsel %vm3205, %v2415, %v3204
        %vm3207 = vcmp.eq.f32.partialorder %v2415, 0.0
        %v3208 = vand.u32 %v2415, 2147483648
        %v3209 = vsel %vm3207, %v3208, %v3206
        %v3210 = vrsqrt.pop %v2419
        %v3211 = vmul.f32 %v2419, %v3210
        %vm3212 = vcmp.eq.f32.partialorder %v2419, inf
        %v3213 = vsel %vm3212, %v2419, %v3211
        %vm3214 = vcmp.eq.f32.partialorder %v2419, 0.0
        %v3215 = vand.u32 %v2419, 2147483648
        %v3216 = vsel %vm3214, %v3215, %v3213
        %v3217 = vrsqrt.pop %v2423
        %v3218 = vmul.f32 %v2423, %v3217
        %vm3219 = vcmp.eq.f32.partialorder %v2423, inf
        %v3220 = vsel %vm3219, %v2423, %v3218
        %vm3221 = vcmp.eq.f32.partialorder %v2423, 0.0
        %v3222 = vand.u32 %v2423, 2147483648
        %v3223 = vsel %vm3221, %v3222, %v3220
        %v3224 = vrsqrt.pop %v2427
        %v3225 = vmul.f32 %v2427, %v3224
        %vm3226 = vcmp.eq.f32.partialorder %v2427, inf
        %v3227 = vsel %vm3226, %v2427, %v3225
        %vm3228 = vcmp.eq.f32.partialorder %v2427, 0.0
        %v3229 = vand.u32 %v2427, 2147483648
        %v3230 = vsel %vm3228, %v3229, %v3227
        %v3231 = vrsqrt.pop %v2431
        %v3232 = vmul.f32 %v2431, %v3231
        %vm3233 = vcmp.eq.f32.partialorder %v2431, inf
        %v3234 = vsel %vm3233, %v2431, %v3232
        %vm3235 = vcmp.eq.f32.partialorder %v2431, 0.0
        %v3236 = vand.u32 %v2431, 2147483648
        %v3237 = vsel %vm3235, %v3236, %v3234
        %v3238 = vrsqrt.pop %v2435
        %v3239 = vmul.f32 %v2435, %v3238
        %vm3240 = vcmp.eq.f32.partialorder %v2435, inf
        %v3241 = vsel %vm3240, %v2435, %v3239
        %vm3242 = vcmp.eq.f32.partialorder %v2435, 0.0
        %v3243 = vand.u32 %v2435, 2147483648
        %v3244 = vsel %vm3242, %v3243, %v3241
        %v3245 = vrsqrt.pop %v2439
        %v3246 = vmul.f32 %v2439, %v3245
        %vm3247 = vcmp.eq.f32.partialorder %v2439, inf
        %v3248 = vsel %vm3247, %v2439, %v3246
        %vm3249 = vcmp.eq.f32.partialorder %v2439, 0.0
        %v3250 = vand.u32 %v2439, 2147483648
        %v3251 = vsel %vm3249, %v3250, %v3248
        %v3252 = vrsqrt.pop %v2443
        %v3253 = vmul.f32 %v2443, %v3252
        %vm3254 = vcmp.eq.f32.partialorder %v2443, inf
        %v3255 = vsel %vm3254, %v2443, %v3253
        %vm3256 = vcmp.eq.f32.partialorder %v2443, 0.0
        %v3257 = vand.u32 %v2443, 2147483648
        %v3258 = vsel %vm3256, %v3257, %v3255
        %v3259 = vrsqrt.pop %v2447
        %v3260 = vmul.f32 %v2447, %v3259
        %vm3261 = vcmp.eq.f32.partialorder %v2447, inf
        %v3262 = vsel %vm3261, %v2447, %v3260
        %vm3263 = vcmp.eq.f32.partialorder %v2447, 0.0
        %v3264 = vand.u32 %v2447, 2147483648
        %v3265 = vsel %vm3263, %v3264, %v3262
        %v3266 = vrsqrt.pop %v2451
        %v3267 = vmul.f32 %v2451, %v3266
        %vm3268 = vcmp.eq.f32.partialorder %v2451, inf
        %v3269 = vsel %vm3268, %v2451, %v3267
        %vm3270 = vcmp.eq.f32.partialorder %v2451, 0.0
        %v3271 = vand.u32 %v2451, 2147483648
        %v3272 = vsel %vm3270, %v3271, %v3269
        %v3273 = vrsqrt.pop %v2455
        %v3274 = vmul.f32 %v2455, %v3273
        %vm3275 = vcmp.eq.f32.partialorder %v2455, inf
        %v3276 = vsel %vm3275, %v2455, %v3274
        %vm3277 = vcmp.eq.f32.partialorder %v2455, 0.0
        %v3278 = vand.u32 %v2455, 2147483648
        %v3279 = vsel %vm3277, %v3278, %v3276
        %v3280 = vrsqrt.pop %v2459
        %v3281 = vmul.f32 %v2459, %v3280
        %vm3282 = vcmp.eq.f32.partialorder %v2459, inf
        %v3283 = vsel %vm3282, %v2459, %v3281
        %vm3284 = vcmp.eq.f32.partialorder %v2459, 0.0
        %v3285 = vand.u32 %v2459, 2147483648
        %v3286 = vsel %vm3284, %v3285, %v3283
        %v3287 = vrsqrt.pop %v2463
        %v3288 = vmul.f32 %v2463, %v3287
        %vm3289 = vcmp.eq.f32.partialorder %v2463, inf
        %v3290 = vsel %vm3289, %v2463, %v3288
        %vm3291 = vcmp.eq.f32.partialorder %v2463, 0.0
        %v3292 = vand.u32 %v2463, 2147483648
        %v3293 = vsel %vm3291, %v3292, %v3290
        %v3294 = vrsqrt.pop %v2467
        %v3295 = vmul.f32 %v2467, %v3294
        %vm3296 = vcmp.eq.f32.partialorder %v2467, inf
        %v3297 = vsel %vm3296, %v2467, %v3295
        %vm3298 = vcmp.eq.f32.partialorder %v2467, 0.0
        %v3299 = vand.u32 %v2467, 2147483648
        %v3300 = vsel %vm3298, %v3299, %v3297
        %v3301 = vrsqrt.pop %v2471
        %v3302 = vmul.f32 %v2471, %v3301
        %vm3303 = vcmp.eq.f32.partialorder %v2471, inf
        %v3304 = vsel %vm3303, %v2471, %v3302
        %vm3305 = vcmp.eq.f32.partialorder %v2471, 0.0
        %v3306 = vand.u32 %v2471, 2147483648
        %v3307 = vsel %vm3305, %v3306, %v3304
        %v3308 = vrsqrt.pop %v2475
        %v3309 = vmul.f32 %v2475, %v3308
        %vm3310 = vcmp.eq.f32.partialorder %v2475, inf
        %v3311 = vsel %vm3310, %v2475, %v3309
        %vm3312 = vcmp.eq.f32.partialorder %v2475, 0.0
        %v3313 = vand.u32 %v2475, 2147483648
        %v3314 = vsel %vm3312, %v3313, %v3311
        %v3315 = vrsqrt.pop %v2479
        %v3316 = vmul.f32 %v2479, %v3315
        %vm3317 = vcmp.eq.f32.partialorder %v2479, inf
        %v3318 = vsel %vm3317, %v2479, %v3316
        %vm3319 = vcmp.eq.f32.partialorder %v2479, 0.0
        %v3320 = vand.u32 %v2479, 2147483648
        %v3321 = vsel %vm3319, %v3320, %v3318
        %v3322 = vrsqrt.pop %v2483
        %v3323 = vmul.f32 %v2483, %v3322
        %vm3324 = vcmp.eq.f32.partialorder %v2483, inf
        %v3325 = vsel %vm3324, %v2483, %v3323
        %vm3326 = vcmp.eq.f32.partialorder %v2483, 0.0
        %v3327 = vand.u32 %v2483, 2147483648
        %v3328 = vsel %vm3326, %v3327, %v3325
        %v3329 = vrsqrt.pop %v2487
        %v3330 = vmul.f32 %v2487, %v3329
        %vm3331 = vcmp.eq.f32.partialorder %v2487, inf
        %v3332 = vsel %vm3331, %v2487, %v3330
        %vm3333 = vcmp.eq.f32.partialorder %v2487, 0.0
        %v3334 = vand.u32 %v2487, 2147483648
        %v3335 = vsel %vm3333, %v3334, %v3332
        %v3336 = vrsqrt.pop %v2491
        %v3337 = vmul.f32 %v2491, %v3336
        %vm3338 = vcmp.eq.f32.partialorder %v2491, inf
        %v3339 = vsel %vm3338, %v2491, %v3337
        %vm3340 = vcmp.eq.f32.partialorder %v2491, 0.0
        %v3341 = vand.u32 %v2491, 2147483648
        %v3342 = vsel %vm3340, %v3341, %v3339
        %v3343 = vrsqrt.pop %v2495
        %v3344 = vmul.f32 %v2495, %v3343
        %vm3345 = vcmp.eq.f32.partialorder %v2495, inf
        %v3346 = vsel %vm3345, %v2495, %v3344
        %vm3347 = vcmp.eq.f32.partialorder %v2495, 0.0
        %v3348 = vand.u32 %v2495, 2147483648
        %v3349 = vsel %vm3347, %v3348, %v3346
        %v3350 = vrsqrt.pop %v2499
        %v3351 = vmul.f32 %v2499, %v3350
        %vm3352 = vcmp.eq.f32.partialorder %v2499, inf
        %v3353 = vsel %vm3352, %v2499, %v3351
        %vm3354 = vcmp.eq.f32.partialorder %v2499, 0.0
        %v3355 = vand.u32 %v2499, 2147483648
        %v3356 = vsel %vm3354, %v3355, %v3353
        %v3357 = vrsqrt.pop %v2503
        %v3358 = vmul.f32 %v2503, %v3357
        %vm3359 = vcmp.eq.f32.partialorder %v2503, inf
        %v3360 = vsel %vm3359, %v2503, %v3358
        %vm3361 = vcmp.eq.f32.partialorder %v2503, 0.0
        %v3362 = vand.u32 %v2503, 2147483648
        %v3363 = vsel %vm3361, %v3362, %v3360
        %v3364 = vrsqrt.pop %v2507
        %v3365 = vmul.f32 %v2507, %v3364
        %vm3366 = vcmp.eq.f32.partialorder %v2507, inf
        %v3367 = vsel %vm3366, %v2507, %v3365
        %vm3368 = vcmp.eq.f32.partialorder %v2507, 0.0
        %v3369 = vand.u32 %v2507, 2147483648
        %v3370 = vsel %vm3368, %v3369, %v3367
        %v3371 = vrsqrt.pop %v2511
        %v3372 = vmul.f32 %v2511, %v3371
        %vm3373 = vcmp.eq.f32.partialorder %v2511, inf
        %v3374 = vsel %vm3373, %v2511, %v3372
        %vm3375 = vcmp.eq.f32.partialorder %v2511, 0.0
        %v3376 = vand.u32 %v2511, 2147483648
        %v3377 = vsel %vm3375, %v3376, %v3374
        %v3378 = vrsqrt.pop %v2515
        %v3379 = vmul.f32 %v2515, %v3378
        %vm3380 = vcmp.eq.f32.partialorder %v2515, inf
        %v3381 = vsel %vm3380, %v2515, %v3379
        %vm3382 = vcmp.eq.f32.partialorder %v2515, 0.0
        %v3383 = vand.u32 %v2515, 2147483648
        %v3384 = vsel %vm3382, %v3383, %v3381
        %v3385 = vrsqrt.pop %v2519
        %v3386 = vmul.f32 %v2519, %v3385
        %vm3387 = vcmp.eq.f32.partialorder %v2519, inf
        %v3388 = vsel %vm3387, %v2519, %v3386
        %vm3389 = vcmp.eq.f32.partialorder %v2519, 0.0
        %v3390 = vand.u32 %v2519, 2147483648
        %v3391 = vsel %vm3389, %v3390, %v3388
        %v3392 = vrsqrt.pop %v2523
        %v3393 = vmul.f32 %v2523, %v3392
        %vm3394 = vcmp.eq.f32.partialorder %v2523, inf
        %v3395 = vsel %vm3394, %v2523, %v3393
        %vm3396 = vcmp.eq.f32.partialorder %v2523, 0.0
        %v3397 = vand.u32 %v2523, 2147483648
        %v3398 = vsel %vm3396, %v3397, %v3395
        %v3399 = vrsqrt.pop %v2527
        %v3400 = vmul.f32 %v2527, %v3399
        %vm3401 = vcmp.eq.f32.partialorder %v2527, inf
        %v3402 = vsel %vm3401, %v2527, %v3400
        %vm3403 = vcmp.eq.f32.partialorder %v2527, 0.0
        %v3404 = vand.u32 %v2527, 2147483648
        %v3405 = vsel %vm3403, %v3404, %v3402
        %v3406 = vrsqrt.pop %v2531
        %v3407 = vmul.f32 %v2531, %v3406
        %vm3408 = vcmp.eq.f32.partialorder %v2531, inf
        %v3409 = vsel %vm3408, %v2531, %v3407
        %vm3410 = vcmp.eq.f32.partialorder %v2531, 0.0
        %v3411 = vand.u32 %v2531, 2147483648
        %v3412 = vsel %vm3410, %v3411, %v3409
        %v3413 = vrsqrt.pop %v2535
        %v3414 = vmul.f32 %v2535, %v3413
        %vm3415 = vcmp.eq.f32.partialorder %v2535, inf
        %v3416 = vsel %vm3415, %v2535, %v3414
        %vm3417 = vcmp.eq.f32.partialorder %v2535, 0.0
        %v3418 = vand.u32 %v2535, 2147483648
        %v3419 = vsel %vm3417, %v3418, %v3416
        %v3420 = vrsqrt.pop %v2539
        %v3421 = vmul.f32 %v2539, %v3420
        %vm3422 = vcmp.eq.f32.partialorder %v2539, inf
        %v3423 = vsel %vm3422, %v2539, %v3421
        %vm3424 = vcmp.eq.f32.partialorder %v2539, 0.0
        %v3425 = vand.u32 %v2539, 2147483648
        %v3426 = vsel %vm3424, %v3425, %v3423
        %v3427 = vrsqrt.pop %v2543
        %v3428 = vmul.f32 %v2543, %v3427
        %vm3429 = vcmp.eq.f32.partialorder %v2543, inf
        %v3430 = vsel %vm3429, %v2543, %v3428
        %vm3431 = vcmp.eq.f32.partialorder %v2543, 0.0
        %v3432 = vand.u32 %v2543, 2147483648
        %v3433 = vsel %vm3431, %v3432, %v3430
        %v3434 = vrsqrt.pop %v2547
        %v3435 = vmul.f32 %v2547, %v3434
        %vm3436 = vcmp.eq.f32.partialorder %v2547, inf
        %v3437 = vsel %vm3436, %v2547, %v3435
        %vm3438 = vcmp.eq.f32.partialorder %v2547, 0.0
        %v3439 = vand.u32 %v2547, 2147483648
        %v3440 = vsel %vm3438, %v3439, %v3437
        %v3441 = vrsqrt.pop %v2551
        %v3442 = vmul.f32 %v2551, %v3441
        %vm3443 = vcmp.eq.f32.partialorder %v2551, inf
        %v3444 = vsel %vm3443, %v2551, %v3442
        %vm3445 = vcmp.eq.f32.partialorder %v2551, 0.0
        %v3446 = vand.u32 %v2551, 2147483648
        %v3447 = vsel %vm3445, %v3446, %v3444
        %v3448 = vrsqrt.pop %v2555
        %v3449 = vmul.f32 %v2555, %v3448
        %vm3450 = vcmp.eq.f32.partialorder %v2555, inf
        %v3451 = vsel %vm3450, %v2555, %v3449
        %vm3452 = vcmp.eq.f32.partialorder %v2555, 0.0
        %v3453 = vand.u32 %v2555, 2147483648
        %v3454 = vsel %vm3452, %v3453, %v3451
        %v3455 = vrsqrt.pop %v2559
        %v3456 = vmul.f32 %v2559, %v3455
        %vm3457 = vcmp.eq.f32.partialorder %v2559, inf
        %v3458 = vsel %vm3457, %v2559, %v3456
        %vm3459 = vcmp.eq.f32.partialorder %v2559, 0.0
        %v3460 = vand.u32 %v2559, 2147483648
        %v3461 = vsel %vm3459, %v3460, %v3458
        %v3462 = vrsqrt.pop %v2563
        %v3463 = vmul.f32 %v2563, %v3462
        %vm3464 = vcmp.eq.f32.partialorder %v2563, inf
        %v3465 = vsel %vm3464, %v2563, %v3463
        %vm3466 = vcmp.eq.f32.partialorder %v2563, 0.0
        %v3467 = vand.u32 %v2563, 2147483648
        %v3468 = vsel %vm3466, %v3467, %v3465
        %v3469 = vrsqrt.pop %v2567
        %v3470 = vmul.f32 %v2567, %v3469
        %vm3471 = vcmp.eq.f32.partialorder %v2567, inf
        %v3472 = vsel %vm3471, %v2567, %v3470
        %vm3473 = vcmp.eq.f32.partialorder %v2567, 0.0
        %v3474 = vand.u32 %v2567, 2147483648
        %v3475 = vsel %vm3473, %v3474, %v3472
        %v3476 = vrsqrt.pop %v2571
        %v3477 = vmul.f32 %v2571, %v3476
        %vm3478 = vcmp.eq.f32.partialorder %v2571, inf
        %v3479 = vsel %vm3478, %v2571, %v3477
        %vm3480 = vcmp.eq.f32.partialorder %v2571, 0.0
        %v3481 = vand.u32 %v2571, 2147483648
        %v3482 = vsel %vm3480, %v3481, %v3479
        %v3483 = vrsqrt.pop %v2575
        %v3484 = vmul.f32 %v2575, %v3483
        %vm3485 = vcmp.eq.f32.partialorder %v2575, inf
        %v3486 = vsel %vm3485, %v2575, %v3484
        %vm3487 = vcmp.eq.f32.partialorder %v2575, 0.0
        %v3488 = vand.u32 %v2575, 2147483648
        %v3489 = vsel %vm3487, %v3488, %v3486
        %v3490 = vrsqrt.pop %v2579
        %v3491 = vmul.f32 %v2579, %v3490
        %vm3492 = vcmp.eq.f32.partialorder %v2579, inf
        %v3493 = vsel %vm3492, %v2579, %v3491
        %vm3494 = vcmp.eq.f32.partialorder %v2579, 0.0
        %v3495 = vand.u32 %v2579, 2147483648
        %v3496 = vsel %vm3494, %v3495, %v3493
        %v3497 = vrsqrt.pop %v2583
        %v3498 = vmul.f32 %v2583, %v3497
        %vm3499 = vcmp.eq.f32.partialorder %v2583, inf
        %v3500 = vsel %vm3499, %v2583, %v3498
        %vm3501 = vcmp.eq.f32.partialorder %v2583, 0.0
        %v3502 = vand.u32 %v2583, 2147483648
        %v3503 = vsel %vm3501, %v3502, %v3500
        %v3504 = vrsqrt.pop %v2587
        %v3505 = vmul.f32 %v2587, %v3504
        %vm3506 = vcmp.eq.f32.partialorder %v2587, inf
        %v3507 = vsel %vm3506, %v2587, %v3505
        %vm3508 = vcmp.eq.f32.partialorder %v2587, 0.0
        %v3509 = vand.u32 %v2587, 2147483648
        %v3510 = vsel %vm3508, %v3509, %v3507
        %v3511 = vrsqrt.pop %v2591
        %v3512 = vmul.f32 %v2591, %v3511
        %vm3513 = vcmp.eq.f32.partialorder %v2591, inf
        %v3514 = vsel %vm3513, %v2591, %v3512
        %vm3515 = vcmp.eq.f32.partialorder %v2591, 0.0
        %v3516 = vand.u32 %v2591, 2147483648
        %v3517 = vsel %vm3515, %v3516, %v3514
        %v3518 = vrsqrt.pop %v2595
        %v3519 = vmul.f32 %v2595, %v3518
        %vm3520 = vcmp.eq.f32.partialorder %v2595, inf
        %v3521 = vsel %vm3520, %v2595, %v3519
        %vm3522 = vcmp.eq.f32.partialorder %v2595, 0.0
        %v3523 = vand.u32 %v2595, 2147483648
        %v3524 = vsel %vm3522, %v3523, %v3521
        %v3525 = vrsqrt.pop %v2599
        %v3526 = vmul.f32 %v2599, %v3525
        %vm3527 = vcmp.eq.f32.partialorder %v2599, inf
        %v3528 = vsel %vm3527, %v2599, %v3526
        %vm3529 = vcmp.eq.f32.partialorder %v2599, 0.0
        %v3530 = vand.u32 %v2599, 2147483648
        %v3531 = vsel %vm3529, %v3530, %v3528
        %v3532 = vrsqrt.pop %v2603
        %v3533 = vmul.f32 %v2603, %v3532
        %vm3534 = vcmp.eq.f32.partialorder %v2603, inf
        %v3535 = vsel %vm3534, %v2603, %v3533
        %vm3536 = vcmp.eq.f32.partialorder %v2603, 0.0
        %v3537 = vand.u32 %v2603, 2147483648
        %v3538 = vsel %vm3536, %v3537, %v3535
        %v3539 = vrsqrt.pop %v2607
        %v3540 = vmul.f32 %v2607, %v3539
        %vm3541 = vcmp.eq.f32.partialorder %v2607, inf
        %v3542 = vsel %vm3541, %v2607, %v3540
        %vm3543 = vcmp.eq.f32.partialorder %v2607, 0.0
        %v3544 = vand.u32 %v2607, 2147483648
        %v3545 = vsel %vm3543, %v3544, %v3542
        %v3546 = vrsqrt.pop %v2611
        %v3547 = vmul.f32 %v2611, %v3546
        %vm3548 = vcmp.eq.f32.partialorder %v2611, inf
        %v3549 = vsel %vm3548, %v2611, %v3547
        %vm3550 = vcmp.eq.f32.partialorder %v2611, 0.0
        %v3551 = vand.u32 %v2611, 2147483648
        %v3552 = vsel %vm3550, %v3551, %v3549
        %v3553 = vrsqrt.pop %v2615
        %v3554 = vmul.f32 %v2615, %v3553
        %vm3555 = vcmp.eq.f32.partialorder %v2615, inf
        %v3556 = vsel %vm3555, %v2615, %v3554
        %vm3557 = vcmp.eq.f32.partialorder %v2615, 0.0
        %v3558 = vand.u32 %v2615, 2147483648
        %v3559 = vsel %vm3557, %v3558, %v3556
        %v3560 = vrsqrt.pop %v2619
        %v3561 = vmul.f32 %v2619, %v3560
        %vm3562 = vcmp.eq.f32.partialorder %v2619, inf
        %v3563 = vsel %vm3562, %v2619, %v3561
        %vm3564 = vcmp.eq.f32.partialorder %v2619, 0.0
        %v3565 = vand.u32 %v2619, 2147483648
        %v3566 = vsel %vm3564, %v3565, %v3563
        %v3567 = vrsqrt.pop %v2623
        %v3568 = vmul.f32 %v2623, %v3567
        %vm3569 = vcmp.eq.f32.partialorder %v2623, inf
        %v3570 = vsel %vm3569, %v2623, %v3568
        %vm3571 = vcmp.eq.f32.partialorder %v2623, 0.0
        %v3572 = vand.u32 %v2623, 2147483648
        %v3573 = vsel %vm3571, %v3572, %v3570
        %v3574 = vrsqrt.pop %v2627
        %v3575 = vmul.f32 %v2627, %v3574
        %vm3576 = vcmp.eq.f32.partialorder %v2627, inf
        %v3577 = vsel %vm3576, %v2627, %v3575
        %vm3578 = vcmp.eq.f32.partialorder %v2627, 0.0
        %v3579 = vand.u32 %v2627, 2147483648
        %v3580 = vsel %vm3578, %v3579, %v3577
        %v3581 = vrsqrt.pop %v2631
        %v3582 = vmul.f32 %v2631, %v3581
        %vm3583 = vcmp.eq.f32.partialorder %v2631, inf
        %v3584 = vsel %vm3583, %v2631, %v3582
        %vm3585 = vcmp.eq.f32.partialorder %v2631, 0.0
        %v3586 = vand.u32 %v2631, 2147483648
        %v3587 = vsel %vm3585, %v3586, %v3584
        %v3588 = vrsqrt.pop %v2635
        %v3589 = vmul.f32 %v2635, %v3588
        %vm3590 = vcmp.eq.f32.partialorder %v2635, inf
        %v3591 = vsel %vm3590, %v2635, %v3589
        %vm3592 = vcmp.eq.f32.partialorder %v2635, 0.0
        %v3593 = vand.u32 %v2635, 2147483648
        %v3594 = vsel %vm3592, %v3593, %v3591
        %v3595 = vrsqrt.pop %v2639
        %v3596 = vmul.f32 %v2639, %v3595
        %vm3597 = vcmp.eq.f32.partialorder %v2639, inf
        %v3598 = vsel %vm3597, %v2639, %v3596
        %vm3599 = vcmp.eq.f32.partialorder %v2639, 0.0
        %v3600 = vand.u32 %v2639, 2147483648
        %v3601 = vsel %vm3599, %v3600, %v3598
        %v3602 = vrsqrt.pop %v2643
        %v3603 = vmul.f32 %v2643, %v3602
        %vm3604 = vcmp.eq.f32.partialorder %v2643, inf
        %v3605 = vsel %vm3604, %v2643, %v3603
        %vm3606 = vcmp.eq.f32.partialorder %v2643, 0.0
        %v3607 = vand.u32 %v2643, 2147483648
        %v3608 = vsel %vm3606, %v3607, %v3605
        %v3609 = vrsqrt.pop %v2647
        %v3610 = vmul.f32 %v2647, %v3609
        %vm3611 = vcmp.eq.f32.partialorder %v2647, inf
        %v3612 = vsel %vm3611, %v2647, %v3610
        %vm3613 = vcmp.eq.f32.partialorder %v2647, 0.0
        %v3614 = vand.u32 %v2647, 2147483648
        %v3615 = vsel %vm3613, %v3614, %v3612
        %v3616 = vrsqrt.pop %v2651
        %v3617 = vmul.f32 %v2651, %v3616
        %vm3618 = vcmp.eq.f32.partialorder %v2651, inf
        %v3619 = vsel %vm3618, %v2651, %v3617
        %vm3620 = vcmp.eq.f32.partialorder %v2651, 0.0
        %v3621 = vand.u32 %v2651, 2147483648
        %v3622 = vsel %vm3620, %v3621, %v3619
        %v3623 = vrsqrt.pop %v2655
        %v3624 = vmul.f32 %v2655, %v3623
        %vm3625 = vcmp.eq.f32.partialorder %v2655, inf
        %v3626 = vsel %vm3625, %v2655, %v3624
        %vm3627 = vcmp.eq.f32.partialorder %v2655, 0.0
        %v3628 = vand.u32 %v2655, 2147483648
        %v3629 = vsel %vm3627, %v3628, %v3626
        %v3630 = vrsqrt.pop %v2659
        %v3631 = vmul.f32 %v2659, %v3630
        %vm3632 = vcmp.eq.f32.partialorder %v2659, inf
        %v3633 = vsel %vm3632, %v2659, %v3631
        %vm3634 = vcmp.eq.f32.partialorder %v2659, 0.0
        %v3635 = vand.u32 %v2659, 2147483648
        %v3636 = vsel %vm3634, %v3635, %v3633
        %v3637 = vrsqrt.pop %v2663
        %v3638 = vmul.f32 %v2663, %v3637
        %vm3639 = vcmp.eq.f32.partialorder %v2663, inf
        %v3640 = vsel %vm3639, %v2663, %v3638
        %vm3641 = vcmp.eq.f32.partialorder %v2663, 0.0
        %v3642 = vand.u32 %v2663, 2147483648
        %v3643 = vsel %vm3641, %v3642, %v3640
        %v3644 = vrsqrt.pop %v2667
        %v3645 = vmul.f32 %v2667, %v3644
        %vm3646 = vcmp.eq.f32.partialorder %v2667, inf
        %v3647 = vsel %vm3646, %v2667, %v3645
        %vm3648 = vcmp.eq.f32.partialorder %v2667, 0.0
        %v3649 = vand.u32 %v2667, 2147483648
        %v3650 = vsel %vm3648, %v3649, %v3647
        %v3651 = vrsqrt.pop %v2671
        %v3652 = vmul.f32 %v2671, %v3651
        %vm3653 = vcmp.eq.f32.partialorder %v2671, inf
        %v3654 = vsel %vm3653, %v2671, %v3652
        %vm3655 = vcmp.eq.f32.partialorder %v2671, 0.0
        %v3656 = vand.u32 %v2671, 2147483648
        %v3657 = vsel %vm3655, %v3656, %v3654
        %v3658 = vrsqrt.pop %v2675
        %v3659 = vmul.f32 %v2675, %v3658
        %vm3660 = vcmp.eq.f32.partialorder %v2675, inf
        %v3661 = vsel %vm3660, %v2675, %v3659
        %vm3662 = vcmp.eq.f32.partialorder %v2675, 0.0
        %v3663 = vand.u32 %v2675, 2147483648
        %v3664 = vsel %vm3662, %v3663, %v3661
        %v3665 = vrsqrt.pop %v2679
        %v3666 = vmul.f32 %v2679, %v3665
        %vm3667 = vcmp.eq.f32.partialorder %v2679, inf
        %v3668 = vsel %vm3667, %v2679, %v3666
        %vm3669 = vcmp.eq.f32.partialorder %v2679, 0.0
        %v3670 = vand.u32 %v2679, 2147483648
        %v3671 = vsel %vm3669, %v3670, %v3668
        %v3672 = vrsqrt.pop %v2683
        %v3673 = vmul.f32 %v2683, %v3672
        %vm3674 = vcmp.eq.f32.partialorder %v2683, inf
        %v3675 = vsel %vm3674, %v2683, %v3673
        %vm3676 = vcmp.eq.f32.partialorder %v2683, 0.0
        %v3677 = vand.u32 %v2683, 2147483648
        %v3678 = vsel %vm3676, %v3677, %v3675
        %v3679 = vrsqrt.pop %v2687
        %v3680 = vmul.f32 %v2687, %v3679
        %vm3681 = vcmp.eq.f32.partialorder %v2687, inf
        %v3682 = vsel %vm3681, %v2687, %v3680
        %vm3683 = vcmp.eq.f32.partialorder %v2687, 0.0
        %v3684 = vand.u32 %v2687, 2147483648
        %v3685 = vsel %vm3683, %v3684, %v3682
        %v3686 = vrsqrt.pop %v2691
        %v3687 = vmul.f32 %v2691, %v3686
        %vm3688 = vcmp.eq.f32.partialorder %v2691, inf
        %v3689 = vsel %vm3688, %v2691, %v3687
        %vm3690 = vcmp.eq.f32.partialorder %v2691, 0.0
        %v3691 = vand.u32 %v2691, 2147483648
        %v3692 = vsel %vm3690, %v3691, %v3689
        %v3693 = vrsqrt.pop %v2695
        %v3694 = vmul.f32 %v2695, %v3693
        %vm3695 = vcmp.eq.f32.partialorder %v2695, inf
        %v3696 = vsel %vm3695, %v2695, %v3694
        %vm3697 = vcmp.eq.f32.partialorder %v2695, 0.0
        %v3698 = vand.u32 %v2695, 2147483648
        %v3699 = vsel %vm3697, %v3698, %v3696
        %v3700 = vrsqrt.pop %v2699
        %v3701 = vmul.f32 %v2699, %v3700
        %vm3702 = vcmp.eq.f32.partialorder %v2699, inf
        %v3703 = vsel %vm3702, %v2699, %v3701
        %vm3704 = vcmp.eq.f32.partialorder %v2699, 0.0
        %v3705 = vand.u32 %v2699, 2147483648
        %v3706 = vsel %vm3704, %v3705, %v3703
        %v3707 = vrsqrt.pop %v2703
        %v3708 = vmul.f32 %v2703, %v3707
        %vm3709 = vcmp.eq.f32.partialorder %v2703, inf
        %v3710 = vsel %vm3709, %v2703, %v3708
        %vm3711 = vcmp.eq.f32.partialorder %v2703, 0.0
        %v3712 = vand.u32 %v2703, 2147483648
        %v3713 = vsel %vm3711, %v3712, %v3710
        %v3714 = vrsqrt.pop %v2707
        %v3715 = vmul.f32 %v2707, %v3714
        %vm3716 = vcmp.eq.f32.partialorder %v2707, inf
        %v3717 = vsel %vm3716, %v2707, %v3715
        %vm3718 = vcmp.eq.f32.partialorder %v2707, 0.0
        %v3719 = vand.u32 %v2707, 2147483648
        %v3720 = vsel %vm3718, %v3719, %v3717
        %v3721 = vrsqrt.pop %v2711
        %v3722 = vmul.f32 %v2711, %v3721
        %vm3723 = vcmp.eq.f32.partialorder %v2711, inf
        %v3724 = vsel %vm3723, %v2711, %v3722
        %vm3725 = vcmp.eq.f32.partialorder %v2711, 0.0
        %v3726 = vand.u32 %v2711, 2147483648
        %v3727 = vsel %vm3725, %v3726, %v3724
        %v3728 = vrsqrt.pop %v2715
        %v3729 = vmul.f32 %v2715, %v3728
        %vm3730 = vcmp.eq.f32.partialorder %v2715, inf
        %v3731 = vsel %vm3730, %v2715, %v3729
        %vm3732 = vcmp.eq.f32.partialorder %v2715, 0.0
        %v3733 = vand.u32 %v2715, 2147483648
        %v3734 = vsel %vm3732, %v3733, %v3731
        %v3735 = vrsqrt.pop %v2719
        %v3736 = vmul.f32 %v2719, %v3735
        %vm3737 = vcmp.eq.f32.partialorder %v2719, inf
        %v3738 = vsel %vm3737, %v2719, %v3736
        %vm3739 = vcmp.eq.f32.partialorder %v2719, 0.0
        %v3740 = vand.u32 %v2719, 2147483648
        %v3741 = vsel %vm3739, %v3740, %v3738
        %v3742 = vrsqrt.pop %v2723
        %v3743 = vmul.f32 %v2723, %v3742
        %vm3744 = vcmp.eq.f32.partialorder %v2723, inf
        %v3745 = vsel %vm3744, %v2723, %v3743
        %vm3746 = vcmp.eq.f32.partialorder %v2723, 0.0
        %v3747 = vand.u32 %v2723, 2147483648
        %v3748 = vsel %vm3746, %v3747, %v3745
        %v3749 = vrsqrt.pop %v2727
        %v3750 = vmul.f32 %v2727, %v3749
        %vm3751 = vcmp.eq.f32.partialorder %v2727, inf
        %v3752 = vsel %vm3751, %v2727, %v3750
        %vm3753 = vcmp.eq.f32.partialorder %v2727, 0.0
        %v3754 = vand.u32 %v2727, 2147483648
        %v3755 = vsel %vm3753, %v3754, %v3752
        %v3756 = vrsqrt.pop %v2731
        %v3757 = vmul.f32 %v2731, %v3756
        %vm3758 = vcmp.eq.f32.partialorder %v2731, inf
        %v3759 = vsel %vm3758, %v2731, %v3757
        %vm3760 = vcmp.eq.f32.partialorder %v2731, 0.0
        %v3761 = vand.u32 %v2731, 2147483648
        %v3762 = vsel %vm3760, %v3761, %v3759
        %v3763 = vrsqrt.pop %v2735
        %v3764 = vmul.f32 %v2735, %v3763
        %vm3765 = vcmp.eq.f32.partialorder %v2735, inf
        %v3766 = vsel %vm3765, %v2735, %v3764
        %vm3767 = vcmp.eq.f32.partialorder %v2735, 0.0
        %v3768 = vand.u32 %v2735, 2147483648
        %v3769 = vsel %vm3767, %v3768, %v3766
        %v3770 = vrsqrt.pop %v2739
        %v3771 = vmul.f32 %v2739, %v3770
        %vm3772 = vcmp.eq.f32.partialorder %v2739, inf
        %v3773 = vsel %vm3772, %v2739, %v3771
        %vm3774 = vcmp.eq.f32.partialorder %v2739, 0.0
        %v3775 = vand.u32 %v2739, 2147483648
        %v3776 = vsel %vm3774, %v3775, %v3773
        %v3777 = vrsqrt.pop %v2743
        %v3778 = vmul.f32 %v2743, %v3777
        %vm3779 = vcmp.eq.f32.partialorder %v2743, inf
        %v3780 = vsel %vm3779, %v2743, %v3778
        %vm3781 = vcmp.eq.f32.partialorder %v2743, 0.0
        %v3782 = vand.u32 %v2743, 2147483648
        %v3783 = vsel %vm3781, %v3782, %v3780
        %v3784 = vrsqrt.pop %v2747
        %v3785 = vmul.f32 %v2747, %v3784
        %vm3786 = vcmp.eq.f32.partialorder %v2747, inf
        %v3787 = vsel %vm3786, %v2747, %v3785
        %vm3788 = vcmp.eq.f32.partialorder %v2747, 0.0
        %v3789 = vand.u32 %v2747, 2147483648
        %v3790 = vsel %vm3788, %v3789, %v3787
        %v3791 = vrsqrt.pop %v2751
        %v3792 = vmul.f32 %v2751, %v3791
        %vm3793 = vcmp.eq.f32.partialorder %v2751, inf
        %v3794 = vsel %vm3793, %v2751, %v3792
        %vm3795 = vcmp.eq.f32.partialorder %v2751, 0.0
        %v3796 = vand.u32 %v2751, 2147483648
        %v3797 = vsel %vm3795, %v3796, %v3794
        %v3798 = vrsqrt.pop %v2755
        %v3799 = vmul.f32 %v2755, %v3798
        %vm3800 = vcmp.eq.f32.partialorder %v2755, inf
        %v3801 = vsel %vm3800, %v2755, %v3799
        %vm3802 = vcmp.eq.f32.partialorder %v2755, 0.0
        %v3803 = vand.u32 %v2755, 2147483648
        %v3804 = vsel %vm3802, %v3803, %v3801
        %v3805 = vrsqrt.pop %v2759
        %v3806 = vmul.f32 %v2759, %v3805
        %vm3807 = vcmp.eq.f32.partialorder %v2759, inf
        %v3808 = vsel %vm3807, %v2759, %v3806
        %vm3809 = vcmp.eq.f32.partialorder %v2759, 0.0
        %v3810 = vand.u32 %v2759, 2147483648
        %v3811 = vsel %vm3809, %v3810, %v3808
        %v3812 = vrsqrt.pop %v2763
        %v3813 = vmul.f32 %v2763, %v3812
        %vm3814 = vcmp.eq.f32.partialorder %v2763, inf
        %v3815 = vsel %vm3814, %v2763, %v3813
        %vm3816 = vcmp.eq.f32.partialorder %v2763, 0.0
        %v3817 = vand.u32 %v2763, 2147483648
        %v3818 = vsel %vm3816, %v3817, %v3815
        %v3819 = vrsqrt.pop %v2767
        %v3820 = vmul.f32 %v2767, %v3819
        %vm3821 = vcmp.eq.f32.partialorder %v2767, inf
        %v3822 = vsel %vm3821, %v2767, %v3820
        %vm3823 = vcmp.eq.f32.partialorder %v2767, 0.0
        %v3824 = vand.u32 %v2767, 2147483648
        %v3825 = vsel %vm3823, %v3824, %v3822
        %v3826 = vrsqrt.pop %v2771
        %v3827 = vmul.f32 %v2771, %v3826
        %vm3828 = vcmp.eq.f32.partialorder %v2771, inf
        %v3829 = vsel %vm3828, %v2771, %v3827
        %vm3830 = vcmp.eq.f32.partialorder %v2771, 0.0
        %v3831 = vand.u32 %v2771, 2147483648
        %v3832 = vsel %vm3830, %v3831, %v3829
        %v3833 = vrsqrt.pop %v2775
        %v3834 = vmul.f32 %v2775, %v3833
        %vm3835 = vcmp.eq.f32.partialorder %v2775, inf
        %v3836 = vsel %vm3835, %v2775, %v3834
        %vm3837 = vcmp.eq.f32.partialorder %v2775, 0.0
        %v3838 = vand.u32 %v2775, 2147483648
        %v3839 = vsel %vm3837, %v3838, %v3836
        %v3840 = vrsqrt.pop %v2779
        %v3841 = vmul.f32 %v2779, %v3840
        %vm3842 = vcmp.eq.f32.partialorder %v2779, inf
        %v3843 = vsel %vm3842, %v2779, %v3841
        %vm3844 = vcmp.eq.f32.partialorder %v2779, 0.0
        %v3845 = vand.u32 %v2779, 2147483648
        %v3846 = vsel %vm3844, %v3845, %v3843
        %v3847 = vrsqrt.pop %v2783
        %v3848 = vmul.f32 %v2783, %v3847
        %vm3849 = vcmp.eq.f32.partialorder %v2783, inf
        %v3850 = vsel %vm3849, %v2783, %v3848
        %vm3851 = vcmp.eq.f32.partialorder %v2783, 0.0
        %v3852 = vand.u32 %v2783, 2147483648
        %v3853 = vsel %vm3851, %v3852, %v3850
        %v3854 = vrsqrt.pop %v2787
        %v3855 = vmul.f32 %v2787, %v3854
        %vm3856 = vcmp.eq.f32.partialorder %v2787, inf
        %v3857 = vsel %vm3856, %v2787, %v3855
        %vm3858 = vcmp.eq.f32.partialorder %v2787, 0.0
        %v3859 = vand.u32 %v2787, 2147483648
        %v3860 = vsel %vm3858, %v3859, %v3857
        %v3861 = vrsqrt.pop %v2791
        %v3862 = vmul.f32 %v2791, %v3861
        %vm3863 = vcmp.eq.f32.partialorder %v2791, inf
        %v3864 = vsel %vm3863, %v2791, %v3862
        %vm3865 = vcmp.eq.f32.partialorder %v2791, 0.0
        %v3866 = vand.u32 %v2791, 2147483648
        %v3867 = vsel %vm3865, %v3866, %v3864
        %v3868 = vrsqrt.pop %v2795
        %v3869 = vmul.f32 %v2795, %v3868
        %vm3870 = vcmp.eq.f32.partialorder %v2795, inf
        %v3871 = vsel %vm3870, %v2795, %v3869
        %vm3872 = vcmp.eq.f32.partialorder %v2795, 0.0
        %v3873 = vand.u32 %v2795, 2147483648
        %v3874 = vsel %vm3872, %v3873, %v3871
        %v3875 = vrsqrt.pop %v2799
        %v3876 = vmul.f32 %v2799, %v3875
        %vm3877 = vcmp.eq.f32.partialorder %v2799, inf
        %v3878 = vsel %vm3877, %v2799, %v3876
        %vm3879 = vcmp.eq.f32.partialorder %v2799, 0.0
        %v3880 = vand.u32 %v2799, 2147483648
        %v3881 = vsel %vm3879, %v3880, %v3878
        %v3882 = vrsqrt.pop %v2803
        %v3883 = vmul.f32 %v2803, %v3882
        %vm3884 = vcmp.eq.f32.partialorder %v2803, inf
        %v3885 = vsel %vm3884, %v2803, %v3883
        %vm3886 = vcmp.eq.f32.partialorder %v2803, 0.0
        %v3887 = vand.u32 %v2803, 2147483648
        %v3888 = vsel %vm3886, %v3887, %v3885
        %v3889 = vrsqrt.pop %v2807
        %v3890 = vmul.f32 %v2807, %v3889
        %vm3891 = vcmp.eq.f32.partialorder %v2807, inf
        %v3892 = vsel %vm3891, %v2807, %v3890
        %vm3893 = vcmp.eq.f32.partialorder %v2807, 0.0
        %v3894 = vand.u32 %v2807, 2147483648
        %v3895 = vsel %vm3893, %v3894, %v3892
        %v3896 = vrsqrt.pop %v2811
        %v3897 = vmul.f32 %v2811, %v3896
        %vm3898 = vcmp.eq.f32.partialorder %v2811, inf
        %v3899 = vsel %vm3898, %v2811, %v3897
        %vm3900 = vcmp.eq.f32.partialorder %v2811, 0.0
        %v3901 = vand.u32 %v2811, 2147483648
        %v3902 = vsel %vm3900, %v3901, %v3899
        %v3903 = vrsqrt.pop %v2815
        %v3904 = vmul.f32 %v2815, %v3903
        %vm3905 = vcmp.eq.f32.partialorder %v2815, inf
        %v3906 = vsel %vm3905, %v2815, %v3904
        %vm3907 = vcmp.eq.f32.partialorder %v2815, 0.0
        %v3908 = vand.u32 %v2815, 2147483648
        %v3909 = vsel %vm3907, %v3908, %v3906
        %v3910 = vrsqrt.pop %v2819
        %v3911 = vmul.f32 %v2819, %v3910
        %vm3912 = vcmp.eq.f32.partialorder %v2819, inf
        %v3913 = vsel %vm3912, %v2819, %v3911
        %vm3914 = vcmp.eq.f32.partialorder %v2819, 0.0
        %v3915 = vand.u32 %v2819, 2147483648
        %v3916 = vsel %vm3914, %v3915, %v3913
        %v3917 = vrsqrt.pop %v2823
        %v3918 = vmul.f32 %v2823, %v3917
        %vm3919 = vcmp.eq.f32.partialorder %v2823, inf
        %v3920 = vsel %vm3919, %v2823, %v3918
        %vm3921 = vcmp.eq.f32.partialorder %v2823, 0.0
        %v3922 = vand.u32 %v2823, 2147483648
        %v3923 = vsel %vm3921, %v3922, %v3920
        %v3924 = vrsqrt.pop %v2827
        %v3925 = vmul.f32 %v2827, %v3924
        %vm3926 = vcmp.eq.f32.partialorder %v2827, inf
        %v3927 = vsel %vm3926, %v2827, %v3925
        %vm3928 = vcmp.eq.f32.partialorder %v2827, 0.0
        %v3929 = vand.u32 %v2827, 2147483648
        %v3930 = vsel %vm3928, %v3929, %v3927
        %v3931 = vrsqrt.pop %v2831
        %v3932 = vmul.f32 %v2831, %v3931
        %vm3933 = vcmp.eq.f32.partialorder %v2831, inf
        %v3934 = vsel %vm3933, %v2831, %v3932
        %vm3935 = vcmp.eq.f32.partialorder %v2831, 0.0
        %v3936 = vand.u32 %v2831, 2147483648
        %v3937 = vsel %vm3935, %v3936, %v3934
        %v3938 = vrsqrt.pop %v2835
        %v3939 = vmul.f32 %v2835, %v3938
        %vm3940 = vcmp.eq.f32.partialorder %v2835, inf
        %v3941 = vsel %vm3940, %v2835, %v3939
        %vm3942 = vcmp.eq.f32.partialorder %v2835, 0.0
        %v3943 = vand.u32 %v2835, 2147483648
        %v3944 = vsel %vm3942, %v3943, %v3941
        %v3945 = vrsqrt.pop %v2839
        %v3946 = vmul.f32 %v2839, %v3945
        %vm3947 = vcmp.eq.f32.partialorder %v2839, inf
        %v3948 = vsel %vm3947, %v2839, %v3946
        %vm3949 = vcmp.eq.f32.partialorder %v2839, 0.0
        %v3950 = vand.u32 %v2839, 2147483648
        %v3951 = vsel %vm3949, %v3950, %v3948
        %v3952 = vrsqrt.pop %v2843
        %v3953 = vmul.f32 %v2843, %v3952
        %vm3954 = vcmp.eq.f32.partialorder %v2843, inf
        %v3955 = vsel %vm3954, %v2843, %v3953
        %vm3956 = vcmp.eq.f32.partialorder %v2843, 0.0
        %v3957 = vand.u32 %v2843, 2147483648
        %v3958 = vsel %vm3956, %v3957, %v3955
        %v3959 = vrsqrt.pop %v2847
        %v3960 = vmul.f32 %v2847, %v3959
        %vm3961 = vcmp.eq.f32.partialorder %v2847, inf
        %v3962 = vsel %vm3961, %v2847, %v3960
        %vm3963 = vcmp.eq.f32.partialorder %v2847, 0.0
        %v3964 = vand.u32 %v2847, 2147483648
        %v3965 = vsel %vm3963, %v3964, %v3962
        %v3966 = vrsqrt.pop %v2851
        %v3967 = vmul.f32 %v2851, %v3966
        %vm3968 = vcmp.eq.f32.partialorder %v2851, inf
        %v3969 = vsel %vm3968, %v2851, %v3967
        %vm3970 = vcmp.eq.f32.partialorder %v2851, 0.0
        %v3971 = vand.u32 %v2851, 2147483648
        %v3972 = vsel %vm3970, %v3971, %v3969
        %v3973 = vrsqrt.pop %v2855
        %v3974 = vmul.f32 %v2855, %v3973
        %vm3975 = vcmp.eq.f32.partialorder %v2855, inf
        %v3976 = vsel %vm3975, %v2855, %v3974
        %vm3977 = vcmp.eq.f32.partialorder %v2855, 0.0
        %v3978 = vand.u32 %v2855, 2147483648
        %v3979 = vsel %vm3977, %v3978, %v3976
        %v3980 = vrsqrt.pop %v2859
        %v3981 = vmul.f32 %v2859, %v3980
        %vm3982 = vcmp.eq.f32.partialorder %v2859, inf
        %v3983 = vsel %vm3982, %v2859, %v3981
        %vm3984 = vcmp.eq.f32.partialorder %v2859, 0.0
        %v3985 = vand.u32 %v2859, 2147483648
        %v3986 = vsel %vm3984, %v3985, %v3983
        %v3987 = vrsqrt.pop %v2863
        %v3988 = vmul.f32 %v2863, %v3987
        %vm3989 = vcmp.eq.f32.partialorder %v2863, inf
        %v3990 = vsel %vm3989, %v2863, %v3988
        %vm3991 = vcmp.eq.f32.partialorder %v2863, 0.0
        %v3992 = vand.u32 %v2863, 2147483648
        %v3993 = vsel %vm3991, %v3992, %v3990
        %v3994 = vrsqrt.pop %v2867
        %v3995 = vmul.f32 %v2867, %v3994
        %vm3996 = vcmp.eq.f32.partialorder %v2867, inf
        %v3997 = vsel %vm3996, %v2867, %v3995
        %vm3998 = vcmp.eq.f32.partialorder %v2867, 0.0
        %v3999 = vand.u32 %v2867, 2147483648
        %v4000 = vsel %vm3998, %v3999, %v3997
        %v4001 = vrsqrt.pop %v2871
        %v4002 = vmul.f32 %v2871, %v4001
        %vm4003 = vcmp.eq.f32.partialorder %v2871, inf
        %v4004 = vsel %vm4003, %v2871, %v4002
        %vm4005 = vcmp.eq.f32.partialorder %v2871, 0.0
        %v4006 = vand.u32 %v2871, 2147483648
        %v4007 = vsel %vm4005, %v4006, %v4004
        %v4008 = vrsqrt.pop %v2875
        %v4009 = vmul.f32 %v2875, %v4008
        %vm4010 = vcmp.eq.f32.partialorder %v2875, inf
        %v4011 = vsel %vm4010, %v2875, %v4009
        %vm4012 = vcmp.eq.f32.partialorder %v2875, 0.0
        %v4013 = vand.u32 %v2875, 2147483648
        %v4014 = vsel %vm4012, %v4013, %v4011
        %v4015 = vrsqrt.pop %v2879
        %v4016 = vmul.f32 %v2879, %v4015
        %vm4017 = vcmp.eq.f32.partialorder %v2879, inf
        %v4018 = vsel %vm4017, %v2879, %v4016
        %vm4019 = vcmp.eq.f32.partialorder %v2879, 0.0
        %v4020 = vand.u32 %v2879, 2147483648
        %v4021 = vsel %vm4019, %v4020, %v4018
        %v4022 = vrsqrt.pop %v2883
        %v4023 = vmul.f32 %v2883, %v4022
        %vm4024 = vcmp.eq.f32.partialorder %v2883, inf
        %v4025 = vsel %vm4024, %v2883, %v4023
        %vm4026 = vcmp.eq.f32.partialorder %v2883, 0.0
        %v4027 = vand.u32 %v2883, 2147483648
        %v4028 = vsel %vm4026, %v4027, %v4025
        %v4029 = vrsqrt.pop %v2887
        %v4030 = vmul.f32 %v2887, %v4029
        %vm4031 = vcmp.eq.f32.partialorder %v2887, inf
        %v4032 = vsel %vm4031, %v2887, %v4030
        %vm4033 = vcmp.eq.f32.partialorder %v2887, 0.0
        %v4034 = vand.u32 %v2887, 2147483648
        %v4035 = vsel %vm4033, %v4034, %v4032
        %v4036 = vrsqrt.pop %v2891
        %v4037 = vmul.f32 %v2891, %v4036
        %vm4038 = vcmp.eq.f32.partialorder %v2891, inf
        %v4039 = vsel %vm4038, %v2891, %v4037
        %vm4040 = vcmp.eq.f32.partialorder %v2891, 0.0
        %v4041 = vand.u32 %v2891, 2147483648
        %v4042 = vsel %vm4040, %v4041, %v4039
        %v4043 = vrsqrt.pop %v2895
        %v4044 = vmul.f32 %v2895, %v4043
        %vm4045 = vcmp.eq.f32.partialorder %v2895, inf
        %v4046 = vsel %vm4045, %v2895, %v4044
        %vm4047 = vcmp.eq.f32.partialorder %v2895, 0.0
        %v4048 = vand.u32 %v2895, 2147483648
        %v4049 = vsel %vm4047, %v4048, %v4046
        %v4050 = vrsqrt.pop %v2899
        %v4051 = vmul.f32 %v2899, %v4050
        %vm4052 = vcmp.eq.f32.partialorder %v2899, inf
        %v4053 = vsel %vm4052, %v2899, %v4051
        %vm4054 = vcmp.eq.f32.partialorder %v2899, 0.0
        %v4055 = vand.u32 %v2899, 2147483648
        %v4056 = vsel %vm4054, %v4055, %v4053
        %v4057 = vrsqrt.pop %v2903
        %v4058 = vmul.f32 %v2903, %v4057
        %vm4059 = vcmp.eq.f32.partialorder %v2903, inf
        %v4060 = vsel %vm4059, %v2903, %v4058
        %vm4061 = vcmp.eq.f32.partialorder %v2903, 0.0
        %v4062 = vand.u32 %v2903, 2147483648
        %v4063 = vsel %vm4061, %v4062, %v4060
        %v4064 = vrsqrt.pop %v2907
        %v4065 = vmul.f32 %v2907, %v4064
        %vm4066 = vcmp.eq.f32.partialorder %v2907, inf
        %v4067 = vsel %vm4066, %v2907, %v4065
        %vm4068 = vcmp.eq.f32.partialorder %v2907, 0.0
        %v4069 = vand.u32 %v2907, 2147483648
        %v4070 = vsel %vm4068, %v4069, %v4067
        %v4071 = vrsqrt.pop %v2911
        %v4072 = vmul.f32 %v2911, %v4071
        %vm4073 = vcmp.eq.f32.partialorder %v2911, inf
        %v4074 = vsel %vm4073, %v2911, %v4072
        %vm4075 = vcmp.eq.f32.partialorder %v2911, 0.0
        %v4076 = vand.u32 %v2911, 2147483648
        %v4077 = vsel %vm4075, %v4076, %v4074
        %v4078 = vrsqrt.pop %v2915
        %v4079 = vmul.f32 %v2915, %v4078
        %vm4080 = vcmp.eq.f32.partialorder %v2915, inf
        %v4081 = vsel %vm4080, %v2915, %v4079
        %vm4082 = vcmp.eq.f32.partialorder %v2915, 0.0
        %v4083 = vand.u32 %v2915, 2147483648
        %v4084 = vsel %vm4082, %v4083, %v4081
        %v4085 = vrsqrt.pop %v2919
        %v4086 = vmul.f32 %v2919, %v4085
        %vm4087 = vcmp.eq.f32.partialorder %v2919, inf
        %v4088 = vsel %vm4087, %v2919, %v4086
        %vm4089 = vcmp.eq.f32.partialorder %v2919, 0.0
        %v4090 = vand.u32 %v2919, 2147483648
        %v4091 = vsel %vm4089, %v4090, %v4088
        %v4092 = vrsqrt.pop %v2923
        %v4093 = vmul.f32 %v2923, %v4092
        %vm4094 = vcmp.eq.f32.partialorder %v2923, inf
        %v4095 = vsel %vm4094, %v2923, %v4093
        %vm4096 = vcmp.eq.f32.partialorder %v2923, 0.0
        %v4097 = vand.u32 %v2923, 2147483648
        %v4098 = vsel %vm4096, %v4097, %v4095
        %v4099 = vrsqrt.pop %v2927
        %v4100 = vmul.f32 %v2927, %v4099
        %vm4101 = vcmp.eq.f32.partialorder %v2927, inf
        %v4102 = vsel %vm4101, %v2927, %v4100
        %vm4103 = vcmp.eq.f32.partialorder %v2927, 0.0
        %v4104 = vand.u32 %v2927, 2147483648
        %v4105 = vsel %vm4103, %v4104, %v4102
        %v4106 = vrsqrt.pop %v2931
        %v4107 = vmul.f32 %v2931, %v4106
        %vm4108 = vcmp.eq.f32.partialorder %v2931, inf
        %v4109 = vsel %vm4108, %v2931, %v4107
        %vm4110 = vcmp.eq.f32.partialorder %v2931, 0.0
        %v4111 = vand.u32 %v2931, 2147483648
        %v4112 = vsel %vm4110, %v4111, %v4109
        %v4113 = vrsqrt.pop %v2935
        %v4114 = vmul.f32 %v2935, %v4113
        %vm4115 = vcmp.eq.f32.partialorder %v2935, inf
        %v4116 = vsel %vm4115, %v2935, %v4114
        %vm4117 = vcmp.eq.f32.partialorder %v2935, 0.0
        %v4118 = vand.u32 %v2935, 2147483648
        %v4119 = vsel %vm4117, %v4118, %v4116
        %v4120 = vrsqrt.pop %v2939
        %v4121 = vmul.f32 %v2939, %v4120
        %vm4122 = vcmp.eq.f32.partialorder %v2939, inf
        %v4123 = vsel %vm4122, %v2939, %v4121
        %vm4124 = vcmp.eq.f32.partialorder %v2939, 0.0
        %v4125 = vand.u32 %v2939, 2147483648
        %v4126 = vsel %vm4124, %v4125, %v4123
        %v4127 = vrsqrt.pop %v2943
        %v4128 = vmul.f32 %v2943, %v4127
        %vm4129 = vcmp.eq.f32.partialorder %v2943, inf
        %v4130 = vsel %vm4129, %v2943, %v4128
        %vm4131 = vcmp.eq.f32.partialorder %v2943, 0.0
        %v4132 = vand.u32 %v2943, 2147483648
        %v4133 = vsel %vm4131, %v4132, %v4130
        %v4134 = vrsqrt.pop %v2947
        %v4135 = vmul.f32 %v2947, %v4134
        %vm4136 = vcmp.eq.f32.partialorder %v2947, inf
        %v4137 = vsel %vm4136, %v2947, %v4135
        %vm4138 = vcmp.eq.f32.partialorder %v2947, 0.0
        %v4139 = vand.u32 %v2947, 2147483648
        %v4140 = vsel %vm4138, %v4139, %v4137
        %v4141 = vrsqrt.pop %v2951
        %v4142 = vmul.f32 %v2951, %v4141
        %vm4143 = vcmp.eq.f32.partialorder %v2951, inf
        %v4144 = vsel %vm4143, %v2951, %v4142
        %vm4145 = vcmp.eq.f32.partialorder %v2951, 0.0
        %v4146 = vand.u32 %v2951, 2147483648
        %v4147 = vsel %vm4145, %v4146, %v4144
        %v4148 = vrsqrt.pop %v2955
        %v4149 = vmul.f32 %v2955, %v4148
        %vm4150 = vcmp.eq.f32.partialorder %v2955, inf
        %v4151 = vsel %vm4150, %v2955, %v4149
        %vm4152 = vcmp.eq.f32.partialorder %v2955, 0.0
        %v4153 = vand.u32 %v2955, 2147483648
        %v4154 = vsel %vm4152, %v4153, %v4151
        %v4155 = vrsqrt.pop %v2959
        %v4156 = vmul.f32 %v2959, %v4155
        %vm4157 = vcmp.eq.f32.partialorder %v2959, inf
        %v4158 = vsel %vm4157, %v2959, %v4156
        %vm4159 = vcmp.eq.f32.partialorder %v2959, 0.0
        %v4160 = vand.u32 %v2959, 2147483648
        %v4161 = vsel %vm4159, %v4160, %v4158
        %v4162 = vrsqrt.pop %v2963
        %v4163 = vmul.f32 %v2963, %v4162
        %vm4164 = vcmp.eq.f32.partialorder %v2963, inf
        %v4165 = vsel %vm4164, %v2963, %v4163
        %vm4166 = vcmp.eq.f32.partialorder %v2963, 0.0
        %v4167 = vand.u32 %v2963, 2147483648
        %v4168 = vsel %vm4166, %v4167, %v4165
        %v4169 = vrsqrt.pop %v2967
        %v4170 = vmul.f32 %v2967, %v4169
        %vm4171 = vcmp.eq.f32.partialorder %v2967, inf
        %v4172 = vsel %vm4171, %v2967, %v4170
        %vm4173 = vcmp.eq.f32.partialorder %v2967, 0.0
        %v4174 = vand.u32 %v2967, 2147483648
        %v4175 = vsel %vm4173, %v4174, %v4172
        %v4176 = vrsqrt.pop %v2971
        %v4177 = vmul.f32 %v2971, %v4176
        %vm4178 = vcmp.eq.f32.partialorder %v2971, inf
        %v4179 = vsel %vm4178, %v2971, %v4177
        %vm4180 = vcmp.eq.f32.partialorder %v2971, 0.0
        %v4181 = vand.u32 %v2971, 2147483648
        %v4182 = vsel %vm4180, %v4181, %v4179
        %v4183 = vrsqrt.pop %v2975
        %v4184 = vmul.f32 %v2975, %v4183
        %vm4185 = vcmp.eq.f32.partialorder %v2975, inf
        %v4186 = vsel %vm4185, %v2975, %v4184
        %vm4187 = vcmp.eq.f32.partialorder %v2975, 0.0
        %v4188 = vand.u32 %v2975, 2147483648
        %v4189 = vsel %vm4187, %v4188, %v4186
        %v4190 = vrsqrt.pop %v2979
        %v4191 = vmul.f32 %v2979, %v4190
        %vm4192 = vcmp.eq.f32.partialorder %v2979, inf
        %v4193 = vsel %vm4192, %v2979, %v4191
        %vm4194 = vcmp.eq.f32.partialorder %v2979, 0.0
        %v4195 = vand.u32 %v2979, 2147483648
        %v4196 = vsel %vm4194, %v4195, %v4193
        %v4197 = vrsqrt.pop %v2983
        %v4198 = vmul.f32 %v2983, %v4197
        %vm4199 = vcmp.eq.f32.partialorder %v2983, inf
        %v4200 = vsel %vm4199, %v2983, %v4198
        %vm4201 = vcmp.eq.f32.partialorder %v2983, 0.0
        %v4202 = vand.u32 %v2983, 2147483648
        %v4203 = vsel %vm4201, %v4202, %v4200
        %v4204 = vrsqrt.pop %v2987
        %v4205 = vmul.f32 %v2987, %v4204
        %vm4206 = vcmp.eq.f32.partialorder %v2987, inf
        %v4207 = vsel %vm4206, %v2987, %v4205
        %vm4208 = vcmp.eq.f32.partialorder %v2987, 0.0
        %v4209 = vand.u32 %v2987, 2147483648
        %v4210 = vsel %vm4208, %v4209, %v4207
        %v4211 = vrsqrt.pop %v2991
        %v4212 = vmul.f32 %v2991, %v4211
        %vm4213 = vcmp.eq.f32.partialorder %v2991, inf
        %v4214 = vsel %vm4213, %v2991, %v4212
        %vm4215 = vcmp.eq.f32.partialorder %v2991, 0.0
        %v4216 = vand.u32 %v2991, 2147483648
        %v4217 = vsel %vm4215, %v4216, %v4214
        %v4218 = vrsqrt.pop %v2995
        %v4219 = vmul.f32 %v2995, %v4218
        %vm4220 = vcmp.eq.f32.partialorder %v2995, inf
        %v4221 = vsel %vm4220, %v2995, %v4219
        %vm4222 = vcmp.eq.f32.partialorder %v2995, 0.0
        %v4223 = vand.u32 %v2995, 2147483648
        %v4224 = vsel %vm4222, %v4223, %v4221
        %v4225 = vrsqrt.pop %v2999
        %v4226 = vmul.f32 %v2999, %v4225
        %vm4227 = vcmp.eq.f32.partialorder %v2999, inf
        %v4228 = vsel %vm4227, %v2999, %v4226
        %vm4229 = vcmp.eq.f32.partialorder %v2999, 0.0
        %v4230 = vand.u32 %v2999, 2147483648
        %v4231 = vsel %vm4229, %v4230, %v4228
        %v4232 = vrsqrt.pop %v3003
        %v4233 = vmul.f32 %v3003, %v4232
        %vm4234 = vcmp.eq.f32.partialorder %v3003, inf
        %v4235 = vsel %vm4234, %v3003, %v4233
        %vm4236 = vcmp.eq.f32.partialorder %v3003, 0.0
        %v4237 = vand.u32 %v3003, 2147483648
        %v4238 = vsel %vm4236, %v4237, %v4235
        %v4239 = vrsqrt.pop %v3007
        %v4240 = vmul.f32 %v3007, %v4239
        %vm4241 = vcmp.eq.f32.partialorder %v3007, inf
        %v4242 = vsel %vm4241, %v3007, %v4240
        %vm4243 = vcmp.eq.f32.partialorder %v3007, 0.0
        %v4244 = vand.u32 %v3007, 2147483648
        %v4245 = vsel %vm4243, %v4244, %v4242
        %v4246 = vrsqrt.pop %v3011
        %v4247 = vmul.f32 %v3011, %v4246
        %vm4248 = vcmp.eq.f32.partialorder %v3011, inf
        %v4249 = vsel %vm4248, %v3011, %v4247
        %vm4250 = vcmp.eq.f32.partialorder %v3011, 0.0
        %v4251 = vand.u32 %v3011, 2147483648
        %v4252 = vsel %vm4250, %v4251, %v4249
        %v4253 = vrsqrt.pop %v3015
        %v4254 = vmul.f32 %v3015, %v4253
        %vm4255 = vcmp.eq.f32.partialorder %v3015, inf
        %v4256 = vsel %vm4255, %v3015, %v4254
        %vm4257 = vcmp.eq.f32.partialorder %v3015, 0.0
        %v4258 = vand.u32 %v3015, 2147483648
        %v4259 = vsel %vm4257, %v4258, %v4256
        %v4260 = vrsqrt.pop %v3019
        %v4261 = vmul.f32 %v3019, %v4260
        %vm4262 = vcmp.eq.f32.partialorder %v3019, inf
        %v4263 = vsel %vm4262, %v3019, %v4261
        %vm4264 = vcmp.eq.f32.partialorder %v3019, 0.0
        %v4265 = vand.u32 %v3019, 2147483648
        %v4266 = vsel %vm4264, %v4265, %v4263
        %v4267 = vrsqrt.pop %v3023
        %v4268 = vmul.f32 %v3023, %v4267
        %vm4269 = vcmp.eq.f32.partialorder %v3023, inf
        %v4270 = vsel %vm4269, %v3023, %v4268
        %vm4271 = vcmp.eq.f32.partialorder %v3023, 0.0
        %v4272 = vand.u32 %v3023, 2147483648
        %v4273 = vsel %vm4271, %v4272, %v4270
        %v4274 = vrsqrt.pop %v3027
        %v4275 = vmul.f32 %v3027, %v4274
        %vm4276 = vcmp.eq.f32.partialorder %v3027, inf
        %v4277 = vsel %vm4276, %v3027, %v4275
        %vm4278 = vcmp.eq.f32.partialorder %v3027, 0.0
        %v4279 = vand.u32 %v3027, 2147483648
        %v4280 = vsel %vm4278, %v4279, %v4277
        %v4281 = vrsqrt.pop %v3031
        %v4282 = vmul.f32 %v3031, %v4281
        %vm4283 = vcmp.eq.f32.partialorder %v3031, inf
        %v4284 = vsel %vm4283, %v3031, %v4282
        %vm4285 = vcmp.eq.f32.partialorder %v3031, 0.0
        %v4286 = vand.u32 %v3031, 2147483648
        %v4287 = vsel %vm4285, %v4286, %v4284
        %v4288 = vrsqrt.pop %v3035
        %v4289 = vmul.f32 %v3035, %v4288
        %vm4290 = vcmp.eq.f32.partialorder %v3035, inf
        %v4291 = vsel %vm4290, %v3035, %v4289
        %vm4292 = vcmp.eq.f32.partialorder %v3035, 0.0
        %v4293 = vand.u32 %v3035, 2147483648
        %v4294 = vsel %vm4292, %v4293, %v4291
        %v4295 = vrsqrt.pop %v3039
        %v4296 = vmul.f32 %v3039, %v4295
        %vm4297 = vcmp.eq.f32.partialorder %v3039, inf
        %v4298 = vsel %vm4297, %v3039, %v4296
        %vm4299 = vcmp.eq.f32.partialorder %v3039, 0.0
        %v4300 = vand.u32 %v3039, 2147483648
        %v4301 = vsel %vm4299, %v4300, %v4298
        %v4302 = vrsqrt.pop %v3043
        %v4303 = vmul.f32 %v3043, %v4302
        %vm4304 = vcmp.eq.f32.partialorder %v3043, inf
        %v4305 = vsel %vm4304, %v3043, %v4303
        %vm4306 = vcmp.eq.f32.partialorder %v3043, 0.0
        %v4307 = vand.u32 %v3043, 2147483648
        %v4308 = vsel %vm4306, %v4307, %v4305
        %v4309 = vrsqrt.pop %v3047
        %v4310 = vmul.f32 %v3047, %v4309
        %vm4311 = vcmp.eq.f32.partialorder %v3047, inf
        %v4312 = vsel %vm4311, %v3047, %v4310
        %vm4313 = vcmp.eq.f32.partialorder %v3047, 0.0
        %v4314 = vand.u32 %v3047, 2147483648
        %v4315 = vsel %vm4313, %v4314, %v4312
        %v4316 = vrsqrt.pop %v3051
        %v4317 = vmul.f32 %v3051, %v4316
        %vm4318 = vcmp.eq.f32.partialorder %v3051, inf
        %v4319 = vsel %vm4318, %v3051, %v4317
        %vm4320 = vcmp.eq.f32.partialorder %v3051, 0.0
        %v4321 = vand.u32 %v3051, 2147483648
        %v4322 = vsel %vm4320, %v4321, %v4319
        %v4323 = vrsqrt.pop %v3055
        %v4324 = vmul.f32 %v3055, %v4323
        %vm4325 = vcmp.eq.f32.partialorder %v3055, inf
        %v4326 = vsel %vm4325, %v3055, %v4324
        %vm4327 = vcmp.eq.f32.partialorder %v3055, 0.0
        %v4328 = vand.u32 %v3055, 2147483648
        %v4329 = vsel %vm4327, %v4328, %v4326
        %v4330 = vrsqrt.pop %v3059
        %v4331 = vmul.f32 %v3059, %v4330
        %vm4332 = vcmp.eq.f32.partialorder %v3059, inf
        %v4333 = vsel %vm4332, %v3059, %v4331
        %vm4334 = vcmp.eq.f32.partialorder %v3059, 0.0
        %v4335 = vand.u32 %v3059, 2147483648
        %v4336 = vsel %vm4334, %v4335, %v4333
        %v4337 = vrsqrt.pop %v3063
        %v4338 = vmul.f32 %v3063, %v4337
        %vm4339 = vcmp.eq.f32.partialorder %v3063, inf
        %v4340 = vsel %vm4339, %v3063, %v4338
        %vm4341 = vcmp.eq.f32.partialorder %v3063, 0.0
        %v4342 = vand.u32 %v3063, 2147483648
        %v4343 = vsel %vm4341, %v4342, %v4340
        %v4344 = vrsqrt.pop %v3067
        %v4345 = vmul.f32 %v3067, %v4344
        %vm4346 = vcmp.eq.f32.partialorder %v3067, inf
        %v4347 = vsel %vm4346, %v3067, %v4345
        %vm4348 = vcmp.eq.f32.partialorder %v3067, 0.0
        %v4349 = vand.u32 %v3067, 2147483648
        %v4350 = vsel %vm4348, %v4349, %v4347
        %v4351 = vrsqrt.pop %v3071
        %v4352 = vmul.f32 %v3071, %v4351
        %vm4353 = vcmp.eq.f32.partialorder %v3071, inf
        %v4354 = vsel %vm4353, %v3071, %v4352
        %vm4355 = vcmp.eq.f32.partialorder %v3071, 0.0
        %v4356 = vand.u32 %v3071, 2147483648
        %v4357 = vsel %vm4355, %v4356, %v4354
        %v4358 = vrsqrt.pop %v3075
        %v4359 = vmul.f32 %v3075, %v4358
        %vm4360 = vcmp.eq.f32.partialorder %v3075, inf
        %v4361 = vsel %vm4360, %v3075, %v4359
        %vm4362 = vcmp.eq.f32.partialorder %v3075, 0.0
        %v4363 = vand.u32 %v3075, 2147483648
        %v4364 = vsel %vm4362, %v4363, %v4361
        %v4365 = vrsqrt.pop %v3079
        %v4366 = vmul.f32 %v3079, %v4365
        %vm4367 = vcmp.eq.f32.partialorder %v3079, inf
        %v4368 = vsel %vm4367, %v3079, %v4366
        %vm4369 = vcmp.eq.f32.partialorder %v3079, 0.0
        %v4370 = vand.u32 %v3079, 2147483648
        %v4371 = vsel %vm4369, %v4370, %v4368
        %v4372 = vrsqrt.pop %v3083
        %v4373 = vmul.f32 %v3083, %v4372
        %vm4374 = vcmp.eq.f32.partialorder %v3083, inf
        %v4375 = vsel %vm4374, %v3083, %v4373
        %vm4376 = vcmp.eq.f32.partialorder %v3083, 0.0
        %v4377 = vand.u32 %v3083, 2147483648
        %v4378 = vsel %vm4376, %v4377, %v4375
        %v4379 = vrsqrt.pop %v3087
        %v4380 = vmul.f32 %v3087, %v4379
        %vm4381 = vcmp.eq.f32.partialorder %v3087, inf
        %v4382 = vsel %vm4381, %v3087, %v4380
        %vm4383 = vcmp.eq.f32.partialorder %v3087, 0.0
        %v4384 = vand.u32 %v3087, 2147483648
        %v4385 = vsel %vm4383, %v4384, %v4382
        %v4386 = vrsqrt.pop %v3091
        %v4387 = vmul.f32 %v3091, %v4386
        %vm4388 = vcmp.eq.f32.partialorder %v3091, inf
        %v4389 = vsel %vm4388, %v3091, %v4387
        %vm4390 = vcmp.eq.f32.partialorder %v3091, 0.0
        %v4391 = vand.u32 %v3091, 2147483648
        %v4392 = vsel %vm4390, %v4391, %v4389
        %v4393 = vrsqrt.pop %v3095
        %v4394 = vmul.f32 %v3095, %v4393
        %vm4395 = vcmp.eq.f32.partialorder %v3095, inf
        %v4396 = vsel %vm4395, %v3095, %v4394
        %vm4397 = vcmp.eq.f32.partialorder %v3095, 0.0
        %v4398 = vand.u32 %v3095, 2147483648
        %v4399 = vsel %vm4397, %v4398, %v4396
        %v4400 = vrsqrt.pop %v3099
        %v4401 = vmul.f32 %v3099, %v4400
        %vm4402 = vcmp.eq.f32.partialorder %v3099, inf
        %v4403 = vsel %vm4402, %v3099, %v4401
        %vm4404 = vcmp.eq.f32.partialorder %v3099, 0.0
        %v4405 = vand.u32 %v3099, 2147483648
        %v4406 = vsel %vm4404, %v4405, %v4403
        %v4407 = vrsqrt.pop %v3103
        %v4408 = vmul.f32 %v3103, %v4407
        %vm4409 = vcmp.eq.f32.partialorder %v3103, inf
        %v4410 = vsel %vm4409, %v3103, %v4408
        %vm4411 = vcmp.eq.f32.partialorder %v3103, 0.0
        %v4412 = vand.u32 %v3103, 2147483648
        %v4413 = vsel %vm4411, %v4412, %v4410
        %v4414 = vrsqrt.pop %v3107
        %v4415 = vmul.f32 %v3107, %v4414
        %vm4416 = vcmp.eq.f32.partialorder %v3107, inf
        %v4417 = vsel %vm4416, %v3107, %v4415
        %vm4418 = vcmp.eq.f32.partialorder %v3107, 0.0
        %v4419 = vand.u32 %v3107, 2147483648
        %v4420 = vsel %vm4418, %v4419, %v4417
        %v4421 = vrsqrt.pop %v3111
        %v4422 = vmul.f32 %v3111, %v4421
        %vm4423 = vcmp.eq.f32.partialorder %v3111, inf
        %v4424 = vsel %vm4423, %v3111, %v4422
        %vm4425 = vcmp.eq.f32.partialorder %v3111, 0.0
        %v4426 = vand.u32 %v3111, 2147483648
        %v4427 = vsel %vm4425, %v4426, %v4424
        %v4428 = vsub.f32 200.0, %v3118
        %v4429 = vsub.f32 200.0, %v3125
        %v4430 = vsub.f32 200.0, %v3132
        %v4431 = vsub.f32 200.0, %v3139
        %v4432 = vsub.f32 200.0, %v3146
        %v4433 = vsub.f32 200.0, %v3153
        %v4434 = vsub.f32 200.0, %v3160
        %v4435 = vsub.f32 200.0, %v3167
        %v4436 = vsub.f32 200.0, %v3174
        %v4437 = vsub.f32 200.0, %v3181
        %v4438 = vsub.f32 200.0, %v3188
        %v4439 = vsub.f32 200.0, %v3195
        %v4440 = vsub.f32 200.0, %v3202
        %v4441 = vsub.f32 200.0, %v3209
        %v4442 = vsub.f32 200.0, %v3216
        %v4443 = vsub.f32 200.0, %v3223
        %v4444 = vsub.f32 200.0, %v3230
        %v4445 = vsub.f32 200.0, %v3237
        %v4446 = vsub.f32 200.0, %v3244
        %v4447 = vsub.f32 200.0, %v3251
        %v4448 = vsub.f32 200.0, %v3258
        %v4449 = vsub.f32 200.0, %v3265
        %v4450 = vsub.f32 200.0, %v3272
        %v4451 = vsub.f32 200.0, %v3279
        %v4452 = vsub.f32 200.0, %v3286
        %v4453 = vsub.f32 200.0, %v3293
        %v4454 = vsub.f32 200.0, %v3300
        %v4455 = vsub.f32 200.0, %v3307
        %v4456 = vsub.f32 200.0, %v3314
        %v4457 = vsub.f32 200.0, %v3321
        %v4458 = vsub.f32 200.0, %v3328
        %v4459 = vsub.f32 200.0, %v3335
        %v4460 = vsub.f32 200.0, %v3342
        %v4461 = vsub.f32 200.0, %v3349
        %v4462 = vsub.f32 200.0, %v3356
        %v4463 = vsub.f32 200.0, %v3363
        %v4464 = vsub.f32 200.0, %v3370
        %v4465 = vsub.f32 200.0, %v3377
        %v4466 = vsub.f32 200.0, %v3384
        %v4467 = vsub.f32 200.0, %v3391
        %v4468 = vsub.f32 200.0, %v3398
        %v4469 = vsub.f32 200.0, %v3405
        %v4470 = vsub.f32 200.0, %v3412
        %v4471 = vsub.f32 200.0, %v3419
        %v4472 = vsub.f32 200.0, %v3426
        %v4473 = vsub.f32 200.0, %v3433
        %v4474 = vsub.f32 200.0, %v3440
        %v4475 = vsub.f32 200.0, %v3447
        %v4476 = vsub.f32 200.0, %v3454
        %v4477 = vsub.f32 200.0, %v3461
        %v4478 = vsub.f32 200.0, %v3468
        %v4479 = vsub.f32 200.0, %v3475
        %v4480 = vsub.f32 200.0, %v3482
        %v4481 = vsub.f32 200.0, %v3489
        %v4482 = vsub.f32 200.0, %v3496
        %v4483 = vsub.f32 200.0, %v3503
        %v4484 = vsub.f32 200.0, %v3510
        %v4485 = vsub.f32 200.0, %v3517
        %v4486 = vsub.f32 200.0, %v3524
        %v4487 = vsub.f32 200.0, %v3531
        %v4488 = vsub.f32 200.0, %v3538
        %v4489 = vsub.f32 200.0, %v3545
        %v4490 = vsub.f32 200.0, %v3552
        %v4491 = vsub.f32 200.0, %v3559
        %v4492 = vsub.f32 200.0, %v3566
        %v4493 = vsub.f32 200.0, %v3573
        %v4494 = vsub.f32 200.0, %v3580
        %v4495 = vsub.f32 200.0, %v3587
        %v4496 = vsub.f32 200.0, %v3594
        %v4497 = vsub.f32 200.0, %v3601
        %v4498 = vsub.f32 200.0, %v3608
        %v4499 = vsub.f32 200.0, %v3615
        %v4500 = vsub.f32 200.0, %v3622
        %v4501 = vsub.f32 200.0, %v3629
        %v4502 = vsub.f32 200.0, %v3636
        %v4503 = vsub.f32 200.0, %v3643
        %v4504 = vsub.f32 200.0, %v3650
        %v4505 = vsub.f32 200.0, %v3657
        %v4506 = vsub.f32 200.0, %v3664
        %v4507 = vsub.f32 200.0, %v3671
        %v4508 = vsub.f32 200.0, %v3678
        %v4509 = vsub.f32 200.0, %v3685
        %v4510 = vsub.f32 200.0, %v3692
        %v4511 = vsub.f32 200.0, %v3699
        %v4512 = vsub.f32 200.0, %v3706
        %v4513 = vsub.f32 200.0, %v3713
        %v4514 = vsub.f32 200.0, %v3720
        %v4515 = vsub.f32 200.0, %v3727
        %v4516 = vsub.f32 200.0, %v3734
        %v4517 = vsub.f32 200.0, %v3741
        %v4518 = vsub.f32 200.0, %v3748
        %v4519 = vsub.f32 200.0, %v3755
        %v4520 = vsub.f32 200.0, %v3762
        %v4521 = vsub.f32 200.0, %v3769
        %v4522 = vsub.f32 200.0, %v3776
        %v4523 = vsub.f32 200.0, %v3783
        %v4524 = vsub.f32 200.0, %v3790
        %v4525 = vsub.f32 200.0, %v3797
        %v4526 = vsub.f32 200.0, %v3804
        %v4527 = vsub.f32 200.0, %v3811
        %v4528 = vsub.f32 200.0, %v3818
        %v4529 = vsub.f32 200.0, %v3825
        %v4530 = vsub.f32 200.0, %v3832
        %v4531 = vsub.f32 200.0, %v3839
        %v4532 = vsub.f32 200.0, %v3846
        %v4533 = vsub.f32 200.0, %v3853
        %v4534 = vsub.f32 200.0, %v3860
        %v4535 = vsub.f32 200.0, %v3867
        %v4536 = vsub.f32 200.0, %v3874
        %v4537 = vsub.f32 200.0, %v3881
        %v4538 = vsub.f32 200.0, %v3888
        %v4539 = vsub.f32 200.0, %v3895
        %v4540 = vsub.f32 200.0, %v3902
        %v4541 = vsub.f32 200.0, %v3909
        %v4542 = vsub.f32 200.0, %v3916
        %v4543 = vsub.f32 200.0, %v3923
        %v4544 = vsub.f32 200.0, %v3930
        %v4545 = vsub.f32 200.0, %v3937
        %v4546 = vsub.f32 200.0, %v3944
        %v4547 = vsub.f32 200.0, %v3951
        %v4548 = vsub.f32 200.0, %v3958
        %v4549 = vsub.f32 200.0, %v3965
        %v4550 = vsub.f32 200.0, %v3972
        %v4551 = vsub.f32 200.0, %v3979
        %v4552 = vsub.f32 200.0, %v3986
        %v4553 = vsub.f32 200.0, %v3993
        %v4554 = vsub.f32 200.0, %v4000
        %v4555 = vsub.f32 200.0, %v4007
        %v4556 = vsub.f32 200.0, %v4014
        %v4557 = vsub.f32 200.0, %v4021
        %v4558 = vsub.f32 200.0, %v4028
        %v4559 = vsub.f32 200.0, %v4035
        %v4560 = vsub.f32 200.0, %v4042
        %v4561 = vsub.f32 200.0, %v4049
        %v4562 = vsub.f32 200.0, %v4056
        %v4563 = vsub.f32 200.0, %v4063
        %v4564 = vsub.f32 200.0, %v4070
        %v4565 = vsub.f32 200.0, %v4077
        %v4566 = vsub.f32 200.0, %v4084
        %v4567 = vsub.f32 200.0, %v4091
        %v4568 = vsub.f32 200.0, %v4098
        %v4569 = vsub.f32 200.0, %v4105
        %v4570 = vsub.f32 200.0, %v4112
        %v4571 = vsub.f32 200.0, %v4119
        %v4572 = vsub.f32 200.0, %v4126
        %v4573 = vsub.f32 200.0, %v4133
        %v4574 = vsub.f32 200.0, %v4140
        %v4575 = vsub.f32 200.0, %v4147
        %v4576 = vsub.f32 200.0, %v4154
        %v4577 = vsub.f32 200.0, %v4161
        %v4578 = vsub.f32 200.0, %v4168
        %v4579 = vsub.f32 200.0, %v4175
        %v4580 = vsub.f32 200.0, %v4182
        %v4581 = vsub.f32 200.0, %v4189
        %v4582 = vsub.f32 200.0, %v4196
        %v4583 = vsub.f32 200.0, %v4203
        %v4584 = vsub.f32 200.0, %v4210
        %v4585 = vsub.f32 200.0, %v4217
        %v4586 = vsub.f32 200.0, %v4224
        %v4587 = vsub.f32 200.0, %v4231
        %v4588 = vsub.f32 200.0, %v4238
        %v4589 = vsub.f32 200.0, %v4245
        %v4590 = vsub.f32 200.0, %v4252
        %v4591 = vsub.f32 200.0, %v4259
        %v4592 = vsub.f32 200.0, %v4266
        %v4593 = vsub.f32 200.0, %v4273
        %v4594 = vsub.f32 200.0, %v4280
        %v4595 = vsub.f32 200.0, %v4287
        %v4596 = vsub.f32 200.0, %v4294
        %v4597 = vsub.f32 200.0, %v4301
        %v4598 = vsub.f32 200.0, %v4308
        %v4599 = vsub.f32 200.0, %v4315
        %v4600 = vsub.f32 200.0, %v4322
        %v4601 = vsub.f32 200.0, %v4329
        %v4602 = vsub.f32 200.0, %v4336
        %v4603 = vsub.f32 200.0, %v4343
        %v4604 = vsub.f32 200.0, %v4350
        %v4605 = vsub.f32 200.0, %v4357
        %v4606 = vsub.f32 200.0, %v4364
        %v4607 = vsub.f32 200.0, %v4371
        %v4608 = vsub.f32 200.0, %v4378
        %v4609 = vsub.f32 200.0, %v4385
        %v4610 = vsub.f32 200.0, %v4392
        %v4611 = vsub.f32 200.0, %v4399
        %v4612 = vsub.f32 200.0, %v4406
        %v4613 = vsub.f32 200.0, %v4413
        %v4614 = vsub.f32 200.0, %v4420
        %v4615 = vsub.f32 200.0, %v4427
        %v4616 = vmax.f32 %v4428, 0.0
        %v4617 = vmax.f32 %v4429, 0.0
        %v4618 = vmax.f32 %v4430, 0.0
        %v4619 = vmax.f32 %v4431, 0.0
        %v4620 = vmax.f32 %v4432, 0.0
        %v4621 = vmax.f32 %v4433, 0.0
        %v4622 = vmax.f32 %v4434, 0.0
        %v4623 = vmax.f32 %v4435, 0.0
        %v4624 = vmax.f32 %v4436, 0.0
        %v4625 = vmax.f32 %v4437, 0.0
        %v4626 = vmax.f32 %v4438, 0.0
        %v4627 = vmax.f32 %v4439, 0.0
        %v4628 = vmax.f32 %v4440, 0.0
        %v4629 = vmax.f32 %v4441, 0.0
        %v4630 = vmax.f32 %v4442, 0.0
        %v4631 = vmax.f32 %v4443, 0.0
        %v4632 = vmax.f32 %v4444, 0.0
        %v4633 = vmax.f32 %v4445, 0.0
        %v4634 = vmax.f32 %v4446, 0.0
        %v4635 = vmax.f32 %v4447, 0.0
        %v4636 = vmax.f32 %v4448, 0.0
        %v4637 = vmax.f32 %v4449, 0.0
        %v4638 = vmax.f32 %v4450, 0.0
        %v4639 = vmax.f32 %v4451, 0.0
        %v4640 = vmax.f32 %v4452, 0.0
        %v4641 = vmax.f32 %v4453, 0.0
        %v4642 = vmax.f32 %v4454, 0.0
        %v4643 = vmax.f32 %v4455, 0.0
        %v4644 = vmax.f32 %v4456, 0.0
        %v4645 = vmax.f32 %v4457, 0.0
        %v4646 = vmax.f32 %v4458, 0.0
        %v4647 = vmax.f32 %v4459, 0.0
        %v4648 = vmax.f32 %v4460, 0.0
        %v4649 = vmax.f32 %v4461, 0.0
        %v4650 = vmax.f32 %v4462, 0.0
        %v4651 = vmax.f32 %v4463, 0.0
        %v4652 = vmax.f32 %v4464, 0.0
        %v4653 = vmax.f32 %v4465, 0.0
        %v4654 = vmax.f32 %v4466, 0.0
        %v4655 = vmax.f32 %v4467, 0.0
        %v4656 = vmax.f32 %v4468, 0.0
        %v4657 = vmax.f32 %v4469, 0.0
        %v4658 = vmax.f32 %v4470, 0.0
        %v4659 = vmax.f32 %v4471, 0.0
        %v4660 = vmax.f32 %v4472, 0.0
        %v4661 = vmax.f32 %v4473, 0.0
        %v4662 = vmax.f32 %v4474, 0.0
        %v4663 = vmax.f32 %v4475, 0.0
        %v4664 = vmax.f32 %v4476, 0.0
        %v4665 = vmax.f32 %v4477, 0.0
        %v4666 = vmax.f32 %v4478, 0.0
        %v4667 = vmax.f32 %v4479, 0.0
        %v4668 = vmax.f32 %v4480, 0.0
        %v4669 = vmax.f32 %v4481, 0.0
        %v4670 = vmax.f32 %v4482, 0.0
        %v4671 = vmax.f32 %v4483, 0.0
        %v4672 = vmax.f32 %v4484, 0.0
        %v4673 = vmax.f32 %v4485, 0.0
        %v4674 = vmax.f32 %v4486, 0.0
        %v4675 = vmax.f32 %v4487, 0.0
        %v4676 = vmax.f32 %v4488, 0.0
        %v4677 = vmax.f32 %v4489, 0.0
        %v4678 = vmax.f32 %v4490, 0.0
        %v4679 = vmax.f32 %v4491, 0.0
        %v4680 = vmax.f32 %v4492, 0.0
        %v4681 = vmax.f32 %v4493, 0.0
        %v4682 = vmax.f32 %v4494, 0.0
        %v4683 = vmax.f32 %v4495, 0.0
        %v4684 = vmax.f32 %v4496, 0.0
        %v4685 = vmax.f32 %v4497, 0.0
        %v4686 = vmax.f32 %v4498, 0.0
        %v4687 = vmax.f32 %v4499, 0.0
        %v4688 = vmax.f32 %v4500, 0.0
        %v4689 = vmax.f32 %v4501, 0.0
        %v4690 = vmax.f32 %v4502, 0.0
        %v4691 = vmax.f32 %v4503, 0.0
        %v4692 = vmax.f32 %v4504, 0.0
        %v4693 = vmax.f32 %v4505, 0.0
        %v4694 = vmax.f32 %v4506, 0.0
        %v4695 = vmax.f32 %v4507, 0.0
        %v4696 = vmax.f32 %v4508, 0.0
        %v4697 = vmax.f32 %v4509, 0.0
        %v4698 = vmax.f32 %v4510, 0.0
        %v4699 = vmax.f32 %v4511, 0.0
        %v4700 = vmax.f32 %v4512, 0.0
        %v4701 = vmax.f32 %v4513, 0.0
        %v4702 = vmax.f32 %v4514, 0.0
        %v4703 = vmax.f32 %v4515, 0.0
        %v4704 = vmax.f32 %v4516, 0.0
        %v4705 = vmax.f32 %v4517, 0.0
        %v4706 = vmax.f32 %v4518, 0.0
        %v4707 = vmax.f32 %v4519, 0.0
        %v4708 = vmax.f32 %v4520, 0.0
        %v4709 = vmax.f32 %v4521, 0.0
        %v4710 = vmax.f32 %v4522, 0.0
        %v4711 = vmax.f32 %v4523, 0.0
        %v4712 = vmax.f32 %v4524, 0.0
        %v4713 = vmax.f32 %v4525, 0.0
        %v4714 = vmax.f32 %v4526, 0.0
        %v4715 = vmax.f32 %v4527, 0.0
        %v4716 = vmax.f32 %v4528, 0.0
        %v4717 = vmax.f32 %v4529, 0.0
        %v4718 = vmax.f32 %v4530, 0.0
        %v4719 = vmax.f32 %v4531, 0.0
        %v4720 = vmax.f32 %v4532, 0.0
        %v4721 = vmax.f32 %v4533, 0.0
        %v4722 = vmax.f32 %v4534, 0.0
        %v4723 = vmax.f32 %v4535, 0.0
        %v4724 = vmax.f32 %v4536, 0.0
        %v4725 = vmax.f32 %v4537, 0.0
        %v4726 = vmax.f32 %v4538, 0.0
        %v4727 = vmax.f32 %v4539, 0.0
        %v4728 = vmax.f32 %v4540, 0.0
        %v4729 = vmax.f32 %v4541, 0.0
        %v4730 = vmax.f32 %v4542, 0.0
        %v4731 = vmax.f32 %v4543, 0.0
        %v4732 = vmax.f32 %v4544, 0.0
        %v4733 = vmax.f32 %v4545, 0.0
        %v4734 = vmax.f32 %v4546, 0.0
        %v4735 = vmax.f32 %v4547, 0.0
        %v4736 = vmax.f32 %v4548, 0.0
        %v4737 = vmax.f32 %v4549, 0.0
        %v4738 = vmax.f32 %v4550, 0.0
        %v4739 = vmax.f32 %v4551, 0.0
        %v4740 = vmax.f32 %v4552, 0.0
        %v4741 = vmax.f32 %v4553, 0.0
        %v4742 = vmax.f32 %v4554, 0.0
        %v4743 = vmax.f32 %v4555, 0.0
        %v4744 = vmax.f32 %v4556, 0.0
        %v4745 = vmax.f32 %v4557, 0.0
        %v4746 = vmax.f32 %v4558, 0.0
        %v4747 = vmax.f32 %v4559, 0.0
        %v4748 = vmax.f32 %v4560, 0.0
        %v4749 = vmax.f32 %v4561, 0.0
        %v4750 = vmax.f32 %v4562, 0.0
        %v4751 = vmax.f32 %v4563, 0.0
        %v4752 = vmax.f32 %v4564, 0.0
        %v4753 = vmax.f32 %v4565, 0.0
        %v4754 = vmax.f32 %v4566, 0.0
        %v4755 = vmax.f32 %v4567, 0.0
        %v4756 = vmax.f32 %v4568, 0.0
        %v4757 = vmax.f32 %v4569, 0.0
        %v4758 = vmax.f32 %v4570, 0.0
        %v4759 = vmax.f32 %v4571, 0.0
        %v4760 = vmax.f32 %v4572, 0.0
        %v4761 = vmax.f32 %v4573, 0.0
        %v4762 = vmax.f32 %v4574, 0.0
        %v4763 = vmax.f32 %v4575, 0.0
        %v4764 = vmax.f32 %v4576, 0.0
        %v4765 = vmax.f32 %v4577, 0.0
        %v4766 = vmax.f32 %v4578, 0.0
        %v4767 = vmax.f32 %v4579, 0.0
        %v4768 = vmax.f32 %v4580, 0.0
        %v4769 = vmax.f32 %v4581, 0.0
        %v4770 = vmax.f32 %v4582, 0.0
        %v4771 = vmax.f32 %v4583, 0.0
        %v4772 = vmax.f32 %v4584, 0.0
        %v4773 = vmax.f32 %v4585, 0.0
        %v4774 = vmax.f32 %v4586, 0.0
        %v4775 = vmax.f32 %v4587, 0.0
        %v4776 = vmax.f32 %v4588, 0.0
        %v4777 = vmax.f32 %v4589, 0.0
        %v4778 = vmax.f32 %v4590, 0.0
        %v4779 = vmax.f32 %v4591, 0.0
        %v4780 = vmax.f32 %v4592, 0.0
        %v4781 = vmax.f32 %v4593, 0.0
        %v4782 = vmax.f32 %v4594, 0.0
        %v4783 = vmax.f32 %v4595, 0.0
        %v4784 = vmax.f32 %v4596, 0.0
        %v4785 = vmax.f32 %v4597, 0.0
        %v4786 = vmax.f32 %v4598, 0.0
        %v4787 = vmax.f32 %v4599, 0.0
        %v4788 = vmax.f32 %v4600, 0.0
        %v4789 = vmax.f32 %v4601, 0.0
        %v4790 = vmax.f32 %v4602, 0.0
        %v4791 = vmax.f32 %v4603, 0.0
        %v4792 = vmax.f32 %v4604, 0.0
        %v4793 = vmax.f32 %v4605, 0.0
        %v4794 = vmax.f32 %v4606, 0.0
        %v4795 = vmax.f32 %v4607, 0.0
        %v4796 = vmax.f32 %v4608, 0.0
        %v4797 = vmax.f32 %v4609, 0.0
        %v4798 = vmax.f32 %v4610, 0.0
        %v4799 = vmax.f32 %v4611, 0.0
        %v4800 = vmax.f32 %v4612, 0.0
        %v4801 = vmax.f32 %v4613, 0.0
        %v4802 = vmax.f32 %v4614, 0.0
        %v4803 = vmax.f32 %v4615, 0.0
        %v4804 = vsub.f32 1.0, %v1043
        %v4805 = vsub.f32 1.0, %v1044
        %v4806 = vsub.f32 1.0, %v1045
        %v4807 = vsub.f32 1.0, %v1046
        %v4808 = vsub.f32 1.0, %v1047
        %v4809 = vsub.f32 1.0, %v1048
        %v4810 = vsub.f32 1.0, %v1049
        %v4811 = vsub.f32 1.0, %v1050
        %v4812 = vsub.f32 1.0, %v1051
        %v4813 = vsub.f32 1.0, %v1052
        %v4814 = vsub.f32 1.0, %v1053
        %v4815 = vsub.f32 1.0, %v1054
        %v4816 = vsub.f32 1.0, %v1055
        %v4817 = vsub.f32 1.0, %v1056
        %v4818 = vsub.f32 1.0, %v1057
        %v4819 = vsub.f32 1.0, %v1058
        %v4820 = vsub.f32 1.0, %v1059
        %v4821 = vsub.f32 1.0, %v1060
        %v4822 = vsub.f32 1.0, %v1061
        %v4823 = vsub.f32 1.0, %v1062
        %v4824 = vsub.f32 1.0, %v1063
        %v4825 = vsub.f32 1.0, %v1064
        %v4826 = vsub.f32 1.0, %v1065
        %v4827 = vsub.f32 1.0, %v1066
        %v4828 = vsub.f32 1.0, %v1067
        %v4829 = vsub.f32 1.0, %v1068
        %v4830 = vsub.f32 1.0, %v1069
        %v4831 = vsub.f32 1.0, %v1070
        %v4832 = vsub.f32 1.0, %v1071
        %v4833 = vsub.f32 1.0, %v1072
        %v4834 = vsub.f32 1.0, %v1073
        %v4835 = vsub.f32 1.0, %v1074
        %v4836 = vsub.f32 1.0, %v1075
        %v4837 = vsub.f32 1.0, %v1076
        %v4838 = vsub.f32 1.0, %v1077
        %v4839 = vsub.f32 1.0, %v1078
        %v4840 = vsub.f32 1.0, %v1079
        %v4841 = vsub.f32 1.0, %v1080
        %v4842 = vsub.f32 1.0, %v1081
        %v4843 = vsub.f32 1.0, %v1082
        %v4844 = vsub.f32 1.0, %v1083
        %v4845 = vsub.f32 1.0, %v1084
        %v4846 = vsub.f32 1.0, %v1085
        %v4847 = vsub.f32 1.0, %v1086
        %v4848 = vsub.f32 1.0, %v1087
        %v4849 = vsub.f32 1.0, %v1088
        %v4850 = vsub.f32 1.0, %v1089
        %v4851 = vsub.f32 1.0, %v1090
        %v4852 = vsub.f32 1.0, %v1091
        %v4853 = vsub.f32 1.0, %v1092
        %v4854 = vsub.f32 1.0, %v1093
        %v4855 = vsub.f32 1.0, %v1094
        %v4856 = vsub.f32 1.0, %v1095
        %v4857 = vsub.f32 1.0, %v1096
        %v4858 = vsub.f32 1.0, %v1097
        %v4859 = vsub.f32 1.0, %v1098
        %v4860 = vsub.f32 1.0, %v1099
        %v4861 = vsub.f32 1.0, %v1100
        %v4862 = vsub.f32 1.0, %v1101
        %v4863 = vsub.f32 1.0, %v1102
        %v4864 = vsub.f32 1.0, %v1103
        %v4865 = vsub.f32 1.0, %v1104
        %v4866 = vsub.f32 1.0, %v1105
        %v4867 = vsub.f32 1.0, %v1106
        %v4868 = vsub.f32 1.0, %v1107
        %v4869 = vsub.f32 1.0, %v1108
        %v4870 = vsub.f32 1.0, %v1109
        %v4871 = vsub.f32 1.0, %v1110
        %v4872 = vsub.f32 1.0, %v1111
        %v4873 = vsub.f32 1.0, %v1112
        %v4874 = vsub.f32 1.0, %v1113
        %v4875 = vsub.f32 1.0, %v1114
        %v4876 = vsub.f32 1.0, %v1115
        %v4877 = vsub.f32 1.0, %v1116
        %v4878 = vsub.f32 1.0, %v1117
        %v4879 = vsub.f32 1.0, %v1118
        %v4880 = vsub.f32 1.0, %v1119
        %v4881 = vsub.f32 1.0, %v1120
        %v4882 = vsub.f32 1.0, %v1121
        %v4883 = vsub.f32 1.0, %v1122
        %v4884 = vsub.f32 1.0, %v1123
        %v4885 = vsub.f32 1.0, %v1124
        %v4886 = vsub.f32 1.0, %v1125
        %v4887 = vsub.f32 1.0, %v1126
        %v4888 = vsub.f32 1.0, %v1127
        %v4889 = vsub.f32 1.0, %v1128
        %v4890 = vsub.f32 1.0, %v1129
        %v4891 = vsub.f32 1.0, %v1130
        %v4892 = vsub.f32 1.0, %v1131
        %v4893 = vsub.f32 1.0, %v1132
        %v4894 = vsub.f32 1.0, %v1133
        %v4895 = vsub.f32 1.0, %v1134
        %v4896 = vsub.f32 1.0, %v1135
        %v4897 = vsub.f32 1.0, %v1136
        %v4898 = vsub.f32 1.0, %v1137
        %v4899 = vsub.f32 1.0, %v1138
        %v4900 = vsub.f32 1.0, %v1139
        %v4901 = vsub.f32 1.0, %v1140
        %v4902 = vsub.f32 1.0, %v1141
        %v4903 = vsub.f32 1.0, %v1142
        %v4904 = vsub.f32 1.0, %v1143
        %v4905 = vsub.f32 1.0, %v1144
        %v4906 = vsub.f32 1.0, %v1145
        %v4907 = vsub.f32 1.0, %v1146
        %v4908 = vsub.f32 1.0, %v1147
        %v4909 = vsub.f32 1.0, %v1148
        %v4910 = vsub.f32 1.0, %v1149
        %v4911 = vsub.f32 1.0, %v1150
        %v4912 = vsub.f32 1.0, %v1151
        %v4913 = vsub.f32 1.0, %v1152
        %v4914 = vsub.f32 1.0, %v1153
        %v4915 = vsub.f32 1.0, %v1154
        %v4916 = vsub.f32 1.0, %v1155
        %v4917 = vsub.f32 1.0, %v1156
        %v4918 = vsub.f32 1.0, %v1157
        %v4919 = vsub.f32 1.0, %v1158
        %v4920 = vsub.f32 1.0, %v1159
        %v4921 = vsub.f32 1.0, %v1160
        %v4922 = vsub.f32 1.0, %v1161
        %v4923 = vsub.f32 1.0, %v1162
        %v4924 = vsub.f32 1.0, %v1163
        %v4925 = vsub.f32 1.0, %v1164
        %v4926 = vsub.f32 1.0, %v1165
        %v4927 = vsub.f32 1.0, %v1166
        %v4928 = vsub.f32 1.0, %v1167
        %v4929 = vsub.f32 1.0, %v1168
        %v4930 = vsub.f32 1.0, %v1169
        %v4931 = vsub.f32 1.0, %v1170
        %v4932 = vsub.f32 1.0, %v1171
        %v4933 = vsub.f32 1.0, %v1172
        %v4934 = vsub.f32 1.0, %v1173
        %v4935 = vsub.f32 1.0, %v1174
        %v4936 = vsub.f32 1.0, %v1175
        %v4937 = vsub.f32 1.0, %v1176
        %v4938 = vsub.f32 1.0, %v1177
        %v4939 = vsub.f32 1.0, %v1178
        %v4940 = vsub.f32 1.0, %v1179
        %v4941 = vsub.f32 1.0, %v1180
        %v4942 = vsub.f32 1.0, %v1181
        %v4943 = vsub.f32 1.0, %v1182
        %v4944 = vsub.f32 1.0, %v1183
        %v4945 = vsub.f32 1.0, %v1184
        %v4946 = vsub.f32 1.0, %v1185
        %v4947 = vsub.f32 1.0, %v1186
        %v4948 = vsub.f32 1.0, %v1187
        %v4949 = vsub.f32 1.0, %v1188
        %v4950 = vsub.f32 1.0, %v1189
        %v4951 = vsub.f32 1.0, %v1190
        %v4952 = vsub.f32 1.0, %v1191
        %v4953 = vsub.f32 1.0, %v1192
        %v4954 = vsub.f32 1.0, %v1193
        %v4955 = vsub.f32 1.0, %v1194
        %v4956 = vsub.f32 1.0, %v1195
        %v4957 = vsub.f32 1.0, %v1196
        %v4958 = vsub.f32 1.0, %v1197
        %v4959 = vsub.f32 1.0, %v1198
        %v4960 = vsub.f32 1.0, %v1199
        %v4961 = vsub.f32 1.0, %v1200
        %v4962 = vsub.f32 1.0, %v1201
        %v4963 = vsub.f32 1.0, %v1202
        %v4964 = vsub.f32 1.0, %v1203
        %v4965 = vsub.f32 1.0, %v1204
        %v4966 = vsub.f32 1.0, %v1205
        %v4967 = vsub.f32 1.0, %v1206
        %v4968 = vsub.f32 1.0, %v1207
        %v4969 = vsub.f32 1.0, %v1208
        %v4970 = vsub.f32 1.0, %v1209
        %v4971 = vsub.f32 1.0, %v1210
        %v4972 = vsub.f32 1.0, %v1211
        %v4973 = vsub.f32 1.0, %v1212
        %v4974 = vsub.f32 1.0, %v1213
        %v4975 = vsub.f32 1.0, %v1214
        %v4976 = vsub.f32 1.0, %v1215
        %v4977 = vsub.f32 1.0, %v1216
        %v4978 = vsub.f32 1.0, %v1217
        %v4979 = vsub.f32 1.0, %v1218
        %v4980 = vsub.f32 1.0, %v1219
        %v4981 = vsub.f32 1.0, %v1220
        %v4982 = vsub.f32 1.0, %v1221
        %v4983 = vsub.f32 1.0, %v1222
        %v4984 = vsub.f32 1.0, %v1223
        %v4985 = vsub.f32 1.0, %v1224
        %v4986 = vsub.f32 1.0, %v1225
        %v4987 = vsub.f32 1.0, %v1226
        %v4988 = vsub.f32 1.0, %v1227
        %v4989 = vsub.f32 1.0, %v1228
        %v4990 = vsub.f32 1.0, %v1229
        %v4991 = vsub.f32 1.0, %v1230
        %v4992 = vmul.f32 %v4804, %v2363
        %v4993 = vmul.f32 %v4805, %v2367
        %v4994 = vmul.f32 %v4806, %v2371
        %v4995 = vmul.f32 %v4807, %v2375
        %v4996 = vmul.f32 %v4808, %v2379
        %v4997 = vmul.f32 %v4809, %v2383
        %v4998 = vmul.f32 %v4810, %v2387
        %v4999 = vmul.f32 %v4811, %v2391
        %v5000 = vmul.f32 %v4812, %v2395
        %v5001 = vmul.f32 %v4813, %v2399
        %v5002 = vmul.f32 %v4814, %v2403
        %v5003 = vmul.f32 %v4815, %v2407
        %v5004 = vmul.f32 %v4816, %v2411
        %v5005 = vmul.f32 %v4817, %v2415
        %v5006 = vmul.f32 %v4818, %v2419
        %v5007 = vmul.f32 %v4819, %v2423
        %v5008 = vmul.f32 %v4820, %v2427
        %v5009 = vmul.f32 %v4821, %v2431
        %v5010 = vmul.f32 %v4822, %v2435
        %v5011 = vmul.f32 %v4823, %v2439
        %v5012 = vmul.f32 %v4824, %v2443
        %v5013 = vmul.f32 %v4825, %v2447
        %v5014 = vmul.f32 %v4826, %v2451
        %v5015 = vmul.f32 %v4827, %v2455
        %v5016 = vmul.f32 %v4828, %v2459
        %v5017 = vmul.f32 %v4829, %v2463
        %v5018 = vmul.f32 %v4830, %v2467
        %v5019 = vmul.f32 %v4831, %v2471
        %v5020 = vmul.f32 %v4832, %v2475
        %v5021 = vmul.f32 %v4833, %v2479
        %v5022 = vmul.f32 %v4834, %v2483
        %v5023 = vmul.f32 %v4835, %v2487
        %v5024 = vmul.f32 %v4836, %v2491
        %v5025 = vmul.f32 %v4837, %v2495
        %v5026 = vmul.f32 %v4838, %v2499
        %v5027 = vmul.f32 %v4839, %v2503
        %v5028 = vmul.f32 %v4840, %v2507
        %v5029 = vmul.f32 %v4841, %v2511
        %v5030 = vmul.f32 %v4842, %v2515
        %v5031 = vmul.f32 %v4843, %v2519
        %v5032 = vmul.f32 %v4844, %v2523
        %v5033 = vmul.f32 %v4845, %v2527
        %v5034 = vmul.f32 %v4846, %v2531
        %v5035 = vmul.f32 %v4847, %v2535
        %v5036 = vmul.f32 %v4848, %v2539
        %v5037 = vmul.f32 %v4849, %v2543
        %v5038 = vmul.f32 %v4850, %v2547
        %v5039 = vmul.f32 %v4851, %v2551
        %v5040 = vmul.f32 %v4852, %v2555
        %v5041 = vmul.f32 %v4853, %v2559
        %v5042 = vmul.f32 %v4854, %v2563
        %v5043 = vmul.f32 %v4855, %v2567
        %v5044 = vmul.f32 %v4856, %v2571
        %v5045 = vmul.f32 %v4857, %v2575
        %v5046 = vmul.f32 %v4858, %v2579
        %v5047 = vmul.f32 %v4859, %v2583
        %v5048 = vmul.f32 %v4860, %v2587
        %v5049 = vmul.f32 %v4861, %v2591
        %v5050 = vmul.f32 %v4862, %v2595
        %v5051 = vmul.f32 %v4863, %v2599
        %v5052 = vmul.f32 %v4864, %v2603
        %v5053 = vmul.f32 %v4865, %v2607
        %v5054 = vmul.f32 %v4866, %v2611
        %v5055 = vmul.f32 %v4867, %v2615
        %v5056 = vmul.f32 %v4868, %v2619
        %v5057 = vmul.f32 %v4869, %v2623
        %v5058 = vmul.f32 %v4870, %v2627
        %v5059 = vmul.f32 %v4871, %v2631
        %v5060 = vmul.f32 %v4872, %v2635
        %v5061 = vmul.f32 %v4873, %v2639
        %v5062 = vmul.f32 %v4874, %v2643
        %v5063 = vmul.f32 %v4875, %v2647
        %v5064 = vmul.f32 %v4876, %v2651
        %v5065 = vmul.f32 %v4877, %v2655
        %v5066 = vmul.f32 %v4878, %v2659
        %v5067 = vmul.f32 %v4879, %v2663
        %v5068 = vmul.f32 %v4880, %v2667
        %v5069 = vmul.f32 %v4881, %v2671
        %v5070 = vmul.f32 %v4882, %v2675
        %v5071 = vmul.f32 %v4883, %v2679
        %v5072 = vmul.f32 %v4884, %v2683
        %v5073 = vmul.f32 %v4885, %v2687
        %v5074 = vmul.f32 %v4886, %v2691
        %v5075 = vmul.f32 %v4887, %v2695
        %v5076 = vmul.f32 %v4888, %v2699
        %v5077 = vmul.f32 %v4889, %v2703
        %v5078 = vmul.f32 %v4890, %v2707
        %v5079 = vmul.f32 %v4891, %v2711
        %v5080 = vmul.f32 %v4892, %v2715
        %v5081 = vmul.f32 %v4893, %v2719
        %v5082 = vmul.f32 %v4894, %v2723
        %v5083 = vmul.f32 %v4895, %v2727
        %v5084 = vmul.f32 %v4896, %v2731
        %v5085 = vmul.f32 %v4897, %v2735
        %v5086 = vmul.f32 %v4898, %v2739
        %v5087 = vmul.f32 %v4899, %v2743
        %v5088 = vmul.f32 %v4900, %v2747
        %v5089 = vmul.f32 %v4901, %v2751
        %v5090 = vmul.f32 %v4902, %v2755
        %v5091 = vmul.f32 %v4903, %v2759
        %v5092 = vmul.f32 %v4904, %v2763
        %v5093 = vmul.f32 %v4905, %v2767
        %v5094 = vmul.f32 %v4906, %v2771
        %v5095 = vmul.f32 %v4907, %v2775
        %v5096 = vmul.f32 %v4908, %v2779
        %v5097 = vmul.f32 %v4909, %v2783
        %v5098 = vmul.f32 %v4910, %v2787
        %v5099 = vmul.f32 %v4911, %v2791
        %v5100 = vmul.f32 %v4912, %v2795
        %v5101 = vmul.f32 %v4913, %v2799
        %v5102 = vmul.f32 %v4914, %v2803
        %v5103 = vmul.f32 %v4915, %v2807
        %v5104 = vmul.f32 %v4916, %v2811
        %v5105 = vmul.f32 %v4917, %v2815
        %v5106 = vmul.f32 %v4918, %v2819
        %v5107 = vmul.f32 %v4919, %v2823
        %v5108 = vmul.f32 %v4920, %v2827
        %v5109 = vmul.f32 %v4921, %v2831
        %v5110 = vmul.f32 %v4922, %v2835
        %v5111 = vmul.f32 %v4923, %v2839
        %v5112 = vmul.f32 %v4924, %v2843
        %v5113 = vmul.f32 %v4925, %v2847
        %v5114 = vmul.f32 %v4926, %v2851
        %v5115 = vmul.f32 %v4927, %v2855
        %v5116 = vmul.f32 %v4928, %v2859
        %v5117 = vmul.f32 %v4929, %v2863
        %v5118 = vmul.f32 %v4930, %v2867
        %v5119 = vmul.f32 %v4931, %v2871
        %v5120 = vmul.f32 %v4932, %v2875
        %v5121 = vmul.f32 %v4933, %v2879
        %v5122 = vmul.f32 %v4934, %v2883
        %v5123 = vmul.f32 %v4935, %v2887
        %v5124 = vmul.f32 %v4936, %v2891
        %v5125 = vmul.f32 %v4937, %v2895
        %v5126 = vmul.f32 %v4938, %v2899
        %v5127 = vmul.f32 %v4939, %v2903
        %v5128 = vmul.f32 %v4940, %v2907
        %v5129 = vmul.f32 %v4941, %v2911
        %v5130 = vmul.f32 %v4942, %v2915
        %v5131 = vmul.f32 %v4943, %v2919
        %v5132 = vmul.f32 %v4944, %v2923
        %v5133 = vmul.f32 %v4945, %v2927
        %v5134 = vmul.f32 %v4946, %v2931
        %v5135 = vmul.f32 %v4947, %v2935
        %v5136 = vmul.f32 %v4948, %v2939
        %v5137 = vmul.f32 %v4949, %v2943
        %v5138 = vmul.f32 %v4950, %v2947
        %v5139 = vmul.f32 %v4951, %v2951
        %v5140 = vmul.f32 %v4952, %v2955
        %v5141 = vmul.f32 %v4953, %v2959
        %v5142 = vmul.f32 %v4954, %v2963
        %v5143 = vmul.f32 %v4955, %v2967
        %v5144 = vmul.f32 %v4956, %v2971
        %v5145 = vmul.f32 %v4957, %v2975
        %v5146 = vmul.f32 %v4958, %v2979
        %v5147 = vmul.f32 %v4959, %v2983
        %v5148 = vmul.f32 %v4960, %v2987
        %v5149 = vmul.f32 %v4961, %v2991
        %v5150 = vmul.f32 %v4962, %v2995
        %v5151 = vmul.f32 %v4963, %v2999
        %v5152 = vmul.f32 %v4964, %v3003
        %v5153 = vmul.f32 %v4965, %v3007
        %v5154 = vmul.f32 %v4966, %v3011
        %v5155 = vmul.f32 %v4967, %v3015
        %v5156 = vmul.f32 %v4968, %v3019
        %v5157 = vmul.f32 %v4969, %v3023
        %v5158 = vmul.f32 %v4970, %v3027
        %v5159 = vmul.f32 %v4971, %v3031
        %v5160 = vmul.f32 %v4972, %v3035
        %v5161 = vmul.f32 %v4973, %v3039
        %v5162 = vmul.f32 %v4974, %v3043
        %v5163 = vmul.f32 %v4975, %v3047
        %v5164 = vmul.f32 %v4976, %v3051
        %v5165 = vmul.f32 %v4977, %v3055
        %v5166 = vmul.f32 %v4978, %v3059
        %v5167 = vmul.f32 %v4979, %v3063
        %v5168 = vmul.f32 %v4980, %v3067
        %v5169 = vmul.f32 %v4981, %v3071
        %v5170 = vmul.f32 %v4982, %v3075
        %v5171 = vmul.f32 %v4983, %v3079
        %v5172 = vmul.f32 %v4984, %v3083
        %v5173 = vmul.f32 %v4985, %v3087
        %v5174 = vmul.f32 %v4986, %v3091
        %v5175 = vmul.f32 %v4987, %v3095
        %v5176 = vmul.f32 %v4988, %v3099
        %v5177 = vmul.f32 %v4989, %v3103
        %v5178 = vmul.f32 %v4990, %v3107
        %v5179 = vmul.f32 %v4991, %v3111
        %v5180 = vmul.f32 %v4616, %v4616
        %v5181 = vmul.f32 %v4617, %v4617
        %v5182 = vmul.f32 %v4618, %v4618
        %v5183 = vmul.f32 %v4619, %v4619
        %v5184 = vmul.f32 %v4620, %v4620
        %v5185 = vmul.f32 %v4621, %v4621
        %v5186 = vmul.f32 %v4622, %v4622
        %v5187 = vmul.f32 %v4623, %v4623
        %v5188 = vmul.f32 %v4624, %v4624
        %v5189 = vmul.f32 %v4625, %v4625
        %v5190 = vmul.f32 %v4626, %v4626
        %v5191 = vmul.f32 %v4627, %v4627
        %v5192 = vmul.f32 %v4628, %v4628
        %v5193 = vmul.f32 %v4629, %v4629
        %v5194 = vmul.f32 %v4630, %v4630
        %v5195 = vmul.f32 %v4631, %v4631
        %v5196 = vmul.f32 %v4632, %v4632
        %v5197 = vmul.f32 %v4633, %v4633
        %v5198 = vmul.f32 %v4634, %v4634
        %v5199 = vmul.f32 %v4635, %v4635
        %v5200 = vmul.f32 %v4636, %v4636
        %v5201 = vmul.f32 %v4637, %v4637
        %v5202 = vmul.f32 %v4638, %v4638
        %v5203 = vmul.f32 %v4639, %v4639
        %v5204 = vmul.f32 %v4640, %v4640
        %v5205 = vmul.f32 %v4641, %v4641
        %v5206 = vmul.f32 %v4642, %v4642
        %v5207 = vmul.f32 %v4643, %v4643
        %v5208 = vmul.f32 %v4644, %v4644
        %v5209 = vmul.f32 %v4645, %v4645
        %v5210 = vmul.f32 %v4646, %v4646
        %v5211 = vmul.f32 %v4647, %v4647
        %v5212 = vmul.f32 %v4648, %v4648
        %v5213 = vmul.f32 %v4649, %v4649
        %v5214 = vmul.f32 %v4650, %v4650
        %v5215 = vmul.f32 %v4651, %v4651
        %v5216 = vmul.f32 %v4652, %v4652
        %v5217 = vmul.f32 %v4653, %v4653
        %v5218 = vmul.f32 %v4654, %v4654
        %v5219 = vmul.f32 %v4655, %v4655
        %v5220 = vmul.f32 %v4656, %v4656
        %v5221 = vmul.f32 %v4657, %v4657
        %v5222 = vmul.f32 %v4658, %v4658
        %v5223 = vmul.f32 %v4659, %v4659
        %v5224 = vmul.f32 %v4660, %v4660
        %v5225 = vmul.f32 %v4661, %v4661
        %v5226 = vmul.f32 %v4662, %v4662
        %v5227 = vmul.f32 %v4663, %v4663
        %v5228 = vmul.f32 %v4664, %v4664
        %v5229 = vmul.f32 %v4665, %v4665
        %v5230 = vmul.f32 %v4666, %v4666
        %v5231 = vmul.f32 %v4667, %v4667
        %v5232 = vmul.f32 %v4668, %v4668
        %v5233 = vmul.f32 %v4669, %v4669
        %v5234 = vmul.f32 %v4670, %v4670
        %v5235 = vmul.f32 %v4671, %v4671
        %v5236 = vmul.f32 %v4672, %v4672
        %v5237 = vmul.f32 %v4673, %v4673
        %v5238 = vmul.f32 %v4674, %v4674
        %v5239 = vmul.f32 %v4675, %v4675
        %v5240 = vmul.f32 %v4676, %v4676
        %v5241 = vmul.f32 %v4677, %v4677
        %v5242 = vmul.f32 %v4678, %v4678
        %v5243 = vmul.f32 %v4679, %v4679
        %v5244 = vmul.f32 %v4680, %v4680
        %v5245 = vmul.f32 %v4681, %v4681
        %v5246 = vmul.f32 %v4682, %v4682
        %v5247 = vmul.f32 %v4683, %v4683
        %v5248 = vmul.f32 %v4684, %v4684
        %v5249 = vmul.f32 %v4685, %v4685
        %v5250 = vmul.f32 %v4686, %v4686
        %v5251 = vmul.f32 %v4687, %v4687
        %v5252 = vmul.f32 %v4688, %v4688
        %v5253 = vmul.f32 %v4689, %v4689
        %v5254 = vmul.f32 %v4690, %v4690
        %v5255 = vmul.f32 %v4691, %v4691
        %v5256 = vmul.f32 %v4692, %v4692
        %v5257 = vmul.f32 %v4693, %v4693
        %v5258 = vmul.f32 %v4694, %v4694
        %v5259 = vmul.f32 %v4695, %v4695
        %v5260 = vmul.f32 %v4696, %v4696
        %v5261 = vmul.f32 %v4697, %v4697
        %v5262 = vmul.f32 %v4698, %v4698
        %v5263 = vmul.f32 %v4699, %v4699
        %v5264 = vmul.f32 %v4700, %v4700
        %v5265 = vmul.f32 %v4701, %v4701
        %v5266 = vmul.f32 %v4702, %v4702
        %v5267 = vmul.f32 %v4703, %v4703
        %v5268 = vmul.f32 %v4704, %v4704
        %v5269 = vmul.f32 %v4705, %v4705
        %v5270 = vmul.f32 %v4706, %v4706
        %v5271 = vmul.f32 %v4707, %v4707
        %v5272 = vmul.f32 %v4708, %v4708
        %v5273 = vmul.f32 %v4709, %v4709
        %v5274 = vmul.f32 %v4710, %v4710
        %v5275 = vmul.f32 %v4711, %v4711
        %v5276 = vmul.f32 %v4712, %v4712
        %v5277 = vmul.f32 %v4713, %v4713
        %v5278 = vmul.f32 %v4714, %v4714
        %v5279 = vmul.f32 %v4715, %v4715
        %v5280 = vmul.f32 %v4716, %v4716
        %v5281 = vmul.f32 %v4717, %v4717
        %v5282 = vmul.f32 %v4718, %v4718
        %v5283 = vmul.f32 %v4719, %v4719
        %v5284 = vmul.f32 %v4720, %v4720
        %v5285 = vmul.f32 %v4721, %v4721
        %v5286 = vmul.f32 %v4722, %v4722
        %v5287 = vmul.f32 %v4723, %v4723
        %v5288 = vmul.f32 %v4724, %v4724
        %v5289 = vmul.f32 %v4725, %v4725
        %v5290 = vmul.f32 %v4726, %v4726
        %v5291 = vmul.f32 %v4727, %v4727
        %v5292 = vmul.f32 %v4728, %v4728
        %v5293 = vmul.f32 %v4729, %v4729
        %v5294 = vmul.f32 %v4730, %v4730
        %v5295 = vmul.f32 %v4731, %v4731
        %v5296 = vmul.f32 %v4732, %v4732
        %v5297 = vmul.f32 %v4733, %v4733
        %v5298 = vmul.f32 %v4734, %v4734
        %v5299 = vmul.f32 %v4735, %v4735
        %v5300 = vmul.f32 %v4736, %v4736
        %v5301 = vmul.f32 %v4737, %v4737
        %v5302 = vmul.f32 %v4738, %v4738
        %v5303 = vmul.f32 %v4739, %v4739
        %v5304 = vmul.f32 %v4740, %v4740
        %v5305 = vmul.f32 %v4741, %v4741
        %v5306 = vmul.f32 %v4742, %v4742
        %v5307 = vmul.f32 %v4743, %v4743
        %v5308 = vmul.f32 %v4744, %v4744
        %v5309 = vmul.f32 %v4745, %v4745
        %v5310 = vmul.f32 %v4746, %v4746
        %v5311 = vmul.f32 %v4747, %v4747
        %v5312 = vmul.f32 %v4748, %v4748
        %v5313 = vmul.f32 %v4749, %v4749
        %v5314 = vmul.f32 %v4750, %v4750
        %v5315 = vmul.f32 %v4751, %v4751
        %v5316 = vmul.f32 %v4752, %v4752
        %v5317 = vmul.f32 %v4753, %v4753
        %v5318 = vmul.f32 %v4754, %v4754
        %v5319 = vmul.f32 %v4755, %v4755
        %v5320 = vmul.f32 %v4756, %v4756
        %v5321 = vmul.f32 %v4757, %v4757
        %v5322 = vmul.f32 %v4758, %v4758
        %v5323 = vmul.f32 %v4759, %v4759
        %v5324 = vmul.f32 %v4760, %v4760
        %v5325 = vmul.f32 %v4761, %v4761
        %v5326 = vmul.f32 %v4762, %v4762
        %v5327 = vmul.f32 %v4763, %v4763
        %v5328 = vmul.f32 %v4764, %v4764
        %v5329 = vmul.f32 %v4765, %v4765
        %v5330 = vmul.f32 %v4766, %v4766
        %v5331 = vmul.f32 %v4767, %v4767
        %v5332 = vmul.f32 %v4768, %v4768
        %v5333 = vmul.f32 %v4769, %v4769
        %v5334 = vmul.f32 %v4770, %v4770
        %v5335 = vmul.f32 %v4771, %v4771
        %v5336 = vmul.f32 %v4772, %v4772
        %v5337 = vmul.f32 %v4773, %v4773
        %v5338 = vmul.f32 %v4774, %v4774
        %v5339 = vmul.f32 %v4775, %v4775
        %v5340 = vmul.f32 %v4776, %v4776
        %v5341 = vmul.f32 %v4777, %v4777
        %v5342 = vmul.f32 %v4778, %v4778
        %v5343 = vmul.f32 %v4779, %v4779
        %v5344 = vmul.f32 %v4780, %v4780
        %v5345 = vmul.f32 %v4781, %v4781
        %v5346 = vmul.f32 %v4782, %v4782
        %v5347 = vmul.f32 %v4783, %v4783
        %v5348 = vmul.f32 %v4784, %v4784
        %v5349 = vmul.f32 %v4785, %v4785
        %v5350 = vmul.f32 %v4786, %v4786
        %v5351 = vmul.f32 %v4787, %v4787
        %v5352 = vmul.f32 %v4788, %v4788
        %v5353 = vmul.f32 %v4789, %v4789
        %v5354 = vmul.f32 %v4790, %v4790
        %v5355 = vmul.f32 %v4791, %v4791
        %v5356 = vmul.f32 %v4792, %v4792
        %v5357 = vmul.f32 %v4793, %v4793
        %v5358 = vmul.f32 %v4794, %v4794
        %v5359 = vmul.f32 %v4795, %v4795
        %v5360 = vmul.f32 %v4796, %v4796
        %v5361 = vmul.f32 %v4797, %v4797
        %v5362 = vmul.f32 %v4798, %v4798
        %v5363 = vmul.f32 %v4799, %v4799
        %v5364 = vmul.f32 %v4800, %v4800
        %v5365 = vmul.f32 %v4801, %v4801
        %v5366 = vmul.f32 %v4802, %v4802
        %v5367 = vmul.f32 %v4803, %v4803
        %v5368 = vmul.f32 %v1043, %v5180
        %v5369 = vmul.f32 %v1044, %v5181
        %v5370 = vmul.f32 %v1045, %v5182
        %v5371 = vmul.f32 %v1046, %v5183
        %v5372 = vmul.f32 %v1047, %v5184
        %v5373 = vmul.f32 %v1048, %v5185
        %v5374 = vmul.f32 %v1049, %v5186
        %v5375 = vmul.f32 %v1050, %v5187
        %v5376 = vmul.f32 %v1051, %v5188
        %v5377 = vmul.f32 %v1052, %v5189
        %v5378 = vmul.f32 %v1053, %v5190
        %v5379 = vmul.f32 %v1054, %v5191
        %v5380 = vmul.f32 %v1055, %v5192
        %v5381 = vmul.f32 %v1056, %v5193
        %v5382 = vmul.f32 %v1057, %v5194
        %v5383 = vmul.f32 %v1058, %v5195
        %v5384 = vmul.f32 %v1059, %v5196
        %v5385 = vmul.f32 %v1060, %v5197
        %v5386 = vmul.f32 %v1061, %v5198
        %v5387 = vmul.f32 %v1062, %v5199
        %v5388 = vmul.f32 %v1063, %v5200
        %v5389 = vmul.f32 %v1064, %v5201
        %v5390 = vmul.f32 %v1065, %v5202
        %v5391 = vmul.f32 %v1066, %v5203
        %v5392 = vmul.f32 %v1067, %v5204
        %v5393 = vmul.f32 %v1068, %v5205
        %v5394 = vmul.f32 %v1069, %v5206
        %v5395 = vmul.f32 %v1070, %v5207
        %v5396 = vmul.f32 %v1071, %v5208
        %v5397 = vmul.f32 %v1072, %v5209
        %v5398 = vmul.f32 %v1073, %v5210
        %v5399 = vmul.f32 %v1074, %v5211
        %v5400 = vmul.f32 %v1075, %v5212
        %v5401 = vmul.f32 %v1076, %v5213
        %v5402 = vmul.f32 %v1077, %v5214
        %v5403 = vmul.f32 %v1078, %v5215
        %v5404 = vmul.f32 %v1079, %v5216
        %v5405 = vmul.f32 %v1080, %v5217
        %v5406 = vmul.f32 %v1081, %v5218
        %v5407 = vmul.f32 %v1082, %v5219
        %v5408 = vmul.f32 %v1083, %v5220
        %v5409 = vmul.f32 %v1084, %v5221
        %v5410 = vmul.f32 %v1085, %v5222
        %v5411 = vmul.f32 %v1086, %v5223
        %v5412 = vmul.f32 %v1087, %v5224
        %v5413 = vmul.f32 %v1088, %v5225
        %v5414 = vmul.f32 %v1089, %v5226
        %v5415 = vmul.f32 %v1090, %v5227
        %v5416 = vmul.f32 %v1091, %v5228
        %v5417 = vmul.f32 %v1092, %v5229
        %v5418 = vmul.f32 %v1093, %v5230
        %v5419 = vmul.f32 %v1094, %v5231
        %v5420 = vmul.f32 %v1095, %v5232
        %v5421 = vmul.f32 %v1096, %v5233
        %v5422 = vmul.f32 %v1097, %v5234
        %v5423 = vmul.f32 %v1098, %v5235
        %v5424 = vmul.f32 %v1099, %v5236
        %v5425 = vmul.f32 %v1100, %v5237
        %v5426 = vmul.f32 %v1101, %v5238
        %v5427 = vmul.f32 %v1102, %v5239
        %v5428 = vmul.f32 %v1103, %v5240
        %v5429 = vmul.f32 %v1104, %v5241
        %v5430 = vmul.f32 %v1105, %v5242
        %v5431 = vmul.f32 %v1106, %v5243
        %v5432 = vmul.f32 %v1107, %v5244
        %v5433 = vmul.f32 %v1108, %v5245
        %v5434 = vmul.f32 %v1109, %v5246
        %v5435 = vmul.f32 %v1110, %v5247
        %v5436 = vmul.f32 %v1111, %v5248
        %v5437 = vmul.f32 %v1112, %v5249
        %v5438 = vmul.f32 %v1113, %v5250
        %v5439 = vmul.f32 %v1114, %v5251
        %v5440 = vmul.f32 %v1115, %v5252
        %v5441 = vmul.f32 %v1116, %v5253
        %v5442 = vmul.f32 %v1117, %v5254
        %v5443 = vmul.f32 %v1118, %v5255
        %v5444 = vmul.f32 %v1119, %v5256
        %v5445 = vmul.f32 %v1120, %v5257
        %v5446 = vmul.f32 %v1121, %v5258
        %v5447 = vmul.f32 %v1122, %v5259
        %v5448 = vmul.f32 %v1123, %v5260
        %v5449 = vmul.f32 %v1124, %v5261
        %v5450 = vmul.f32 %v1125, %v5262
        %v5451 = vmul.f32 %v1126, %v5263
        %v5452 = vmul.f32 %v1127, %v5264
        %v5453 = vmul.f32 %v1128, %v5265
        %v5454 = vmul.f32 %v1129, %v5266
        %v5455 = vmul.f32 %v1130, %v5267
        %v5456 = vmul.f32 %v1131, %v5268
        %v5457 = vmul.f32 %v1132, %v5269
        %v5458 = vmul.f32 %v1133, %v5270
        %v5459 = vmul.f32 %v1134, %v5271
        %v5460 = vmul.f32 %v1135, %v5272
        %v5461 = vmul.f32 %v1136, %v5273
        %v5462 = vmul.f32 %v1137, %v5274
        %v5463 = vmul.f32 %v1138, %v5275
        %v5464 = vmul.f32 %v1139, %v5276
        %v5465 = vmul.f32 %v1140, %v5277
        %v5466 = vmul.f32 %v1141, %v5278
        %v5467 = vmul.f32 %v1142, %v5279
        %v5468 = vmul.f32 %v1143, %v5280
        %v5469 = vmul.f32 %v1144, %v5281
        %v5470 = vmul.f32 %v1145, %v5282
        %v5471 = vmul.f32 %v1146, %v5283
        %v5472 = vmul.f32 %v1147, %v5284
        %v5473 = vmul.f32 %v1148, %v5285
        %v5474 = vmul.f32 %v1149, %v5286
        %v5475 = vmul.f32 %v1150, %v5287
        %v5476 = vmul.f32 %v1151, %v5288
        %v5477 = vmul.f32 %v1152, %v5289
        %v5478 = vmul.f32 %v1153, %v5290
        %v5479 = vmul.f32 %v1154, %v5291
        %v5480 = vmul.f32 %v1155, %v5292
        %v5481 = vmul.f32 %v1156, %v5293
        %v5482 = vmul.f32 %v1157, %v5294
        %v5483 = vmul.f32 %v1158, %v5295
        %v5484 = vmul.f32 %v1159, %v5296
        %v5485 = vmul.f32 %v1160, %v5297
        %v5486 = vmul.f32 %v1161, %v5298
        %v5487 = vmul.f32 %v1162, %v5299
        %v5488 = vmul.f32 %v1163, %v5300
        %v5489 = vmul.f32 %v1164, %v5301
        %v5490 = vmul.f32 %v1165, %v5302
        %v5491 = vmul.f32 %v1166, %v5303
        %v5492 = vmul.f32 %v1167, %v5304
        %v5493 = vmul.f32 %v1168, %v5305
        %v5494 = vmul.f32 %v1169, %v5306
        %v5495 = vmul.f32 %v1170, %v5307
        %v5496 = vmul.f32 %v1171, %v5308
        %v5497 = vmul.f32 %v1172, %v5309
        %v5498 = vmul.f32 %v1173, %v5310
        %v5499 = vmul.f32 %v1174, %v5311
        %v5500 = vmul.f32 %v1175, %v5312
        %v5501 = vmul.f32 %v1176, %v5313
        %v5502 = vmul.f32 %v1177, %v5314
        %v5503 = vmul.f32 %v1178, %v5315
        %v5504 = vmul.f32 %v1179, %v5316
        %v5505 = vmul.f32 %v1180, %v5317
        %v5506 = vmul.f32 %v1181, %v5318
        %v5507 = vmul.f32 %v1182, %v5319
        %v5508 = vmul.f32 %v1183, %v5320
        %v5509 = vmul.f32 %v1184, %v5321
        %v5510 = vmul.f32 %v1185, %v5322
        %v5511 = vmul.f32 %v1186, %v5323
        %v5512 = vmul.f32 %v1187, %v5324
        %v5513 = vmul.f32 %v1188, %v5325
        %v5514 = vmul.f32 %v1189, %v5326
        %v5515 = vmul.f32 %v1190, %v5327
        %v5516 = vmul.f32 %v1191, %v5328
        %v5517 = vmul.f32 %v1192, %v5329
        %v5518 = vmul.f32 %v1193, %v5330
        %v5519 = vmul.f32 %v1194, %v5331
        %v5520 = vmul.f32 %v1195, %v5332
        %v5521 = vmul.f32 %v1196, %v5333
        %v5522 = vmul.f32 %v1197, %v5334
        %v5523 = vmul.f32 %v1198, %v5335
        %v5524 = vmul.f32 %v1199, %v5336
        %v5525 = vmul.f32 %v1200, %v5337
        %v5526 = vmul.f32 %v1201, %v5338
        %v5527 = vmul.f32 %v1202, %v5339
        %v5528 = vmul.f32 %v1203, %v5340
        %v5529 = vmul.f32 %v1204, %v5341
        %v5530 = vmul.f32 %v1205, %v5342
        %v5531 = vmul.f32 %v1206, %v5343
        %v5532 = vmul.f32 %v1207, %v5344
        %v5533 = vmul.f32 %v1208, %v5345
        %v5534 = vmul.f32 %v1209, %v5346
        %v5535 = vmul.f32 %v1210, %v5347
        %v5536 = vmul.f32 %v1211, %v5348
        %v5537 = vmul.f32 %v1212, %v5349
        %v5538 = vmul.f32 %v1213, %v5350
        %v5539 = vmul.f32 %v1214, %v5351
        %v5540 = vmul.f32 %v1215, %v5352
        %v5541 = vmul.f32 %v1216, %v5353
        %v5542 = vmul.f32 %v1217, %v5354
        %v5543 = vmul.f32 %v1218, %v5355
        %v5544 = vmul.f32 %v1219, %v5356
        %v5545 = vmul.f32 %v1220, %v5357
        %v5546 = vmul.f32 %v1221, %v5358
        %v5547 = vmul.f32 %v1222, %v5359
        %v5548 = vmul.f32 %v1223, %v5360
        %v5549 = vmul.f32 %v1224, %v5361
        %v5550 = vmul.f32 %v1225, %v5362
        %v5551 = vmul.f32 %v1226, %v5363
        %v5552 = vmul.f32 %v1227, %v5364
        %v5553 = vmul.f32 %v1228, %v5365
        %v5554 = vmul.f32 %v1229, %v5366
        %v5555 = vmul.f32 %v1230, %v5367
        %v5556 = vadd.f32 %v4992, %v5368
        %v5557 = vadd.f32 %v4993, %v5369
        %v5558 = vadd.f32 %v4994, %v5370
        %v5559 = vadd.f32 %v4995, %v5371
        %v5560 = vadd.f32 %v4996, %v5372
        %v5561 = vadd.f32 %v4997, %v5373
        %v5562 = vadd.f32 %v4998, %v5374
        %v5563 = vadd.f32 %v4999, %v5375
        %v5564 = vadd.f32 %v5000, %v5376
        %v5565 = vadd.f32 %v5001, %v5377
        %v5566 = vadd.f32 %v5002, %v5378
        %v5567 = vadd.f32 %v5003, %v5379
        %v5568 = vadd.f32 %v5004, %v5380
        %v5569 = vadd.f32 %v5005, %v5381
        %v5570 = vadd.f32 %v5006, %v5382
        %v5571 = vadd.f32 %v5007, %v5383
        %v5572 = vadd.f32 %v5008, %v5384
        %v5573 = vadd.f32 %v5009, %v5385
        %v5574 = vadd.f32 %v5010, %v5386
        %v5575 = vadd.f32 %v5011, %v5387
        %v5576 = vadd.f32 %v5012, %v5388
        %v5577 = vadd.f32 %v5013, %v5389
        %v5578 = vadd.f32 %v5014, %v5390
        %v5579 = vadd.f32 %v5015, %v5391
        %v5580 = vadd.f32 %v5016, %v5392
        %v5581 = vadd.f32 %v5017, %v5393
        %v5582 = vadd.f32 %v5018, %v5394
        %v5583 = vadd.f32 %v5019, %v5395
        %v5584 = vadd.f32 %v5020, %v5396
        %v5585 = vadd.f32 %v5021, %v5397
        %v5586 = vadd.f32 %v5022, %v5398
        %v5587 = vadd.f32 %v5023, %v5399
        %v5588 = vadd.f32 %v5024, %v5400
        %v5589 = vadd.f32 %v5025, %v5401
        %v5590 = vadd.f32 %v5026, %v5402
        %v5591 = vadd.f32 %v5027, %v5403
        %v5592 = vadd.f32 %v5028, %v5404
        %v5593 = vadd.f32 %v5029, %v5405
        %v5594 = vadd.f32 %v5030, %v5406
        %v5595 = vadd.f32 %v5031, %v5407
        %v5596 = vadd.f32 %v5032, %v5408
        %v5597 = vadd.f32 %v5033, %v5409
        %v5598 = vadd.f32 %v5034, %v5410
        %v5599 = vadd.f32 %v5035, %v5411
        %v5600 = vadd.f32 %v5036, %v5412
        %v5601 = vadd.f32 %v5037, %v5413
        %v5602 = vadd.f32 %v5038, %v5414
        %v5603 = vadd.f32 %v5039, %v5415
        %v5604 = vadd.f32 %v5040, %v5416
        %v5605 = vadd.f32 %v5041, %v5417
        %v5606 = vadd.f32 %v5042, %v5418
        %v5607 = vadd.f32 %v5043, %v5419
        %v5608 = vadd.f32 %v5044, %v5420
        %v5609 = vadd.f32 %v5045, %v5421
        %v5610 = vadd.f32 %v5046, %v5422
        %v5611 = vadd.f32 %v5047, %v5423
        %v5612 = vadd.f32 %v5048, %v5424
        %v5613 = vadd.f32 %v5049, %v5425
        %v5614 = vadd.f32 %v5050, %v5426
        %v5615 = vadd.f32 %v5051, %v5427
        %v5616 = vadd.f32 %v5052, %v5428
        %v5617 = vadd.f32 %v5053, %v5429
        %v5618 = vadd.f32 %v5054, %v5430
        %v5619 = vadd.f32 %v5055, %v5431
        %v5620 = vadd.f32 %v5056, %v5432
        %v5621 = vadd.f32 %v5057, %v5433
        %v5622 = vadd.f32 %v5058, %v5434
        %v5623 = vadd.f32 %v5059, %v5435
        %v5624 = vadd.f32 %v5060, %v5436
        %v5625 = vadd.f32 %v5061, %v5437
        %v5626 = vadd.f32 %v5062, %v5438
        %v5627 = vadd.f32 %v5063, %v5439
        %v5628 = vadd.f32 %v5064, %v5440
        %v5629 = vadd.f32 %v5065, %v5441
        %v5630 = vadd.f32 %v5066, %v5442
        %v5631 = vadd.f32 %v5067, %v5443
        %v5632 = vadd.f32 %v5068, %v5444
        %v5633 = vadd.f32 %v5069, %v5445
        %v5634 = vadd.f32 %v5070, %v5446
        %v5635 = vadd.f32 %v5071, %v5447
        %v5636 = vadd.f32 %v5072, %v5448
        %v5637 = vadd.f32 %v5073, %v5449
        %v5638 = vadd.f32 %v5074, %v5450
        %v5639 = vadd.f32 %v5075, %v5451
        %v5640 = vadd.f32 %v5076, %v5452
        %v5641 = vadd.f32 %v5077, %v5453
        %v5642 = vadd.f32 %v5078, %v5454
        %v5643 = vadd.f32 %v5079, %v5455
        %v5644 = vadd.f32 %v5080, %v5456
        %v5645 = vadd.f32 %v5081, %v5457
        %v5646 = vadd.f32 %v5082, %v5458
        %v5647 = vadd.f32 %v5083, %v5459
        %v5648 = vadd.f32 %v5084, %v5460
        %v5649 = vadd.f32 %v5085, %v5461
        %v5650 = vadd.f32 %v5086, %v5462
        %v5651 = vadd.f32 %v5087, %v5463
        %v5652 = vadd.f32 %v5088, %v5464
        %v5653 = vadd.f32 %v5089, %v5465
        %v5654 = vadd.f32 %v5090, %v5466
        %v5655 = vadd.f32 %v5091, %v5467
        %v5656 = vadd.f32 %v5092, %v5468
        %v5657 = vadd.f32 %v5093, %v5469
        %v5658 = vadd.f32 %v5094, %v5470
        %v5659 = vadd.f32 %v5095, %v5471
        %v5660 = vadd.f32 %v5096, %v5472
        %v5661 = vadd.f32 %v5097, %v5473
        %v5662 = vadd.f32 %v5098, %v5474
        %v5663 = vadd.f32 %v5099, %v5475
        %v5664 = vadd.f32 %v5100, %v5476
        %v5665 = vadd.f32 %v5101, %v5477
        %v5666 = vadd.f32 %v5102, %v5478
        %v5667 = vadd.f32 %v5103, %v5479
        %v5668 = vadd.f32 %v5104, %v5480
        %v5669 = vadd.f32 %v5105, %v5481
        %v5670 = vadd.f32 %v5106, %v5482
        %v5671 = vadd.f32 %v5107, %v5483
        %v5672 = vadd.f32 %v5108, %v5484
        %v5673 = vadd.f32 %v5109, %v5485
        %v5674 = vadd.f32 %v5110, %v5486
        %v5675 = vadd.f32 %v5111, %v5487
        %v5676 = vadd.f32 %v5112, %v5488
        %v5677 = vadd.f32 %v5113, %v5489
        %v5678 = vadd.f32 %v5114, %v5490
        %v5679 = vadd.f32 %v5115, %v5491
        %v5680 = vadd.f32 %v5116, %v5492
        %v5681 = vadd.f32 %v5117, %v5493
        %v5682 = vadd.f32 %v5118, %v5494
        %v5683 = vadd.f32 %v5119, %v5495
        %v5684 = vadd.f32 %v5120, %v5496
        %v5685 = vadd.f32 %v5121, %v5497
        %v5686 = vadd.f32 %v5122, %v5498
        %v5687 = vadd.f32 %v5123, %v5499
        %v5688 = vadd.f32 %v5124, %v5500
        %v5689 = vadd.f32 %v5125, %v5501
        %v5690 = vadd.f32 %v5126, %v5502
        %v5691 = vadd.f32 %v5127, %v5503
        %v5692 = vadd.f32 %v5128, %v5504
        %v5693 = vadd.f32 %v5129, %v5505
        %v5694 = vadd.f32 %v5130, %v5506
        %v5695 = vadd.f32 %v5131, %v5507
        %v5696 = vadd.f32 %v5132, %v5508
        %v5697 = vadd.f32 %v5133, %v5509
        %v5698 = vadd.f32 %v5134, %v5510
        %v5699 = vadd.f32 %v5135, %v5511
        %v5700 = vadd.f32 %v5136, %v5512
        %v5701 = vadd.f32 %v5137, %v5513
        %v5702 = vadd.f32 %v5138, %v5514
        %v5703 = vadd.f32 %v5139, %v5515
        %v5704 = vadd.f32 %v5140, %v5516
        %v5705 = vadd.f32 %v5141, %v5517
        %v5706 = vadd.f32 %v5142, %v5518
        %v5707 = vadd.f32 %v5143, %v5519
        %v5708 = vadd.f32 %v5144, %v5520
        %v5709 = vadd.f32 %v5145, %v5521
        %v5710 = vadd.f32 %v5146, %v5522
        %v5711 = vadd.f32 %v5147, %v5523
        %v5712 = vadd.f32 %v5148, %v5524
        %v5713 = vadd.f32 %v5149, %v5525
        %v5714 = vadd.f32 %v5150, %v5526
        %v5715 = vadd.f32 %v5151, %v5527
        %v5716 = vadd.f32 %v5152, %v5528
        %v5717 = vadd.f32 %v5153, %v5529
        %v5718 = vadd.f32 %v5154, %v5530
        %v5719 = vadd.f32 %v5155, %v5531
        %v5720 = vadd.f32 %v5156, %v5532
        %v5721 = vadd.f32 %v5157, %v5533
        %v5722 = vadd.f32 %v5158, %v5534
        %v5723 = vadd.f32 %v5159, %v5535
        %v5724 = vadd.f32 %v5160, %v5536
        %v5725 = vadd.f32 %v5161, %v5537
        %v5726 = vadd.f32 %v5162, %v5538
        %v5727 = vadd.f32 %v5163, %v5539
        %v5728 = vadd.f32 %v5164, %v5540
        %v5729 = vadd.f32 %v5165, %v5541
        %v5730 = vadd.f32 %v5166, %v5542
        %v5731 = vadd.f32 %v5167, %v5543
        %v5732 = vadd.f32 %v5168, %v5544
        %v5733 = vadd.f32 %v5169, %v5545
        %v5734 = vadd.f32 %v5170, %v5546
        %v5735 = vadd.f32 %v5171, %v5547
        %v5736 = vadd.f32 %v5172, %v5548
        %v5737 = vadd.f32 %v5173, %v5549
        %v5738 = vadd.f32 %v5174, %v5550
        %v5739 = vadd.f32 %v5175, %v5551
        %v5740 = vadd.f32 %v5176, %v5552
        %v5741 = vadd.f32 %v5177, %v5553
        %v5742 = vadd.f32 %v5178, %v5554
        %v5743 = vadd.f32 %v5179, %v5555
        %s5744 = smul.u32 %s17, 1504
        %v5745 = vlaneseq
        %v5746 = vshrl.u32 %v5745, 7
        %v5747 = vadd.s32 %v5746, 8
        %v5748 = vadd.s32 %v5746, 16
        %v5749 = vadd.s32 %v5746, 24
        %v5750 = vadd.s32 %v5746, 32
        %v5751 = vadd.s32 %v5746, 40
        %v5752 = vadd.s32 %v5746, 48
        %v5753 = vadd.s32 %v5746, 56
        %v5754 = vadd.s32 %v5746, 64
        %v5755 = vadd.s32 %v5746, 72
        %v5756 = vadd.s32 %v5746, 80
        %v5757 = vadd.s32 %v5746, 88
        %v5758 = vadd.s32 %v5746, 96
        %v5759 = vadd.s32 %v5746, 104
        %v5760 = vadd.s32 %v5746, 112
        %v5761 = vadd.s32 %v5746, 120
        %v5762 = vadd.s32 %v5746, 128
        %v5763 = vadd.s32 %v5746, 136
        %v5764 = vadd.s32 %v5746, 144
        %v5765 = vadd.s32 %v5746, 152
        %v5766 = vadd.s32 %v5746, 160
        %v5767 = vadd.s32 %v5746, 168
        %v5768 = vadd.s32 %v5746, 176
        %v5769 = vadd.s32 %v5746, 184
        %v5770 = vadd.s32 %v5746, 192
        %v5771 = vadd.s32 %v5746, 200
        %v5772 = vadd.s32 %v5746, 208
        %v5773 = vadd.s32 %v5746, 216
        %v5774 = vadd.s32 %v5746, 224
        %v5775 = vadd.s32 %v5746, 232
        %v5776 = vadd.s32 %v5746, 240
        %v5777 = vadd.s32 %v5746, 248
        %v5778 = vadd.s32 %v5746, 256
        %v5779 = vadd.s32 %v5746, 264
        %v5780 = vadd.s32 %v5746, 272
        %v5781 = vadd.s32 %v5746, 280
        %v5782 = vadd.s32 %v5746, 288
        %v5783 = vadd.s32 %v5746, 296
        %v5784 = vadd.s32 %v5746, 304
        %v5785 = vadd.s32 %v5746, 312
        %v5786 = vadd.s32 %v5746, 320
        %v5787 = vadd.s32 %v5746, 328
        %v5788 = vadd.s32 %v5746, 336
        %v5789 = vadd.s32 %v5746, 344
        %v5790 = vadd.s32 %v5746, 352
        %v5791 = vadd.s32 %v5746, 360
        %v5792 = vadd.s32 %v5746, 368
        %v5793 = vadd.s32 %v5746, 376
        %v5794 = vadd.s32 %v5746, 384
        %v5795 = vadd.s32 %v5746, 392
        %v5796 = vadd.s32 %v5746, 400
        %v5797 = vadd.s32 %v5746, 408
        %v5798 = vadd.s32 %v5746, 416
        %v5799 = vadd.s32 %v5746, 424
        %v5800 = vadd.s32 %v5746, 432
        %v5801 = vadd.s32 %v5746, 440
        %v5802 = vadd.s32 %v5746, 448
        %v5803 = vadd.s32 %v5746, 456
        %v5804 = vadd.s32 %v5746, 464
        %v5805 = vadd.s32 %v5746, 472
        %v5806 = vadd.s32 %v5746, 480
        %v5807 = vadd.s32 %v5746, 488
        %v5808 = vadd.s32 %v5746, 496
        %v5809 = vadd.s32 %v5746, 504
        %v5810 = vadd.s32 %v5746, 512
        %v5811 = vadd.s32 %v5746, 520
        %v5812 = vadd.s32 %v5746, 528
        %v5813 = vadd.s32 %v5746, 536
        %v5814 = vadd.s32 %v5746, 544
        %v5815 = vadd.s32 %v5746, 552
        %v5816 = vadd.s32 %v5746, 560
        %v5817 = vadd.s32 %v5746, 568
        %v5818 = vadd.s32 %v5746, 576
        %v5819 = vadd.s32 %v5746, 584
        %v5820 = vadd.s32 %v5746, 592
        %v5821 = vadd.s32 %v5746, 600
        %v5822 = vadd.s32 %v5746, 608
        %v5823 = vadd.s32 %v5746, 616
        %v5824 = vadd.s32 %v5746, 624
        %v5825 = vadd.s32 %v5746, 632
        %v5826 = vadd.s32 %v5746, 640
        %v5827 = vadd.s32 %v5746, 648
        %v5828 = vadd.s32 %v5746, 656
        %v5829 = vadd.s32 %v5746, 664
        %v5830 = vadd.s32 %v5746, 672
        %v5831 = vadd.s32 %v5746, 680
        %v5832 = vadd.s32 %v5746, 688
        %v5833 = vadd.s32 %v5746, 696
        %v5834 = vadd.s32 %v5746, 704
        %v5835 = vadd.s32 %v5746, 712
        %v5836 = vadd.s32 %v5746, 720
        %v5837 = vadd.s32 %v5746, 728
        %v5838 = vadd.s32 %v5746, 736
        %v5839 = vadd.s32 %v5746, 744
        %v5840 = vadd.s32 %v5746, 752
        %v5841 = vadd.s32 %v5746, 760
        %v5842 = vadd.s32 %v5746, 768
        %v5843 = vadd.s32 %v5746, 776
        %v5844 = vadd.s32 %v5746, 784
        %v5845 = vadd.s32 %v5746, 792
        %v5846 = vadd.s32 %v5746, 800
        %v5847 = vadd.s32 %v5746, 808
        %v5848 = vadd.s32 %v5746, 816
        %v5849 = vadd.s32 %v5746, 824
        %v5850 = vadd.s32 %v5746, 832
        %v5851 = vadd.s32 %v5746, 840
        %v5852 = vadd.s32 %v5746, 848
        %v5853 = vadd.s32 %v5746, 856
        %v5854 = vadd.s32 %v5746, 864
        %v5855 = vadd.s32 %v5746, 872
        %v5856 = vadd.s32 %v5746, 880
        %v5857 = vadd.s32 %v5746, 888
        %v5858 = vadd.s32 %v5746, 896
        %v5859 = vadd.s32 %v5746, 904
        %v5860 = vadd.s32 %v5746, 912
        %v5861 = vadd.s32 %v5746, 920
        %v5862 = vadd.s32 %v5746, 928
        %v5863 = vadd.s32 %v5746, 936
        %v5864 = vadd.s32 %v5746, 944
        %v5865 = vadd.s32 %v5746, 952
        %v5866 = vadd.s32 %v5746, 960
        %v5867 = vadd.s32 %v5746, 968
        %v5868 = vadd.s32 %v5746, 976
        %v5869 = vadd.s32 %v5746, 984
        %v5870 = vadd.s32 %v5746, 992
        %v5871 = vadd.s32 %v5746, 1000
        %v5872 = vadd.s32 %v5746, 1008
        %v5873 = vadd.s32 %v5746, 1016
        %v5874 = vadd.s32 %v5746, 1024
        %v5875 = vadd.s32 %v5746, 1032
        %v5876 = vadd.s32 %v5746, 1040
        %v5877 = vadd.s32 %v5746, 1048
        %v5878 = vadd.s32 %v5746, 1056
        %v5879 = vadd.s32 %v5746, 1064
        %v5880 = vadd.s32 %v5746, 1072
        %v5881 = vadd.s32 %v5746, 1080
        %v5882 = vadd.s32 %v5746, 1088
        %v5883 = vadd.s32 %v5746, 1096
        %v5884 = vadd.s32 %v5746, 1104
        %v5885 = vadd.s32 %v5746, 1112
        %v5886 = vadd.s32 %v5746, 1120
        %v5887 = vadd.s32 %v5746, 1128
        %v5888 = vadd.s32 %v5746, 1136
        %v5889 = vadd.s32 %v5746, 1144
        %v5890 = vadd.s32 %v5746, 1152
        %v5891 = vadd.s32 %v5746, 1160
        %v5892 = vadd.s32 %v5746, 1168
        %v5893 = vadd.s32 %v5746, 1176
        %v5894 = vadd.s32 %v5746, 1184
        %v5895 = vadd.s32 %v5746, 1192
        %v5896 = vadd.s32 %v5746, 1200
        %v5897 = vadd.s32 %v5746, 1208
        %v5898 = vadd.s32 %v5746, 1216
        %v5899 = vadd.s32 %v5746, 1224
        %v5900 = vadd.s32 %v5746, 1232
        %v5901 = vadd.s32 %v5746, 1240
        %v5902 = vadd.s32 %v5746, 1248
        %v5903 = vadd.s32 %v5746, 1256
        %v5904 = vadd.s32 %v5746, 1264
        %v5905 = vadd.s32 %v5746, 1272
        %v5906 = vadd.s32 %v5746, 1280
        %v5907 = vadd.s32 %v5746, 1288
        %v5908 = vadd.s32 %v5746, 1296
        %v5909 = vadd.s32 %v5746, 1304
        %v5910 = vadd.s32 %v5746, 1312
        %v5911 = vadd.s32 %v5746, 1320
        %v5912 = vadd.s32 %v5746, 1328
        %v5913 = vadd.s32 %v5746, 1336
        %v5914 = vadd.s32 %v5746, 1344
        %v5915 = vadd.s32 %v5746, 1352
        %v5916 = vadd.s32 %v5746, 1360
        %v5917 = vadd.s32 %v5746, 1368
        %v5918 = vadd.s32 %v5746, 1376
        %v5919 = vadd.s32 %v5746, 1384
        %v5920 = vadd.s32 %v5746, 1392
        %v5921 = vadd.s32 %v5746, 1400
        %v5922 = vadd.s32 %v5746, 1408
        %v5923 = vadd.s32 %v5746, 1416
        %v5924 = vadd.s32 %v5746, 1424
        %v5925 = vadd.s32 %v5746, 1432
        %v5926 = vadd.s32 %v5746, 1440
        %v5927 = vadd.s32 %v5746, 1448
        %v5928 = vadd.s32 %v5746, 1456
        %v5929 = vadd.s32 %v5746, 1464
        %v5930 = vadd.s32 %v5746, 1472
        %v5931 = vadd.s32 %v5746, 1480
        %v5932 = vadd.s32 %v5746, 1488
        %v5933 = vadd.s32 %v5746, 1496
        %v5934 = vstv %s5744
        %v5935 = vadd.s32 %v5934, %v5746
        %v5936 = vadd.s32 %v5934, %v5747
        %v5937 = vadd.s32 %v5934, %v5748
        %v5938 = vadd.s32 %v5934, %v5749
        %v5939 = vadd.s32 %v5934, %v5750
        %v5940 = vadd.s32 %v5934, %v5751
        %v5941 = vadd.s32 %v5934, %v5752
        %v5942 = vadd.s32 %v5934, %v5753
        %v5943 = vadd.s32 %v5934, %v5754
        %v5944 = vadd.s32 %v5934, %v5755
        %v5945 = vadd.s32 %v5934, %v5756
        %v5946 = vadd.s32 %v5934, %v5757
        %v5947 = vadd.s32 %v5934, %v5758
        %v5948 = vadd.s32 %v5934, %v5759
        %v5949 = vadd.s32 %v5934, %v5760
        %v5950 = vadd.s32 %v5934, %v5761
        %v5951 = vadd.s32 %v5934, %v5762
        %v5952 = vadd.s32 %v5934, %v5763
        %v5953 = vadd.s32 %v5934, %v5764
        %v5954 = vadd.s32 %v5934, %v5765
        %v5955 = vadd.s32 %v5934, %v5766
        %v5956 = vadd.s32 %v5934, %v5767
        %v5957 = vadd.s32 %v5934, %v5768
        %v5958 = vadd.s32 %v5934, %v5769
        %v5959 = vadd.s32 %v5934, %v5770
        %v5960 = vadd.s32 %v5934, %v5771
        %v5961 = vadd.s32 %v5934, %v5772
        %v5962 = vadd.s32 %v5934, %v5773
        %v5963 = vadd.s32 %v5934, %v5774
        %v5964 = vadd.s32 %v5934, %v5775
        %v5965 = vadd.s32 %v5934, %v5776
        %v5966 = vadd.s32 %v5934, %v5777
        %v5967 = vadd.s32 %v5934, %v5778
        %v5968 = vadd.s32 %v5934, %v5779
        %v5969 = vadd.s32 %v5934, %v5780
        %v5970 = vadd.s32 %v5934, %v5781
        %v5971 = vadd.s32 %v5934, %v5782
        %v5972 = vadd.s32 %v5934, %v5783
        %v5973 = vadd.s32 %v5934, %v5784
        %v5974 = vadd.s32 %v5934, %v5785
        %v5975 = vadd.s32 %v5934, %v5786
        %v5976 = vadd.s32 %v5934, %v5787
        %v5977 = vadd.s32 %v5934, %v5788
        %v5978 = vadd.s32 %v5934, %v5789
        %v5979 = vadd.s32 %v5934, %v5790
        %v5980 = vadd.s32 %v5934, %v5791
        %v5981 = vadd.s32 %v5934, %v5792
        %v5982 = vadd.s32 %v5934, %v5793
        %v5983 = vadd.s32 %v5934, %v5794
        %v5984 = vadd.s32 %v5934, %v5795
        %v5985 = vadd.s32 %v5934, %v5796
        %v5986 = vadd.s32 %v5934, %v5797
        %v5987 = vadd.s32 %v5934, %v5798
        %v5988 = vadd.s32 %v5934, %v5799
        %v5989 = vadd.s32 %v5934, %v5800
        %v5990 = vadd.s32 %v5934, %v5801
        %v5991 = vadd.s32 %v5934, %v5802
        %v5992 = vadd.s32 %v5934, %v5803
        %v5993 = vadd.s32 %v5934, %v5804
        %v5994 = vadd.s32 %v5934, %v5805
        %v5995 = vadd.s32 %v5934, %v5806
        %v5996 = vadd.s32 %v5934, %v5807
        %v5997 = vadd.s32 %v5934, %v5808
        %v5998 = vadd.s32 %v5934, %v5809
        %v5999 = vadd.s32 %v5934, %v5810
        %v6000 = vadd.s32 %v5934, %v5811
        %v6001 = vadd.s32 %v5934, %v5812
        %v6002 = vadd.s32 %v5934, %v5813
        %v6003 = vadd.s32 %v5934, %v5814
        %v6004 = vadd.s32 %v5934, %v5815
        %v6005 = vadd.s32 %v5934, %v5816
        %v6006 = vadd.s32 %v5934, %v5817
        %v6007 = vadd.s32 %v5934, %v5818
        %v6008 = vadd.s32 %v5934, %v5819
        %v6009 = vadd.s32 %v5934, %v5820
        %v6010 = vadd.s32 %v5934, %v5821
        %v6011 = vadd.s32 %v5934, %v5822
        %v6012 = vadd.s32 %v5934, %v5823
        %v6013 = vadd.s32 %v5934, %v5824
        %v6014 = vadd.s32 %v5934, %v5825
        %v6015 = vadd.s32 %v5934, %v5826
        %v6016 = vadd.s32 %v5934, %v5827
        %v6017 = vadd.s32 %v5934, %v5828
        %v6018 = vadd.s32 %v5934, %v5829
        %v6019 = vadd.s32 %v5934, %v5830
        %v6020 = vadd.s32 %v5934, %v5831
        %v6021 = vadd.s32 %v5934, %v5832
        %v6022 = vadd.s32 %v5934, %v5833
        %v6023 = vadd.s32 %v5934, %v5834
        %v6024 = vadd.s32 %v5934, %v5835
        %v6025 = vadd.s32 %v5934, %v5836
        %v6026 = vadd.s32 %v5934, %v5837
        %v6027 = vadd.s32 %v5934, %v5838
        %v6028 = vadd.s32 %v5934, %v5839
        %v6029 = vadd.s32 %v5934, %v5840
        %v6030 = vadd.s32 %v5934, %v5841
        %v6031 = vadd.s32 %v5934, %v5842
        %v6032 = vadd.s32 %v5934, %v5843
        %v6033 = vadd.s32 %v5934, %v5844
        %v6034 = vadd.s32 %v5934, %v5845
        %v6035 = vadd.s32 %v5934, %v5846
        %v6036 = vadd.s32 %v5934, %v5847
        %v6037 = vadd.s32 %v5934, %v5848
        %v6038 = vadd.s32 %v5934, %v5849
        %v6039 = vadd.s32 %v5934, %v5850
        %v6040 = vadd.s32 %v5934, %v5851
        %v6041 = vadd.s32 %v5934, %v5852
        %v6042 = vadd.s32 %v5934, %v5853
        %v6043 = vadd.s32 %v5934, %v5854
        %v6044 = vadd.s32 %v5934, %v5855
        %v6045 = vadd.s32 %v5934, %v5856
        %v6046 = vadd.s32 %v5934, %v5857
        %v6047 = vadd.s32 %v5934, %v5858
        %v6048 = vadd.s32 %v5934, %v5859
        %v6049 = vadd.s32 %v5934, %v5860
        %v6050 = vadd.s32 %v5934, %v5861
        %v6051 = vadd.s32 %v5934, %v5862
        %v6052 = vadd.s32 %v5934, %v5863
        %v6053 = vadd.s32 %v5934, %v5864
        %v6054 = vadd.s32 %v5934, %v5865
        %v6055 = vadd.s32 %v5934, %v5866
        %v6056 = vadd.s32 %v5934, %v5867
        %v6057 = vadd.s32 %v5934, %v5868
        %v6058 = vadd.s32 %v5934, %v5869
        %v6059 = vadd.s32 %v5934, %v5870
        %v6060 = vadd.s32 %v5934, %v5871
        %v6061 = vadd.s32 %v5934, %v5872
        %v6062 = vadd.s32 %v5934, %v5873
        %v6063 = vadd.s32 %v5934, %v5874
        %v6064 = vadd.s32 %v5934, %v5875
        %v6065 = vadd.s32 %v5934, %v5876
        %v6066 = vadd.s32 %v5934, %v5877
        %v6067 = vadd.s32 %v5934, %v5878
        %v6068 = vadd.s32 %v5934, %v5879
        %v6069 = vadd.s32 %v5934, %v5880
        %v6070 = vadd.s32 %v5934, %v5881
        %v6071 = vadd.s32 %v5934, %v5882
        %v6072 = vadd.s32 %v5934, %v5883
        %v6073 = vadd.s32 %v5934, %v5884
        %v6074 = vadd.s32 %v5934, %v5885
        %v6075 = vadd.s32 %v5934, %v5886
        %v6076 = vadd.s32 %v5934, %v5887
        %v6077 = vadd.s32 %v5934, %v5888
        %v6078 = vadd.s32 %v5934, %v5889
        %v6079 = vadd.s32 %v5934, %v5890
        %v6080 = vadd.s32 %v5934, %v5891
        %v6081 = vadd.s32 %v5934, %v5892
        %v6082 = vadd.s32 %v5934, %v5893
        %v6083 = vadd.s32 %v5934, %v5894
        %v6084 = vadd.s32 %v5934, %v5895
        %v6085 = vadd.s32 %v5934, %v5896
        %v6086 = vadd.s32 %v5934, %v5897
        %v6087 = vadd.s32 %v5934, %v5898
        %v6088 = vadd.s32 %v5934, %v5899
        %v6089 = vadd.s32 %v5934, %v5900
        %v6090 = vadd.s32 %v5934, %v5901
        %v6091 = vadd.s32 %v5934, %v5902
        %v6092 = vadd.s32 %v5934, %v5903
        %v6093 = vadd.s32 %v5934, %v5904
        %v6094 = vadd.s32 %v5934, %v5905
        %v6095 = vadd.s32 %v5934, %v5906
        %v6096 = vadd.s32 %v5934, %v5907
        %v6097 = vadd.s32 %v5934, %v5908
        %v6098 = vadd.s32 %v5934, %v5909
        %v6099 = vadd.s32 %v5934, %v5910
        %v6100 = vadd.s32 %v5934, %v5911
        %v6101 = vadd.s32 %v5934, %v5912
        %v6102 = vadd.s32 %v5934, %v5913
        %v6103 = vadd.s32 %v5934, %v5914
        %v6104 = vadd.s32 %v5934, %v5915
        %v6105 = vadd.s32 %v5934, %v5916
        %v6106 = vadd.s32 %v5934, %v5917
        %v6107 = vadd.s32 %v5934, %v5918
        %v6108 = vadd.s32 %v5934, %v5919
        %v6109 = vadd.s32 %v5934, %v5920
        %v6110 = vadd.s32 %v5934, %v5921
        %v6111 = vadd.s32 %v5934, %v5922
        %v6112 = vadd.s32 %v5934, %v5923
        %v6113 = vadd.s32 %v5934, %v5924
        %v6114 = vadd.s32 %v5934, %v5925
        %v6115 = vadd.s32 %v5934, %v5926
        %v6116 = vadd.s32 %v5934, %v5927
        %v6117 = vadd.s32 %v5934, %v5928
        %v6118 = vadd.s32 %v5934, %v5929
        %v6119 = vadd.s32 %v5934, %v5930
        %v6120 = vadd.s32 %v5934, %v5931
        %v6121 = vadd.s32 %v5934, %v5932
        %v6122 = vadd.s32 %v5934, %v5933
        %vm6123 = vcmp.lt.s32.totalorder %v5935, 3000
        %vm6124 = vcmp.lt.s32.totalorder %v5936, 3000
        %vm6125 = vcmp.lt.s32.totalorder %v5937, 3000
        %vm6126 = vcmp.lt.s32.totalorder %v5938, 3000
        %vm6127 = vcmp.lt.s32.totalorder %v5939, 3000
        %vm6128 = vcmp.lt.s32.totalorder %v5940, 3000
        %vm6129 = vcmp.lt.s32.totalorder %v5941, 3000
        %vm6130 = vcmp.lt.s32.totalorder %v5942, 3000
        %vm6131 = vcmp.lt.s32.totalorder %v5943, 3000
        %vm6132 = vcmp.lt.s32.totalorder %v5944, 3000
        %vm6133 = vcmp.lt.s32.totalorder %v5945, 3000
        %vm6134 = vcmp.lt.s32.totalorder %v5946, 3000
        %vm6135 = vcmp.lt.s32.totalorder %v5947, 3000
        %vm6136 = vcmp.lt.s32.totalorder %v5948, 3000
        %vm6137 = vcmp.lt.s32.totalorder %v5949, 3000
        %vm6138 = vcmp.lt.s32.totalorder %v5950, 3000
        %vm6139 = vcmp.lt.s32.totalorder %v5951, 3000
        %vm6140 = vcmp.lt.s32.totalorder %v5952, 3000
        %vm6141 = vcmp.lt.s32.totalorder %v5953, 3000
        %vm6142 = vcmp.lt.s32.totalorder %v5954, 3000
        %vm6143 = vcmp.lt.s32.totalorder %v5955, 3000
        %vm6144 = vcmp.lt.s32.totalorder %v5956, 3000
        %vm6145 = vcmp.lt.s32.totalorder %v5957, 3000
        %vm6146 = vcmp.lt.s32.totalorder %v5958, 3000
        %vm6147 = vcmp.lt.s32.totalorder %v5959, 3000
        %vm6148 = vcmp.lt.s32.totalorder %v5960, 3000
        %vm6149 = vcmp.lt.s32.totalorder %v5961, 3000
        %vm6150 = vcmp.lt.s32.totalorder %v5962, 3000
        %vm6151 = vcmp.lt.s32.totalorder %v5963, 3000
        %vm6152 = vcmp.lt.s32.totalorder %v5964, 3000
        %vm6153 = vcmp.lt.s32.totalorder %v5965, 3000
        %vm6154 = vcmp.lt.s32.totalorder %v5966, 3000
        %vm6155 = vcmp.lt.s32.totalorder %v5967, 3000
        %vm6156 = vcmp.lt.s32.totalorder %v5968, 3000
        %vm6157 = vcmp.lt.s32.totalorder %v5969, 3000
        %vm6158 = vcmp.lt.s32.totalorder %v5970, 3000
        %vm6159 = vcmp.lt.s32.totalorder %v5971, 3000
        %vm6160 = vcmp.lt.s32.totalorder %v5972, 3000
        %vm6161 = vcmp.lt.s32.totalorder %v5973, 3000
        %vm6162 = vcmp.lt.s32.totalorder %v5974, 3000
        %vm6163 = vcmp.lt.s32.totalorder %v5975, 3000
        %vm6164 = vcmp.lt.s32.totalorder %v5976, 3000
        %vm6165 = vcmp.lt.s32.totalorder %v5977, 3000
        %vm6166 = vcmp.lt.s32.totalorder %v5978, 3000
        %vm6167 = vcmp.lt.s32.totalorder %v5979, 3000
        %vm6168 = vcmp.lt.s32.totalorder %v5980, 3000
        %vm6169 = vcmp.lt.s32.totalorder %v5981, 3000
        %vm6170 = vcmp.lt.s32.totalorder %v5982, 3000
        %vm6171 = vcmp.lt.s32.totalorder %v5983, 3000
        %vm6172 = vcmp.lt.s32.totalorder %v5984, 3000
        %vm6173 = vcmp.lt.s32.totalorder %v5985, 3000
        %vm6174 = vcmp.lt.s32.totalorder %v5986, 3000
        %vm6175 = vcmp.lt.s32.totalorder %v5987, 3000
        %vm6176 = vcmp.lt.s32.totalorder %v5988, 3000
        %vm6177 = vcmp.lt.s32.totalorder %v5989, 3000
        %vm6178 = vcmp.lt.s32.totalorder %v5990, 3000
        %vm6179 = vcmp.lt.s32.totalorder %v5991, 3000
        %vm6180 = vcmp.lt.s32.totalorder %v5992, 3000
        %vm6181 = vcmp.lt.s32.totalorder %v5993, 3000
        %vm6182 = vcmp.lt.s32.totalorder %v5994, 3000
        %vm6183 = vcmp.lt.s32.totalorder %v5995, 3000
        %vm6184 = vcmp.lt.s32.totalorder %v5996, 3000
        %vm6185 = vcmp.lt.s32.totalorder %v5997, 3000
        %vm6186 = vcmp.lt.s32.totalorder %v5998, 3000
        %vm6187 = vcmp.lt.s32.totalorder %v5999, 3000
        %vm6188 = vcmp.lt.s32.totalorder %v6000, 3000
        %vm6189 = vcmp.lt.s32.totalorder %v6001, 3000
        %vm6190 = vcmp.lt.s32.totalorder %v6002, 3000
        %vm6191 = vcmp.lt.s32.totalorder %v6003, 3000
        %vm6192 = vcmp.lt.s32.totalorder %v6004, 3000
        %vm6193 = vcmp.lt.s32.totalorder %v6005, 3000
        %vm6194 = vcmp.lt.s32.totalorder %v6006, 3000
        %vm6195 = vcmp.lt.s32.totalorder %v6007, 3000
        %vm6196 = vcmp.lt.s32.totalorder %v6008, 3000
        %vm6197 = vcmp.lt.s32.totalorder %v6009, 3000
        %vm6198 = vcmp.lt.s32.totalorder %v6010, 3000
        %vm6199 = vcmp.lt.s32.totalorder %v6011, 3000
        %vm6200 = vcmp.lt.s32.totalorder %v6012, 3000
        %vm6201 = vcmp.lt.s32.totalorder %v6013, 3000
        %vm6202 = vcmp.lt.s32.totalorder %v6014, 3000
        %vm6203 = vcmp.lt.s32.totalorder %v6015, 3000
        %vm6204 = vcmp.lt.s32.totalorder %v6016, 3000
        %vm6205 = vcmp.lt.s32.totalorder %v6017, 3000
        %vm6206 = vcmp.lt.s32.totalorder %v6018, 3000
        %vm6207 = vcmp.lt.s32.totalorder %v6019, 3000
        %vm6208 = vcmp.lt.s32.totalorder %v6020, 3000
        %vm6209 = vcmp.lt.s32.totalorder %v6021, 3000
        %vm6210 = vcmp.lt.s32.totalorder %v6022, 3000
        %vm6211 = vcmp.lt.s32.totalorder %v6023, 3000
        %vm6212 = vcmp.lt.s32.totalorder %v6024, 3000
        %vm6213 = vcmp.lt.s32.totalorder %v6025, 3000
        %vm6214 = vcmp.lt.s32.totalorder %v6026, 3000
        %vm6215 = vcmp.lt.s32.totalorder %v6027, 3000
        %vm6216 = vcmp.lt.s32.totalorder %v6028, 3000
        %vm6217 = vcmp.lt.s32.totalorder %v6029, 3000
        %vm6218 = vcmp.lt.s32.totalorder %v6030, 3000
        %vm6219 = vcmp.lt.s32.totalorder %v6031, 3000
        %vm6220 = vcmp.lt.s32.totalorder %v6032, 3000
        %vm6221 = vcmp.lt.s32.totalorder %v6033, 3000
        %vm6222 = vcmp.lt.s32.totalorder %v6034, 3000
        %vm6223 = vcmp.lt.s32.totalorder %v6035, 3000
        %vm6224 = vcmp.lt.s32.totalorder %v6036, 3000
        %vm6225 = vcmp.lt.s32.totalorder %v6037, 3000
        %vm6226 = vcmp.lt.s32.totalorder %v6038, 3000
        %vm6227 = vcmp.lt.s32.totalorder %v6039, 3000
        %vm6228 = vcmp.lt.s32.totalorder %v6040, 3000
        %vm6229 = vcmp.lt.s32.totalorder %v6041, 3000
        %vm6230 = vcmp.lt.s32.totalorder %v6042, 3000
        %vm6231 = vcmp.lt.s32.totalorder %v6043, 3000
        %vm6232 = vcmp.lt.s32.totalorder %v6044, 3000
        %vm6233 = vcmp.lt.s32.totalorder %v6045, 3000
        %vm6234 = vcmp.lt.s32.totalorder %v6046, 3000
        %vm6235 = vcmp.lt.s32.totalorder %v6047, 3000
        %vm6236 = vcmp.lt.s32.totalorder %v6048, 3000
        %vm6237 = vcmp.lt.s32.totalorder %v6049, 3000
        %vm6238 = vcmp.lt.s32.totalorder %v6050, 3000
        %vm6239 = vcmp.lt.s32.totalorder %v6051, 3000
        %vm6240 = vcmp.lt.s32.totalorder %v6052, 3000
        %vm6241 = vcmp.lt.s32.totalorder %v6053, 3000
        %vm6242 = vcmp.lt.s32.totalorder %v6054, 3000
        %vm6243 = vcmp.lt.s32.totalorder %v6055, 3000
        %vm6244 = vcmp.lt.s32.totalorder %v6056, 3000
        %vm6245 = vcmp.lt.s32.totalorder %v6057, 3000
        %vm6246 = vcmp.lt.s32.totalorder %v6058, 3000
        %vm6247 = vcmp.lt.s32.totalorder %v6059, 3000
        %vm6248 = vcmp.lt.s32.totalorder %v6060, 3000
        %vm6249 = vcmp.lt.s32.totalorder %v6061, 3000
        %vm6250 = vcmp.lt.s32.totalorder %v6062, 3000
        %vm6251 = vcmp.lt.s32.totalorder %v6063, 3000
        %vm6252 = vcmp.lt.s32.totalorder %v6064, 3000
        %vm6253 = vcmp.lt.s32.totalorder %v6065, 3000
        %vm6254 = vcmp.lt.s32.totalorder %v6066, 3000
        %vm6255 = vcmp.lt.s32.totalorder %v6067, 3000
        %vm6256 = vcmp.lt.s32.totalorder %v6068, 3000
        %vm6257 = vcmp.lt.s32.totalorder %v6069, 3000
        %vm6258 = vcmp.lt.s32.totalorder %v6070, 3000
        %vm6259 = vcmp.lt.s32.totalorder %v6071, 3000
        %vm6260 = vcmp.lt.s32.totalorder %v6072, 3000
        %vm6261 = vcmp.lt.s32.totalorder %v6073, 3000
        %vm6262 = vcmp.lt.s32.totalorder %v6074, 3000
        %vm6263 = vcmp.lt.s32.totalorder %v6075, 3000
        %vm6264 = vcmp.lt.s32.totalorder %v6076, 3000
        %vm6265 = vcmp.lt.s32.totalorder %v6077, 3000
        %vm6266 = vcmp.lt.s32.totalorder %v6078, 3000
        %vm6267 = vcmp.lt.s32.totalorder %v6079, 3000
        %vm6268 = vcmp.lt.s32.totalorder %v6080, 3000
        %vm6269 = vcmp.lt.s32.totalorder %v6081, 3000
        %vm6270 = vcmp.lt.s32.totalorder %v6082, 3000
        %vm6271 = vcmp.lt.s32.totalorder %v6083, 3000
        %vm6272 = vcmp.lt.s32.totalorder %v6084, 3000
        %vm6273 = vcmp.lt.s32.totalorder %v6085, 3000
        %vm6274 = vcmp.lt.s32.totalorder %v6086, 3000
        %vm6275 = vcmp.lt.s32.totalorder %v6087, 3000
        %vm6276 = vcmp.lt.s32.totalorder %v6088, 3000
        %vm6277 = vcmp.lt.s32.totalorder %v6089, 3000
        %vm6278 = vcmp.lt.s32.totalorder %v6090, 3000
        %vm6279 = vcmp.lt.s32.totalorder %v6091, 3000
        %vm6280 = vcmp.lt.s32.totalorder %v6092, 3000
        %vm6281 = vcmp.lt.s32.totalorder %v6093, 3000
        %vm6282 = vcmp.lt.s32.totalorder %v6094, 3000
        %vm6283 = vcmp.lt.s32.totalorder %v6095, 3000
        %vm6284 = vcmp.lt.s32.totalorder %v6096, 3000
        %vm6285 = vcmp.lt.s32.totalorder %v6097, 3000
        %vm6286 = vcmp.lt.s32.totalorder %v6098, 3000
        %vm6287 = vcmp.lt.s32.totalorder %v6099, 3000
        %vm6288 = vcmp.lt.s32.totalorder %v6100, 3000
        %vm6289 = vcmp.lt.s32.totalorder %v6101, 3000
        %vm6290 = vcmp.lt.s32.totalorder %v6102, 3000
        %vm6291 = vcmp.lt.s32.totalorder %v6103, 3000
        %vm6292 = vcmp.lt.s32.totalorder %v6104, 3000
        %vm6293 = vcmp.lt.s32.totalorder %v6105, 3000
        %vm6294 = vcmp.lt.s32.totalorder %v6106, 3000
        %vm6295 = vcmp.lt.s32.totalorder %v6107, 3000
        %vm6296 = vcmp.lt.s32.totalorder %v6108, 3000
        %vm6297 = vcmp.lt.s32.totalorder %v6109, 3000
        %vm6298 = vcmp.lt.s32.totalorder %v6110, 3000
        %vm6299 = vcmp.lt.s32.totalorder %v6111, 3000
        %vm6300 = vcmp.lt.s32.totalorder %v6112, 3000
        %vm6301 = vcmp.lt.s32.totalorder %v6113, 3000
        %vm6302 = vcmp.lt.s32.totalorder %v6114, 3000
        %vm6303 = vcmp.lt.s32.totalorder %v6115, 3000
        %vm6304 = vcmp.lt.s32.totalorder %v6116, 3000
        %vm6305 = vcmp.lt.s32.totalorder %v6117, 3000
        %vm6306 = vcmp.lt.s32.totalorder %v6118, 3000
        %vm6307 = vcmp.lt.s32.totalorder %v6119, 3000
        %vm6308 = vcmp.lt.s32.totalorder %v6120, 3000
        %vm6309 = vcmp.lt.s32.totalorder %v6121, 3000
        %vm6310 = vcmp.lt.s32.totalorder %v6122, 3000
        %v6311 = vsel %vm6123, %v5556, 0.0
        %v6312 = vsel %vm6124, %v5557, 0.0
        %v6313 = vsel %vm6125, %v5558, 0.0
        %v6314 = vsel %vm6126, %v5559, 0.0
        %v6315 = vsel %vm6127, %v5560, 0.0
        %v6316 = vsel %vm6128, %v5561, 0.0
        %v6317 = vsel %vm6129, %v5562, 0.0
        %v6318 = vsel %vm6130, %v5563, 0.0
        %v6319 = vsel %vm6131, %v5564, 0.0
        %v6320 = vsel %vm6132, %v5565, 0.0
        %v6321 = vsel %vm6133, %v5566, 0.0
        %v6322 = vsel %vm6134, %v5567, 0.0
        %v6323 = vsel %vm6135, %v5568, 0.0
        %v6324 = vsel %vm6136, %v5569, 0.0
        %v6325 = vsel %vm6137, %v5570, 0.0
        %v6326 = vsel %vm6138, %v5571, 0.0
        %v6327 = vsel %vm6139, %v5572, 0.0
        %v6328 = vsel %vm6140, %v5573, 0.0
        %v6329 = vsel %vm6141, %v5574, 0.0
        %v6330 = vsel %vm6142, %v5575, 0.0
        %v6331 = vsel %vm6143, %v5576, 0.0
        %v6332 = vsel %vm6144, %v5577, 0.0
        %v6333 = vsel %vm6145, %v5578, 0.0
        %v6334 = vsel %vm6146, %v5579, 0.0
        %v6335 = vsel %vm6147, %v5580, 0.0
        %v6336 = vsel %vm6148, %v5581, 0.0
        %v6337 = vsel %vm6149, %v5582, 0.0
        %v6338 = vsel %vm6150, %v5583, 0.0
        %v6339 = vsel %vm6151, %v5584, 0.0
        %v6340 = vsel %vm6152, %v5585, 0.0
        %v6341 = vsel %vm6153, %v5586, 0.0
        %v6342 = vsel %vm6154, %v5587, 0.0
        %v6343 = vsel %vm6155, %v5588, 0.0
        %v6344 = vsel %vm6156, %v5589, 0.0
        %v6345 = vsel %vm6157, %v5590, 0.0
        %v6346 = vsel %vm6158, %v5591, 0.0
        %v6347 = vsel %vm6159, %v5592, 0.0
        %v6348 = vsel %vm6160, %v5593, 0.0
        %v6349 = vsel %vm6161, %v5594, 0.0
        %v6350 = vsel %vm6162, %v5595, 0.0
        %v6351 = vsel %vm6163, %v5596, 0.0
        %v6352 = vsel %vm6164, %v5597, 0.0
        %v6353 = vsel %vm6165, %v5598, 0.0
        %v6354 = vsel %vm6166, %v5599, 0.0
        %v6355 = vsel %vm6167, %v5600, 0.0
        %v6356 = vsel %vm6168, %v5601, 0.0
        %v6357 = vsel %vm6169, %v5602, 0.0
        %v6358 = vsel %vm6170, %v5603, 0.0
        %v6359 = vsel %vm6171, %v5604, 0.0
        %v6360 = vsel %vm6172, %v5605, 0.0
        %v6361 = vsel %vm6173, %v5606, 0.0
        %v6362 = vsel %vm6174, %v5607, 0.0
        %v6363 = vsel %vm6175, %v5608, 0.0
        %v6364 = vsel %vm6176, %v5609, 0.0
        %v6365 = vsel %vm6177, %v5610, 0.0
        %v6366 = vsel %vm6178, %v5611, 0.0
        %v6367 = vsel %vm6179, %v5612, 0.0
        %v6368 = vsel %vm6180, %v5613, 0.0
        %v6369 = vsel %vm6181, %v5614, 0.0
        %v6370 = vsel %vm6182, %v5615, 0.0
        %v6371 = vsel %vm6183, %v5616, 0.0
        %v6372 = vsel %vm6184, %v5617, 0.0
        %v6373 = vsel %vm6185, %v5618, 0.0
        %v6374 = vsel %vm6186, %v5619, 0.0
        %v6375 = vsel %vm6187, %v5620, 0.0
        %v6376 = vsel %vm6188, %v5621, 0.0
        %v6377 = vsel %vm6189, %v5622, 0.0
        %v6378 = vsel %vm6190, %v5623, 0.0
        %v6379 = vsel %vm6191, %v5624, 0.0
        %v6380 = vsel %vm6192, %v5625, 0.0
        %v6381 = vsel %vm6193, %v5626, 0.0
        %v6382 = vsel %vm6194, %v5627, 0.0
        %v6383 = vsel %vm6195, %v5628, 0.0
        %v6384 = vsel %vm6196, %v5629, 0.0
        %v6385 = vsel %vm6197, %v5630, 0.0
        %v6386 = vsel %vm6198, %v5631, 0.0
        %v6387 = vsel %vm6199, %v5632, 0.0
        %v6388 = vsel %vm6200, %v5633, 0.0
        %v6389 = vsel %vm6201, %v5634, 0.0
        %v6390 = vsel %vm6202, %v5635, 0.0
        %v6391 = vsel %vm6203, %v5636, 0.0
        %v6392 = vsel %vm6204, %v5637, 0.0
        %v6393 = vsel %vm6205, %v5638, 0.0
        %v6394 = vsel %vm6206, %v5639, 0.0
        %v6395 = vsel %vm6207, %v5640, 0.0
        %v6396 = vsel %vm6208, %v5641, 0.0
        %v6397 = vsel %vm6209, %v5642, 0.0
        %v6398 = vsel %vm6210, %v5643, 0.0
        %v6399 = vsel %vm6211, %v5644, 0.0
        %v6400 = vsel %vm6212, %v5645, 0.0
        %v6401 = vsel %vm6213, %v5646, 0.0
        %v6402 = vsel %vm6214, %v5647, 0.0
        %v6403 = vsel %vm6215, %v5648, 0.0
        %v6404 = vsel %vm6216, %v5649, 0.0
        %v6405 = vsel %vm6217, %v5650, 0.0
        %v6406 = vsel %vm6218, %v5651, 0.0
        %v6407 = vsel %vm6219, %v5652, 0.0
        %v6408 = vsel %vm6220, %v5653, 0.0
        %v6409 = vsel %vm6221, %v5654, 0.0
        %v6410 = vsel %vm6222, %v5655, 0.0
        %v6411 = vsel %vm6223, %v5656, 0.0
        %v6412 = vsel %vm6224, %v5657, 0.0
        %v6413 = vsel %vm6225, %v5658, 0.0
        %v6414 = vsel %vm6226, %v5659, 0.0
        %v6415 = vsel %vm6227, %v5660, 0.0
        %v6416 = vsel %vm6228, %v5661, 0.0
        %v6417 = vsel %vm6229, %v5662, 0.0
        %v6418 = vsel %vm6230, %v5663, 0.0
        %v6419 = vsel %vm6231, %v5664, 0.0
        %v6420 = vsel %vm6232, %v5665, 0.0
        %v6421 = vsel %vm6233, %v5666, 0.0
        %v6422 = vsel %vm6234, %v5667, 0.0
        %v6423 = vsel %vm6235, %v5668, 0.0
        %v6424 = vsel %vm6236, %v5669, 0.0
        %v6425 = vsel %vm6237, %v5670, 0.0
        %v6426 = vsel %vm6238, %v5671, 0.0
        %v6427 = vsel %vm6239, %v5672, 0.0
        %v6428 = vsel %vm6240, %v5673, 0.0
        %v6429 = vsel %vm6241, %v5674, 0.0
        %v6430 = vsel %vm6242, %v5675, 0.0
        %v6431 = vsel %vm6243, %v5676, 0.0
        %v6432 = vsel %vm6244, %v5677, 0.0
        %v6433 = vsel %vm6245, %v5678, 0.0
        %v6434 = vsel %vm6246, %v5679, 0.0
        %v6435 = vsel %vm6247, %v5680, 0.0
        %v6436 = vsel %vm6248, %v5681, 0.0
        %v6437 = vsel %vm6249, %v5682, 0.0
        %v6438 = vsel %vm6250, %v5683, 0.0
        %v6439 = vsel %vm6251, %v5684, 0.0
        %v6440 = vsel %vm6252, %v5685, 0.0
        %v6441 = vsel %vm6253, %v5686, 0.0
        %v6442 = vsel %vm6254, %v5687, 0.0
        %v6443 = vsel %vm6255, %v5688, 0.0
        %v6444 = vsel %vm6256, %v5689, 0.0
        %v6445 = vsel %vm6257, %v5690, 0.0
        %v6446 = vsel %vm6258, %v5691, 0.0
        %v6447 = vsel %vm6259, %v5692, 0.0
        %v6448 = vsel %vm6260, %v5693, 0.0
        %v6449 = vsel %vm6261, %v5694, 0.0
        %v6450 = vsel %vm6262, %v5695, 0.0
        %v6451 = vsel %vm6263, %v5696, 0.0
        %v6452 = vsel %vm6264, %v5697, 0.0
        %v6453 = vsel %vm6265, %v5698, 0.0
        %v6454 = vsel %vm6266, %v5699, 0.0
        %v6455 = vsel %vm6267, %v5700, 0.0
        %v6456 = vsel %vm6268, %v5701, 0.0
        %v6457 = vsel %vm6269, %v5702, 0.0
        %v6458 = vsel %vm6270, %v5703, 0.0
        %v6459 = vsel %vm6271, %v5704, 0.0
        %v6460 = vsel %vm6272, %v5705, 0.0
        %v6461 = vsel %vm6273, %v5706, 0.0
        %v6462 = vsel %vm6274, %v5707, 0.0
        %v6463 = vsel %vm6275, %v5708, 0.0
        %v6464 = vsel %vm6276, %v5709, 0.0
        %v6465 = vsel %vm6277, %v5710, 0.0
        %v6466 = vsel %vm6278, %v5711, 0.0
        %v6467 = vsel %vm6279, %v5712, 0.0
        %v6468 = vsel %vm6280, %v5713, 0.0
        %v6469 = vsel %vm6281, %v5714, 0.0
        %v6470 = vsel %vm6282, %v5715, 0.0
        %v6471 = vsel %vm6283, %v5716, 0.0
        %v6472 = vsel %vm6284, %v5717, 0.0
        %v6473 = vsel %vm6285, %v5718, 0.0
        %v6474 = vsel %vm6286, %v5719, 0.0
        %v6475 = vsel %vm6287, %v5720, 0.0
        %v6476 = vsel %vm6288, %v5721, 0.0
        %v6477 = vsel %vm6289, %v5722, 0.0
        %v6478 = vsel %vm6290, %v5723, 0.0
        %v6479 = vsel %vm6291, %v5724, 0.0
        %v6480 = vsel %vm6292, %v5725, 0.0
        %v6481 = vsel %vm6293, %v5726, 0.0
        %v6482 = vsel %vm6294, %v5727, 0.0
        %v6483 = vsel %vm6295, %v5728, 0.0
        %v6484 = vsel %vm6296, %v5729, 0.0
        %v6485 = vsel %vm6297, %v5730, 0.0
        %v6486 = vsel %vm6298, %v5731, 0.0
        %v6487 = vsel %vm6299, %v5732, 0.0
        %v6488 = vsel %vm6300, %v5733, 0.0
        %v6489 = vsel %vm6301, %v5734, 0.0
        %v6490 = vsel %vm6302, %v5735, 0.0
        %v6491 = vsel %vm6303, %v5736, 0.0
        %v6492 = vsel %vm6304, %v5737, 0.0
        %v6493 = vsel %vm6305, %v5738, 0.0
        %v6494 = vsel %vm6306, %v5739, 0.0
        %v6495 = vsel %vm6307, %v5740, 0.0
        %v6496 = vsel %vm6308, %v5741, 0.0
        %v6497 = vsel %vm6309, %v5742, 0.0
        %v6498 = vsel %vm6310, %v5743, 0.0
        %vm6499 = vcmask 7168
        %v6500 = vsel %vm6499, %v6311, 0.0
        %v6501 = vsel %vm6499, %v6312, 0.0
        %v6502 = vadd.f32 %v6500, %v6501
        %v6503 = vsel %vm6499, %v6313, 0.0
        %v6504 = vadd.f32 %v6502, %v6503
        %v6505 = vsel %vm6499, %v6314, 0.0
        %v6506 = vadd.f32 %v6504, %v6505
        %v6507 = vsel %vm6499, %v6315, 0.0
        %v6508 = vadd.f32 %v6506, %v6507
        %v6509 = vsel %vm6499, %v6316, 0.0
        %v6510 = vadd.f32 %v6508, %v6509
        %v6511 = vsel %vm6499, %v6317, 0.0
        %v6512 = vadd.f32 %v6510, %v6511
        %v6513 = vsel %vm6499, %v6318, 0.0
        %v6514 = vadd.f32 %v6512, %v6513
        %v6515 = vsel %vm6499, %v6319, 0.0
        %v6516 = vadd.f32 %v6514, %v6515
        %v6517 = vsel %vm6499, %v6320, 0.0
        %v6518 = vadd.f32 %v6516, %v6517
        %v6519 = vsel %vm6499, %v6321, 0.0
        %v6520 = vadd.f32 %v6518, %v6519
        %v6521 = vsel %vm6499, %v6322, 0.0
        %v6522 = vadd.f32 %v6520, %v6521
        %v6523 = vsel %vm6499, %v6323, 0.0
        %v6524 = vadd.f32 %v6522, %v6523
        %v6525 = vsel %vm6499, %v6324, 0.0
        %v6526 = vadd.f32 %v6524, %v6525
        %v6527 = vsel %vm6499, %v6325, 0.0
        %v6528 = vadd.f32 %v6526, %v6527
        %v6529 = vsel %vm6499, %v6326, 0.0
        %v6530 = vadd.f32 %v6528, %v6529
        %v6531 = vsel %vm6499, %v6327, 0.0
        %v6532 = vadd.f32 %v6530, %v6531
        %v6533 = vsel %vm6499, %v6328, 0.0
        %v6534 = vadd.f32 %v6532, %v6533
        %v6535 = vsel %vm6499, %v6329, 0.0
        %v6536 = vadd.f32 %v6534, %v6535
        %v6537 = vsel %vm6499, %v6330, 0.0
        %v6538 = vadd.f32 %v6536, %v6537
        %v6539 = vsel %vm6499, %v6331, 0.0
        %v6540 = vadd.f32 %v6538, %v6539
        %v6541 = vsel %vm6499, %v6332, 0.0
        %v6542 = vadd.f32 %v6540, %v6541
        %v6543 = vsel %vm6499, %v6333, 0.0
        %v6544 = vadd.f32 %v6542, %v6543
        %v6545 = vsel %vm6499, %v6334, 0.0
        %v6546 = vadd.f32 %v6544, %v6545
        %v6547 = vsel %vm6499, %v6335, 0.0
        %v6548 = vadd.f32 %v6546, %v6547
        %v6549 = vsel %vm6499, %v6336, 0.0
        %v6550 = vadd.f32 %v6548, %v6549
        %v6551 = vsel %vm6499, %v6337, 0.0
        %v6552 = vadd.f32 %v6550, %v6551
        %v6553 = vsel %vm6499, %v6338, 0.0
        %v6554 = vadd.f32 %v6552, %v6553
        %v6555 = vsel %vm6499, %v6339, 0.0
        %v6556 = vadd.f32 %v6554, %v6555
        %v6557 = vsel %vm6499, %v6340, 0.0
        %v6558 = vadd.f32 %v6556, %v6557
        %v6559 = vsel %vm6499, %v6341, 0.0
        %v6560 = vadd.f32 %v6558, %v6559
        %v6561 = vsel %vm6499, %v6342, 0.0
        %v6562 = vadd.f32 %v6560, %v6561
        %v6563 = vsel %vm6499, %v6343, 0.0
        %v6564 = vadd.f32 %v6562, %v6563
        %v6565 = vsel %vm6499, %v6344, 0.0
        %v6566 = vadd.f32 %v6564, %v6565
        %v6567 = vsel %vm6499, %v6345, 0.0
        %v6568 = vadd.f32 %v6566, %v6567
        %v6569 = vsel %vm6499, %v6346, 0.0
        %v6570 = vadd.f32 %v6568, %v6569
        %v6571 = vsel %vm6499, %v6347, 0.0
        %v6572 = vadd.f32 %v6570, %v6571
        %v6573 = vsel %vm6499, %v6348, 0.0
        %v6574 = vadd.f32 %v6572, %v6573
        %v6575 = vsel %vm6499, %v6349, 0.0
        %v6576 = vadd.f32 %v6574, %v6575
        %v6577 = vsel %vm6499, %v6350, 0.0
        %v6578 = vadd.f32 %v6576, %v6577
        %v6579 = vsel %vm6499, %v6351, 0.0
        %v6580 = vadd.f32 %v6578, %v6579
        %v6581 = vsel %vm6499, %v6352, 0.0
        %v6582 = vadd.f32 %v6580, %v6581
        %v6583 = vsel %vm6499, %v6353, 0.0
        %v6584 = vadd.f32 %v6582, %v6583
        %v6585 = vsel %vm6499, %v6354, 0.0
        %v6586 = vadd.f32 %v6584, %v6585
        %v6587 = vsel %vm6499, %v6355, 0.0
        %v6588 = vadd.f32 %v6586, %v6587
        %v6589 = vsel %vm6499, %v6356, 0.0
        %v6590 = vadd.f32 %v6588, %v6589
        %v6591 = vsel %vm6499, %v6357, 0.0
        %v6592 = vadd.f32 %v6590, %v6591
        %v6593 = vsel %vm6499, %v6358, 0.0
        %v6594 = vadd.f32 %v6592, %v6593
        %v6595 = vsel %vm6499, %v6359, 0.0
        %v6596 = vadd.f32 %v6594, %v6595
        %v6597 = vsel %vm6499, %v6360, 0.0
        %v6598 = vadd.f32 %v6596, %v6597
        %v6599 = vsel %vm6499, %v6361, 0.0
        %v6600 = vadd.f32 %v6598, %v6599
        %v6601 = vsel %vm6499, %v6362, 0.0
        %v6602 = vadd.f32 %v6600, %v6601
        %v6603 = vsel %vm6499, %v6363, 0.0
        %v6604 = vadd.f32 %v6602, %v6603
        %v6605 = vsel %vm6499, %v6364, 0.0
        %v6606 = vadd.f32 %v6604, %v6605
        %v6607 = vsel %vm6499, %v6365, 0.0
        %v6608 = vadd.f32 %v6606, %v6607
        %v6609 = vsel %vm6499, %v6366, 0.0
        %v6610 = vadd.f32 %v6608, %v6609
        %v6611 = vsel %vm6499, %v6367, 0.0
        %v6612 = vadd.f32 %v6610, %v6611
        %v6613 = vsel %vm6499, %v6368, 0.0
        %v6614 = vadd.f32 %v6612, %v6613
        %v6615 = vsel %vm6499, %v6369, 0.0
        %v6616 = vadd.f32 %v6614, %v6615
        %v6617 = vsel %vm6499, %v6370, 0.0
        %v6618 = vadd.f32 %v6616, %v6617
        %v6619 = vsel %vm6499, %v6371, 0.0
        %v6620 = vadd.f32 %v6618, %v6619
        %v6621 = vsel %vm6499, %v6372, 0.0
        %v6622 = vadd.f32 %v6620, %v6621
        %v6623 = vsel %vm6499, %v6373, 0.0
        %v6624 = vadd.f32 %v6622, %v6623
        %v6625 = vsel %vm6499, %v6374, 0.0
        %v6626 = vadd.f32 %v6624, %v6625
        %v6627 = vsel %vm6499, %v6375, 0.0
        %v6628 = vadd.f32 %v6626, %v6627
        %v6629 = vsel %vm6499, %v6376, 0.0
        %v6630 = vadd.f32 %v6628, %v6629
        %v6631 = vsel %vm6499, %v6377, 0.0
        %v6632 = vadd.f32 %v6630, %v6631
        %v6633 = vsel %vm6499, %v6378, 0.0
        %v6634 = vadd.f32 %v6632, %v6633
        %v6635 = vsel %vm6499, %v6379, 0.0
        %v6636 = vadd.f32 %v6634, %v6635
        %v6637 = vsel %vm6499, %v6380, 0.0
        %v6638 = vadd.f32 %v6636, %v6637
        %v6639 = vsel %vm6499, %v6381, 0.0
        %v6640 = vadd.f32 %v6638, %v6639
        %v6641 = vsel %vm6499, %v6382, 0.0
        %v6642 = vadd.f32 %v6640, %v6641
        %v6643 = vsel %vm6499, %v6383, 0.0
        %v6644 = vadd.f32 %v6642, %v6643
        %v6645 = vsel %vm6499, %v6384, 0.0
        %v6646 = vadd.f32 %v6644, %v6645
        %v6647 = vsel %vm6499, %v6385, 0.0
        %v6648 = vadd.f32 %v6646, %v6647
        %v6649 = vsel %vm6499, %v6386, 0.0
        %v6650 = vadd.f32 %v6648, %v6649
        %v6651 = vsel %vm6499, %v6387, 0.0
        %v6652 = vadd.f32 %v6650, %v6651
        %v6653 = vsel %vm6499, %v6388, 0.0
        %v6654 = vadd.f32 %v6652, %v6653
        %v6655 = vsel %vm6499, %v6389, 0.0
        %v6656 = vadd.f32 %v6654, %v6655
        %v6657 = vsel %vm6499, %v6390, 0.0
        %v6658 = vadd.f32 %v6656, %v6657
        %v6659 = vsel %vm6499, %v6391, 0.0
        %v6660 = vadd.f32 %v6658, %v6659
        %v6661 = vsel %vm6499, %v6392, 0.0
        %v6662 = vadd.f32 %v6660, %v6661
        %v6663 = vsel %vm6499, %v6393, 0.0
        %v6664 = vadd.f32 %v6662, %v6663
        %v6665 = vsel %vm6499, %v6394, 0.0
        %v6666 = vadd.f32 %v6664, %v6665
        %v6667 = vsel %vm6499, %v6395, 0.0
        %v6668 = vadd.f32 %v6666, %v6667
        %v6669 = vsel %vm6499, %v6396, 0.0
        %v6670 = vadd.f32 %v6668, %v6669
        %v6671 = vsel %vm6499, %v6397, 0.0
        %v6672 = vadd.f32 %v6670, %v6671
        %v6673 = vsel %vm6499, %v6398, 0.0
        %v6674 = vadd.f32 %v6672, %v6673
        %v6675 = vsel %vm6499, %v6399, 0.0
        %v6676 = vadd.f32 %v6674, %v6675
        %v6677 = vsel %vm6499, %v6400, 0.0
        %v6678 = vadd.f32 %v6676, %v6677
        %v6679 = vsel %vm6499, %v6401, 0.0
        %v6680 = vadd.f32 %v6678, %v6679
        %v6681 = vsel %vm6499, %v6402, 0.0
        %v6682 = vadd.f32 %v6680, %v6681
        %v6683 = vsel %vm6499, %v6403, 0.0
        %v6684 = vadd.f32 %v6682, %v6683
        %v6685 = vsel %vm6499, %v6404, 0.0
        %v6686 = vadd.f32 %v6684, %v6685
        %v6687 = vsel %vm6499, %v6405, 0.0
        %v6688 = vadd.f32 %v6686, %v6687
        %v6689 = vsel %vm6499, %v6406, 0.0
        %v6690 = vadd.f32 %v6688, %v6689
        %v6691 = vsel %vm6499, %v6407, 0.0
        %v6692 = vadd.f32 %v6690, %v6691
        %v6693 = vsel %vm6499, %v6408, 0.0
        %v6694 = vadd.f32 %v6692, %v6693
        %v6695 = vsel %vm6499, %v6409, 0.0
        %v6696 = vadd.f32 %v6694, %v6695
        %v6697 = vsel %vm6499, %v6410, 0.0
        %v6698 = vadd.f32 %v6696, %v6697
        %v6699 = vsel %vm6499, %v6411, 0.0
        %v6700 = vadd.f32 %v6698, %v6699
        %v6701 = vsel %vm6499, %v6412, 0.0
        %v6702 = vadd.f32 %v6700, %v6701
        %v6703 = vsel %vm6499, %v6413, 0.0
        %v6704 = vadd.f32 %v6702, %v6703
        %v6705 = vsel %vm6499, %v6414, 0.0
        %v6706 = vadd.f32 %v6704, %v6705
        %v6707 = vsel %vm6499, %v6415, 0.0
        %v6708 = vadd.f32 %v6706, %v6707
        %v6709 = vsel %vm6499, %v6416, 0.0
        %v6710 = vadd.f32 %v6708, %v6709
        %v6711 = vsel %vm6499, %v6417, 0.0
        %v6712 = vadd.f32 %v6710, %v6711
        %v6713 = vsel %vm6499, %v6418, 0.0
        %v6714 = vadd.f32 %v6712, %v6713
        %v6715 = vsel %vm6499, %v6419, 0.0
        %v6716 = vadd.f32 %v6714, %v6715
        %v6717 = vsel %vm6499, %v6420, 0.0
        %v6718 = vadd.f32 %v6716, %v6717
        %v6719 = vsel %vm6499, %v6421, 0.0
        %v6720 = vadd.f32 %v6718, %v6719
        %v6721 = vsel %vm6499, %v6422, 0.0
        %v6722 = vadd.f32 %v6720, %v6721
        %v6723 = vsel %vm6499, %v6423, 0.0
        %v6724 = vadd.f32 %v6722, %v6723
        %v6725 = vsel %vm6499, %v6424, 0.0
        %v6726 = vadd.f32 %v6724, %v6725
        %v6727 = vsel %vm6499, %v6425, 0.0
        %v6728 = vadd.f32 %v6726, %v6727
        %v6729 = vsel %vm6499, %v6426, 0.0
        %v6730 = vadd.f32 %v6728, %v6729
        %v6731 = vsel %vm6499, %v6427, 0.0
        %v6732 = vadd.f32 %v6730, %v6731
        %v6733 = vsel %vm6499, %v6428, 0.0
        %v6734 = vadd.f32 %v6732, %v6733
        %v6735 = vsel %vm6499, %v6429, 0.0
        %v6736 = vadd.f32 %v6734, %v6735
        %v6737 = vsel %vm6499, %v6430, 0.0
        %v6738 = vadd.f32 %v6736, %v6737
        %v6739 = vsel %vm6499, %v6431, 0.0
        %v6740 = vadd.f32 %v6738, %v6739
        %v6741 = vsel %vm6499, %v6432, 0.0
        %v6742 = vadd.f32 %v6740, %v6741
        %v6743 = vsel %vm6499, %v6433, 0.0
        %v6744 = vadd.f32 %v6742, %v6743
        %v6745 = vsel %vm6499, %v6434, 0.0
        %v6746 = vadd.f32 %v6744, %v6745
        %v6747 = vsel %vm6499, %v6435, 0.0
        %v6748 = vadd.f32 %v6746, %v6747
        %v6749 = vsel %vm6499, %v6436, 0.0
        %v6750 = vadd.f32 %v6748, %v6749
        %v6751 = vsel %vm6499, %v6437, 0.0
        %v6752 = vadd.f32 %v6750, %v6751
        %v6753 = vsel %vm6499, %v6438, 0.0
        %v6754 = vadd.f32 %v6752, %v6753
        %v6755 = vsel %vm6499, %v6439, 0.0
        %v6756 = vadd.f32 %v6754, %v6755
        %v6757 = vsel %vm6499, %v6440, 0.0
        %v6758 = vadd.f32 %v6756, %v6757
        %v6759 = vsel %vm6499, %v6441, 0.0
        %v6760 = vadd.f32 %v6758, %v6759
        %v6761 = vsel %vm6499, %v6442, 0.0
        %v6762 = vadd.f32 %v6760, %v6761
        %v6763 = vsel %vm6499, %v6443, 0.0
        %v6764 = vadd.f32 %v6762, %v6763
        %v6765 = vsel %vm6499, %v6444, 0.0
        %v6766 = vadd.f32 %v6764, %v6765
        %v6767 = vsel %vm6499, %v6445, 0.0
        %v6768 = vadd.f32 %v6766, %v6767
        %v6769 = vsel %vm6499, %v6446, 0.0
        %v6770 = vadd.f32 %v6768, %v6769
        %v6771 = vsel %vm6499, %v6447, 0.0
        %v6772 = vadd.f32 %v6770, %v6771
        %v6773 = vsel %vm6499, %v6448, 0.0
        %v6774 = vadd.f32 %v6772, %v6773
        %v6775 = vsel %vm6499, %v6449, 0.0
        %v6776 = vadd.f32 %v6774, %v6775
        %v6777 = vsel %vm6499, %v6450, 0.0
        %v6778 = vadd.f32 %v6776, %v6777
        %v6779 = vsel %vm6499, %v6451, 0.0
        %v6780 = vadd.f32 %v6778, %v6779
        %v6781 = vsel %vm6499, %v6452, 0.0
        %v6782 = vadd.f32 %v6780, %v6781
        %v6783 = vsel %vm6499, %v6453, 0.0
        %v6784 = vadd.f32 %v6782, %v6783
        %v6785 = vsel %vm6499, %v6454, 0.0
        %v6786 = vadd.f32 %v6784, %v6785
        %v6787 = vsel %vm6499, %v6455, 0.0
        %v6788 = vadd.f32 %v6786, %v6787
        %v6789 = vsel %vm6499, %v6456, 0.0
        %v6790 = vadd.f32 %v6788, %v6789
        %v6791 = vsel %vm6499, %v6457, 0.0
        %v6792 = vadd.f32 %v6790, %v6791
        %v6793 = vsel %vm6499, %v6458, 0.0
        %v6794 = vadd.f32 %v6792, %v6793
        %v6795 = vsel %vm6499, %v6459, 0.0
        %v6796 = vadd.f32 %v6794, %v6795
        %v6797 = vsel %vm6499, %v6460, 0.0
        %v6798 = vadd.f32 %v6796, %v6797
        %v6799 = vsel %vm6499, %v6461, 0.0
        %v6800 = vadd.f32 %v6798, %v6799
        %v6801 = vsel %vm6499, %v6462, 0.0
        %v6802 = vadd.f32 %v6800, %v6801
        %v6803 = vsel %vm6499, %v6463, 0.0
        %v6804 = vadd.f32 %v6802, %v6803
        %v6805 = vsel %vm6499, %v6464, 0.0
        %v6806 = vadd.f32 %v6804, %v6805
        %v6807 = vsel %vm6499, %v6465, 0.0
        %v6808 = vadd.f32 %v6806, %v6807
        %v6809 = vsel %vm6499, %v6466, 0.0
        %v6810 = vadd.f32 %v6808, %v6809
        %v6811 = vsel %vm6499, %v6467, 0.0
        %v6812 = vadd.f32 %v6810, %v6811
        %v6813 = vsel %vm6499, %v6468, 0.0
        %v6814 = vadd.f32 %v6812, %v6813
        %v6815 = vsel %vm6499, %v6469, 0.0
        %v6816 = vadd.f32 %v6814, %v6815
        %v6817 = vsel %vm6499, %v6470, 0.0
        %v6818 = vadd.f32 %v6816, %v6817
        %v6819 = vsel %vm6499, %v6471, 0.0
        %v6820 = vadd.f32 %v6818, %v6819
        %v6821 = vsel %vm6499, %v6472, 0.0
        %v6822 = vadd.f32 %v6820, %v6821
        %v6823 = vsel %vm6499, %v6473, 0.0
        %v6824 = vadd.f32 %v6822, %v6823
        %v6825 = vsel %vm6499, %v6474, 0.0
        %v6826 = vadd.f32 %v6824, %v6825
        %v6827 = vsel %vm6499, %v6475, 0.0
        %v6828 = vadd.f32 %v6826, %v6827
        %v6829 = vsel %vm6499, %v6476, 0.0
        %v6830 = vadd.f32 %v6828, %v6829
        %v6831 = vsel %vm6499, %v6477, 0.0
        %v6832 = vadd.f32 %v6830, %v6831
        %v6833 = vsel %vm6499, %v6478, 0.0
        %v6834 = vadd.f32 %v6832, %v6833
        %v6835 = vsel %vm6499, %v6479, 0.0
        %v6836 = vadd.f32 %v6834, %v6835
        %v6837 = vsel %vm6499, %v6480, 0.0
        %v6838 = vadd.f32 %v6836, %v6837
        %v6839 = vsel %vm6499, %v6481, 0.0
        %v6840 = vadd.f32 %v6838, %v6839
        %v6841 = vsel %vm6499, %v6482, 0.0
        %v6842 = vadd.f32 %v6840, %v6841
        %v6843 = vsel %vm6499, %v6483, 0.0
        %v6844 = vadd.f32 %v6842, %v6843
        %v6845 = vsel %vm6499, %v6484, 0.0
        %v6846 = vadd.f32 %v6844, %v6845
        %v6847 = vsel %vm6499, %v6485, 0.0
        %v6848 = vadd.f32 %v6846, %v6847
        %v6849 = vsel %vm6499, %v6486, 0.0
        %v6850 = vadd.f32 %v6848, %v6849
        %v6851 = vsel %vm6499, %v6487, 0.0
        %v6852 = vadd.f32 %v6850, %v6851
        %v6853 = vsel %vm6499, %v6488, 0.0
        %v6854 = vadd.f32 %v6852, %v6853
        %v6855 = vsel %vm6499, %v6489, 0.0
        %v6856 = vadd.f32 %v6854, %v6855
        %v6857 = vsel %vm6499, %v6490, 0.0
        %v6858 = vadd.f32 %v6856, %v6857
        %v6859 = vsel %vm6499, %v6491, 0.0
        %v6860 = vadd.f32 %v6858, %v6859
        %v6861 = vsel %vm6499, %v6492, 0.0
        %v6862 = vadd.f32 %v6860, %v6861
        %v6863 = vsel %vm6499, %v6493, 0.0
        %v6864 = vadd.f32 %v6862, %v6863
        %v6865 = vsel %vm6499, %v6494, 0.0
        %v6866 = vadd.f32 %v6864, %v6865
        %v6867 = vsel %vm6499, %v6495, 0.0
        %v6868 = vadd.f32 %v6866, %v6867
        %v6869 = vsel %vm6499, %v6496, 0.0
        %v6870 = vadd.f32 %v6868, %v6869
        %v6871 = vsel %vm6499, %v6497, 0.0
        %v6872 = vadd.f32 %v6870, %v6871
        %v6873 = vsel %vm6499, %v6498, 0.0
        %v6874 = vadd.f32 %v6872, %v6873
        %6875 = vadd.xlane.f32.xlu0 %v6874
        %v6876 = vpop.xlane.xlu0 %6875
        %v6877 = vrot.slane %v6876, 4
        %v6878 = vadd.f32 %v6876, %v6877
        %v6879 = vrot.slane %v6878, 2
        %v6880 = vadd.f32 %v6878, %v6879
        %v6881 = vrot.slane %v6880, 1
        %v6882 = vadd.f32 %v6880, %v6881
        %s6883 = vtos %v6882
        %v6884 = vstv %s6883
        %6885 = vst [vmem:[%s242] sm:$0xff] %v6884
        %s6886 = sand.u32 %s103, 1
        %s6887 = scalar_lea.sflag [#allocation3], %s6886
        %s6888 = sand.u32 %s103, 1
        %s6889 = smul.addr %s6888, 8
        %s6890 = scalar_lea.vmem [#allocation2], %s6889
        // Predicated region
        $region33: #{tpu_custom_call.1} parent=31 // pred_check
          %p6891 = pneg %p113
        $region34: #{tpu_custom_call.1} parent=31 // pred_check_branch
          %6893 = sbr.rel (%p6891) target = $region36
        $region35: #{tpu_custom_call.1} parent=31 // pred_region
          %s6895 = ssub.s32 128, 128
          %6896 = vsyncadd %s6887, %s6895
          %s6897 = smul.addr %s17, 128
          %s6898 = scalar_lea.hbm %s3, %s6897
          %s6900 = sshll.u32 %s6890, 4
          %s6901 = int_to_ptr.vmem [resolvable:$true] %s6900
          %6903 = dma.vmem_to_hbm [thread:$0]  %s6901, 128, %s6898, %s6887
        $region36: #{tpu_custom_call.1} parent=31 // pred_fallthru
          _
      $region32: #{tpu_custom_call.1} parent=5 // pred_fallthru
        _
      %p6904 = scmp.le.s32.totalorder 2, %s12
      // Predicated region
      $region37: #{tpu_custom_call.1} parent=5 // pred_check
        %p6905 = pneg %p6904
      $region38: #{tpu_custom_call.1} parent=5 // pred_check_branch
        %6907 = sbr.rel (%p6905) target = $region40
      $region39: #{tpu_custom_call.1} parent=5 // pred_region
        %s6908 = ssub.s32 %s12, 2
        // Predicated region
        $region41: #{tpu_custom_call.1} parent=39 // pred_check
          %p6909 = pneg %p119
        $region42: #{tpu_custom_call.1} parent=39 // pred_check_branch
          %6911 = sbr.rel (%p6909) target = $region44
        $region43: #{tpu_custom_call.1} parent=39 // pred_region
          %s6912 = sand.u32 %s104, 1
          %s6913 = scalar_lea.sflag [#allocation3], %s6912
          %s6914 = sand.u32 %s104, 1
          %s6915 = smul.addr %s6914, 8
          %s6916 = scalar_lea.vmem [#allocation2], %s6915
          %6917 = dma.done %s6913, 128
        $region44: #{tpu_custom_call.1} parent=39 // pred_fallthru
          _
      $region40: #{tpu_custom_call.1} parent=5 // pred_fallthru
        _
    $region6: #{tpu_custom_call.1} parent=1 // loop_footer
      %s16 = sadd.s32 1, %s12
    $region7: #{tpu_custom_call.1} parent=1 // loop_footer_branch
      %11 = sbr.rel target = $region3
    $region8: #{tpu_custom_call.1} parent=1 // loop_exit
      _
    %6918 = vsyncpa [#allocation3], 1
    %s6919 = scalar_lea.sflag [#allocation3], 1
    %6920 = vsyncpa %s6919, 1

</llo_original>
